<compile_context>
chip_gen: v7x
topology: tpu7x:2x2x1
jax: 0.10.0
libtpu: 0.0.40
codegen_flags: <defaults>
</compile_context>

<pallas_src>
import functools

import jax
import jax.numpy as jnp
from jax import lax
from jax.experimental import pallas as pl
from jax.experimental.pallas import tpu as pltpu


def _round_up(x, m):
    return ((x + m - 1) // m) * m


def _vmem_budget():
    """(vmem_limit_bytes, tile-sizing budget) from the chip's VMEM capacity."""
    cap = 64 * 1024 * 1024
    try:
        info = pltpu.get_tpu_info()
        cap = int(getattr(info, "vmem_capacity_bytes", cap) or cap)
    except Exception:
        pass
    limit = max(32 * 1024 * 1024, int(cap * 0.75))
    budget = int(limit * 0.6)
    return limit, budget


def _pick_tg(G, W, D, x_bytes, out_bytes, budget):
    """Largest windows-per-block tile that fits the VMEM budget (>=2 steps)."""
    # bf16 weights (double-buffered) + f32 biases + slack for mask/iota temps.
    fixed = 2 * 2 * (3 * D * D + D * D) + 2 * 4 * (4 * D) + (1 << 20)
    per_win = W * (2 * x_bytes * D          # x tile (double-buffered)
                   + 2 * out_bytes * D      # out tile (double-buffered)
                   + 4 * 3 * D              # f32 qkv temporary
                   + 4 * 5 * D              # ctx / act / proj / q,k,v slices
                   + 4 * 4 * 128)           # score / softmax temporaries
    avail = max(budget - fixed, 8 * per_win)
    tg = int(avail // per_win)
    tg = max(8, min(tg, 128))               # 128 windows = 1024 token rows
    if G > 8:                               # keep >=2 grid steps (v7x megacore)
        tg = min(tg, _round_up(-(-G // 2), 8))
    return max(8, (tg // 8) * 8)


def _window_attention_kernel(*refs, num_heads, window, head_dim, has_mask):
    if has_mask:
        (x_ref, wqkv_ref, bqkv_ref, wproj_ref, bproj_ref,
         nwid_ref, mask_ref, o_ref) = refs
    else:
        x_ref, wqkv_ref, bqkv_ref, wproj_ref, bproj_ref, o_ref = refs
        nwid_ref = mask_ref = None

    H, W, hd = num_heads, window, head_dim
    D = H * hd
    tm = x_ref.shape[0]                      # token rows in this block
    tg = tm // W                             # windows in this block

    # ---- fused QKV projection: bf16 MXU, f32 accumulation.  The qk scale is
    # already folded into the q-columns of wqkv/bqkv on the host.
    x_bf = x_ref[...].astype(jnp.bfloat16)
    qkv = jnp.dot(x_bf, wqkv_ref[...], preferred_element_type=jnp.float32)
    qkv = qkv + bqkv_ref[...]                            # (tm, 3D) f32
    qkv = qkv.reshape(tg, W, 3 * D)                      # W==8: sublane split

    # ---- per-window additive mask, gathered from the tiny (nW*W, W) table
    # with a one-hot matmul (no (G, W, W) HBM broadcast, no in-kernel gather).
    if has_mask:
        n_rows = mask_ref.shape[0]                       # nW * W
        sel = (nwid_ref[...].reshape(tg, 1, 1) * W
               + lax.broadcasted_iota(jnp.int32, (tg, W, 1), 1))
        col = lax.broadcasted_iota(jnp.int32, (tg, W, n_rows), 2)
        onehot = (sel == col).astype(jnp.float32).reshape(tm, n_rows)
        mask_blk = jnp.dot(onehot, mask_ref[...],
                           preferred_element_type=jnp.float32)
        mask_blk = mask_blk.reshape(tg, W, W)            # cheap sublane split
    else:
        mask_blk = None

    # ---- per-head attention (f32 math; FLOPs negligible vs. projections).
    ctx = []                                             # ctx[h]: (tg, W, hd)
    for h in range(H):
        q = qkv[:, :, h * hd:(h + 1) * hd]
        k = qkv[:, :, D + h * hd:D + (h + 1) * hd]
        v = qkv[:, :, 2 * D + h * hd:2 * D + (h + 1) * hd]
        s = jnp.einsum('gwe,gve->gwv', q, k,
                       preferred_element_type=jnp.float32)   # (tg, W, W)
        if mask_blk is not None:
            s = s + mask_blk
        s = s - jnp.max(s, axis=-1, keepdims=True)
        p = jnp.exp(s)
        denom = jnp.sum(p, axis=-1, keepdims=True)
        p = p * pl.reciprocal(denom, approx=True)
        ctx.append(jnp.einsum('gwv,gve->gwe', p, v,
                              preferred_element_type=jnp.float32))

    # ---- faithful replica of `(attn @ v).transpose(1, 2).reshape(B_,N,W,D)`:
    # output row w_out gathers hd-chunks m = w_out*H + j -> (h, w) = divmod(m, W).
    # The chunks are lane-concatenated per output row and row-stacked so the
    # projection is ONE full-K bf16 matmul instead of W*H tiny K=hd matmuls.
    rows = []
    for w_out in range(W):
        chunks = []
        for j in range(H):
            h, w = divmod(w_out * H + j, W)
            chunks.append(ctx[h][:, w, :])
        rows.append(jnp.concatenate(chunks, axis=-1))    # (tg, D)
    act = jnp.concatenate(rows, axis=0).astype(jnp.bfloat16)   # (W*tg, D)
    proj = jnp.dot(act, wproj_ref[...], preferred_element_type=jnp.float32)
    proj = proj + bproj_ref[...]                         # (W*tg, D) f32

    # ---- lane-dense store of the (tg, W*D) output block.
    if D % 128 == 0:
        for w_out in range(W):
            o_ref[:, w_out * D:(w_out + 1) * D] = (
                proj[w_out * tg:(w_out + 1) * tg, :].astype(o_ref.dtype))
    else:
        o_ref[...] = jnp.concatenate(
            [proj[w * tg:(w + 1) * tg, :] for w in range(W)],
            axis=-1).astype(o_ref.dtype)


@functools.partial(jax.jit, static_argnames=("num_heads", "qk_scale", "tg"))
def window_attention(x, w_qkv, b_qkv, w_proj, b_proj, mask=None, *,
                     num_heads, qk_scale=None, tg=None):
    """WindowAttention forward.

    x:      (B_, N, W, D)  with B_ = nW * B
    w_qkv:  (3D, D)  b_qkv: (3D,)    (PyTorch nn.Linear (out, in) layout)
    w_proj: (D, D)   b_proj: (D,)
    mask:   optional (nW, W, W) additive 0 / -inf-style mask, B_ % nW == 0
    returns (B_, N, W, D)
    """
    B_, N, W, D = x.shape
    H = num_heads
    assert D % H == 0, "dim must be divisible by num_heads"
    hd = D // H
    scale = qk_scale or hd ** (-0.5)

    G = B_ * N                                  # number of windows
    vmem_limit, budget = _vmem_budget()
    x_bytes = jnp.dtype(x.dtype).itemsize
    if tg is None:
        tg_eff = _pick_tg(G, W, D, x_bytes, x_bytes, budget)
    else:
        tg_eff = max(8, (int(tg) // 8) * 8)
    Gp = _round_up(G, tg_eff)

    # token view (free leading-dim reshape), padded to the tile boundary
    x_tok = x.reshape(G * W, D)
    if Gp != G:
        x_tok = jnp.pad(x_tok, ((0, (Gp - G) * W), (0, 0)))

    # PyTorch Linear computes y = x @ W.T + b -> pass transposed weights, cast
    # to bf16 for the MXU, and fold the qk scale into the q-columns.
    col_scale = jnp.concatenate([jnp.full((D,), scale, jnp.float32),
                                 jnp.ones((2 * D,), jnp.float32)])
    wqkv_t = (jnp.transpose(w_qkv).astype(jnp.float32)
              * col_scale[None, :]).astype(jnp.bfloat16)            # (D, 3D)
    bqkv = (b_qkv.astype(jnp.float32) * col_scale).reshape(1, 3 * D)
    wproj_t = jnp.transpose(w_proj).astype(jnp.bfloat16)            # (D, D)
    bproj = b_proj.astype(jnp.float32).reshape(1, D)

    has_mask = mask is not None
    operands = [x_tok, wqkv_t, bqkv, wproj_t, bproj]
    in_specs = [
        pl.BlockSpec((tg_eff * W, D), lambda i: (i, 0)),
        pl.BlockSpec((D, 3 * D), lambda i: (0, 0)),
        pl.BlockSpec((1, 3 * D), lambda i: (0, 0)),
        pl.BlockSpec((D, D), lambda i: (0, 0)),
        pl.BlockSpec((1, D), lambda i: (0, 0)),
    ]
    if has_mask:
        nW = mask.shape[0]
        assert B_ % nW == 0, "B_ must be divisible by the number of masks"
        # window g -> mask id (g // N) % nW, matching the (B_, N) -> G order;
        # the full per-window mask is never materialized in HBM.
        nw_ids = ((jnp.arange(Gp, dtype=jnp.int32) // N) % nW).reshape(Gp, 1)
        mask2d = mask.astype(jnp.float32).reshape(nW * W, W)
        operands += [nw_ids, mask2d]
        in_specs += [
            pl.BlockSpec((tg_eff, 1), lambda i: (i, 0)),
            pl.BlockSpec((nW * W, W), lambda i: (0, 0)),
        ]

    kernel = functools.partial(
        _window_attention_kernel, num_heads=H, window=W, head_dim=hd,
        has_mask=has_mask)

    out = pl.pallas_call(
        kernel,
        out_shape=jax.ShapeDtypeStruct((Gp, W * D), x.dtype),
        grid_spec=pltpu.PrefetchScalarGridSpec(
            num_scalar_prefetch=0,
            grid=(Gp // tg_eff,),
            in_specs=in_specs,
            out_specs=pl.BlockSpec((tg_eff, W * D), lambda i: (i, 0)),
        ),
        compiler_params=pltpu.CompilerParams(
            dimension_semantics=("parallel",),
            vmem_limit_bytes=int(vmem_limit)),
    )(*operands)

    return out[:G].reshape(B_, N, W, D)


def _reference(x, w_qkv, b_qkv, w_proj, b_proj, mask=None, *, num_heads,
               qk_scale=None):
    """Pure-JAX f32 mirror of the PyTorch forward (eval mode)."""
    B_, N, W, D = x.shape
    H = num_heads
    hd = D // H
    scale = qk_scale or hd ** (-0.5)
    hp = jax.lax.Precision.HIGHEST

    qkv = jnp.einsum('bnwd,ed->bnwe', x, w_qkv, precision=hp) + b_qkv
    qkv = jnp.transpose(qkv.reshape(B_, N, W, 3, H, hd), (3, 0, 4, 1, 2, 5))
    q, k, v = qkv[0] * scale, qkv[1], qkv[2]               # (B_, H, N, W, hd)
    attn = jnp.einsum('bhnwe,bhnve->bhnwv', q, k, precision=hp)
    if mask is not None:
        nW = mask.shape[0]
        attn = attn.reshape(B_ // nW, nW, H, N, W, W) + \
            mask[None, :, None, None, :, :]
        attn = attn.reshape(B_, H, N, W, W)
    attn = jax.nn.softmax(attn, axis=-1)
    xo = jnp.einsum('bhnwv,bhnve->bhnwe', attn, v, precision=hp)
    # torch: (attn @ v).transpose(1, 2).reshape(B_, N, W, D)
    xo = jnp.transpose(xo, (0, 2, 1, 3, 4)).reshape(B_, N, W, D)
    return jnp.einsum('bnwd,od->bnwo', xo, w_proj, precision=hp) + b_proj


if __name__ == "__main__":
    # Shapes implied by the forward: x is (nW*B, N, window_size, dim)
    B_, N, W, D = 4, 4, 8, 32
    H = 4
    nW = 2

    key = jax.random.PRNGKey(0)
    kx, k1, k2, k3, k4, km = jax.random.split(key, 6)

    x = jax.random.normal(kx, (B_, N, W, D), dtype=jnp.float32)
    w_qkv = 0.1 * jax.random.normal(k1, (3 * D, D), dtype=jnp.float32)
    b_qkv = 0.1 * jax.random.normal(k2, (3 * D,), dtype=jnp.float32)
    w_proj = 0.1 * jax.random.normal(k3, (D, D), dtype=jnp.float32)
    b_proj = 0.1 * jax.random.normal(k4, (D,), dtype=jnp.float32)
    # Swin-style additive mask: 0 where allowed, -100 where masked
    mask = jnp.where(jax.random.uniform(km, (nW, W, W)) > 0.5,
                     0.0, -100.0).astype(jnp.float32)

    # --- un-masked path (auto tile; G=16 windows -> 2 grid steps) ---
    out = window_attention(x, w_qkv, b_qkv, w_proj, b_proj, num_heads=H)
    out = jax.block_until_ready(out)
    ref = _reference(x, w_qkv, b_qkv, w_proj, b_proj, num_heads=H)
    assert out.shape == (B_, N, W, D), out.shape
    # bf16 MXU projections + approx reciprocal -> compare with bf16-level tol.
    assert jnp.allclose(out, ref, atol=3e-2, rtol=3e-2), float(
        jnp.max(jnp.abs(out - ref)))

    # --- masked path (in-kernel mask gather, multi-step grid) ---
    out_m = window_attention(x, w_qkv, b_qkv, w_proj, b_proj, mask,
                             num_heads=H)
    out_m = jax.block_until_ready(out_m)
    ref_m = _reference(x, w_qkv, b_qkv, w_proj, b_proj, mask=mask, num_heads=H)
    assert jnp.allclose(out_m, ref_m, atol=3e-2, rtol=3e-2), float(
        jnp.max(jnp.abs(out_m - ref_m)))

    print("KERNEL_OK")
</pallas_src>

<mosaic_0001>
module attributes {stable_mosaic.version = 11 : i64} {
  func.func @_window_attention_kernel(%arg0: i32, %arg1: memref<64x32xf32, #tpu.memory_space<vmem>>, %arg2: memref<32x96xbf16, #tpu.memory_space<vmem>>, %arg3: memref<1x96xf32, #tpu.memory_space<vmem>>, %arg4: memref<32x32xbf16, #tpu.memory_space<vmem>>, %arg5: memref<1x32xf32, #tpu.memory_space<vmem>>, %arg6: memref<8x256xf32, #tpu.memory_space<vmem>>) attributes {dimension_semantics = [#tpu.dimension_semantics<parallel>], iteration_bounds = array<i64: 2>, scalar_prefetch = 0 : i64, scratch_operands = 0 : i64, tpu.core_type = #tpu.core_type<tc>, window_params = [{transform_indices = @transform_0, window_bounds = array<i64: 64, 32>}, {pipeline_mode = #tpu.pipeline_mode<synchronous>, transform_indices = @transform_1, window_bounds = array<i64: 32, 96>}, {pipeline_mode = #tpu.pipeline_mode<synchronous>, transform_indices = @transform_2, window_bounds = array<i64: 1, 96>}, {pipeline_mode = #tpu.pipeline_mode<synchronous>, transform_indices = @transform_3, window_bounds = array<i64: 32, 32>}, {pipeline_mode = #tpu.pipeline_mode<synchronous>, transform_indices = @transform_4, window_bounds = array<i64: 1, 32>}, {transform_indices = @transform_5, window_bounds = array<i64: 8, 256>}]} {
    %c0 = arith.constant 0 : index
    %c0_0 = arith.constant 0 : index
    %0 = vector.load %arg1[%c0, %c0_0] : memref<64x32xf32, #tpu.memory_space<vmem>>, vector<64x32xf32>
    %1 = arith.truncf %0 : vector<64x32xf32> to vector<64x32xbf16>
    %c0_1 = arith.constant 0 : index
    %c0_2 = arith.constant 0 : index
    %2 = vector.load %arg2[%c0_1, %c0_2] : memref<32x96xbf16, #tpu.memory_space<vmem>>, vector<32x96xbf16>
    %cst = arith.constant dense<0.000000e+00> : vector<64x96xf32>
    %3 = tpu.matmul %1, %2, %cst {dimension_numbers = #tpu.dot_dimension_numbers<[1], [0], [0], [1], [0, 0, 1, 1], [], []>} : vector<64x32xbf16>, vector<32x96xbf16>, vector<64x96xf32> -> vector<64x96xf32>
    %c0_3 = arith.constant 0 : index
    %c0_4 = arith.constant 0 : index
    %4 = vector.load %arg3[%c0_3, %c0_4] : memref<1x96xf32, #tpu.memory_space<vmem>>, vector<1x96xf32>
    %5 = vector.broadcast %4 : vector<1x96xf32> to vector<64x96xf32>
    %6 = arith.addf %3, %5 : vector<64x96xf32>
    %7 = vector.shape_cast %6 : vector<64x96xf32> to vector<8x8x96xf32>
    %8 = vector.extract_strided_slice %7 {offsets = [0, 0, 0], sizes = [8, 8, 8], strides = [1, 1, 1]} : vector<8x8x96xf32> to vector<8x8x8xf32>
    %9 = vector.extract_strided_slice %7 {offsets = [0, 0, 32], sizes = [8, 8, 8], strides = [1, 1, 1]} : vector<8x8x96xf32> to vector<8x8x8xf32>
    %10 = vector.extract_strided_slice %7 {offsets = [0, 0, 64], sizes = [8, 8, 8], strides = [1, 1, 1]} : vector<8x8x96xf32> to vector<8x8x8xf32>
    "tpu.trace_start"() <{level = 10 : i32, message = "gwe,gve->gwv"}> : () -> ()
    %cst_5 = arith.constant dense<0.000000e+00> : vector<8x8x8xf32>
    %11 = tpu.matmul %8, %9, %cst_5 {dimension_numbers = #tpu.dot_dimension_numbers<[2], [2], [1], [1], [0, 0, 0, 1, 1, 1], [0], [0]>} : vector<8x8x8xf32>, vector<8x8x8xf32>, vector<8x8x8xf32> -> vector<8x8x8xf32>
    "tpu.trace_stop"() : () -> ()
    %cst_6 = arith.constant dense<0xFF800000> : vector<8x8xf32>
    %12 = vector.multi_reduction <maximumf>, %11, %cst_6 [2] : vector<8x8x8xf32> to vector<8x8xf32>
    %13 = vector.shape_cast %12 : vector<8x8xf32> to vector<8x8x1xf32>
    %14 = vector.broadcast %13 : vector<8x8x1xf32> to vector<8x8x8xf32>
    %15 = arith.subf %11, %14 : vector<8x8x8xf32>
    %16 = math.exp %15 : vector<8x8x8xf32>
    %cst_7 = arith.constant dense<0.000000e+00> : vector<8x8xf32>
    %17 = vector.multi_reduction <add>, %16, %cst_7 [2] : vector<8x8x8xf32> to vector<8x8xf32>
    %18 = vector.shape_cast %17 : vector<8x8xf32> to vector<8x8x1xf32>
    %19 = tpu.reciprocal %18 {approx = true} : vector<8x8x1xf32> -> vector<8x8x1xf32>
    %20 = vector.broadcast %19 : vector<8x8x1xf32> to vector<8x8x8xf32>
    %21 = arith.mulf %16, %20 : vector<8x8x8xf32>
    "tpu.trace_start"() <{level = 10 : i32, message = "gwv,gve->gwe"}> : () -> ()
    %cst_8 = arith.constant dense<0.000000e+00> : vector<8x8x8xf32>
    %22 = tpu.matmul %21, %10, %cst_8 {dimension_numbers = #tpu.dot_dimension_numbers<[2], [1], [1], [2], [0, 0, 0, 1, 1, 2], [0], [0]>} : vector<8x8x8xf32>, vector<8x8x8xf32>, vector<8x8x8xf32> -> vector<8x8x8xf32>
    "tpu.trace_stop"() : () -> ()
    %23 = vector.extract_strided_slice %7 {offsets = [0, 0, 8], sizes = [8, 8, 8], strides = [1, 1, 1]} : vector<8x8x96xf32> to vector<8x8x8xf32>
    %24 = vector.extract_strided_slice %7 {offsets = [0, 0, 40], sizes = [8, 8, 8], strides = [1, 1, 1]} : vector<8x8x96xf32> to vector<8x8x8xf32>
    %25 = vector.extract_strided_slice %7 {offsets = [0, 0, 72], sizes = [8, 8, 8], strides = [1, 1, 1]} : vector<8x8x96xf32> to vector<8x8x8xf32>
    "tpu.trace_start"() <{level = 10 : i32, message = "gwe,gve->gwv"}> : () -> ()
    %cst_9 = arith.constant dense<0.000000e+00> : vector<8x8x8xf32>
    %26 = tpu.matmul %23, %24, %cst_9 {dimension_numbers = #tpu.dot_dimension_numbers<[2], [2], [1], [1], [0, 0, 0, 1, 1, 1], [0], [0]>} : vector<8x8x8xf32>, vector<8x8x8xf32>, vector<8x8x8xf32> -> vector<8x8x8xf32>
    "tpu.trace_stop"() : () -> ()
    %cst_10 = arith.constant dense<0xFF800000> : vector<8x8xf32>
    %27 = vector.multi_reduction <maximumf>, %26, %cst_10 [2] : vector<8x8x8xf32> to vector<8x8xf32>
    %28 = vector.shape_cast %27 : vector<8x8xf32> to vector<8x8x1xf32>
    %29 = vector.broadcast %28 : vector<8x8x1xf32> to vector<8x8x8xf32>
    %30 = arith.subf %26, %29 : vector<8x8x8xf32>
    %31 = math.exp %30 : vector<8x8x8xf32>
    %cst_11 = arith.constant dense<0.000000e+00> : vector<8x8xf32>
    %32 = vector.multi_reduction <add>, %31, %cst_11 [2] : vector<8x8x8xf32> to vector<8x8xf32>
    %33 = vector.shape_cast %32 : vector<8x8xf32> to vector<8x8x1xf32>
    %34 = tpu.reciprocal %33 {approx = true} : vector<8x8x1xf32> -> vector<8x8x1xf32>
    %35 = vector.broadcast %34 : vector<8x8x1xf32> to vector<8x8x8xf32>
    %36 = arith.mulf %31, %35 : vector<8x8x8xf32>
    "tpu.trace_start"() <{level = 10 : i32, message = "gwv,gve->gwe"}> : () -> ()
    %cst_12 = arith.constant dense<0.000000e+00> : vector<8x8x8xf32>
    %37 = tpu.matmul %36, %25, %cst_12 {dimension_numbers = #tpu.dot_dimension_numbers<[2], [1], [1], [2], [0, 0, 0, 1, 1, 2], [0], [0]>} : vector<8x8x8xf32>, vector<8x8x8xf32>, vector<8x8x8xf32> -> vector<8x8x8xf32>
    "tpu.trace_stop"() : () -> ()
    %38 = vector.extract_strided_slice %7 {offsets = [0, 0, 16], sizes = [8, 8, 8], strides = [1, 1, 1]} : vector<8x8x96xf32> to vector<8x8x8xf32>
    %39 = vector.extract_strided_slice %7 {offsets = [0, 0, 48], sizes = [8, 8, 8], strides = [1, 1, 1]} : vector<8x8x96xf32> to vector<8x8x8xf32>
    %40 = vector.extract_strided_slice %7 {offsets = [0, 0, 80], sizes = [8, 8, 8], strides = [1, 1, 1]} : vector<8x8x96xf32> to vector<8x8x8xf32>
    "tpu.trace_start"() <{level = 10 : i32, message = "gwe,gve->gwv"}> : () -> ()
    %cst_13 = arith.constant dense<0.000000e+00> : vector<8x8x8xf32>
    %41 = tpu.matmul %38, %39, %cst_13 {dimension_numbers = #tpu.dot_dimension_numbers<[2], [2], [1], [1], [0, 0, 0, 1, 1, 1], [0], [0]>} : vector<8x8x8xf32>, vector<8x8x8xf32>, vector<8x8x8xf32> -> vector<8x8x8xf32>
    "tpu.trace_stop"() : () -> ()
    %cst_14 = arith.constant dense<0xFF800000> : vector<8x8xf32>
    %42 = vector.multi_reduction <maximumf>, %41, %cst_14 [2] : vector<8x8x8xf32> to vector<8x8xf32>
    %43 = vector.shape_cast %42 : vector<8x8xf32> to vector<8x8x1xf32>
    %44 = vector.broadcast %43 : vector<8x8x1xf32> to vector<8x8x8xf32>
    %45 = arith.subf %41, %44 : vector<8x8x8xf32>
    %46 = math.exp %45 : vector<8x8x8xf32>
    %cst_15 = arith.constant dense<0.000000e+00> : vector<8x8xf32>
    %47 = vector.multi_reduction <add>, %46, %cst_15 [2] : vector<8x8x8xf32> to vector<8x8xf32>
    %48 = vector.shape_cast %47 : vector<8x8xf32> to vector<8x8x1xf32>
    %49 = tpu.reciprocal %48 {approx = true} : vector<8x8x1xf32> -> vector<8x8x1xf32>
    %50 = vector.broadcast %49 : vector<8x8x1xf32> to vector<8x8x8xf32>
    %51 = arith.mulf %46, %50 : vector<8x8x8xf32>
    "tpu.trace_start"() <{level = 10 : i32, message = "gwv,gve->gwe"}> : () -> ()
    %cst_16 = arith.constant dense<0.000000e+00> : vector<8x8x8xf32>
    %52 = tpu.matmul %51, %40, %cst_16 {dimension_numbers = #tpu.dot_dimension_numbers<[2], [1], [1], [2], [0, 0, 0, 1, 1, 2], [0], [0]>} : vector<8x8x8xf32>, vector<8x8x8xf32>, vector<8x8x8xf32> -> vector<8x8x8xf32>
    "tpu.trace_stop"() : () -> ()
    %53 = vector.extract_strided_slice %7 {offsets = [0, 0, 24], sizes = [8, 8, 8], strides = [1, 1, 1]} : vector<8x8x96xf32> to vector<8x8x8xf32>
    %54 = vector.extract_strided_slice %7 {offsets = [0, 0, 56], sizes = [8, 8, 8], strides = [1, 1, 1]} : vector<8x8x96xf32> to vector<8x8x8xf32>
    %55 = vector.extract_strided_slice %7 {offsets = [0, 0, 88], sizes = [8, 8, 8], strides = [1, 1, 1]} : vector<8x8x96xf32> to vector<8x8x8xf32>
    "tpu.trace_start"() <{level = 10 : i32, message = "gwe,gve->gwv"}> : () -> ()
    %cst_17 = arith.constant dense<0.000000e+00> : vector<8x8x8xf32>
    %56 = tpu.matmul %53, %54, %cst_17 {dimension_numbers = #tpu.dot_dimension_numbers<[2], [2], [1], [1], [0, 0, 0, 1, 1, 1], [0], [0]>} : vector<8x8x8xf32>, vector<8x8x8xf32>, vector<8x8x8xf32> -> vector<8x8x8xf32>
    "tpu.trace_stop"() : () -> ()
    %cst_18 = arith.constant dense<0xFF800000> : vector<8x8xf32>
    %57 = vector.multi_reduction <maximumf>, %56, %cst_18 [2] : vector<8x8x8xf32> to vector<8x8xf32>
    %58 = vector.shape_cast %57 : vector<8x8xf32> to vector<8x8x1xf32>
    %59 = vector.broadcast %58 : vector<8x8x1xf32> to vector<8x8x8xf32>
    %60 = arith.subf %56, %59 : vector<8x8x8xf32>
    %61 = math.exp %60 : vector<8x8x8xf32>
    %cst_19 = arith.constant dense<0.000000e+00> : vector<8x8xf32>
    %62 = vector.multi_reduction <add>, %61, %cst_19 [2] : vector<8x8x8xf32> to vector<8x8xf32>
    %63 = vector.shape_cast %62 : vector<8x8xf32> to vector<8x8x1xf32>
    %64 = tpu.reciprocal %63 {approx = true} : vector<8x8x1xf32> -> vector<8x8x1xf32>
    %65 = vector.broadcast %64 : vector<8x8x1xf32> to vector<8x8x8xf32>
    %66 = arith.mulf %61, %65 : vector<8x8x8xf32>
    "tpu.trace_start"() <{level = 10 : i32, message = "gwv,gve->gwe"}> : () -> ()
    %cst_20 = arith.constant dense<0.000000e+00> : vector<8x8x8xf32>
    %67 = tpu.matmul %66, %55, %cst_20 {dimension_numbers = #tpu.dot_dimension_numbers<[2], [1], [1], [2], [0, 0, 0, 1, 1, 2], [0], [0]>} : vector<8x8x8xf32>, vector<8x8x8xf32>, vector<8x8x8xf32> -> vector<8x8x8xf32>
    "tpu.trace_stop"() : () -> ()
    %68 = vector.extract_strided_slice %22 {offsets = [0, 0, 0], sizes = [8, 1, 8], strides = [1, 1, 1]} : vector<8x8x8xf32> to vector<8x1x8xf32>
    %69 = vector.shape_cast %68 : vector<8x1x8xf32> to vector<8x8xf32>
    %70 = vector.extract_strided_slice %22 {offsets = [0, 1, 0], sizes = [8, 1, 8], strides = [1, 1, 1]} : vector<8x8x8xf32> to vector<8x1x8xf32>
    %71 = vector.shape_cast %70 : vector<8x1x8xf32> to vector<8x8xf32>
    %72 = vector.extract_strided_slice %22 {offsets = [0, 2, 0], sizes = [8, 1, 8], strides = [1, 1, 1]} : vector<8x8x8xf32> to vector<8x1x8xf32>
    %73 = vector.shape_cast %72 : vector<8x1x8xf32> to vector<8x8xf32>
    %74 = vector.extract_strided_slice %22 {offsets = [0, 3, 0], sizes = [8, 1, 8], strides = [1, 1, 1]} : vector<8x8x8xf32> to vector<8x1x8xf32>
    %75 = vector.shape_cast %74 : vector<8x1x8xf32> to vector<8x8xf32>
    %76 = tpu.concatenate %69, %71, %73, %75 in 1 : vector<8x8xf32>, vector<8x8xf32>, vector<8x8xf32>, vector<8x8xf32> -> vector<8x32xf32>
    %77 = vector.extract_strided_slice %22 {offsets = [0, 4, 0], sizes = [8, 1, 8], strides = [1, 1, 1]} : vector<8x8x8xf32> to vector<8x1x8xf32>
    %78 = vector.shape_cast %77 : vector<8x1x8xf32> to vector<8x8xf32>
    %79 = vector.extract_strided_slice %22 {offsets = [0, 5, 0], sizes = [8, 1, 8], strides = [1, 1, 1]} : vector<8x8x8xf32> to vector<8x1x8xf32>
    %80 = vector.shape_cast %79 : vector<8x1x8xf32> to vector<8x8xf32>
    %81 = vector.extract_strided_slice %22 {offsets = [0, 6, 0], sizes = [8, 1, 8], strides = [1, 1, 1]} : vector<8x8x8xf32> to vector<8x1x8xf32>
    %82 = vector.shape_cast %81 : vector<8x1x8xf32> to vector<8x8xf32>
    %83 = vector.extract_strided_slice %22 {offsets = [0, 7, 0], sizes = [8, 1, 8], strides = [1, 1, 1]} : vector<8x8x8xf32> to vector<8x1x8xf32>
    %84 = vector.shape_cast %83 : vector<8x1x8xf32> to vector<8x8xf32>
    %85 = tpu.concatenate %78, %80, %82, %84 in 1 : vector<8x8xf32>, vector<8x8xf32>, vector<8x8xf32>, vector<8x8xf32> -> vector<8x32xf32>
    %86 = vector.extract_strided_slice %37 {offsets = [0, 0, 0], sizes = [8, 1, 8], strides = [1, 1, 1]} : vector<8x8x8xf32> to vector<8x1x8xf32>
    %87 = vector.shape_cast %86 : vector<8x1x8xf32> to vector<8x8xf32>
    %88 = vector.extract_strided_slice %37 {offsets = [0, 1, 0], sizes = [8, 1, 8], strides = [1, 1, 1]} : vector<8x8x8xf32> to vector<8x1x8xf32>
    %89 = vector.shape_cast %88 : vector<8x1x8xf32> to vector<8x8xf32>
    %90 = vector.extract_strided_slice %37 {offsets = [0, 2, 0], sizes = [8, 1, 8], strides = [1, 1, 1]} : vector<8x8x8xf32> to vector<8x1x8xf32>
    %91 = vector.shape_cast %90 : vector<8x1x8xf32> to vector<8x8xf32>
    %92 = vector.extract_strided_slice %37 {offsets = [0, 3, 0], sizes = [8, 1, 8], strides = [1, 1, 1]} : vector<8x8x8xf32> to vector<8x1x8xf32>
    %93 = vector.shape_cast %92 : vector<8x1x8xf32> to vector<8x8xf32>
    %94 = tpu.concatenate %87, %89, %91, %93 in 1 : vector<8x8xf32>, vector<8x8xf32>, vector<8x8xf32>, vector<8x8xf32> -> vector<8x32xf32>
    %95 = vector.extract_strided_slice %37 {offsets = [0, 4, 0], sizes = [8, 1, 8], strides = [1, 1, 1]} : vector<8x8x8xf32> to vector<8x1x8xf32>
    %96 = vector.shape_cast %95 : vector<8x1x8xf32> to vector<8x8xf32>
    %97 = vector.extract_strided_slice %37 {offsets = [0, 5, 0], sizes = [8, 1, 8], strides = [1, 1, 1]} : vector<8x8x8xf32> to vector<8x1x8xf32>
    %98 = vector.shape_cast %97 : vector<8x1x8xf32> to vector<8x8xf32>
    %99 = vector.extract_strided_slice %37 {offsets = [0, 6, 0], sizes = [8, 1, 8], strides = [1, 1, 1]} : vector<8x8x8xf32> to vector<8x1x8xf32>
    %100 = vector.shape_cast %99 : vector<8x1x8xf32> to vector<8x8xf32>
    %101 = vector.extract_strided_slice %37 {offsets = [0, 7, 0], sizes = [8, 1, 8], strides = [1, 1, 1]} : vector<8x8x8xf32> to vector<8x1x8xf32>
    %102 = vector.shape_cast %101 : vector<8x1x8xf32> to vector<8x8xf32>
    %103 = tpu.concatenate %96, %98, %100, %102 in 1 : vector<8x8xf32>, vector<8x8xf32>, vector<8x8xf32>, vector<8x8xf32> -> vector<8x32xf32>
    %104 = vector.extract_strided_slice %52 {offsets = [0, 0, 0], sizes = [8, 1, 8], strides = [1, 1, 1]} : vector<8x8x8xf32> to vector<8x1x8xf32>
    %105 = vector.shape_cast %104 : vector<8x1x8xf32> to vector<8x8xf32>
    %106 = vector.extract_strided_slice %52 {offsets = [0, 1, 0], sizes = [8, 1, 8], strides = [1, 1, 1]} : vector<8x8x8xf32> to vector<8x1x8xf32>
    %107 = vector.shape_cast %106 : vector<8x1x8xf32> to vector<8x8xf32>
    %108 = vector.extract_strided_slice %52 {offsets = [0, 2, 0], sizes = [8, 1, 8], strides = [1, 1, 1]} : vector<8x8x8xf32> to vector<8x1x8xf32>
    %109 = vector.shape_cast %108 : vector<8x1x8xf32> to vector<8x8xf32>
    %110 = vector.extract_strided_slice %52 {offsets = [0, 3, 0], sizes = [8, 1, 8], strides = [1, 1, 1]} : vector<8x8x8xf32> to vector<8x1x8xf32>
    %111 = vector.shape_cast %110 : vector<8x1x8xf32> to vector<8x8xf32>
    %112 = tpu.concatenate %105, %107, %109, %111 in 1 : vector<8x8xf32>, vector<8x8xf32>, vector<8x8xf32>, vector<8x8xf32> -> vector<8x32xf32>
    %113 = vector.extract_strided_slice %52 {offsets = [0, 4, 0], sizes = [8, 1, 8], strides = [1, 1, 1]} : vector<8x8x8xf32> to vector<8x1x8xf32>
    %114 = vector.shape_cast %113 : vector<8x1x8xf32> to vector<8x8xf32>
    %115 = vector.extract_strided_slice %52 {offsets = [0, 5, 0], sizes = [8, 1, 8], strides = [1, 1, 1]} : vector<8x8x8xf32> to vector<8x1x8xf32>
    %116 = vector.shape_cast %115 : vector<8x1x8xf32> to vector<8x8xf32>
    %117 = vector.extract_strided_slice %52 {offsets = [0, 6, 0], sizes = [8, 1, 8], strides = [1, 1, 1]} : vector<8x8x8xf32> to vector<8x1x8xf32>
    %118 = vector.shape_cast %117 : vector<8x1x8xf32> to vector<8x8xf32>
    %119 = vector.extract_strided_slice %52 {offsets = [0, 7, 0], sizes = [8, 1, 8], strides = [1, 1, 1]} : vector<8x8x8xf32> to vector<8x1x8xf32>
    %120 = vector.shape_cast %119 : vector<8x1x8xf32> to vector<8x8xf32>
    %121 = tpu.concatenate %114, %116, %118, %120 in 1 : vector<8x8xf32>, vector<8x8xf32>, vector<8x8xf32>, vector<8x8xf32> -> vector<8x32xf32>
    %122 = vector.extract_strided_slice %67 {offsets = [0, 0, 0], sizes = [8, 1, 8], strides = [1, 1, 1]} : vector<8x8x8xf32> to vector<8x1x8xf32>
    %123 = vector.shape_cast %122 : vector<8x1x8xf32> to vector<8x8xf32>
    %124 = vector.extract_strided_slice %67 {offsets = [0, 1, 0], sizes = [8, 1, 8], strides = [1, 1, 1]} : vector<8x8x8xf32> to vector<8x1x8xf32>
    %125 = vector.shape_cast %124 : vector<8x1x8xf32> to vector<8x8xf32>
    %126 = vector.extract_strided_slice %67 {offsets = [0, 2, 0], sizes = [8, 1, 8], strides = [1, 1, 1]} : vector<8x8x8xf32> to vector<8x1x8xf32>
    %127 = vector.shape_cast %126 : vector<8x1x8xf32> to vector<8x8xf32>
    %128 = vector.extract_strided_slice %67 {offsets = [0, 3, 0], sizes = [8, 1, 8], strides = [1, 1, 1]} : vector<8x8x8xf32> to vector<8x1x8xf32>
    %129 = vector.shape_cast %128 : vector<8x1x8xf32> to vector<8x8xf32>
    %130 = tpu.concatenate %123, %125, %127, %129 in 1 : vector<8x8xf32>, vector<8x8xf32>, vector<8x8xf32>, vector<8x8xf32> -> vector<8x32xf32>
    %131 = vector.extract_strided_slice %67 {offsets = [0, 4, 0], sizes = [8, 1, 8], strides = [1, 1, 1]} : vector<8x8x8xf32> to vector<8x1x8xf32>
    %132 = vector.shape_cast %131 : vector<8x1x8xf32> to vector<8x8xf32>
    %133 = vector.extract_strided_slice %67 {offsets = [0, 5, 0], sizes = [8, 1, 8], strides = [1, 1, 1]} : vector<8x8x8xf32> to vector<8x1x8xf32>
    %134 = vector.shape_cast %133 : vector<8x1x8xf32> to vector<8x8xf32>
    %135 = vector.extract_strided_slice %67 {offsets = [0, 6, 0], sizes = [8, 1, 8], strides = [1, 1, 1]} : vector<8x8x8xf32> to vector<8x1x8xf32>
    %136 = vector.shape_cast %135 : vector<8x1x8xf32> to vector<8x8xf32>
    %137 = vector.extract_strided_slice %67 {offsets = [0, 7, 0], sizes = [8, 1, 8], strides = [1, 1, 1]} : vector<8x8x8xf32> to vector<8x1x8xf32>
    %138 = vector.shape_cast %137 : vector<8x1x8xf32> to vector<8x8xf32>
    %139 = tpu.concatenate %132, %134, %136, %138 in 1 : vector<8x8xf32>, vector<8x8xf32>, vector<8x8xf32>, vector<8x8xf32> -> vector<8x32xf32>
    %140 = tpu.concatenate %76, %85, %94, %103, %112, %121, %130, %139 in 0 : vector<8x32xf32>, vector<8x32xf32>, vector<8x32xf32>, vector<8x32xf32>, vector<8x32xf32>, vector<8x32xf32>, vector<8x32xf32>, vector<8x32xf32> -> vector<64x32xf32>
    %141 = arith.truncf %140 : vector<64x32xf32> to vector<64x32xbf16>
    %c0_21 = arith.constant 0 : index
    %c0_22 = arith.constant 0 : index
    %142 = vector.load %arg4[%c0_21, %c0_22] : memref<32x32xbf16, #tpu.memory_space<vmem>>, vector<32x32xbf16>
    %cst_23 = arith.constant dense<0.000000e+00> : vector<64x32xf32>
    %143 = tpu.matmul %141, %142, %cst_23 {dimension_numbers = #tpu.dot_dimension_numbers<[1], [0], [0], [1], [0, 0, 1, 1], [], []>} : vector<64x32xbf16>, vector<32x32xbf16>, vector<64x32xf32> -> vector<64x32xf32>
    %c0_24 = arith.constant 0 : index
    %c0_25 = arith.constant 0 : index
    %144 = vector.load %arg5[%c0_24, %c0_25] : memref<1x32xf32, #tpu.memory_space<vmem>>, vector<1x32xf32>
    %145 = vector.broadcast %144 : vector<1x32xf32> to vector<64x32xf32>
    %146 = arith.addf %143, %145 : vector<64x32xf32>
    %147 = vector.extract_strided_slice %146 {offsets = [0, 0], sizes = [8, 32], strides = [1, 1]} : vector<64x32xf32> to vector<8x32xf32>
    %148 = vector.extract_strided_slice %146 {offsets = [8, 0], sizes = [8, 32], strides = [1, 1]} : vector<64x32xf32> to vector<8x32xf32>
    %149 = vector.extract_strided_slice %146 {offsets = [16, 0], sizes = [8, 32], strides = [1, 1]} : vector<64x32xf32> to vector<8x32xf32>
    %150 = vector.extract_strided_slice %146 {offsets = [24, 0], sizes = [8, 32], strides = [1, 1]} : vector<64x32xf32> to vector<8x32xf32>
    %151 = vector.extract_strided_slice %146 {offsets = [32, 0], sizes = [8, 32], strides = [1, 1]} : vector<64x32xf32> to vector<8x32xf32>
    %152 = vector.extract_strided_slice %146 {offsets = [40, 0], sizes = [8, 32], strides = [1, 1]} : vector<64x32xf32> to vector<8x32xf32>
    %153 = vector.extract_strided_slice %146 {offsets = [48, 0], sizes = [8, 32], strides = [1, 1]} : vector<64x32xf32> to vector<8x32xf32>
    %154 = vector.extract_strided_slice %146 {offsets = [56, 0], sizes = [8, 32], strides = [1, 1]} : vector<64x32xf32> to vector<8x32xf32>
    %155 = tpu.concatenate %147, %148, %149, %150, %151, %152, %153, %154 in 1 : vector<8x32xf32>, vector<8x32xf32>, vector<8x32xf32>, vector<8x32xf32>, vector<8x32xf32>, vector<8x32xf32>, vector<8x32xf32>, vector<8x32xf32> -> vector<8x256xf32>
    %c0_26 = arith.constant 0 : index
    %c0_27 = arith.constant 0 : index
    %156 = vector.load %arg6[%c0_26, %c0_27] : memref<8x256xf32, #tpu.memory_space<vmem>>, vector<8x256xf32>
    tpu.vector_store %arg6[%c0_26, %c0_27], %155 {strides = array<i32>} : memref<8x256xf32, #tpu.memory_space<vmem>>, vector<8x256xf32>,
    return
  }
  func.func @transform_0(%arg0: i32) -> (i32, i32) {
    %c0_i32 = arith.constant 0 : i32
    %c0_i32_0 = arith.constant 0 : i32
    return %arg0, %c0_i32 : i32, i32
  }
  func.func @transform_1(%arg0: i32) -> (i32, i32) {
    %c0_i32 = arith.constant 0 : i32
    %c0_i32_0 = arith.constant 0 : i32
    %c0_i32_1 = arith.constant 0 : i32
    return %c0_i32, %c0_i32_0 : i32, i32
  }
  func.func @transform_2(%arg0: i32) -> (i32, i32) {
    %c0_i32 = arith.constant 0 : i32
    %c0_i32_0 = arith.constant 0 : i32
    %c0_i32_1 = arith.constant 0 : i32
    return %c0_i32, %c0_i32_0 : i32, i32
  }
  func.func @transform_3(%arg0: i32) -> (i32, i32) {
    %c0_i32 = arith.constant 0 : i32
    %c0_i32_0 = arith.constant 0 : i32
    %c0_i32_1 = arith.constant 0 : i32
    return %c0_i32, %c0_i32_0 : i32, i32
  }
  func.func @transform_4(%arg0: i32) -> (i32, i32) {
    %c0_i32 = arith.constant 0 : i32
    %c0_i32_0 = arith.constant 0 : i32
    %c0_i32_1 = arith.constant 0 : i32
    return %c0_i32, %c0_i32_0 : i32, i32
  }
  func.func @transform_5(%arg0: i32) -> (i32, i32) {
    %c0_i32 = arith.constant 0 : i32
    %c0_i32_0 = arith.constant 0 : i32
    return %arg0, %c0_i32 : i32, i32
  }
}

</mosaic_0001>

<llo_original>
// kernel: window_attention.1
$region0: #{window_attention.1}
  #allocation0 [shape = 'u32[]', space=smem, size = 0x4, offset = 0x4, fixed_abs, tag = 'smem constant byte address 0x4 - core index']
  #allocation1 [shape = 'u32[144,128]{1,0:T(1,128)}', space=vmem, size = 0x12000, scoped, tag = 'internal scratch']
  %s0 = inlined_call_operand.hbm [shape: f32[128,32], index: 0, kind: input, shape index: {}]
  %s1 = inlined_call_operand.vmem [shape: bf16[32,96], index: 1, kind: input, shape index: {}]
  %s2 = inlined_call_operand.vmem [shape: f32[1,96], index: 2, kind: input, shape index: {}]
  %s3 = inlined_call_operand.vmem [shape: bf16[32,32], index: 3, kind: input, shape index: {}]
  %s4 = inlined_call_operand.vmem [shape: f32[1,32], index: 4, kind: input, shape index: {}]
  %s5 = inlined_call_operand.vmem [shape: f32[16,256], index: 5, kind: output, shape index: {}]
  %s6 = sld [smem:[#allocation0]]
  $region57: #{window_attention.1} parent=0
    _
  %s8 = ssub.s32 1, %s6
  %s9 = scalar_select 0, %s8, %s6
  $region1: #{window_attention.1} parent=0
    #allocation2 [shape = 'u8[65536]{0}', space=vmem, size = 0x10000, scoped, tag = 'input window, operand 0']
    #allocation3 [shape = 's32[2]{0}', space=sflag, size = 0x8, scoped, tag = 'scoped memory for window_attention.1']
    %10 = vsyncpa [#allocation3], 0
    %s11 = scalar_lea.sflag [#allocation3], 1
    %12 = vsyncpa %s11, 0
    loop: start=0, step=1, limit=4
    $region2: #{window_attention.1} parent=1 // loop_pre_header
      _
    $region3: #{window_attention.1} parent=1 // loop_header
      %s14 = sphi 0, %s18
      %p15 = scmp.ge.s32.totalorder %s14, 4
      %s24 = sphi 0, %s26
      %s27 = sphi 0, %s24
      %s28 = sphi 0, %s27
      %s44 = sphi 0, %s28
      %s48 = sphi 0, %s48
      %s50 = sphi 0, %s48
      %s51 = sphi 0, %s50
      %s65 = sphi 0, %s51
      %s69 = sphi 0, %s69
      %s71 = sphi 0, %s69
      %s72 = sphi 0, %s71
      %s86 = sphi 0, %s72
      %s90 = sphi 0, %s90
      %s92 = sphi 0, %s90
      %s93 = sphi 0, %s92
      %s107 = sphi 0, %s93
      %s111 = sphi 0, %s111
      %s113 = sphi 0, %s111
      %s114 = sphi 0, %s113
      %s128 = sphi 0, %s114
      %s134 = sphi 0, %s136
      %s137 = sphi 0, %s134
      %s138 = sphi 0, %s137
      %s154 = sphi 0, %s138
    $region4: #{window_attention.1} parent=1 // loop_header_branch
      %17 = sbr.rel (%p15) target = $region8
    $region5: #{window_attention.1} parent=1 // loop_body
      %s19 = ssub.s32 %s14, 1
      %s20 = ssub.s32 %s14, 2
      %s21 = sadd.s32 %s14, 1
      %s22 = ssub.s32 %s14, %s21
      %p23 = scmp.eq.s32.totalorder %s22, 0
      %s25 = sadd.s32 %s24, 1
      %s26 = scalar_select %p23, %s24, %s25
      %p29 = pneg %p23
      %p30 = scmp.eq.s32.totalorder %s14, 1
      %p31 = por %p29, %p30
      %p32 = scmp.ne.s32.totalorder %s24, %s27
      %p33 = scmp.eq.s32.totalorder %s14, 0
      %p34 = por %p32, %p33
      %p35 = scmp.ne.s32.totalorder %s24, %s27
      %p36 = scmp.eq.s32.totalorder %s19, 1
      %p37 = por %p35, %p36
      %p38 = scmp.ne.s32.totalorder %s27, %s28
      %p39 = scmp.eq.s32.totalorder %s19, 0
      %p40 = por %p38, %p39
      %p41 = scmp.ne.s32.totalorder %s27, %s28
      %p42 = scmp.eq.s32.totalorder %s20, 1
      %p43 = por %p41, %p42
      %p45 = scmp.ne.s32.totalorder %s28, %s44
      %p46 = scmp.eq.s32.totalorder %s20, 0
      %p47 = por %p45, %p46
      %s49 = sadd.s32 %s48, 1
      %p52 = scmp.eq.s32.totalorder %s14, 1
      %p53 = scmp.ne.s32.totalorder %s48, %s50
      %p54 = scmp.eq.s32.totalorder %s14, 0
      %p55 = por %p53, %p54
      %p56 = scmp.ne.s32.totalorder %s48, %s50
      %p57 = scmp.eq.s32.totalorder %s19, 1
      %p58 = por %p56, %p57
      %p59 = scmp.ne.s32.totalorder %s50, %s51
      %p60 = scmp.eq.s32.totalorder %s19, 0
      %p61 = por %p59, %p60
      %p62 = scmp.ne.s32.totalorder %s50, %s51
      %p63 = scmp.eq.s32.totalorder %s20, 1
      %p64 = por %p62, %p63
      %p66 = scmp.ne.s32.totalorder %s51, %s65
      %p67 = scmp.eq.s32.totalorder %s20, 0
      %p68 = por %p66, %p67
      %s70 = sadd.s32 %s69, 1
      %p73 = scmp.eq.s32.totalorder %s14, 1
      %p74 = scmp.ne.s32.totalorder %s69, %s71
      %p75 = scmp.eq.s32.totalorder %s14, 0
      %p76 = por %p74, %p75
      %p77 = scmp.ne.s32.totalorder %s69, %s71
      %p78 = scmp.eq.s32.totalorder %s19, 1
      %p79 = por %p77, %p78
      %p80 = scmp.ne.s32.totalorder %s71, %s72
      %p81 = scmp.eq.s32.totalorder %s19, 0
      %p82 = por %p80, %p81
      %p83 = scmp.ne.s32.totalorder %s71, %s72
      %p84 = scmp.eq.s32.totalorder %s20, 1
      %p85 = por %p83, %p84
      %p87 = scmp.ne.s32.totalorder %s72, %s86
      %p88 = scmp.eq.s32.totalorder %s20, 0
      %p89 = por %p87, %p88
      %s91 = sadd.s32 %s90, 1
      %p94 = scmp.eq.s32.totalorder %s14, 1
      %p95 = scmp.ne.s32.totalorder %s90, %s92
      %p96 = scmp.eq.s32.totalorder %s14, 0
      %p97 = por %p95, %p96
      %p98 = scmp.ne.s32.totalorder %s90, %s92
      %p99 = scmp.eq.s32.totalorder %s19, 1
      %p100 = por %p98, %p99
      %p101 = scmp.ne.s32.totalorder %s92, %s93
      %p102 = scmp.eq.s32.totalorder %s19, 0
      %p103 = por %p101, %p102
      %p104 = scmp.ne.s32.totalorder %s92, %s93
      %p105 = scmp.eq.s32.totalorder %s20, 1
      %p106 = por %p104, %p105
      %p108 = scmp.ne.s32.totalorder %s93, %s107
      %p109 = scmp.eq.s32.totalorder %s20, 0
      %p110 = por %p108, %p109
      %s112 = sadd.s32 %s111, 1
      %p115 = scmp.eq.s32.totalorder %s14, 1
      %p116 = scmp.ne.s32.totalorder %s111, %s113
      %p117 = scmp.eq.s32.totalorder %s14, 0
      %p118 = por %p116, %p117
      %p119 = scmp.ne.s32.totalorder %s111, %s113
      %p120 = scmp.eq.s32.totalorder %s19, 1
      %p121 = por %p119, %p120
      %p122 = scmp.ne.s32.totalorder %s113, %s114
      %p123 = scmp.eq.s32.totalorder %s19, 0
      %p124 = por %p122, %p123
      %p125 = scmp.ne.s32.totalorder %s113, %s114
      %p126 = scmp.eq.s32.totalorder %s20, 1
      %p127 = por %p125, %p126
      %p129 = scmp.ne.s32.totalorder %s114, %s128
      %p130 = scmp.eq.s32.totalorder %s20, 0
      %p131 = por %p129, %p130
      %s132 = ssub.s32 %s14, %s21
      %p133 = scmp.eq.s32.totalorder %s132, 0
      %s135 = sadd.s32 %s134, 1
      %s136 = scalar_select %p133, %s134, %s135
      %p139 = pneg %p133
      %p140 = scmp.eq.s32.totalorder %s14, 1
      %p141 = por %p139, %p140
      %p142 = scmp.ne.s32.totalorder %s134, %s137
      %p143 = scmp.eq.s32.totalorder %s14, 0
      %p144 = por %p142, %p143
      %p145 = scmp.ne.s32.totalorder %s134, %s137
      %p146 = scmp.eq.s32.totalorder %s19, 1
      %p147 = por %p145, %p146
      %p148 = scmp.ne.s32.totalorder %s137, %s138
      %p149 = scmp.eq.s32.totalorder %s19, 0
      %p150 = por %p148, %p149
      %p151 = scmp.ne.s32.totalorder %s137, %s138
      %p152 = scmp.eq.s32.totalorder %s20, 1
      %p153 = por %p151, %p152
      %p155 = scmp.ne.s32.totalorder %s138, %s154
      %p156 = scmp.eq.s32.totalorder %s20, 0
      %p157 = por %p155, %p156
      %p158 = scmp.le.s32.totalorder 1, %s14
      %p159 = scmp.lt.s32.totalorder %s14, 3
      %p160 = pnand %p158, %p159
      %p161 = pneg %p160
      // Predicated region
      $region9: #{window_attention.1} parent=5 // pred_check
        _
      $region10: #{window_attention.1} parent=5 // pred_check_branch
        %163 = sbr.rel (%p160) target = $region12
      $region11: #{window_attention.1} parent=5 // pred_region
        %s164 = ssub.s32 %s14, 1
        // Predicated region
        $region13: #{window_attention.1} parent=11 // pred_check
          %p165 = pneg %p61
        $region14: #{window_attention.1} parent=11 // pred_check_branch
          %167 = sbr.rel (%p165) target = $region16
        $region15: #{window_attention.1} parent=11 // pred_region
          _
        $region16: #{window_attention.1} parent=11 // pred_fallthru
          _
        // Predicated region
        $region17: #{window_attention.1} parent=11 // pred_check
          %p168 = pneg %p82
        $region18: #{window_attention.1} parent=11 // pred_check_branch
          %170 = sbr.rel (%p168) target = $region20
        $region19: #{window_attention.1} parent=11 // pred_region
          _
        $region20: #{window_attention.1} parent=11 // pred_fallthru
          _
        // Predicated region
        $region21: #{window_attention.1} parent=11 // pred_check
          %p171 = pneg %p103
        $region22: #{window_attention.1} parent=11 // pred_check_branch
          %173 = sbr.rel (%p171) target = $region24
        $region23: #{window_attention.1} parent=11 // pred_region
          _
        $region24: #{window_attention.1} parent=11 // pred_fallthru
          _
        // Predicated region
        $region25: #{window_attention.1} parent=11 // pred_check
          %p174 = pneg %p124
        $region26: #{window_attention.1} parent=11 // pred_check_branch
          %176 = sbr.rel (%p174) target = $region28
        $region27: #{window_attention.1} parent=11 // pred_region
          _
        $region28: #{window_attention.1} parent=11 // pred_fallthru
          _
      $region12: #{window_attention.1} parent=5 // pred_fallthru
        _
      %p177 = scmp.lt.s32.totalorder %s14, 2
      // Predicated region
      $region29: #{window_attention.1} parent=5 // pred_check
        %p178 = pneg %p177
      $region30: #{window_attention.1} parent=5 // pred_check_branch
        %180 = sbr.rel (%p178) target = $region32
      $region31: #{window_attention.1} parent=5 // pred_region
        // Predicated region
        $region33: #{window_attention.1} parent=31 // pred_check
          %p181 = pneg %p34
        $region34: #{window_attention.1} parent=31 // pred_check_branch
          %183 = sbr.rel (%p181) target = $region36
        $region35: #{window_attention.1} parent=31 // pred_region
          %s184 = sand.u32 %s24, 1
          %s185 = scalar_lea.sflag [#allocation3], %s184
          %s186 = sand.u32 %s24, 1
          %s187 = smul.addr %s186, 64
          %s188 = scalar_lea.vmem [#allocation2], %s187
          %s189 = smul.u32 8, %s14
          %s191 = ssub.s32 1024, 1024
          %192 = vsyncadd %s185, %s191
          %s193 = smul.addr %s189, 128
          %s194 = scalar_lea.hbm %s0, %s193
          %s195 = sshll.u32 %s188, 4
          %s196 = int_to_ptr.vmem [resolvable:$true] %s195
          %201 = dma.hbm_to_vmem [thread:$0]  %s194, 1024, %s196, %s185, 128, 128, 8
        $region36: #{window_attention.1} parent=31 // pred_fallthru
          _
      $region32: #{window_attention.1} parent=5 // pred_fallthru
        _
      %p202 = scmp.le.s32.totalorder 1, %s14
      %p203 = scmp.lt.s32.totalorder %s14, 3
      %p204 = pnand %p202, %p203
      %p205 = pneg %p204
      // Predicated region
      $region37: #{window_attention.1} parent=5 // pred_check
        _
      $region38: #{window_attention.1} parent=5 // pred_check_branch
        %207 = sbr.rel (%p204) target = $region40
      $region39: #{window_attention.1} parent=5 // pred_region
        %s208 = ssub.s32 %s14, 1
        %s209 = sand.u32 %s27, 1
        %s210 = scalar_lea.sflag [#allocation3], %s209
        %s211 = sand.u32 %s27, 1
        %s212 = smul.addr %s211, 64
        %s213 = scalar_lea.vmem [#allocation2], %s212
        // Predicated region
        $region41: #{window_attention.1} parent=39 // pred_check
          %p214 = pneg %p40
        $region42: #{window_attention.1} parent=39 // pred_check_branch
          %216 = sbr.rel (%p214) target = $region44
        $region43: #{window_attention.1} parent=39 // pred_region
          %217 = dma.done %s210, 1024
        $region44: #{window_attention.1} parent=39 // pred_fallthru
          _
        %s218 = sand.u32 %s27, 1
        %s219 = scalar_lea.sflag [#allocation3], %s218
        %s220 = sand.u32 %s27, 1
        %s221 = smul.addr %s220, 64
        %s222 = scalar_lea.vmem [#allocation2], %s221
        %p223 = pneg %p40
        %p224 = pneg %p37
        %p225 = pneg %p61
        %p226 = pneg %p58
        %p227 = pneg %p82
        %p228 = pneg %p79
        %p229 = pneg %p103
        %p230 = pneg %p100
        %p231 = pneg %p124
        %p232 = pneg %p121
        %p233 = pneg %p150
        %p234 = pneg %p147
        %p235 = scmp.lt.s32.totalorder %s19, 1
        %s236 = scalar_select %p235, %s19, 1
        %s237 = smul.addr %s236, 2
        %s238 = smul.addr %s237, 8
        %s239 = scalar_lea.vmem %s5, %s238
        %s240 = smul.u32 8, %s19
        %p241 = scmp.lt.s32.totalorder %s19, 1
        %s242 = scalar_select %p241, %s19, 1
        %s243 = smul.addr %s242, 2
        %s244 = smul.addr %s243, 8
        %s245 = scalar_lea.vmem %s5, %s244
        %v247 = vld [vmem:[%s213] sm:$0xff]
        %v248 = vld [vmem:[%s213 + $0x8] sm:$0xff]
        %v249 = vld [vmem:[%s213 + $0x10] sm:$0xff]
        %v250 = vld [vmem:[%s213 + $0x18] sm:$0xff]
        %v251 = vld [vmem:[%s213 + $0x20] sm:$0xff]
        %v252 = vld [vmem:[%s213 + $0x28] sm:$0xff]
        %v253 = vld [vmem:[%s213 + $0x30] sm:$0xff]
        %v254 = vld [vmem:[%s213 + $0x38] sm:$0xff]
        %v255 = vpack.c.bf16 %v248, %v247
        %v256 = vpack.c.bf16 %v250, %v249
        %v257 = vpack.c.bf16 %v252, %v251
        %v258 = vpack.c.bf16 %v254, %v253
        %v259 = vld [vmem:[%s1] sm:$0xf]
        %v260 = vld [vmem:[%s1 + $0x4] sm:$0xf]
        %v261 = vld [vmem:[%s1 + $0x8] sm:$0xf]
        %v262 = vld [vmem:[%s1 + $0xc] sm:$0xf]
        %v263 = vld [vmem:[%s2] sm:$0x1]
        %v265 = vlaneseq
        %v266 = vshrl.u32 %v265, 7
        %v267 = vsub.s32 0, %v266
        %v268 = vrot.slane %v263, %v267
        %v274 = vunpack.c.l.b16 %v259
        %v275 = vunpack.c.l.b16 %v260
        %v276 = vunpack.c.l.b16 %v261
        %v277 = vunpack.c.l.b16 %v262
        %v278 = vpack.c.b16 %v275, %v274
        %v279 = vpack.c.b16 %v277, %v276
        %vm282 = vcmask 261120
        %v284 = vsel %vm282, %v255, 0
        %v287 = vsel %vm282, %v256, 0
        %v290 = vsel %vm282, %v257, 0
        %v293 = vsel %vm282, %v258, 0
        %295 = vmatprep.subr.bf16.mxu0 0
        %296 = vmatpush1.bf16.msra.mxu0 %v278
        %297 = vmatprep.subr.bf16.mxu0 0
        %298 = vmatpush1.bf16.msra.mxu0 %v279
        %299 = vmatprep.subr.bf16.mxu0 0
        %300 = vmatpush1.bf16.msra.mxu0 0
        %301 = vmatprep.subr.bf16.mxu0 0
        %302 = vmatpush1.bf16.msra.mxu0 0
        %303 = vmatprep.subr.bf16.mxu0 0
        %304 = vmatpush1.bf16.msra.mxu0 0
        %305 = vmatprep.subr.bf16.mxu0 0
        %306 = vmatpush1.bf16.msra.mxu0 0
        %307 = vmatprep.subr.bf16.mxu0 0
        %308 = vmatpush1.bf16.msra.mxu0 0
        %309 = vmatprep.subr.bf16.mxu0 0
        %310 = vmatpush1.bf16.msra.mxu0 0
        %311 = vmatprep.subr.bf16.mxu0 0
        %312 = vmatpush1.bf16.msra.mxu0 0
        %313 = vmatprep.subr.bf16.mxu0 0
        %314 = vmatpush1.bf16.msra.mxu0 0
        %315 = vmatprep.subr.bf16.mxu0 0
        %316 = vmatpush1.bf16.msra.mxu0 0
        %317 = vmatprep.subr.bf16.mxu0 0
        %318 = vmatpush1.bf16.msra.mxu0 0
        %319 = vmatprep.subr.bf16.mxu0 0
        %320 = vmatpush1.bf16.msra.mxu0 0
        %321 = vmatprep.subr.bf16.mxu0 0
        %322 = vmatpush1.bf16.msra.mxu0 0
        %323 = vmatprep.subr.bf16.mxu0 0
        %324 = vmatpush1.bf16.msra.mxu0 0
        %325 = vmatprep.subr.bf16.mxu0 0
        %326 = vmatpush1.bf16.msra.mxu0 0
        %327 = vmatprep.mubr.bf16.mxu0 0
        %328 = vmatmul.mubr.bf16.gmra.mrb[0].mxu0 %v284
        %v329 = vpop.f32.mrb[0].mxu0
        %v330 = vadd.f32 %v268, %v329
        %v331 = vpop.f32.mrb[0].mxu0
        %v332 = vpop.f32.mrb[0].mxu0
        %v333 = vadd.f32 %v268, %v332
        %v334 = vpop.f32.mrb[0].mxu0
        %335 = vmatprep.mubr.bf16.mxu0 0
        %336 = vmatmul.mubr.bf16.gmra.mrb[0].mxu0 %v287
        %v337 = vpop.f32.mrb[0].mxu0
        %v338 = vadd.f32 %v268, %v337
        %v339 = vpop.f32.mrb[0].mxu0
        %v340 = vpop.f32.mrb[0].mxu0
        %v341 = vadd.f32 %v268, %v340
        %v342 = vpop.f32.mrb[0].mxu0
        %343 = vmatprep.mubr.bf16.mxu0 0
        %344 = vmatmul.mubr.bf16.gmra.mrb[0].mxu0 %v290
        %v345 = vpop.f32.mrb[0].mxu0
        %v346 = vadd.f32 %v268, %v345
        %v347 = vpop.f32.mrb[0].mxu0
        %v348 = vpop.f32.mrb[0].mxu0
        %v349 = vadd.f32 %v268, %v348
        %v350 = vpop.f32.mrb[0].mxu0
        %351 = vmatprep.mubr.bf16.mxu0 0
        %352 = vmatmul.mubr.bf16.gmra.mrb[0].mxu0 %v293
        %v353 = vpop.f32.mrb[0].mxu0
        %v354 = vadd.f32 %v268, %v353
        %v355 = vpop.f32.mrb[0].mxu0
        %v356 = vpop.f32.mrb[0].mxu0
        %v357 = vadd.f32 %v268, %v356
        %v358 = vpop.f32.mrb[0].mxu0
        %359 = vdwg.mxu0
        %361 = vrot.lane.b32.xlu0 %v330, 96
        %v362 = vpop.permute.xlu0 %361
        %vm363 = vcmask 64512
        %v364 = vsel %vm363, %v330, 0
        %v366 = vsel %vm363, %v362, 0
        %368 = vmatprep.subr.mxu0 0.0
        %369 = vmatpush1.xpose.msra.mxu0 %v366
        %370 = vmatprep.subr.mxu0 0.0
        %371 = vmatpush1.xpose.msra.mxu0 0.0
        %372 = vmatprep.subr.mxu0 0.0
        %373 = vmatpush1.xpose.msra.mxu0 0.0
        %374 = vmatprep.subr.mxu0 0.0
        %375 = vmatpush1.xpose.msra.mxu0 0.0
        %376 = vmatprep.subr.mxu0 0.0
        %377 = vmatpush1.xpose.msra.mxu0 0.0
        %378 = vmatprep.subr.mxu0 0.0
        %379 = vmatpush1.xpose.msra.mxu0 0.0
        %380 = vmatprep.subr.mxu0 0.0
        %381 = vmatpush1.xpose.msra.mxu0 0.0
        %382 = vmatprep.subr.mxu0 0.0
        %383 = vmatpush1.xpose.msra.mxu0 0.0
        %384 = vmatprep.subr.mxu0 0.0
        %385 = vmatpush1.xpose.msra.mxu0 0.0
        %386 = vmatprep.subr.mxu0 0.0
        %387 = vmatpush1.xpose.msra.mxu0 0.0
        %388 = vmatprep.subr.mxu0 0.0
        %389 = vmatpush1.xpose.msra.mxu0 0.0
        %390 = vmatprep.subr.mxu0 0.0
        %391 = vmatpush1.xpose.msra.mxu0 0.0
        %392 = vmatprep.subr.mxu0 0.0
        %393 = vmatpush1.xpose.msra.mxu0 0.0
        %394 = vmatprep.subr.mxu0 0.0
        %395 = vmatpush1.xpose.msra.mxu0 0.0
        %396 = vmatprep.subr.mxu0 0.0
        %397 = vmatpush1.xpose.msra.mxu0 0.0
        %398 = vmatprep.subr.mxu0 0.0
        %399 = vmatpush1.xpose.msra.mxu0 0.0
        %400 = vmatprep.subr.mxu0 0.0
        %401 = vmatpush1.xpose.msra.mxu0 0.0
        %402 = vmatprep.subr.mxu0 0.0
        %403 = vmatpush1.xpose.msra.mxu0 0.0
        %404 = vmatprep.subr.mxu0 0.0
        %405 = vmatpush1.xpose.msra.mxu0 0.0
        %406 = vmatprep.subr.mxu0 0.0
        %407 = vmatpush1.xpose.msra.mxu0 0.0
        %408 = vmatprep.subr.mxu0 0.0
        %409 = vmatpush1.xpose.msra.mxu0 0.0
        %410 = vmatprep.subr.mxu0 0.0
        %411 = vmatpush1.xpose.msra.mxu0 0.0
        %412 = vmatprep.subr.mxu0 0.0
        %413 = vmatpush1.xpose.msra.mxu0 0.0
        %414 = vmatprep.subr.mxu0 0.0
        %415 = vmatpush1.xpose.msra.mxu0 0.0
        %416 = vmatprep.subr.mxu0 0.0
        %417 = vmatpush1.xpose.msra.mxu0 0.0
        %418 = vmatprep.subr.mxu0 0.0
        %419 = vmatpush1.xpose.msra.mxu0 0.0
        %420 = vmatprep.subr.mxu0 0.0
        %421 = vmatpush1.xpose.msra.mxu0 0.0
        %422 = vmatprep.subr.mxu0 0.0
        %423 = vmatpush1.xpose.msra.mxu0 0.0
        %424 = vmatprep.subr.mxu0 0.0
        %425 = vmatpush1.xpose.msra.mxu0 0.0
        %426 = vmatprep.subr.mxu0 0.0
        %427 = vmatpush1.xpose.msra.mxu0 0.0
        %428 = vmatprep.subr.mxu0 0.0
        %429 = vmatpush1.xpose.msra.mxu0 0.0
        %430 = vmatprep.subr.mxu0 0.0
        %431 = vmatpush1.xpose.msra.mxu0 0.0
        %432 = vmatprep.mubr.f32.mxu0 0.0
        %433 = vmatmul.mubr.f32.gmra.mrb[0].mxu0 %v364
        %v434 = vpop.f32.mrb[0].mxu0
        %v435 = vadd.f32 0.0, %v434
        %v436 = vpop.f32.mrb[0].mxu0
        %437 = vdwg.mxu0
        %439 = vrot.lane.b32.xlu0 %v333, 96
        %v440 = vpop.permute.xlu0 %439
        %v441 = vsel %vm363, %v333, 0
        %v443 = vsel %vm363, %v440, 0
        %445 = vmatprep.subr.mxu0 0.0
        %446 = vmatpush1.xpose.msra.mxu0 %v443
        %447 = vmatprep.subr.mxu0 0.0
        %448 = vmatpush1.xpose.msra.mxu0 0.0
        %449 = vmatprep.subr.mxu0 0.0
        %450 = vmatpush1.xpose.msra.mxu0 0.0
        %451 = vmatprep.subr.mxu0 0.0
        %452 = vmatpush1.xpose.msra.mxu0 0.0
        %453 = vmatprep.subr.mxu0 0.0
        %454 = vmatpush1.xpose.msra.mxu0 0.0
        %455 = vmatprep.subr.mxu0 0.0
        %456 = vmatpush1.xpose.msra.mxu0 0.0
        %457 = vmatprep.subr.mxu0 0.0
        %458 = vmatpush1.xpose.msra.mxu0 0.0
        %459 = vmatprep.subr.mxu0 0.0
        %460 = vmatpush1.xpose.msra.mxu0 0.0
        %461 = vmatprep.subr.mxu0 0.0
        %462 = vmatpush1.xpose.msra.mxu0 0.0
        %463 = vmatprep.subr.mxu0 0.0
        %464 = vmatpush1.xpose.msra.mxu0 0.0
        %465 = vmatprep.subr.mxu0 0.0
        %466 = vmatpush1.xpose.msra.mxu0 0.0
        %467 = vmatprep.subr.mxu0 0.0
        %468 = vmatpush1.xpose.msra.mxu0 0.0
        %469 = vmatprep.subr.mxu0 0.0
        %470 = vmatpush1.xpose.msra.mxu0 0.0
        %471 = vmatprep.subr.mxu0 0.0
        %472 = vmatpush1.xpose.msra.mxu0 0.0
        %473 = vmatprep.subr.mxu0 0.0
        %474 = vmatpush1.xpose.msra.mxu0 0.0
        %475 = vmatprep.subr.mxu0 0.0
        %476 = vmatpush1.xpose.msra.mxu0 0.0
        %477 = vmatprep.subr.mxu0 0.0
        %478 = vmatpush1.xpose.msra.mxu0 0.0
        %479 = vmatprep.subr.mxu0 0.0
        %480 = vmatpush1.xpose.msra.mxu0 0.0
        %481 = vmatprep.subr.mxu0 0.0
        %482 = vmatpush1.xpose.msra.mxu0 0.0
        %483 = vmatprep.subr.mxu0 0.0
        %484 = vmatpush1.xpose.msra.mxu0 0.0
        %485 = vmatprep.subr.mxu0 0.0
        %486 = vmatpush1.xpose.msra.mxu0 0.0
        %487 = vmatprep.subr.mxu0 0.0
        %488 = vmatpush1.xpose.msra.mxu0 0.0
        %489 = vmatprep.subr.mxu0 0.0
        %490 = vmatpush1.xpose.msra.mxu0 0.0
        %491 = vmatprep.subr.mxu0 0.0
        %492 = vmatpush1.xpose.msra.mxu0 0.0
        %493 = vmatprep.subr.mxu0 0.0
        %494 = vmatpush1.xpose.msra.mxu0 0.0
        %495 = vmatprep.subr.mxu0 0.0
        %496 = vmatpush1.xpose.msra.mxu0 0.0
        %497 = vmatprep.subr.mxu0 0.0
        %498 = vmatpush1.xpose.msra.mxu0 0.0
        %499 = vmatprep.subr.mxu0 0.0
        %500 = vmatpush1.xpose.msra.mxu0 0.0
        %501 = vmatprep.subr.mxu0 0.0
        %502 = vmatpush1.xpose.msra.mxu0 0.0
        %503 = vmatprep.subr.mxu0 0.0
        %504 = vmatpush1.xpose.msra.mxu0 0.0
        %505 = vmatprep.subr.mxu0 0.0
        %506 = vmatpush1.xpose.msra.mxu0 0.0
        %507 = vmatprep.subr.mxu0 0.0
        %508 = vmatpush1.xpose.msra.mxu0 0.0
        %509 = vmatprep.mubr.f32.mxu0 0.0
        %510 = vmatmul.mubr.f32.gmra.mrb[0].mxu0 %v441
        %v511 = vpop.f32.mrb[0].mxu0
        %v512 = vadd.f32 0.0, %v511
        %v513 = vpop.f32.mrb[0].mxu0
        %514 = vdwg.mxu0
        %516 = vrot.lane.b32.xlu0 %v338, 96
        %v517 = vpop.permute.xlu0 %516
        %v518 = vsel %vm363, %v338, 0
        %v520 = vsel %vm363, %v517, 0
        %522 = vmatprep.subr.mxu0 0.0
        %523 = vmatpush1.xpose.msra.mxu0 %v520
        %524 = vmatprep.subr.mxu0 0.0
        %525 = vmatpush1.xpose.msra.mxu0 0.0
        %526 = vmatprep.subr.mxu0 0.0
        %527 = vmatpush1.xpose.msra.mxu0 0.0
        %528 = vmatprep.subr.mxu0 0.0
        %529 = vmatpush1.xpose.msra.mxu0 0.0
        %530 = vmatprep.subr.mxu0 0.0
        %531 = vmatpush1.xpose.msra.mxu0 0.0
        %532 = vmatprep.subr.mxu0 0.0
        %533 = vmatpush1.xpose.msra.mxu0 0.0
        %534 = vmatprep.subr.mxu0 0.0
        %535 = vmatpush1.xpose.msra.mxu0 0.0
        %536 = vmatprep.subr.mxu0 0.0
        %537 = vmatpush1.xpose.msra.mxu0 0.0
        %538 = vmatprep.subr.mxu0 0.0
        %539 = vmatpush1.xpose.msra.mxu0 0.0
        %540 = vmatprep.subr.mxu0 0.0
        %541 = vmatpush1.xpose.msra.mxu0 0.0
        %542 = vmatprep.subr.mxu0 0.0
        %543 = vmatpush1.xpose.msra.mxu0 0.0
        %544 = vmatprep.subr.mxu0 0.0
        %545 = vmatpush1.xpose.msra.mxu0 0.0
        %546 = vmatprep.subr.mxu0 0.0
        %547 = vmatpush1.xpose.msra.mxu0 0.0
        %548 = vmatprep.subr.mxu0 0.0
        %549 = vmatpush1.xpose.msra.mxu0 0.0
        %550 = vmatprep.subr.mxu0 0.0
        %551 = vmatpush1.xpose.msra.mxu0 0.0
        %552 = vmatprep.subr.mxu0 0.0
        %553 = vmatpush1.xpose.msra.mxu0 0.0
        %554 = vmatprep.subr.mxu0 0.0
        %555 = vmatpush1.xpose.msra.mxu0 0.0
        %556 = vmatprep.subr.mxu0 0.0
        %557 = vmatpush1.xpose.msra.mxu0 0.0
        %558 = vmatprep.subr.mxu0 0.0
        %559 = vmatpush1.xpose.msra.mxu0 0.0
        %560 = vmatprep.subr.mxu0 0.0
        %561 = vmatpush1.xpose.msra.mxu0 0.0
        %562 = vmatprep.subr.mxu0 0.0
        %563 = vmatpush1.xpose.msra.mxu0 0.0
        %564 = vmatprep.subr.mxu0 0.0
        %565 = vmatpush1.xpose.msra.mxu0 0.0
        %566 = vmatprep.subr.mxu0 0.0
        %567 = vmatpush1.xpose.msra.mxu0 0.0
        %568 = vmatprep.subr.mxu0 0.0
        %569 = vmatpush1.xpose.msra.mxu0 0.0
        %570 = vmatprep.subr.mxu0 0.0
        %571 = vmatpush1.xpose.msra.mxu0 0.0
        %572 = vmatprep.subr.mxu0 0.0
        %573 = vmatpush1.xpose.msra.mxu0 0.0
        %574 = vmatprep.subr.mxu0 0.0
        %575 = vmatpush1.xpose.msra.mxu0 0.0
        %576 = vmatprep.subr.mxu0 0.0
        %577 = vmatpush1.xpose.msra.mxu0 0.0
        %578 = vmatprep.subr.mxu0 0.0
        %579 = vmatpush1.xpose.msra.mxu0 0.0
        %580 = vmatprep.subr.mxu0 0.0
        %581 = vmatpush1.xpose.msra.mxu0 0.0
        %582 = vmatprep.subr.mxu0 0.0
        %583 = vmatpush1.xpose.msra.mxu0 0.0
        %584 = vmatprep.subr.mxu0 0.0
        %585 = vmatpush1.xpose.msra.mxu0 0.0
        %586 = vmatprep.mubr.f32.mxu0 0.0
        %587 = vmatmul.mubr.f32.gmra.mrb[0].mxu0 %v518
        %v588 = vpop.f32.mrb[0].mxu0
        %v589 = vadd.f32 0.0, %v588
        %v590 = vpop.f32.mrb[0].mxu0
        %591 = vdwg.mxu0
        %593 = vrot.lane.b32.xlu0 %v341, 96
        %v594 = vpop.permute.xlu0 %593
        %v595 = vsel %vm363, %v341, 0
        %v597 = vsel %vm363, %v594, 0
        %599 = vmatprep.subr.mxu0 0.0
        %600 = vmatpush1.xpose.msra.mxu0 %v597
        %601 = vmatprep.subr.mxu0 0.0
        %602 = vmatpush1.xpose.msra.mxu0 0.0
        %603 = vmatprep.subr.mxu0 0.0
        %604 = vmatpush1.xpose.msra.mxu0 0.0
        %605 = vmatprep.subr.mxu0 0.0
        %606 = vmatpush1.xpose.msra.mxu0 0.0
        %607 = vmatprep.subr.mxu0 0.0
        %608 = vmatpush1.xpose.msra.mxu0 0.0
        %609 = vmatprep.subr.mxu0 0.0
        %610 = vmatpush1.xpose.msra.mxu0 0.0
        %611 = vmatprep.subr.mxu0 0.0
        %612 = vmatpush1.xpose.msra.mxu0 0.0
        %613 = vmatprep.subr.mxu0 0.0
        %614 = vmatpush1.xpose.msra.mxu0 0.0
        %615 = vmatprep.subr.mxu0 0.0
        %616 = vmatpush1.xpose.msra.mxu0 0.0
        %617 = vmatprep.subr.mxu0 0.0
        %618 = vmatpush1.xpose.msra.mxu0 0.0
        %619 = vmatprep.subr.mxu0 0.0
        %620 = vmatpush1.xpose.msra.mxu0 0.0
        %621 = vmatprep.subr.mxu0 0.0
        %622 = vmatpush1.xpose.msra.mxu0 0.0
        %623 = vmatprep.subr.mxu0 0.0
        %624 = vmatpush1.xpose.msra.mxu0 0.0
        %625 = vmatprep.subr.mxu0 0.0
        %626 = vmatpush1.xpose.msra.mxu0 0.0
        %627 = vmatprep.subr.mxu0 0.0
        %628 = vmatpush1.xpose.msra.mxu0 0.0
        %629 = vmatprep.subr.mxu0 0.0
        %630 = vmatpush1.xpose.msra.mxu0 0.0
        %631 = vmatprep.subr.mxu0 0.0
        %632 = vmatpush1.xpose.msra.mxu0 0.0
        %633 = vmatprep.subr.mxu0 0.0
        %634 = vmatpush1.xpose.msra.mxu0 0.0
        %635 = vmatprep.subr.mxu0 0.0
        %636 = vmatpush1.xpose.msra.mxu0 0.0
        %637 = vmatprep.subr.mxu0 0.0
        %638 = vmatpush1.xpose.msra.mxu0 0.0
        %639 = vmatprep.subr.mxu0 0.0
        %640 = vmatpush1.xpose.msra.mxu0 0.0
        %641 = vmatprep.subr.mxu0 0.0
        %642 = vmatpush1.xpose.msra.mxu0 0.0
        %643 = vmatprep.subr.mxu0 0.0
        %644 = vmatpush1.xpose.msra.mxu0 0.0
        %645 = vmatprep.subr.mxu0 0.0
        %646 = vmatpush1.xpose.msra.mxu0 0.0
        %647 = vmatprep.subr.mxu0 0.0
        %648 = vmatpush1.xpose.msra.mxu0 0.0
        %649 = vmatprep.subr.mxu0 0.0
        %650 = vmatpush1.xpose.msra.mxu0 0.0
        %651 = vmatprep.subr.mxu0 0.0
        %652 = vmatpush1.xpose.msra.mxu0 0.0
        %653 = vmatprep.subr.mxu0 0.0
        %654 = vmatpush1.xpose.msra.mxu0 0.0
        %655 = vmatprep.subr.mxu0 0.0
        %656 = vmatpush1.xpose.msra.mxu0 0.0
        %657 = vmatprep.subr.mxu0 0.0
        %658 = vmatpush1.xpose.msra.mxu0 0.0
        %659 = vmatprep.subr.mxu0 0.0
        %660 = vmatpush1.xpose.msra.mxu0 0.0
        %661 = vmatprep.subr.mxu0 0.0
        %662 = vmatpush1.xpose.msra.mxu0 0.0
        %663 = vmatprep.mubr.f32.mxu0 0.0
        %664 = vmatmul.mubr.f32.gmra.mrb[0].mxu0 %v595
        %v665 = vpop.f32.mrb[0].mxu0
        %v666 = vadd.f32 0.0, %v665
        %v667 = vpop.f32.mrb[0].mxu0
        %668 = vdwg.mxu0
        %670 = vrot.lane.b32.xlu0 %v346, 96
        %v671 = vpop.permute.xlu0 %670
        %v672 = vsel %vm363, %v346, 0
        %v674 = vsel %vm363, %v671, 0
        %676 = vmatprep.subr.mxu0 0.0
        %677 = vmatpush1.xpose.msra.mxu0 %v674
        %678 = vmatprep.subr.mxu0 0.0
        %679 = vmatpush1.xpose.msra.mxu0 0.0
        %680 = vmatprep.subr.mxu0 0.0
        %681 = vmatpush1.xpose.msra.mxu0 0.0
        %682 = vmatprep.subr.mxu0 0.0
        %683 = vmatpush1.xpose.msra.mxu0 0.0
        %684 = vmatprep.subr.mxu0 0.0
        %685 = vmatpush1.xpose.msra.mxu0 0.0
        %686 = vmatprep.subr.mxu0 0.0
        %687 = vmatpush1.xpose.msra.mxu0 0.0
        %688 = vmatprep.subr.mxu0 0.0
        %689 = vmatpush1.xpose.msra.mxu0 0.0
        %690 = vmatprep.subr.mxu0 0.0
        %691 = vmatpush1.xpose.msra.mxu0 0.0
        %692 = vmatprep.subr.mxu0 0.0
        %693 = vmatpush1.xpose.msra.mxu0 0.0
        %694 = vmatprep.subr.mxu0 0.0
        %695 = vmatpush1.xpose.msra.mxu0 0.0
        %696 = vmatprep.subr.mxu0 0.0
        %697 = vmatpush1.xpose.msra.mxu0 0.0
        %698 = vmatprep.subr.mxu0 0.0
        %699 = vmatpush1.xpose.msra.mxu0 0.0
        %700 = vmatprep.subr.mxu0 0.0
        %701 = vmatpush1.xpose.msra.mxu0 0.0
        %702 = vmatprep.subr.mxu0 0.0
        %703 = vmatpush1.xpose.msra.mxu0 0.0
        %704 = vmatprep.subr.mxu0 0.0
        %705 = vmatpush1.xpose.msra.mxu0 0.0
        %706 = vmatprep.subr.mxu0 0.0
        %707 = vmatpush1.xpose.msra.mxu0 0.0
        %708 = vmatprep.subr.mxu0 0.0
        %709 = vmatpush1.xpose.msra.mxu0 0.0
        %710 = vmatprep.subr.mxu0 0.0
        %711 = vmatpush1.xpose.msra.mxu0 0.0
        %712 = vmatprep.subr.mxu0 0.0
        %713 = vmatpush1.xpose.msra.mxu0 0.0
        %714 = vmatprep.subr.mxu0 0.0
        %715 = vmatpush1.xpose.msra.mxu0 0.0
        %716 = vmatprep.subr.mxu0 0.0
        %717 = vmatpush1.xpose.msra.mxu0 0.0
        %718 = vmatprep.subr.mxu0 0.0
        %719 = vmatpush1.xpose.msra.mxu0 0.0
        %720 = vmatprep.subr.mxu0 0.0
        %721 = vmatpush1.xpose.msra.mxu0 0.0
        %722 = vmatprep.subr.mxu0 0.0
        %723 = vmatpush1.xpose.msra.mxu0 0.0
        %724 = vmatprep.subr.mxu0 0.0
        %725 = vmatpush1.xpose.msra.mxu0 0.0
        %726 = vmatprep.subr.mxu0 0.0
        %727 = vmatpush1.xpose.msra.mxu0 0.0
        %728 = vmatprep.subr.mxu0 0.0
        %729 = vmatpush1.xpose.msra.mxu0 0.0
        %730 = vmatprep.subr.mxu0 0.0
        %731 = vmatpush1.xpose.msra.mxu0 0.0
        %732 = vmatprep.subr.mxu0 0.0
        %733 = vmatpush1.xpose.msra.mxu0 0.0
        %734 = vmatprep.subr.mxu0 0.0
        %735 = vmatpush1.xpose.msra.mxu0 0.0
        %736 = vmatprep.subr.mxu0 0.0
        %737 = vmatpush1.xpose.msra.mxu0 0.0
        %738 = vmatprep.subr.mxu0 0.0
        %739 = vmatpush1.xpose.msra.mxu0 0.0
        %740 = vmatprep.mubr.f32.mxu0 0.0
        %741 = vmatmul.mubr.f32.gmra.mrb[0].mxu0 %v672
        %v742 = vpop.f32.mrb[0].mxu0
        %v743 = vadd.f32 0.0, %v742
        %v744 = vpop.f32.mrb[0].mxu0
        %745 = vdwg.mxu0
        %747 = vrot.lane.b32.xlu0 %v349, 96
        %v748 = vpop.permute.xlu0 %747
        %v749 = vsel %vm363, %v349, 0
        %v751 = vsel %vm363, %v748, 0
        %753 = vmatprep.subr.mxu0 0.0
        %754 = vmatpush1.xpose.msra.mxu0 %v751
        %755 = vmatprep.subr.mxu0 0.0
        %756 = vmatpush1.xpose.msra.mxu0 0.0
        %757 = vmatprep.subr.mxu0 0.0
        %758 = vmatpush1.xpose.msra.mxu0 0.0
        %759 = vmatprep.subr.mxu0 0.0
        %760 = vmatpush1.xpose.msra.mxu0 0.0
        %761 = vmatprep.subr.mxu0 0.0
        %762 = vmatpush1.xpose.msra.mxu0 0.0
        %763 = vmatprep.subr.mxu0 0.0
        %764 = vmatpush1.xpose.msra.mxu0 0.0
        %765 = vmatprep.subr.mxu0 0.0
        %766 = vmatpush1.xpose.msra.mxu0 0.0
        %767 = vmatprep.subr.mxu0 0.0
        %768 = vmatpush1.xpose.msra.mxu0 0.0
        %769 = vmatprep.subr.mxu0 0.0
        %770 = vmatpush1.xpose.msra.mxu0 0.0
        %771 = vmatprep.subr.mxu0 0.0
        %772 = vmatpush1.xpose.msra.mxu0 0.0
        %773 = vmatprep.subr.mxu0 0.0
        %774 = vmatpush1.xpose.msra.mxu0 0.0
        %775 = vmatprep.subr.mxu0 0.0
        %776 = vmatpush1.xpose.msra.mxu0 0.0
        %777 = vmatprep.subr.mxu0 0.0
        %778 = vmatpush1.xpose.msra.mxu0 0.0
        %779 = vmatprep.subr.mxu0 0.0
        %780 = vmatpush1.xpose.msra.mxu0 0.0
        %781 = vmatprep.subr.mxu0 0.0
        %782 = vmatpush1.xpose.msra.mxu0 0.0
        %783 = vmatprep.subr.mxu0 0.0
        %784 = vmatpush1.xpose.msra.mxu0 0.0
        %785 = vmatprep.subr.mxu0 0.0
        %786 = vmatpush1.xpose.msra.mxu0 0.0
        %787 = vmatprep.subr.mxu0 0.0
        %788 = vmatpush1.xpose.msra.mxu0 0.0
        %789 = vmatprep.subr.mxu0 0.0
        %790 = vmatpush1.xpose.msra.mxu0 0.0
        %791 = vmatprep.subr.mxu0 0.0
        %792 = vmatpush1.xpose.msra.mxu0 0.0
        %793 = vmatprep.subr.mxu0 0.0
        %794 = vmatpush1.xpose.msra.mxu0 0.0
        %795 = vmatprep.subr.mxu0 0.0
        %796 = vmatpush1.xpose.msra.mxu0 0.0
        %797 = vmatprep.subr.mxu0 0.0
        %798 = vmatpush1.xpose.msra.mxu0 0.0
        %799 = vmatprep.subr.mxu0 0.0
        %800 = vmatpush1.xpose.msra.mxu0 0.0
        %801 = vmatprep.subr.mxu0 0.0
        %802 = vmatpush1.xpose.msra.mxu0 0.0
        %803 = vmatprep.subr.mxu0 0.0
        %804 = vmatpush1.xpose.msra.mxu0 0.0
        %805 = vmatprep.subr.mxu0 0.0
        %806 = vmatpush1.xpose.msra.mxu0 0.0
        %807 = vmatprep.subr.mxu0 0.0
        %808 = vmatpush1.xpose.msra.mxu0 0.0
        %809 = vmatprep.subr.mxu0 0.0
        %810 = vmatpush1.xpose.msra.mxu0 0.0
        %811 = vmatprep.subr.mxu0 0.0
        %812 = vmatpush1.xpose.msra.mxu0 0.0
        %813 = vmatprep.subr.mxu0 0.0
        %814 = vmatpush1.xpose.msra.mxu0 0.0
        %815 = vmatprep.subr.mxu0 0.0
        %816 = vmatpush1.xpose.msra.mxu0 0.0
        %817 = vmatprep.mubr.f32.mxu0 0.0
        %818 = vmatmul.mubr.f32.gmra.mrb[0].mxu0 %v749
        %v819 = vpop.f32.mrb[0].mxu0
        %v820 = vadd.f32 0.0, %v819
        %v821 = vpop.f32.mrb[0].mxu0
        %822 = vdwg.mxu0
        %824 = vrot.lane.b32.xlu0 %v354, 96
        %v825 = vpop.permute.xlu0 %824
        %v826 = vsel %vm363, %v354, 0
        %v828 = vsel %vm363, %v825, 0
        %830 = vmatprep.subr.mxu0 0.0
        %831 = vmatpush1.xpose.msra.mxu0 %v828
        %832 = vmatprep.subr.mxu0 0.0
        %833 = vmatpush1.xpose.msra.mxu0 0.0
        %834 = vmatprep.subr.mxu0 0.0
        %835 = vmatpush1.xpose.msra.mxu0 0.0
        %836 = vmatprep.subr.mxu0 0.0
        %837 = vmatpush1.xpose.msra.mxu0 0.0
        %838 = vmatprep.subr.mxu0 0.0
        %839 = vmatpush1.xpose.msra.mxu0 0.0
        %840 = vmatprep.subr.mxu0 0.0
        %841 = vmatpush1.xpose.msra.mxu0 0.0
        %842 = vmatprep.subr.mxu0 0.0
        %843 = vmatpush1.xpose.msra.mxu0 0.0
        %844 = vmatprep.subr.mxu0 0.0
        %845 = vmatpush1.xpose.msra.mxu0 0.0
        %846 = vmatprep.subr.mxu0 0.0
        %847 = vmatpush1.xpose.msra.mxu0 0.0
        %848 = vmatprep.subr.mxu0 0.0
        %849 = vmatpush1.xpose.msra.mxu0 0.0
        %850 = vmatprep.subr.mxu0 0.0
        %851 = vmatpush1.xpose.msra.mxu0 0.0
        %852 = vmatprep.subr.mxu0 0.0
        %853 = vmatpush1.xpose.msra.mxu0 0.0
        %854 = vmatprep.subr.mxu0 0.0
        %855 = vmatpush1.xpose.msra.mxu0 0.0
        %856 = vmatprep.subr.mxu0 0.0
        %857 = vmatpush1.xpose.msra.mxu0 0.0
        %858 = vmatprep.subr.mxu0 0.0
        %859 = vmatpush1.xpose.msra.mxu0 0.0
        %860 = vmatprep.subr.mxu0 0.0
        %861 = vmatpush1.xpose.msra.mxu0 0.0
        %862 = vmatprep.subr.mxu0 0.0
        %863 = vmatpush1.xpose.msra.mxu0 0.0
        %864 = vmatprep.subr.mxu0 0.0
        %865 = vmatpush1.xpose.msra.mxu0 0.0
        %866 = vmatprep.subr.mxu0 0.0
        %867 = vmatpush1.xpose.msra.mxu0 0.0
        %868 = vmatprep.subr.mxu0 0.0
        %869 = vmatpush1.xpose.msra.mxu0 0.0
        %870 = vmatprep.subr.mxu0 0.0
        %871 = vmatpush1.xpose.msra.mxu0 0.0
        %872 = vmatprep.subr.mxu0 0.0
        %873 = vmatpush1.xpose.msra.mxu0 0.0
        %874 = vmatprep.subr.mxu0 0.0
        %875 = vmatpush1.xpose.msra.mxu0 0.0
        %876 = vmatprep.subr.mxu0 0.0
        %877 = vmatpush1.xpose.msra.mxu0 0.0
        %878 = vmatprep.subr.mxu0 0.0
        %879 = vmatpush1.xpose.msra.mxu0 0.0
        %880 = vmatprep.subr.mxu0 0.0
        %881 = vmatpush1.xpose.msra.mxu0 0.0
        %882 = vmatprep.subr.mxu0 0.0
        %883 = vmatpush1.xpose.msra.mxu0 0.0
        %884 = vmatprep.subr.mxu0 0.0
        %885 = vmatpush1.xpose.msra.mxu0 0.0
        %886 = vmatprep.subr.mxu0 0.0
        %887 = vmatpush1.xpose.msra.mxu0 0.0
        %888 = vmatprep.subr.mxu0 0.0
        %889 = vmatpush1.xpose.msra.mxu0 0.0
        %890 = vmatprep.subr.mxu0 0.0
        %891 = vmatpush1.xpose.msra.mxu0 0.0
        %892 = vmatprep.subr.mxu0 0.0
        %893 = vmatpush1.xpose.msra.mxu0 0.0
        %894 = vmatprep.mubr.f32.mxu0 0.0
        %895 = vmatmul.mubr.f32.gmra.mrb[0].mxu0 %v826
        %v896 = vpop.f32.mrb[0].mxu0
        %v897 = vadd.f32 0.0, %v896
        %v898 = vpop.f32.mrb[0].mxu0
        %899 = vdwg.mxu0
        %901 = vrot.lane.b32.xlu0 %v357, 96
        %v902 = vpop.permute.xlu0 %901
        %v903 = vsel %vm363, %v357, 0
        %v905 = vsel %vm363, %v902, 0
        %907 = vmatprep.subr.mxu0 0.0
        %908 = vmatpush1.xpose.msra.mxu0 %v905
        %909 = vmatprep.subr.mxu0 0.0
        %910 = vmatpush1.xpose.msra.mxu0 0.0
        %911 = vmatprep.subr.mxu0 0.0
        %912 = vmatpush1.xpose.msra.mxu0 0.0
        %913 = vmatprep.subr.mxu0 0.0
        %914 = vmatpush1.xpose.msra.mxu0 0.0
        %915 = vmatprep.subr.mxu0 0.0
        %916 = vmatpush1.xpose.msra.mxu0 0.0
        %917 = vmatprep.subr.mxu0 0.0
        %918 = vmatpush1.xpose.msra.mxu0 0.0
        %919 = vmatprep.subr.mxu0 0.0
        %920 = vmatpush1.xpose.msra.mxu0 0.0
        %921 = vmatprep.subr.mxu0 0.0
        %922 = vmatpush1.xpose.msra.mxu0 0.0
        %923 = vmatprep.subr.mxu0 0.0
        %924 = vmatpush1.xpose.msra.mxu0 0.0
        %925 = vmatprep.subr.mxu0 0.0
        %926 = vmatpush1.xpose.msra.mxu0 0.0
        %927 = vmatprep.subr.mxu0 0.0
        %928 = vmatpush1.xpose.msra.mxu0 0.0
        %929 = vmatprep.subr.mxu0 0.0
        %930 = vmatpush1.xpose.msra.mxu0 0.0
        %931 = vmatprep.subr.mxu0 0.0
        %932 = vmatpush1.xpose.msra.mxu0 0.0
        %933 = vmatprep.subr.mxu0 0.0
        %934 = vmatpush1.xpose.msra.mxu0 0.0
        %935 = vmatprep.subr.mxu0 0.0
        %936 = vmatpush1.xpose.msra.mxu0 0.0
        %937 = vmatprep.subr.mxu0 0.0
        %938 = vmatpush1.xpose.msra.mxu0 0.0
        %939 = vmatprep.subr.mxu0 0.0
        %940 = vmatpush1.xpose.msra.mxu0 0.0
        %941 = vmatprep.subr.mxu0 0.0
        %942 = vmatpush1.xpose.msra.mxu0 0.0
        %943 = vmatprep.subr.mxu0 0.0
        %944 = vmatpush1.xpose.msra.mxu0 0.0
        %945 = vmatprep.subr.mxu0 0.0
        %946 = vmatpush1.xpose.msra.mxu0 0.0
        %947 = vmatprep.subr.mxu0 0.0
        %948 = vmatpush1.xpose.msra.mxu0 0.0
        %949 = vmatprep.subr.mxu0 0.0
        %950 = vmatpush1.xpose.msra.mxu0 0.0
        %951 = vmatprep.subr.mxu0 0.0
        %952 = vmatpush1.xpose.msra.mxu0 0.0
        %953 = vmatprep.subr.mxu0 0.0
        %954 = vmatpush1.xpose.msra.mxu0 0.0
        %955 = vmatprep.subr.mxu0 0.0
        %956 = vmatpush1.xpose.msra.mxu0 0.0
        %957 = vmatprep.subr.mxu0 0.0
        %958 = vmatpush1.xpose.msra.mxu0 0.0
        %959 = vmatprep.subr.mxu0 0.0
        %960 = vmatpush1.xpose.msra.mxu0 0.0
        %961 = vmatprep.subr.mxu0 0.0
        %962 = vmatpush1.xpose.msra.mxu0 0.0
        %963 = vmatprep.subr.mxu0 0.0
        %964 = vmatpush1.xpose.msra.mxu0 0.0
        %965 = vmatprep.subr.mxu0 0.0
        %966 = vmatpush1.xpose.msra.mxu0 0.0
        %967 = vmatprep.subr.mxu0 0.0
        %968 = vmatpush1.xpose.msra.mxu0 0.0
        %969 = vmatprep.subr.mxu0 0.0
        %970 = vmatpush1.xpose.msra.mxu0 0.0
        %971 = vmatprep.mubr.f32.mxu0 0.0
        %972 = vmatmul.mubr.f32.gmra.mrb[0].mxu0 %v903
        %v973 = vpop.f32.mrb[0].mxu0
        %v974 = vadd.f32 0.0, %v973
        %v975 = vpop.f32.mrb[0].mxu0
        %976 = vdwg.mxu0
        %v977 = vsel %vm363, %v435, -inf
        %978 = vmax.xlane.f32.xlu0 %v977
        %v979 = vpop.xlane.xlu0 %978
        %v980 = vsel %vm363, %v512, -inf
        %981 = vmax.xlane.f32.xlu0 %v980
        %v982 = vpop.xlane.xlu0 %981
        %v983 = vsel %vm363, %v589, -inf
        %984 = vmax.xlane.f32.xlu0 %v983
        %v985 = vpop.xlane.xlu0 %984
        %v986 = vsel %vm363, %v666, -inf
        %987 = vmax.xlane.f32.xlu0 %v986
        %v988 = vpop.xlane.xlu0 %987
        %v989 = vsel %vm363, %v743, -inf
        %990 = vmax.xlane.f32.xlu0 %v989
        %v991 = vpop.xlane.xlu0 %990
        %v992 = vsel %vm363, %v820, -inf
        %993 = vmax.xlane.f32.xlu0 %v992
        %v994 = vpop.xlane.xlu0 %993
        %v995 = vsel %vm363, %v897, -inf
        %996 = vmax.xlane.f32.xlu0 %v995
        %v997 = vpop.xlane.xlu0 %996
        %v998 = vsel %vm363, %v974, -inf
        %999 = vmax.xlane.f32.xlu0 %v998
        %v1000 = vpop.xlane.xlu0 %999
        %v1001 = vsub.f32 %v435, %v979
        %v1002 = vsub.f32 %v512, %v982
        %v1003 = vsub.f32 %v589, %v985
        %v1004 = vsub.f32 %v666, %v988
        %v1005 = vsub.f32 %v743, %v991
        %v1006 = vsub.f32 %v820, %v994
        %v1007 = vsub.f32 %v897, %v997
        %v1008 = vsub.f32 %v974, %v1000
        %v1009 = vmul.f32 %v1001, 1.442695
        %v1010 = vpow.pop %v1009
        %v1011 = vmul.f32 %v1002, 1.442695
        %v1012 = vpow.pop %v1011
        %v1013 = vmul.f32 %v1003, 1.442695
        %v1014 = vpow.pop %v1013
        %v1015 = vmul.f32 %v1004, 1.442695
        %v1016 = vpow.pop %v1015
        %v1017 = vmul.f32 %v1005, 1.442695
        %v1018 = vpow.pop %v1017
        %v1019 = vmul.f32 %v1006, 1.442695
        %v1020 = vpow.pop %v1019
        %v1021 = vmul.f32 %v1007, 1.442695
        %v1022 = vpow.pop %v1021
        %v1023 = vmul.f32 %v1008, 1.442695
        %v1024 = vpow.pop %v1023
        %v1025 = vsel %vm363, %v1010, 0.0
        %1026 = vadd.xlane.f32.xlu0 %v1025
        %v1027 = vpop.xlane.xlu0 %1026
        %v1028 = vsel %vm363, %v1012, 0.0
        %1029 = vadd.xlane.f32.xlu0 %v1028
        %v1030 = vpop.xlane.xlu0 %1029
        %v1031 = vsel %vm363, %v1014, 0.0
        %1032 = vadd.xlane.f32.xlu0 %v1031
        %v1033 = vpop.xlane.xlu0 %1032
        %v1034 = vsel %vm363, %v1016, 0.0
        %1035 = vadd.xlane.f32.xlu0 %v1034
        %v1036 = vpop.xlane.xlu0 %1035
        %v1037 = vsel %vm363, %v1018, 0.0
        %1038 = vadd.xlane.f32.xlu0 %v1037
        %v1039 = vpop.xlane.xlu0 %1038
        %v1040 = vsel %vm363, %v1020, 0.0
        %1041 = vadd.xlane.f32.xlu0 %v1040
        %v1042 = vpop.xlane.xlu0 %1041
        %v1043 = vsel %vm363, %v1022, 0.0
        %1044 = vadd.xlane.f32.xlu0 %v1043
        %v1045 = vpop.xlane.xlu0 %1044
        %v1046 = vsel %vm363, %v1024, 0.0
        %1047 = vadd.xlane.f32.xlu0 %v1046
        %v1048 = vpop.xlane.xlu0 %1047
        %v1049 = vrcp.pop %v1027
        %v1050 = vrcp.pop %v1030
        %v1051 = vrcp.pop %v1033
        %v1052 = vrcp.pop %v1036
        %v1053 = vrcp.pop %v1039
        %v1054 = vrcp.pop %v1042
        %v1055 = vrcp.pop %v1045
        %v1056 = vrcp.pop %v1048
        %v1057 = vmul.f32 %v1010, %v1049
        %v1058 = vmul.f32 %v1012, %v1050
        %v1059 = vmul.f32 %v1014, %v1051
        %v1060 = vmul.f32 %v1016, %v1052
        %v1061 = vmul.f32 %v1018, %v1053
        %v1062 = vmul.f32 %v1020, %v1054
        %v1063 = vmul.f32 %v1022, %v1055
        %v1064 = vmul.f32 %v1024, %v1056
        %1065 = vrot.lane.b32.xlu0 %v330, 64
        %v1066 = vpop.permute.xlu0 %1065
        %v1069 = vsel %vm363, %v1057, 0
        %1071 = vmatprep.subr.mxu0 0.0
        %1072 = vmatpush1.msra.mxu0 %v1066
        %1073 = vmatprep.subr.mxu0 0.0
        %1074 = vmatpush1.msra.mxu0 0.0
        %1075 = vmatprep.subr.mxu0 0.0
        %1076 = vmatpush1.msra.mxu0 0.0
        %1077 = vmatprep.subr.mxu0 0.0
        %1078 = vmatpush1.msra.mxu0 0.0
        %1079 = vmatprep.subr.mxu0 0.0
        %1080 = vmatpush1.msra.mxu0 0.0
        %1081 = vmatprep.subr.mxu0 0.0
        %1082 = vmatpush1.msra.mxu0 0.0
        %1083 = vmatprep.subr.mxu0 0.0
        %1084 = vmatpush1.msra.mxu0 0.0
        %1085 = vmatprep.subr.mxu0 0.0
        %1086 = vmatpush1.msra.mxu0 0.0
        %1087 = vmatprep.subr.mxu0 0.0
        %1088 = vmatpush1.msra.mxu0 0.0
        %1089 = vmatprep.subr.mxu0 0.0
        %1090 = vmatpush1.msra.mxu0 0.0
        %1091 = vmatprep.subr.mxu0 0.0
        %1092 = vmatpush1.msra.mxu0 0.0
        %1093 = vmatprep.subr.mxu0 0.0
        %1094 = vmatpush1.msra.mxu0 0.0
        %1095 = vmatprep.subr.mxu0 0.0
        %1096 = vmatpush1.msra.mxu0 0.0
        %1097 = vmatprep.subr.mxu0 0.0
        %1098 = vmatpush1.msra.mxu0 0.0
        %1099 = vmatprep.subr.mxu0 0.0
        %1100 = vmatpush1.msra.mxu0 0.0
        %1101 = vmatprep.subr.mxu0 0.0
        %1102 = vmatpush1.msra.mxu0 0.0
        %1103 = vmatprep.subr.mxu0 0.0
        %1104 = vmatpush1.msra.mxu0 0.0
        %1105 = vmatprep.subr.mxu0 0.0
        %1106 = vmatpush1.msra.mxu0 0.0
        %1107 = vmatprep.subr.mxu0 0.0
        %1108 = vmatpush1.msra.mxu0 0.0
        %1109 = vmatprep.subr.mxu0 0.0
        %1110 = vmatpush1.msra.mxu0 0.0
        %1111 = vmatprep.subr.mxu0 0.0
        %1112 = vmatpush1.msra.mxu0 0.0
        %1113 = vmatprep.subr.mxu0 0.0
        %1114 = vmatpush1.msra.mxu0 0.0
        %1115 = vmatprep.subr.mxu0 0.0
        %1116 = vmatpush1.msra.mxu0 0.0
        %1117 = vmatprep.subr.mxu0 0.0
        %1118 = vmatpush1.msra.mxu0 0.0
        %1119 = vmatprep.subr.mxu0 0.0
        %1120 = vmatpush1.msra.mxu0 0.0
        %1121 = vmatprep.subr.mxu0 0.0
        %1122 = vmatpush1.msra.mxu0 0.0
        %1123 = vmatprep.subr.mxu0 0.0
        %1124 = vmatpush1.msra.mxu0 0.0
        %1125 = vmatprep.subr.mxu0 0.0
        %1126 = vmatpush1.msra.mxu0 0.0
        %1127 = vmatprep.subr.mxu0 0.0
        %1128 = vmatpush1.msra.mxu0 0.0
        %1129 = vmatprep.subr.mxu0 0.0
        %1130 = vmatpush1.msra.mxu0 0.0
        %1131 = vmatprep.subr.mxu0 0.0
        %1132 = vmatpush1.msra.mxu0 0.0
        %1133 = vmatprep.subr.mxu0 0.0
        %1134 = vmatpush1.msra.mxu0 0.0
        %1135 = vmatprep.mubr.f32.mxu0 0.0
        %1136 = vmatmul.mubr.f32.gmra.mrb[0].mxu0 %v1069
        %v1137 = vpop.f32.mrb[0].mxu0
        %v1138 = vadd.f32 0.0, %v1137
        %v1139 = vpop.f32.mrb[0].mxu0
        %1140 = vdwg.mxu0
        %1141 = vrot.lane.b32.xlu0 %v333, 64
        %v1142 = vpop.permute.xlu0 %1141
        %v1145 = vsel %vm363, %v1058, 0
        %1147 = vmatprep.subr.mxu0 0.0
        %1148 = vmatpush1.msra.mxu0 %v1142
        %1149 = vmatprep.subr.mxu0 0.0
        %1150 = vmatpush1.msra.mxu0 0.0
        %1151 = vmatprep.subr.mxu0 0.0
        %1152 = vmatpush1.msra.mxu0 0.0
        %1153 = vmatprep.subr.mxu0 0.0
        %1154 = vmatpush1.msra.mxu0 0.0
        %1155 = vmatprep.subr.mxu0 0.0
        %1156 = vmatpush1.msra.mxu0 0.0
        %1157 = vmatprep.subr.mxu0 0.0
        %1158 = vmatpush1.msra.mxu0 0.0
        %1159 = vmatprep.subr.mxu0 0.0
        %1160 = vmatpush1.msra.mxu0 0.0
        %1161 = vmatprep.subr.mxu0 0.0
        %1162 = vmatpush1.msra.mxu0 0.0
        %1163 = vmatprep.subr.mxu0 0.0
        %1164 = vmatpush1.msra.mxu0 0.0
        %1165 = vmatprep.subr.mxu0 0.0
        %1166 = vmatpush1.msra.mxu0 0.0
        %1167 = vmatprep.subr.mxu0 0.0
        %1168 = vmatpush1.msra.mxu0 0.0
        %1169 = vmatprep.subr.mxu0 0.0
        %1170 = vmatpush1.msra.mxu0 0.0
        %1171 = vmatprep.subr.mxu0 0.0
        %1172 = vmatpush1.msra.mxu0 0.0
        %1173 = vmatprep.subr.mxu0 0.0
        %1174 = vmatpush1.msra.mxu0 0.0
        %1175 = vmatprep.subr.mxu0 0.0
        %1176 = vmatpush1.msra.mxu0 0.0
        %1177 = vmatprep.subr.mxu0 0.0
        %1178 = vmatpush1.msra.mxu0 0.0
        %1179 = vmatprep.subr.mxu0 0.0
        %1180 = vmatpush1.msra.mxu0 0.0
        %1181 = vmatprep.subr.mxu0 0.0
        %1182 = vmatpush1.msra.mxu0 0.0
        %1183 = vmatprep.subr.mxu0 0.0
        %1184 = vmatpush1.msra.mxu0 0.0
        %1185 = vmatprep.subr.mxu0 0.0
        %1186 = vmatpush1.msra.mxu0 0.0
        %1187 = vmatprep.subr.mxu0 0.0
        %1188 = vmatpush1.msra.mxu0 0.0
        %1189 = vmatprep.subr.mxu0 0.0
        %1190 = vmatpush1.msra.mxu0 0.0
        %1191 = vmatprep.subr.mxu0 0.0
        %1192 = vmatpush1.msra.mxu0 0.0
        %1193 = vmatprep.subr.mxu0 0.0
        %1194 = vmatpush1.msra.mxu0 0.0
        %1195 = vmatprep.subr.mxu0 0.0
        %1196 = vmatpush1.msra.mxu0 0.0
        %1197 = vmatprep.subr.mxu0 0.0
        %1198 = vmatpush1.msra.mxu0 0.0
        %1199 = vmatprep.subr.mxu0 0.0
        %1200 = vmatpush1.msra.mxu0 0.0
        %1201 = vmatprep.subr.mxu0 0.0
        %1202 = vmatpush1.msra.mxu0 0.0
        %1203 = vmatprep.subr.mxu0 0.0
        %1204 = vmatpush1.msra.mxu0 0.0
        %1205 = vmatprep.subr.mxu0 0.0
        %1206 = vmatpush1.msra.mxu0 0.0
        %1207 = vmatprep.subr.mxu0 0.0
        %1208 = vmatpush1.msra.mxu0 0.0
        %1209 = vmatprep.subr.mxu0 0.0
        %1210 = vmatpush1.msra.mxu0 0.0
        %1211 = vmatprep.mubr.f32.mxu0 0.0
        %1212 = vmatmul.mubr.f32.gmra.mrb[0].mxu0 %v1145
        %v1213 = vpop.f32.mrb[0].mxu0
        %v1214 = vadd.f32 0.0, %v1213
        %v1215 = vpop.f32.mrb[0].mxu0
        %1216 = vdwg.mxu0
        %1217 = vrot.lane.b32.xlu0 %v338, 64
        %v1218 = vpop.permute.xlu0 %1217
        %v1221 = vsel %vm363, %v1059, 0
        %1223 = vmatprep.subr.mxu0 0.0
        %1224 = vmatpush1.msra.mxu0 %v1218
        %1225 = vmatprep.subr.mxu0 0.0
        %1226 = vmatpush1.msra.mxu0 0.0
        %1227 = vmatprep.subr.mxu0 0.0
        %1228 = vmatpush1.msra.mxu0 0.0
        %1229 = vmatprep.subr.mxu0 0.0
        %1230 = vmatpush1.msra.mxu0 0.0
        %1231 = vmatprep.subr.mxu0 0.0
        %1232 = vmatpush1.msra.mxu0 0.0
        %1233 = vmatprep.subr.mxu0 0.0
        %1234 = vmatpush1.msra.mxu0 0.0
        %1235 = vmatprep.subr.mxu0 0.0
        %1236 = vmatpush1.msra.mxu0 0.0
        %1237 = vmatprep.subr.mxu0 0.0
        %1238 = vmatpush1.msra.mxu0 0.0
        %1239 = vmatprep.subr.mxu0 0.0
        %1240 = vmatpush1.msra.mxu0 0.0
        %1241 = vmatprep.subr.mxu0 0.0
        %1242 = vmatpush1.msra.mxu0 0.0
        %1243 = vmatprep.subr.mxu0 0.0
        %1244 = vmatpush1.msra.mxu0 0.0
        %1245 = vmatprep.subr.mxu0 0.0
        %1246 = vmatpush1.msra.mxu0 0.0
        %1247 = vmatprep.subr.mxu0 0.0
        %1248 = vmatpush1.msra.mxu0 0.0
        %1249 = vmatprep.subr.mxu0 0.0
        %1250 = vmatpush1.msra.mxu0 0.0
        %1251 = vmatprep.subr.mxu0 0.0
        %1252 = vmatpush1.msra.mxu0 0.0
        %1253 = vmatprep.subr.mxu0 0.0
        %1254 = vmatpush1.msra.mxu0 0.0
        %1255 = vmatprep.subr.mxu0 0.0
        %1256 = vmatpush1.msra.mxu0 0.0
        %1257 = vmatprep.subr.mxu0 0.0
        %1258 = vmatpush1.msra.mxu0 0.0
        %1259 = vmatprep.subr.mxu0 0.0
        %1260 = vmatpush1.msra.mxu0 0.0
        %1261 = vmatprep.subr.mxu0 0.0
        %1262 = vmatpush1.msra.mxu0 0.0
        %1263 = vmatprep.subr.mxu0 0.0
        %1264 = vmatpush1.msra.mxu0 0.0
        %1265 = vmatprep.subr.mxu0 0.0
        %1266 = vmatpush1.msra.mxu0 0.0
        %1267 = vmatprep.subr.mxu0 0.0
        %1268 = vmatpush1.msra.mxu0 0.0
        %1269 = vmatprep.subr.mxu0 0.0
        %1270 = vmatpush1.msra.mxu0 0.0
        %1271 = vmatprep.subr.mxu0 0.0
        %1272 = vmatpush1.msra.mxu0 0.0
        %1273 = vmatprep.subr.mxu0 0.0
        %1274 = vmatpush1.msra.mxu0 0.0
        %1275 = vmatprep.subr.mxu0 0.0
        %1276 = vmatpush1.msra.mxu0 0.0
        %1277 = vmatprep.subr.mxu0 0.0
        %1278 = vmatpush1.msra.mxu0 0.0
        %1279 = vmatprep.subr.mxu0 0.0
        %1280 = vmatpush1.msra.mxu0 0.0
        %1281 = vmatprep.subr.mxu0 0.0
        %1282 = vmatpush1.msra.mxu0 0.0
        %1283 = vmatprep.subr.mxu0 0.0
        %1284 = vmatpush1.msra.mxu0 0.0
        %1285 = vmatprep.subr.mxu0 0.0
        %1286 = vmatpush1.msra.mxu0 0.0
        %1287 = vmatprep.mubr.f32.mxu0 0.0
        %1288 = vmatmul.mubr.f32.gmra.mrb[0].mxu0 %v1221
        %v1289 = vpop.f32.mrb[0].mxu0
        %v1290 = vadd.f32 0.0, %v1289
        %v1291 = vpop.f32.mrb[0].mxu0
        %1292 = vdwg.mxu0
        %1293 = vrot.lane.b32.xlu0 %v341, 64
        %v1294 = vpop.permute.xlu0 %1293
        %v1297 = vsel %vm363, %v1060, 0
        %1299 = vmatprep.subr.mxu0 0.0
        %1300 = vmatpush1.msra.mxu0 %v1294
        %1301 = vmatprep.subr.mxu0 0.0
        %1302 = vmatpush1.msra.mxu0 0.0
        %1303 = vmatprep.subr.mxu0 0.0
        %1304 = vmatpush1.msra.mxu0 0.0
        %1305 = vmatprep.subr.mxu0 0.0
        %1306 = vmatpush1.msra.mxu0 0.0
        %1307 = vmatprep.subr.mxu0 0.0
        %1308 = vmatpush1.msra.mxu0 0.0
        %1309 = vmatprep.subr.mxu0 0.0
        %1310 = vmatpush1.msra.mxu0 0.0
        %1311 = vmatprep.subr.mxu0 0.0
        %1312 = vmatpush1.msra.mxu0 0.0
        %1313 = vmatprep.subr.mxu0 0.0
        %1314 = vmatpush1.msra.mxu0 0.0
        %1315 = vmatprep.subr.mxu0 0.0
        %1316 = vmatpush1.msra.mxu0 0.0
        %1317 = vmatprep.subr.mxu0 0.0
        %1318 = vmatpush1.msra.mxu0 0.0
        %1319 = vmatprep.subr.mxu0 0.0
        %1320 = vmatpush1.msra.mxu0 0.0
        %1321 = vmatprep.subr.mxu0 0.0
        %1322 = vmatpush1.msra.mxu0 0.0
        %1323 = vmatprep.subr.mxu0 0.0
        %1324 = vmatpush1.msra.mxu0 0.0
        %1325 = vmatprep.subr.mxu0 0.0
        %1326 = vmatpush1.msra.mxu0 0.0
        %1327 = vmatprep.subr.mxu0 0.0
        %1328 = vmatpush1.msra.mxu0 0.0
        %1329 = vmatprep.subr.mxu0 0.0
        %1330 = vmatpush1.msra.mxu0 0.0
        %1331 = vmatprep.subr.mxu0 0.0
        %1332 = vmatpush1.msra.mxu0 0.0
        %1333 = vmatprep.subr.mxu0 0.0
        %1334 = vmatpush1.msra.mxu0 0.0
        %1335 = vmatprep.subr.mxu0 0.0
        %1336 = vmatpush1.msra.mxu0 0.0
        %1337 = vmatprep.subr.mxu0 0.0
        %1338 = vmatpush1.msra.mxu0 0.0
        %1339 = vmatprep.subr.mxu0 0.0
        %1340 = vmatpush1.msra.mxu0 0.0
        %1341 = vmatprep.subr.mxu0 0.0
        %1342 = vmatpush1.msra.mxu0 0.0
        %1343 = vmatprep.subr.mxu0 0.0
        %1344 = vmatpush1.msra.mxu0 0.0
        %1345 = vmatprep.subr.mxu0 0.0
        %1346 = vmatpush1.msra.mxu0 0.0
        %1347 = vmatprep.subr.mxu0 0.0
        %1348 = vmatpush1.msra.mxu0 0.0
        %1349 = vmatprep.subr.mxu0 0.0
        %1350 = vmatpush1.msra.mxu0 0.0
        %1351 = vmatprep.subr.mxu0 0.0
        %1352 = vmatpush1.msra.mxu0 0.0
        %1353 = vmatprep.subr.mxu0 0.0
        %1354 = vmatpush1.msra.mxu0 0.0
        %1355 = vmatprep.subr.mxu0 0.0
        %1356 = vmatpush1.msra.mxu0 0.0
        %1357 = vmatprep.subr.mxu0 0.0
        %1358 = vmatpush1.msra.mxu0 0.0
        %1359 = vmatprep.subr.mxu0 0.0
        %1360 = vmatpush1.msra.mxu0 0.0
        %1361 = vmatprep.subr.mxu0 0.0
        %1362 = vmatpush1.msra.mxu0 0.0
        %1363 = vmatprep.mubr.f32.mxu0 0.0
        %1364 = vmatmul.mubr.f32.gmra.mrb[0].mxu0 %v1297
        %v1365 = vpop.f32.mrb[0].mxu0
        %v1366 = vadd.f32 0.0, %v1365
        %v1367 = vpop.f32.mrb[0].mxu0
        %1368 = vdwg.mxu0
        %1369 = vrot.lane.b32.xlu0 %v346, 64
        %v1370 = vpop.permute.xlu0 %1369
        %v1373 = vsel %vm363, %v1061, 0
        %1375 = vmatprep.subr.mxu0 0.0
        %1376 = vmatpush1.msra.mxu0 %v1370
        %1377 = vmatprep.subr.mxu0 0.0
        %1378 = vmatpush1.msra.mxu0 0.0
        %1379 = vmatprep.subr.mxu0 0.0
        %1380 = vmatpush1.msra.mxu0 0.0
        %1381 = vmatprep.subr.mxu0 0.0
        %1382 = vmatpush1.msra.mxu0 0.0
        %1383 = vmatprep.subr.mxu0 0.0
        %1384 = vmatpush1.msra.mxu0 0.0
        %1385 = vmatprep.subr.mxu0 0.0
        %1386 = vmatpush1.msra.mxu0 0.0
        %1387 = vmatprep.subr.mxu0 0.0
        %1388 = vmatpush1.msra.mxu0 0.0
        %1389 = vmatprep.subr.mxu0 0.0
        %1390 = vmatpush1.msra.mxu0 0.0
        %1391 = vmatprep.subr.mxu0 0.0
        %1392 = vmatpush1.msra.mxu0 0.0
        %1393 = vmatprep.subr.mxu0 0.0
        %1394 = vmatpush1.msra.mxu0 0.0
        %1395 = vmatprep.subr.mxu0 0.0
        %1396 = vmatpush1.msra.mxu0 0.0
        %1397 = vmatprep.subr.mxu0 0.0
        %1398 = vmatpush1.msra.mxu0 0.0
        %1399 = vmatprep.subr.mxu0 0.0
        %1400 = vmatpush1.msra.mxu0 0.0
        %1401 = vmatprep.subr.mxu0 0.0
        %1402 = vmatpush1.msra.mxu0 0.0
        %1403 = vmatprep.subr.mxu0 0.0
        %1404 = vmatpush1.msra.mxu0 0.0
        %1405 = vmatprep.subr.mxu0 0.0
        %1406 = vmatpush1.msra.mxu0 0.0
        %1407 = vmatprep.subr.mxu0 0.0
        %1408 = vmatpush1.msra.mxu0 0.0
        %1409 = vmatprep.subr.mxu0 0.0
        %1410 = vmatpush1.msra.mxu0 0.0
        %1411 = vmatprep.subr.mxu0 0.0
        %1412 = vmatpush1.msra.mxu0 0.0
        %1413 = vmatprep.subr.mxu0 0.0
        %1414 = vmatpush1.msra.mxu0 0.0
        %1415 = vmatprep.subr.mxu0 0.0
        %1416 = vmatpush1.msra.mxu0 0.0
        %1417 = vmatprep.subr.mxu0 0.0
        %1418 = vmatpush1.msra.mxu0 0.0
        %1419 = vmatprep.subr.mxu0 0.0
        %1420 = vmatpush1.msra.mxu0 0.0
        %1421 = vmatprep.subr.mxu0 0.0
        %1422 = vmatpush1.msra.mxu0 0.0
        %1423 = vmatprep.subr.mxu0 0.0
        %1424 = vmatpush1.msra.mxu0 0.0
        %1425 = vmatprep.subr.mxu0 0.0
        %1426 = vmatpush1.msra.mxu0 0.0
        %1427 = vmatprep.subr.mxu0 0.0
        %1428 = vmatpush1.msra.mxu0 0.0
        %1429 = vmatprep.subr.mxu0 0.0
        %1430 = vmatpush1.msra.mxu0 0.0
        %1431 = vmatprep.subr.mxu0 0.0
        %1432 = vmatpush1.msra.mxu0 0.0
        %1433 = vmatprep.subr.mxu0 0.0
        %1434 = vmatpush1.msra.mxu0 0.0
        %1435 = vmatprep.subr.mxu0 0.0
        %1436 = vmatpush1.msra.mxu0 0.0
        %1437 = vmatprep.subr.mxu0 0.0
        %1438 = vmatpush1.msra.mxu0 0.0
        %1439 = vmatprep.mubr.f32.mxu0 0.0
        %1440 = vmatmul.mubr.f32.gmra.mrb[0].mxu0 %v1373
        %v1441 = vpop.f32.mrb[0].mxu0
        %v1442 = vadd.f32 0.0, %v1441
        %v1443 = vpop.f32.mrb[0].mxu0
        %1444 = vdwg.mxu0
        %1445 = vrot.lane.b32.xlu0 %v349, 64
        %v1446 = vpop.permute.xlu0 %1445
        %v1449 = vsel %vm363, %v1062, 0
        %1451 = vmatprep.subr.mxu0 0.0
        %1452 = vmatpush1.msra.mxu0 %v1446
        %1453 = vmatprep.subr.mxu0 0.0
        %1454 = vmatpush1.msra.mxu0 0.0
        %1455 = vmatprep.subr.mxu0 0.0
        %1456 = vmatpush1.msra.mxu0 0.0
        %1457 = vmatprep.subr.mxu0 0.0
        %1458 = vmatpush1.msra.mxu0 0.0
        %1459 = vmatprep.subr.mxu0 0.0
        %1460 = vmatpush1.msra.mxu0 0.0
        %1461 = vmatprep.subr.mxu0 0.0
        %1462 = vmatpush1.msra.mxu0 0.0
        %1463 = vmatprep.subr.mxu0 0.0
        %1464 = vmatpush1.msra.mxu0 0.0
        %1465 = vmatprep.subr.mxu0 0.0
        %1466 = vmatpush1.msra.mxu0 0.0
        %1467 = vmatprep.subr.mxu0 0.0
        %1468 = vmatpush1.msra.mxu0 0.0
        %1469 = vmatprep.subr.mxu0 0.0
        %1470 = vmatpush1.msra.mxu0 0.0
        %1471 = vmatprep.subr.mxu0 0.0
        %1472 = vmatpush1.msra.mxu0 0.0
        %1473 = vmatprep.subr.mxu0 0.0
        %1474 = vmatpush1.msra.mxu0 0.0
        %1475 = vmatprep.subr.mxu0 0.0
        %1476 = vmatpush1.msra.mxu0 0.0
        %1477 = vmatprep.subr.mxu0 0.0
        %1478 = vmatpush1.msra.mxu0 0.0
        %1479 = vmatprep.subr.mxu0 0.0
        %1480 = vmatpush1.msra.mxu0 0.0
        %1481 = vmatprep.subr.mxu0 0.0
        %1482 = vmatpush1.msra.mxu0 0.0
        %1483 = vmatprep.subr.mxu0 0.0
        %1484 = vmatpush1.msra.mxu0 0.0
        %1485 = vmatprep.subr.mxu0 0.0
        %1486 = vmatpush1.msra.mxu0 0.0
        %1487 = vmatprep.subr.mxu0 0.0
        %1488 = vmatpush1.msra.mxu0 0.0
        %1489 = vmatprep.subr.mxu0 0.0
        %1490 = vmatpush1.msra.mxu0 0.0
        %1491 = vmatprep.subr.mxu0 0.0
        %1492 = vmatpush1.msra.mxu0 0.0
        %1493 = vmatprep.subr.mxu0 0.0
        %1494 = vmatpush1.msra.mxu0 0.0
        %1495 = vmatprep.subr.mxu0 0.0
        %1496 = vmatpush1.msra.mxu0 0.0
        %1497 = vmatprep.subr.mxu0 0.0
        %1498 = vmatpush1.msra.mxu0 0.0
        %1499 = vmatprep.subr.mxu0 0.0
        %1500 = vmatpush1.msra.mxu0 0.0
        %1501 = vmatprep.subr.mxu0 0.0
        %1502 = vmatpush1.msra.mxu0 0.0
        %1503 = vmatprep.subr.mxu0 0.0
        %1504 = vmatpush1.msra.mxu0 0.0
        %1505 = vmatprep.subr.mxu0 0.0
        %1506 = vmatpush1.msra.mxu0 0.0
        %1507 = vmatprep.subr.mxu0 0.0
        %1508 = vmatpush1.msra.mxu0 0.0
        %1509 = vmatprep.subr.mxu0 0.0
        %1510 = vmatpush1.msra.mxu0 0.0
        %1511 = vmatprep.subr.mxu0 0.0
        %1512 = vmatpush1.msra.mxu0 0.0
        %1513 = vmatprep.subr.mxu0 0.0
        %1514 = vmatpush1.msra.mxu0 0.0
        %1515 = vmatprep.mubr.f32.mxu0 0.0
        %1516 = vmatmul.mubr.f32.gmra.mrb[0].mxu0 %v1449
        %v1517 = vpop.f32.mrb[0].mxu0
        %v1518 = vadd.f32 0.0, %v1517
        %v1519 = vpop.f32.mrb[0].mxu0
        %1520 = vdwg.mxu0
        %1521 = vrot.lane.b32.xlu0 %v354, 64
        %v1522 = vpop.permute.xlu0 %1521
        %v1525 = vsel %vm363, %v1063, 0
        %1527 = vmatprep.subr.mxu0 0.0
        %1528 = vmatpush1.msra.mxu0 %v1522
        %1529 = vmatprep.subr.mxu0 0.0
        %1530 = vmatpush1.msra.mxu0 0.0
        %1531 = vmatprep.subr.mxu0 0.0
        %1532 = vmatpush1.msra.mxu0 0.0
        %1533 = vmatprep.subr.mxu0 0.0
        %1534 = vmatpush1.msra.mxu0 0.0
        %1535 = vmatprep.subr.mxu0 0.0
        %1536 = vmatpush1.msra.mxu0 0.0
        %1537 = vmatprep.subr.mxu0 0.0
        %1538 = vmatpush1.msra.mxu0 0.0
        %1539 = vmatprep.subr.mxu0 0.0
        %1540 = vmatpush1.msra.mxu0 0.0
        %1541 = vmatprep.subr.mxu0 0.0
        %1542 = vmatpush1.msra.mxu0 0.0
        %1543 = vmatprep.subr.mxu0 0.0
        %1544 = vmatpush1.msra.mxu0 0.0
        %1545 = vmatprep.subr.mxu0 0.0
        %1546 = vmatpush1.msra.mxu0 0.0
        %1547 = vmatprep.subr.mxu0 0.0
        %1548 = vmatpush1.msra.mxu0 0.0
        %1549 = vmatprep.subr.mxu0 0.0
        %1550 = vmatpush1.msra.mxu0 0.0
        %1551 = vmatprep.subr.mxu0 0.0
        %1552 = vmatpush1.msra.mxu0 0.0
        %1553 = vmatprep.subr.mxu0 0.0
        %1554 = vmatpush1.msra.mxu0 0.0
        %1555 = vmatprep.subr.mxu0 0.0
        %1556 = vmatpush1.msra.mxu0 0.0
        %1557 = vmatprep.subr.mxu0 0.0
        %1558 = vmatpush1.msra.mxu0 0.0
        %1559 = vmatprep.subr.mxu0 0.0
        %1560 = vmatpush1.msra.mxu0 0.0
        %1561 = vmatprep.subr.mxu0 0.0
        %1562 = vmatpush1.msra.mxu0 0.0
        %1563 = vmatprep.subr.mxu0 0.0
        %1564 = vmatpush1.msra.mxu0 0.0
        %1565 = vmatprep.subr.mxu0 0.0
        %1566 = vmatpush1.msra.mxu0 0.0
        %1567 = vmatprep.subr.mxu0 0.0
        %1568 = vmatpush1.msra.mxu0 0.0
        %1569 = vmatprep.subr.mxu0 0.0
        %1570 = vmatpush1.msra.mxu0 0.0
        %1571 = vmatprep.subr.mxu0 0.0
        %1572 = vmatpush1.msra.mxu0 0.0
        %1573 = vmatprep.subr.mxu0 0.0
        %1574 = vmatpush1.msra.mxu0 0.0
        %1575 = vmatprep.subr.mxu0 0.0
        %1576 = vmatpush1.msra.mxu0 0.0
        %1577 = vmatprep.subr.mxu0 0.0
        %1578 = vmatpush1.msra.mxu0 0.0
        %1579 = vmatprep.subr.mxu0 0.0
        %1580 = vmatpush1.msra.mxu0 0.0
        %1581 = vmatprep.subr.mxu0 0.0
        %1582 = vmatpush1.msra.mxu0 0.0
        %1583 = vmatprep.subr.mxu0 0.0
        %1584 = vmatpush1.msra.mxu0 0.0
        %1585 = vmatprep.subr.mxu0 0.0
        %1586 = vmatpush1.msra.mxu0 0.0
        %1587 = vmatprep.subr.mxu0 0.0
        %1588 = vmatpush1.msra.mxu0 0.0
        %1589 = vmatprep.subr.mxu0 0.0
        %1590 = vmatpush1.msra.mxu0 0.0
        %1591 = vmatprep.mubr.f32.mxu0 0.0
        %1592 = vmatmul.mubr.f32.gmra.mrb[0].mxu0 %v1525
        %v1593 = vpop.f32.mrb[0].mxu0
        %v1594 = vadd.f32 0.0, %v1593
        %v1595 = vpop.f32.mrb[0].mxu0
        %1596 = vdwg.mxu0
        %1597 = vrot.lane.b32.xlu0 %v357, 64
        %v1598 = vpop.permute.xlu0 %1597
        %v1601 = vsel %vm363, %v1064, 0
        %1603 = vmatprep.subr.mxu0 0.0
        %1604 = vmatpush1.msra.mxu0 %v1598
        %1605 = vmatprep.subr.mxu0 0.0
        %1606 = vmatpush1.msra.mxu0 0.0
        %1607 = vmatprep.subr.mxu0 0.0
        %1608 = vmatpush1.msra.mxu0 0.0
        %1609 = vmatprep.subr.mxu0 0.0
        %1610 = vmatpush1.msra.mxu0 0.0
        %1611 = vmatprep.subr.mxu0 0.0
        %1612 = vmatpush1.msra.mxu0 0.0
        %1613 = vmatprep.subr.mxu0 0.0
        %1614 = vmatpush1.msra.mxu0 0.0
        %1615 = vmatprep.subr.mxu0 0.0
        %1616 = vmatpush1.msra.mxu0 0.0
        %1617 = vmatprep.subr.mxu0 0.0
        %1618 = vmatpush1.msra.mxu0 0.0
        %1619 = vmatprep.subr.mxu0 0.0
        %1620 = vmatpush1.msra.mxu0 0.0
        %1621 = vmatprep.subr.mxu0 0.0
        %1622 = vmatpush1.msra.mxu0 0.0
        %1623 = vmatprep.subr.mxu0 0.0
        %1624 = vmatpush1.msra.mxu0 0.0
        %1625 = vmatprep.subr.mxu0 0.0
        %1626 = vmatpush1.msra.mxu0 0.0
        %1627 = vmatprep.subr.mxu0 0.0
        %1628 = vmatpush1.msra.mxu0 0.0
        %1629 = vmatprep.subr.mxu0 0.0
        %1630 = vmatpush1.msra.mxu0 0.0
        %1631 = vmatprep.subr.mxu0 0.0
        %1632 = vmatpush1.msra.mxu0 0.0
        %1633 = vmatprep.subr.mxu0 0.0
        %1634 = vmatpush1.msra.mxu0 0.0
        %1635 = vmatprep.subr.mxu0 0.0
        %1636 = vmatpush1.msra.mxu0 0.0
        %1637 = vmatprep.subr.mxu0 0.0
        %1638 = vmatpush1.msra.mxu0 0.0
        %1639 = vmatprep.subr.mxu0 0.0
        %1640 = vmatpush1.msra.mxu0 0.0
        %1641 = vmatprep.subr.mxu0 0.0
        %1642 = vmatpush1.msra.mxu0 0.0
        %1643 = vmatprep.subr.mxu0 0.0
        %1644 = vmatpush1.msra.mxu0 0.0
        %1645 = vmatprep.subr.mxu0 0.0
        %1646 = vmatpush1.msra.mxu0 0.0
        %1647 = vmatprep.subr.mxu0 0.0
        %1648 = vmatpush1.msra.mxu0 0.0
        %1649 = vmatprep.subr.mxu0 0.0
        %1650 = vmatpush1.msra.mxu0 0.0
        %1651 = vmatprep.subr.mxu0 0.0
        %1652 = vmatpush1.msra.mxu0 0.0
        %1653 = vmatprep.subr.mxu0 0.0
        %1654 = vmatpush1.msra.mxu0 0.0
        %1655 = vmatprep.subr.mxu0 0.0
        %1656 = vmatpush1.msra.mxu0 0.0
        %1657 = vmatprep.subr.mxu0 0.0
        %1658 = vmatpush1.msra.mxu0 0.0
        %1659 = vmatprep.subr.mxu0 0.0
        %1660 = vmatpush1.msra.mxu0 0.0
        %1661 = vmatprep.subr.mxu0 0.0
        %1662 = vmatpush1.msra.mxu0 0.0
        %1663 = vmatprep.subr.mxu0 0.0
        %1664 = vmatpush1.msra.mxu0 0.0
        %1665 = vmatprep.subr.mxu0 0.0
        %1666 = vmatpush1.msra.mxu0 0.0
        %1667 = vmatprep.mubr.f32.mxu0 0.0
        %1668 = vmatmul.mubr.f32.gmra.mrb[0].mxu0 %v1601
        %v1669 = vpop.f32.mrb[0].mxu0
        %v1670 = vadd.f32 0.0, %v1669
        %v1671 = vpop.f32.mrb[0].mxu0
        %1672 = vdwg.mxu0
        %1673 = vrot.lane.b32.xlu0 %v330, 120
        %v1674 = vpop.permute.xlu0 %1673
        %1675 = vrot.lane.b32.xlu0 %v330, 88
        %v1676 = vpop.permute.xlu0 %1675
        %v1677 = vsel %vm363, %v1674, 0
        %v1679 = vsel %vm363, %v1676, 0
        %1681 = vmatprep.subr.mxu0 0.0
        %1682 = vmatpush1.xpose.msra.mxu0 %v1679
        %1683 = vmatprep.subr.mxu0 0.0
        %1684 = vmatpush1.xpose.msra.mxu0 0.0
        %1685 = vmatprep.subr.mxu0 0.0
        %1686 = vmatpush1.xpose.msra.mxu0 0.0
        %1687 = vmatprep.subr.mxu0 0.0
        %1688 = vmatpush1.xpose.msra.mxu0 0.0
        %1689 = vmatprep.subr.mxu0 0.0
        %1690 = vmatpush1.xpose.msra.mxu0 0.0
        %1691 = vmatprep.subr.mxu0 0.0
        %1692 = vmatpush1.xpose.msra.mxu0 0.0
        %1693 = vmatprep.subr.mxu0 0.0
        %1694 = vmatpush1.xpose.msra.mxu0 0.0
        %1695 = vmatprep.subr.mxu0 0.0
        %1696 = vmatpush1.xpose.msra.mxu0 0.0
        %1697 = vmatprep.subr.mxu0 0.0
        %1698 = vmatpush1.xpose.msra.mxu0 0.0
        %1699 = vmatprep.subr.mxu0 0.0
        %1700 = vmatpush1.xpose.msra.mxu0 0.0
        %1701 = vmatprep.subr.mxu0 0.0
        %1702 = vmatpush1.xpose.msra.mxu0 0.0
        %1703 = vmatprep.subr.mxu0 0.0
        %1704 = vmatpush1.xpose.msra.mxu0 0.0
        %1705 = vmatprep.subr.mxu0 0.0
        %1706 = vmatpush1.xpose.msra.mxu0 0.0
        %1707 = vmatprep.subr.mxu0 0.0
        %1708 = vmatpush1.xpose.msra.mxu0 0.0
        %1709 = vmatprep.subr.mxu0 0.0
        %1710 = vmatpush1.xpose.msra.mxu0 0.0
        %1711 = vmatprep.subr.mxu0 0.0
        %1712 = vmatpush1.xpose.msra.mxu0 0.0
        %1713 = vmatprep.subr.mxu0 0.0
        %1714 = vmatpush1.xpose.msra.mxu0 0.0
        %1715 = vmatprep.subr.mxu0 0.0
        %1716 = vmatpush1.xpose.msra.mxu0 0.0
        %1717 = vmatprep.subr.mxu0 0.0
        %1718 = vmatpush1.xpose.msra.mxu0 0.0
        %1719 = vmatprep.subr.mxu0 0.0
        %1720 = vmatpush1.xpose.msra.mxu0 0.0
        %1721 = vmatprep.subr.mxu0 0.0
        %1722 = vmatpush1.xpose.msra.mxu0 0.0
        %1723 = vmatprep.subr.mxu0 0.0
        %1724 = vmatpush1.xpose.msra.mxu0 0.0
        %1725 = vmatprep.subr.mxu0 0.0
        %1726 = vmatpush1.xpose.msra.mxu0 0.0
        %1727 = vmatprep.subr.mxu0 0.0
        %1728 = vmatpush1.xpose.msra.mxu0 0.0
        %1729 = vmatprep.subr.mxu0 0.0
        %1730 = vmatpush1.xpose.msra.mxu0 0.0
        %1731 = vmatprep.subr.mxu0 0.0
        %1732 = vmatpush1.xpose.msra.mxu0 0.0
        %1733 = vmatprep.subr.mxu0 0.0
        %1734 = vmatpush1.xpose.msra.mxu0 0.0
        %1735 = vmatprep.subr.mxu0 0.0
        %1736 = vmatpush1.xpose.msra.mxu0 0.0
        %1737 = vmatprep.subr.mxu0 0.0
        %1738 = vmatpush1.xpose.msra.mxu0 0.0
        %1739 = vmatprep.subr.mxu0 0.0
        %1740 = vmatpush1.xpose.msra.mxu0 0.0
        %1741 = vmatprep.subr.mxu0 0.0
        %1742 = vmatpush1.xpose.msra.mxu0 0.0
        %1743 = vmatprep.subr.mxu0 0.0
        %1744 = vmatpush1.xpose.msra.mxu0 0.0
        %1745 = vmatprep.mubr.f32.mxu0 0.0
        %1746 = vmatmul.mubr.f32.gmra.mrb[0].mxu0 %v1677
        %v1747 = vpop.f32.mrb[0].mxu0
        %v1748 = vadd.f32 0.0, %v1747
        %v1749 = vpop.f32.mrb[0].mxu0
        %1750 = vdwg.mxu0
        %1751 = vrot.lane.b32.xlu0 %v333, 120
        %v1752 = vpop.permute.xlu0 %1751
        %1753 = vrot.lane.b32.xlu0 %v333, 88
        %v1754 = vpop.permute.xlu0 %1753
        %v1755 = vsel %vm363, %v1752, 0
        %v1757 = vsel %vm363, %v1754, 0
        %1759 = vmatprep.subr.mxu0 0.0
        %1760 = vmatpush1.xpose.msra.mxu0 %v1757
        %1761 = vmatprep.subr.mxu0 0.0
        %1762 = vmatpush1.xpose.msra.mxu0 0.0
        %1763 = vmatprep.subr.mxu0 0.0
        %1764 = vmatpush1.xpose.msra.mxu0 0.0
        %1765 = vmatprep.subr.mxu0 0.0
        %1766 = vmatpush1.xpose.msra.mxu0 0.0
        %1767 = vmatprep.subr.mxu0 0.0
        %1768 = vmatpush1.xpose.msra.mxu0 0.0
        %1769 = vmatprep.subr.mxu0 0.0
        %1770 = vmatpush1.xpose.msra.mxu0 0.0
        %1771 = vmatprep.subr.mxu0 0.0
        %1772 = vmatpush1.xpose.msra.mxu0 0.0
        %1773 = vmatprep.subr.mxu0 0.0
        %1774 = vmatpush1.xpose.msra.mxu0 0.0
        %1775 = vmatprep.subr.mxu0 0.0
        %1776 = vmatpush1.xpose.msra.mxu0 0.0
        %1777 = vmatprep.subr.mxu0 0.0
        %1778 = vmatpush1.xpose.msra.mxu0 0.0
        %1779 = vmatprep.subr.mxu0 0.0
        %1780 = vmatpush1.xpose.msra.mxu0 0.0
        %1781 = vmatprep.subr.mxu0 0.0
        %1782 = vmatpush1.xpose.msra.mxu0 0.0
        %1783 = vmatprep.subr.mxu0 0.0
        %1784 = vmatpush1.xpose.msra.mxu0 0.0
        %1785 = vmatprep.subr.mxu0 0.0
        %1786 = vmatpush1.xpose.msra.mxu0 0.0
        %1787 = vmatprep.subr.mxu0 0.0
        %1788 = vmatpush1.xpose.msra.mxu0 0.0
        %1789 = vmatprep.subr.mxu0 0.0
        %1790 = vmatpush1.xpose.msra.mxu0 0.0
        %1791 = vmatprep.subr.mxu0 0.0
        %1792 = vmatpush1.xpose.msra.mxu0 0.0
        %1793 = vmatprep.subr.mxu0 0.0
        %1794 = vmatpush1.xpose.msra.mxu0 0.0
        %1795 = vmatprep.subr.mxu0 0.0
        %1796 = vmatpush1.xpose.msra.mxu0 0.0
        %1797 = vmatprep.subr.mxu0 0.0
        %1798 = vmatpush1.xpose.msra.mxu0 0.0
        %1799 = vmatprep.subr.mxu0 0.0
        %1800 = vmatpush1.xpose.msra.mxu0 0.0
        %1801 = vmatprep.subr.mxu0 0.0
        %1802 = vmatpush1.xpose.msra.mxu0 0.0
        %1803 = vmatprep.subr.mxu0 0.0
        %1804 = vmatpush1.xpose.msra.mxu0 0.0
        %1805 = vmatprep.subr.mxu0 0.0
        %1806 = vmatpush1.xpose.msra.mxu0 0.0
        %1807 = vmatprep.subr.mxu0 0.0
        %1808 = vmatpush1.xpose.msra.mxu0 0.0
        %1809 = vmatprep.subr.mxu0 0.0
        %1810 = vmatpush1.xpose.msra.mxu0 0.0
        %1811 = vmatprep.subr.mxu0 0.0
        %1812 = vmatpush1.xpose.msra.mxu0 0.0
        %1813 = vmatprep.subr.mxu0 0.0
        %1814 = vmatpush1.xpose.msra.mxu0 0.0
        %1815 = vmatprep.subr.mxu0 0.0
        %1816 = vmatpush1.xpose.msra.mxu0 0.0
        %1817 = vmatprep.subr.mxu0 0.0
        %1818 = vmatpush1.xpose.msra.mxu0 0.0
        %1819 = vmatprep.subr.mxu0 0.0
        %1820 = vmatpush1.xpose.msra.mxu0 0.0
        %1821 = vmatprep.subr.mxu0 0.0
        %1822 = vmatpush1.xpose.msra.mxu0 0.0
        %1823 = vmatprep.mubr.f32.mxu0 0.0
        %1824 = vmatmul.mubr.f32.gmra.mrb[0].mxu0 %v1755
        %v1825 = vpop.f32.mrb[0].mxu0
        %v1826 = vadd.f32 0.0, %v1825
        %v1827 = vpop.f32.mrb[0].mxu0
        %1828 = vdwg.mxu0
        %1829 = vrot.lane.b32.xlu0 %v338, 120
        %v1830 = vpop.permute.xlu0 %1829
        %1831 = vrot.lane.b32.xlu0 %v338, 88
        %v1832 = vpop.permute.xlu0 %1831
        %v1833 = vsel %vm363, %v1830, 0
        %v1835 = vsel %vm363, %v1832, 0
        %1837 = vmatprep.subr.mxu0 0.0
        %1838 = vmatpush1.xpose.msra.mxu0 %v1835
        %1839 = vmatprep.subr.mxu0 0.0
        %1840 = vmatpush1.xpose.msra.mxu0 0.0
        %1841 = vmatprep.subr.mxu0 0.0
        %1842 = vmatpush1.xpose.msra.mxu0 0.0
        %1843 = vmatprep.subr.mxu0 0.0
        %1844 = vmatpush1.xpose.msra.mxu0 0.0
        %1845 = vmatprep.subr.mxu0 0.0
        %1846 = vmatpush1.xpose.msra.mxu0 0.0
        %1847 = vmatprep.subr.mxu0 0.0
        %1848 = vmatpush1.xpose.msra.mxu0 0.0
        %1849 = vmatprep.subr.mxu0 0.0
        %1850 = vmatpush1.xpose.msra.mxu0 0.0
        %1851 = vmatprep.subr.mxu0 0.0
        %1852 = vmatpush1.xpose.msra.mxu0 0.0
        %1853 = vmatprep.subr.mxu0 0.0
        %1854 = vmatpush1.xpose.msra.mxu0 0.0
        %1855 = vmatprep.subr.mxu0 0.0
        %1856 = vmatpush1.xpose.msra.mxu0 0.0
        %1857 = vmatprep.subr.mxu0 0.0
        %1858 = vmatpush1.xpose.msra.mxu0 0.0
        %1859 = vmatprep.subr.mxu0 0.0
        %1860 = vmatpush1.xpose.msra.mxu0 0.0
        %1861 = vmatprep.subr.mxu0 0.0
        %1862 = vmatpush1.xpose.msra.mxu0 0.0
        %1863 = vmatprep.subr.mxu0 0.0
        %1864 = vmatpush1.xpose.msra.mxu0 0.0
        %1865 = vmatprep.subr.mxu0 0.0
        %1866 = vmatpush1.xpose.msra.mxu0 0.0
        %1867 = vmatprep.subr.mxu0 0.0
        %1868 = vmatpush1.xpose.msra.mxu0 0.0
        %1869 = vmatprep.subr.mxu0 0.0
        %1870 = vmatpush1.xpose.msra.mxu0 0.0
        %1871 = vmatprep.subr.mxu0 0.0
        %1872 = vmatpush1.xpose.msra.mxu0 0.0
        %1873 = vmatprep.subr.mxu0 0.0
        %1874 = vmatpush1.xpose.msra.mxu0 0.0
        %1875 = vmatprep.subr.mxu0 0.0
        %1876 = vmatpush1.xpose.msra.mxu0 0.0
        %1877 = vmatprep.subr.mxu0 0.0
        %1878 = vmatpush1.xpose.msra.mxu0 0.0
        %1879 = vmatprep.subr.mxu0 0.0
        %1880 = vmatpush1.xpose.msra.mxu0 0.0
        %1881 = vmatprep.subr.mxu0 0.0
        %1882 = vmatpush1.xpose.msra.mxu0 0.0
        %1883 = vmatprep.subr.mxu0 0.0
        %1884 = vmatpush1.xpose.msra.mxu0 0.0
        %1885 = vmatprep.subr.mxu0 0.0
        %1886 = vmatpush1.xpose.msra.mxu0 0.0
        %1887 = vmatprep.subr.mxu0 0.0
        %1888 = vmatpush1.xpose.msra.mxu0 0.0
        %1889 = vmatprep.subr.mxu0 0.0
        %1890 = vmatpush1.xpose.msra.mxu0 0.0
        %1891 = vmatprep.subr.mxu0 0.0
        %1892 = vmatpush1.xpose.msra.mxu0 0.0
        %1893 = vmatprep.subr.mxu0 0.0
        %1894 = vmatpush1.xpose.msra.mxu0 0.0
        %1895 = vmatprep.subr.mxu0 0.0
        %1896 = vmatpush1.xpose.msra.mxu0 0.0
        %1897 = vmatprep.subr.mxu0 0.0
        %1898 = vmatpush1.xpose.msra.mxu0 0.0
        %1899 = vmatprep.subr.mxu0 0.0
        %1900 = vmatpush1.xpose.msra.mxu0 0.0
        %1901 = vmatprep.mubr.f32.mxu0 0.0
        %1902 = vmatmul.mubr.f32.gmra.mrb[0].mxu0 %v1833
        %v1903 = vpop.f32.mrb[0].mxu0
        %v1904 = vadd.f32 0.0, %v1903
        %v1905 = vpop.f32.mrb[0].mxu0
        %1906 = vdwg.mxu0
        %1907 = vrot.lane.b32.xlu0 %v341, 120
        %v1908 = vpop.permute.xlu0 %1907
        %1909 = vrot.lane.b32.xlu0 %v341, 88
        %v1910 = vpop.permute.xlu0 %1909
        %v1911 = vsel %vm363, %v1908, 0
        %v1913 = vsel %vm363, %v1910, 0
        %1915 = vmatprep.subr.mxu0 0.0
        %1916 = vmatpush1.xpose.msra.mxu0 %v1913
        %1917 = vmatprep.subr.mxu0 0.0
        %1918 = vmatpush1.xpose.msra.mxu0 0.0
        %1919 = vmatprep.subr.mxu0 0.0
        %1920 = vmatpush1.xpose.msra.mxu0 0.0
        %1921 = vmatprep.subr.mxu0 0.0
        %1922 = vmatpush1.xpose.msra.mxu0 0.0
        %1923 = vmatprep.subr.mxu0 0.0
        %1924 = vmatpush1.xpose.msra.mxu0 0.0
        %1925 = vmatprep.subr.mxu0 0.0
        %1926 = vmatpush1.xpose.msra.mxu0 0.0
        %1927 = vmatprep.subr.mxu0 0.0
        %1928 = vmatpush1.xpose.msra.mxu0 0.0
        %1929 = vmatprep.subr.mxu0 0.0
        %1930 = vmatpush1.xpose.msra.mxu0 0.0
        %1931 = vmatprep.subr.mxu0 0.0
        %1932 = vmatpush1.xpose.msra.mxu0 0.0
        %1933 = vmatprep.subr.mxu0 0.0
        %1934 = vmatpush1.xpose.msra.mxu0 0.0
        %1935 = vmatprep.subr.mxu0 0.0
        %1936 = vmatpush1.xpose.msra.mxu0 0.0
        %1937 = vmatprep.subr.mxu0 0.0
        %1938 = vmatpush1.xpose.msra.mxu0 0.0
        %1939 = vmatprep.subr.mxu0 0.0
        %1940 = vmatpush1.xpose.msra.mxu0 0.0
        %1941 = vmatprep.subr.mxu0 0.0
        %1942 = vmatpush1.xpose.msra.mxu0 0.0
        %1943 = vmatprep.subr.mxu0 0.0
        %1944 = vmatpush1.xpose.msra.mxu0 0.0
        %1945 = vmatprep.subr.mxu0 0.0
        %1946 = vmatpush1.xpose.msra.mxu0 0.0
        %1947 = vmatprep.subr.mxu0 0.0
        %1948 = vmatpush1.xpose.msra.mxu0 0.0
        %1949 = vmatprep.subr.mxu0 0.0
        %1950 = vmatpush1.xpose.msra.mxu0 0.0
        %1951 = vmatprep.subr.mxu0 0.0
        %1952 = vmatpush1.xpose.msra.mxu0 0.0
        %1953 = vmatprep.subr.mxu0 0.0
        %1954 = vmatpush1.xpose.msra.mxu0 0.0
        %1955 = vmatprep.subr.mxu0 0.0
        %1956 = vmatpush1.xpose.msra.mxu0 0.0
        %1957 = vmatprep.subr.mxu0 0.0
        %1958 = vmatpush1.xpose.msra.mxu0 0.0
        %1959 = vmatprep.subr.mxu0 0.0
        %1960 = vmatpush1.xpose.msra.mxu0 0.0
        %1961 = vmatprep.subr.mxu0 0.0
        %1962 = vmatpush1.xpose.msra.mxu0 0.0
        %1963 = vmatprep.subr.mxu0 0.0
        %1964 = vmatpush1.xpose.msra.mxu0 0.0
        %1965 = vmatprep.subr.mxu0 0.0
        %1966 = vmatpush1.xpose.msra.mxu0 0.0
        %1967 = vmatprep.subr.mxu0 0.0
        %1968 = vmatpush1.xpose.msra.mxu0 0.0
        %1969 = vmatprep.subr.mxu0 0.0
        %1970 = vmatpush1.xpose.msra.mxu0 0.0
        %1971 = vmatprep.subr.mxu0 0.0
        %1972 = vmatpush1.xpose.msra.mxu0 0.0
        %1973 = vmatprep.subr.mxu0 0.0
        %1974 = vmatpush1.xpose.msra.mxu0 0.0
        %1975 = vmatprep.subr.mxu0 0.0
        %1976 = vmatpush1.xpose.msra.mxu0 0.0
        %1977 = vmatprep.subr.mxu0 0.0
        %1978 = vmatpush1.xpose.msra.mxu0 0.0
        %1979 = vmatprep.mubr.f32.mxu0 0.0
        %1980 = vmatmul.mubr.f32.gmra.mrb[0].mxu0 %v1911
        %v1981 = vpop.f32.mrb[0].mxu0
        %v1982 = vadd.f32 0.0, %v1981
        %v1983 = vpop.f32.mrb[0].mxu0
        %1984 = vdwg.mxu0
        %1985 = vrot.lane.b32.xlu0 %v346, 120
        %v1986 = vpop.permute.xlu0 %1985
        %1987 = vrot.lane.b32.xlu0 %v346, 88
        %v1988 = vpop.permute.xlu0 %1987
        %v1989 = vsel %vm363, %v1986, 0
        %v1991 = vsel %vm363, %v1988, 0
        %1993 = vmatprep.subr.mxu0 0.0
        %1994 = vmatpush1.xpose.msra.mxu0 %v1991
        %1995 = vmatprep.subr.mxu0 0.0
        %1996 = vmatpush1.xpose.msra.mxu0 0.0
        %1997 = vmatprep.subr.mxu0 0.0
        %1998 = vmatpush1.xpose.msra.mxu0 0.0
        %1999 = vmatprep.subr.mxu0 0.0
        %2000 = vmatpush1.xpose.msra.mxu0 0.0
        %2001 = vmatprep.subr.mxu0 0.0
        %2002 = vmatpush1.xpose.msra.mxu0 0.0
        %2003 = vmatprep.subr.mxu0 0.0
        %2004 = vmatpush1.xpose.msra.mxu0 0.0
        %2005 = vmatprep.subr.mxu0 0.0
        %2006 = vmatpush1.xpose.msra.mxu0 0.0
        %2007 = vmatprep.subr.mxu0 0.0
        %2008 = vmatpush1.xpose.msra.mxu0 0.0
        %2009 = vmatprep.subr.mxu0 0.0
        %2010 = vmatpush1.xpose.msra.mxu0 0.0
        %2011 = vmatprep.subr.mxu0 0.0
        %2012 = vmatpush1.xpose.msra.mxu0 0.0
        %2013 = vmatprep.subr.mxu0 0.0
        %2014 = vmatpush1.xpose.msra.mxu0 0.0
        %2015 = vmatprep.subr.mxu0 0.0
        %2016 = vmatpush1.xpose.msra.mxu0 0.0
        %2017 = vmatprep.subr.mxu0 0.0
        %2018 = vmatpush1.xpose.msra.mxu0 0.0
        %2019 = vmatprep.subr.mxu0 0.0
        %2020 = vmatpush1.xpose.msra.mxu0 0.0
        %2021 = vmatprep.subr.mxu0 0.0
        %2022 = vmatpush1.xpose.msra.mxu0 0.0
        %2023 = vmatprep.subr.mxu0 0.0
        %2024 = vmatpush1.xpose.msra.mxu0 0.0
        %2025 = vmatprep.subr.mxu0 0.0
        %2026 = vmatpush1.xpose.msra.mxu0 0.0
        %2027 = vmatprep.subr.mxu0 0.0
        %2028 = vmatpush1.xpose.msra.mxu0 0.0
        %2029 = vmatprep.subr.mxu0 0.0
        %2030 = vmatpush1.xpose.msra.mxu0 0.0
        %2031 = vmatprep.subr.mxu0 0.0
        %2032 = vmatpush1.xpose.msra.mxu0 0.0
        %2033 = vmatprep.subr.mxu0 0.0
        %2034 = vmatpush1.xpose.msra.mxu0 0.0
        %2035 = vmatprep.subr.mxu0 0.0
        %2036 = vmatpush1.xpose.msra.mxu0 0.0
        %2037 = vmatprep.subr.mxu0 0.0
        %2038 = vmatpush1.xpose.msra.mxu0 0.0
        %2039 = vmatprep.subr.mxu0 0.0
        %2040 = vmatpush1.xpose.msra.mxu0 0.0
        %2041 = vmatprep.subr.mxu0 0.0
        %2042 = vmatpush1.xpose.msra.mxu0 0.0
        %2043 = vmatprep.subr.mxu0 0.0
        %2044 = vmatpush1.xpose.msra.mxu0 0.0
        %2045 = vmatprep.subr.mxu0 0.0
        %2046 = vmatpush1.xpose.msra.mxu0 0.0
        %2047 = vmatprep.subr.mxu0 0.0
        %2048 = vmatpush1.xpose.msra.mxu0 0.0
        %2049 = vmatprep.subr.mxu0 0.0
        %2050 = vmatpush1.xpose.msra.mxu0 0.0
        %2051 = vmatprep.subr.mxu0 0.0
        %2052 = vmatpush1.xpose.msra.mxu0 0.0
        %2053 = vmatprep.subr.mxu0 0.0
        %2054 = vmatpush1.xpose.msra.mxu0 0.0
        %2055 = vmatprep.subr.mxu0 0.0
        %2056 = vmatpush1.xpose.msra.mxu0 0.0
        %2057 = vmatprep.mubr.f32.mxu0 0.0
        %2058 = vmatmul.mubr.f32.gmra.mrb[0].mxu0 %v1989
        %v2059 = vpop.f32.mrb[0].mxu0
        %v2060 = vadd.f32 0.0, %v2059
        %v2061 = vpop.f32.mrb[0].mxu0
        %2062 = vdwg.mxu0
        %2063 = vrot.lane.b32.xlu0 %v349, 120
        %v2064 = vpop.permute.xlu0 %2063
        %2065 = vrot.lane.b32.xlu0 %v349, 88
        %v2066 = vpop.permute.xlu0 %2065
        %v2067 = vsel %vm363, %v2064, 0
        %v2069 = vsel %vm363, %v2066, 0
        %2071 = vmatprep.subr.mxu0 0.0
        %2072 = vmatpush1.xpose.msra.mxu0 %v2069
        %2073 = vmatprep.subr.mxu0 0.0
        %2074 = vmatpush1.xpose.msra.mxu0 0.0
        %2075 = vmatprep.subr.mxu0 0.0
        %2076 = vmatpush1.xpose.msra.mxu0 0.0
        %2077 = vmatprep.subr.mxu0 0.0
        %2078 = vmatpush1.xpose.msra.mxu0 0.0
        %2079 = vmatprep.subr.mxu0 0.0
        %2080 = vmatpush1.xpose.msra.mxu0 0.0
        %2081 = vmatprep.subr.mxu0 0.0
        %2082 = vmatpush1.xpose.msra.mxu0 0.0
        %2083 = vmatprep.subr.mxu0 0.0
        %2084 = vmatpush1.xpose.msra.mxu0 0.0
        %2085 = vmatprep.subr.mxu0 0.0
        %2086 = vmatpush1.xpose.msra.mxu0 0.0
        %2087 = vmatprep.subr.mxu0 0.0
        %2088 = vmatpush1.xpose.msra.mxu0 0.0
        %2089 = vmatprep.subr.mxu0 0.0
        %2090 = vmatpush1.xpose.msra.mxu0 0.0
        %2091 = vmatprep.subr.mxu0 0.0
        %2092 = vmatpush1.xpose.msra.mxu0 0.0
        %2093 = vmatprep.subr.mxu0 0.0
        %2094 = vmatpush1.xpose.msra.mxu0 0.0
        %2095 = vmatprep.subr.mxu0 0.0
        %2096 = vmatpush1.xpose.msra.mxu0 0.0
        %2097 = vmatprep.subr.mxu0 0.0
        %2098 = vmatpush1.xpose.msra.mxu0 0.0
        %2099 = vmatprep.subr.mxu0 0.0
        %2100 = vmatpush1.xpose.msra.mxu0 0.0
        %2101 = vmatprep.subr.mxu0 0.0
        %2102 = vmatpush1.xpose.msra.mxu0 0.0
        %2103 = vmatprep.subr.mxu0 0.0
        %2104 = vmatpush1.xpose.msra.mxu0 0.0
        %2105 = vmatprep.subr.mxu0 0.0
        %2106 = vmatpush1.xpose.msra.mxu0 0.0
        %2107 = vmatprep.subr.mxu0 0.0
        %2108 = vmatpush1.xpose.msra.mxu0 0.0
        %2109 = vmatprep.subr.mxu0 0.0
        %2110 = vmatpush1.xpose.msra.mxu0 0.0
        %2111 = vmatprep.subr.mxu0 0.0
        %2112 = vmatpush1.xpose.msra.mxu0 0.0
        %2113 = vmatprep.subr.mxu0 0.0
        %2114 = vmatpush1.xpose.msra.mxu0 0.0
        %2115 = vmatprep.subr.mxu0 0.0
        %2116 = vmatpush1.xpose.msra.mxu0 0.0
        %2117 = vmatprep.subr.mxu0 0.0
        %2118 = vmatpush1.xpose.msra.mxu0 0.0
        %2119 = vmatprep.subr.mxu0 0.0
        %2120 = vmatpush1.xpose.msra.mxu0 0.0
        %2121 = vmatprep.subr.mxu0 0.0
        %2122 = vmatpush1.xpose.msra.mxu0 0.0
        %2123 = vmatprep.subr.mxu0 0.0
        %2124 = vmatpush1.xpose.msra.mxu0 0.0
        %2125 = vmatprep.subr.mxu0 0.0
        %2126 = vmatpush1.xpose.msra.mxu0 0.0
        %2127 = vmatprep.subr.mxu0 0.0
        %2128 = vmatpush1.xpose.msra.mxu0 0.0
        %2129 = vmatprep.subr.mxu0 0.0
        %2130 = vmatpush1.xpose.msra.mxu0 0.0
        %2131 = vmatprep.subr.mxu0 0.0
        %2132 = vmatpush1.xpose.msra.mxu0 0.0
        %2133 = vmatprep.subr.mxu0 0.0
        %2134 = vmatpush1.xpose.msra.mxu0 0.0
        %2135 = vmatprep.mubr.f32.mxu0 0.0
        %2136 = vmatmul.mubr.f32.gmra.mrb[0].mxu0 %v2067
        %v2137 = vpop.f32.mrb[0].mxu0
        %v2138 = vadd.f32 0.0, %v2137
        %v2139 = vpop.f32.mrb[0].mxu0
        %2140 = vdwg.mxu0
        %2141 = vrot.lane.b32.xlu0 %v354, 120
        %v2142 = vpop.permute.xlu0 %2141
        %2143 = vrot.lane.b32.xlu0 %v354, 88
        %v2144 = vpop.permute.xlu0 %2143
        %v2145 = vsel %vm363, %v2142, 0
        %v2147 = vsel %vm363, %v2144, 0
        %2149 = vmatprep.subr.mxu0 0.0
        %2150 = vmatpush1.xpose.msra.mxu0 %v2147
        %2151 = vmatprep.subr.mxu0 0.0
        %2152 = vmatpush1.xpose.msra.mxu0 0.0
        %2153 = vmatprep.subr.mxu0 0.0
        %2154 = vmatpush1.xpose.msra.mxu0 0.0
        %2155 = vmatprep.subr.mxu0 0.0
        %2156 = vmatpush1.xpose.msra.mxu0 0.0
        %2157 = vmatprep.subr.mxu0 0.0
        %2158 = vmatpush1.xpose.msra.mxu0 0.0
        %2159 = vmatprep.subr.mxu0 0.0
        %2160 = vmatpush1.xpose.msra.mxu0 0.0
        %2161 = vmatprep.subr.mxu0 0.0
        %2162 = vmatpush1.xpose.msra.mxu0 0.0
        %2163 = vmatprep.subr.mxu0 0.0
        %2164 = vmatpush1.xpose.msra.mxu0 0.0
        %2165 = vmatprep.subr.mxu0 0.0
        %2166 = vmatpush1.xpose.msra.mxu0 0.0
        %2167 = vmatprep.subr.mxu0 0.0
        %2168 = vmatpush1.xpose.msra.mxu0 0.0
        %2169 = vmatprep.subr.mxu0 0.0
        %2170 = vmatpush1.xpose.msra.mxu0 0.0
        %2171 = vmatprep.subr.mxu0 0.0
        %2172 = vmatpush1.xpose.msra.mxu0 0.0
        %2173 = vmatprep.subr.mxu0 0.0
        %2174 = vmatpush1.xpose.msra.mxu0 0.0
        %2175 = vmatprep.subr.mxu0 0.0
        %2176 = vmatpush1.xpose.msra.mxu0 0.0
        %2177 = vmatprep.subr.mxu0 0.0
        %2178 = vmatpush1.xpose.msra.mxu0 0.0
        %2179 = vmatprep.subr.mxu0 0.0
        %2180 = vmatpush1.xpose.msra.mxu0 0.0
        %2181 = vmatprep.subr.mxu0 0.0
        %2182 = vmatpush1.xpose.msra.mxu0 0.0
        %2183 = vmatprep.subr.mxu0 0.0
        %2184 = vmatpush1.xpose.msra.mxu0 0.0
        %2185 = vmatprep.subr.mxu0 0.0
        %2186 = vmatpush1.xpose.msra.mxu0 0.0
        %2187 = vmatprep.subr.mxu0 0.0
        %2188 = vmatpush1.xpose.msra.mxu0 0.0
        %2189 = vmatprep.subr.mxu0 0.0
        %2190 = vmatpush1.xpose.msra.mxu0 0.0
        %2191 = vmatprep.subr.mxu0 0.0
        %2192 = vmatpush1.xpose.msra.mxu0 0.0
        %2193 = vmatprep.subr.mxu0 0.0
        %2194 = vmatpush1.xpose.msra.mxu0 0.0
        %2195 = vmatprep.subr.mxu0 0.0
        %2196 = vmatpush1.xpose.msra.mxu0 0.0
        %2197 = vmatprep.subr.mxu0 0.0
        %2198 = vmatpush1.xpose.msra.mxu0 0.0
        %2199 = vmatprep.subr.mxu0 0.0
        %2200 = vmatpush1.xpose.msra.mxu0 0.0
        %2201 = vmatprep.subr.mxu0 0.0
        %2202 = vmatpush1.xpose.msra.mxu0 0.0
        %2203 = vmatprep.subr.mxu0 0.0
        %2204 = vmatpush1.xpose.msra.mxu0 0.0
        %2205 = vmatprep.subr.mxu0 0.0
        %2206 = vmatpush1.xpose.msra.mxu0 0.0
        %2207 = vmatprep.subr.mxu0 0.0
        %2208 = vmatpush1.xpose.msra.mxu0 0.0
        %2209 = vmatprep.subr.mxu0 0.0
        %2210 = vmatpush1.xpose.msra.mxu0 0.0
        %2211 = vmatprep.subr.mxu0 0.0
        %2212 = vmatpush1.xpose.msra.mxu0 0.0
        %2213 = vmatprep.mubr.f32.mxu0 0.0
        %2214 = vmatmul.mubr.f32.gmra.mrb[0].mxu0 %v2145
        %v2215 = vpop.f32.mrb[0].mxu0
        %v2216 = vadd.f32 0.0, %v2215
        %v2217 = vpop.f32.mrb[0].mxu0
        %2218 = vdwg.mxu0
        %2219 = vrot.lane.b32.xlu0 %v357, 120
        %v2220 = vpop.permute.xlu0 %2219
        %2221 = vrot.lane.b32.xlu0 %v357, 88
        %v2222 = vpop.permute.xlu0 %2221
        %v2223 = vsel %vm363, %v2220, 0
        %v2225 = vsel %vm363, %v2222, 0
        %2227 = vmatprep.subr.mxu0 0.0
        %2228 = vmatpush1.xpose.msra.mxu0 %v2225
        %2229 = vmatprep.subr.mxu0 0.0
        %2230 = vmatpush1.xpose.msra.mxu0 0.0
        %2231 = vmatprep.subr.mxu0 0.0
        %2232 = vmatpush1.xpose.msra.mxu0 0.0
        %2233 = vmatprep.subr.mxu0 0.0
        %2234 = vmatpush1.xpose.msra.mxu0 0.0
        %2235 = vmatprep.subr.mxu0 0.0
        %2236 = vmatpush1.xpose.msra.mxu0 0.0
        %2237 = vmatprep.subr.mxu0 0.0
        %2238 = vmatpush1.xpose.msra.mxu0 0.0
        %2239 = vmatprep.subr.mxu0 0.0
        %2240 = vmatpush1.xpose.msra.mxu0 0.0
        %2241 = vmatprep.subr.mxu0 0.0
        %2242 = vmatpush1.xpose.msra.mxu0 0.0
        %2243 = vmatprep.subr.mxu0 0.0
        %2244 = vmatpush1.xpose.msra.mxu0 0.0
        %2245 = vmatprep.subr.mxu0 0.0
        %2246 = vmatpush1.xpose.msra.mxu0 0.0
        %2247 = vmatprep.subr.mxu0 0.0
        %2248 = vmatpush1.xpose.msra.mxu0 0.0
        %2249 = vmatprep.subr.mxu0 0.0
        %2250 = vmatpush1.xpose.msra.mxu0 0.0
        %2251 = vmatprep.subr.mxu0 0.0
        %2252 = vmatpush1.xpose.msra.mxu0 0.0
        %2253 = vmatprep.subr.mxu0 0.0
        %2254 = vmatpush1.xpose.msra.mxu0 0.0
        %2255 = vmatprep.subr.mxu0 0.0
        %2256 = vmatpush1.xpose.msra.mxu0 0.0
        %2257 = vmatprep.subr.mxu0 0.0
        %2258 = vmatpush1.xpose.msra.mxu0 0.0
        %2259 = vmatprep.subr.mxu0 0.0
        %2260 = vmatpush1.xpose.msra.mxu0 0.0
        %2261 = vmatprep.subr.mxu0 0.0
        %2262 = vmatpush1.xpose.msra.mxu0 0.0
        %2263 = vmatprep.subr.mxu0 0.0
        %2264 = vmatpush1.xpose.msra.mxu0 0.0
        %2265 = vmatprep.subr.mxu0 0.0
        %2266 = vmatpush1.xpose.msra.mxu0 0.0
        %2267 = vmatprep.subr.mxu0 0.0
        %2268 = vmatpush1.xpose.msra.mxu0 0.0
        %2269 = vmatprep.subr.mxu0 0.0
        %2270 = vmatpush1.xpose.msra.mxu0 0.0
        %2271 = vmatprep.subr.mxu0 0.0
        %2272 = vmatpush1.xpose.msra.mxu0 0.0
        %2273 = vmatprep.subr.mxu0 0.0
        %2274 = vmatpush1.xpose.msra.mxu0 0.0
        %2275 = vmatprep.subr.mxu0 0.0
        %2276 = vmatpush1.xpose.msra.mxu0 0.0
        %2277 = vmatprep.subr.mxu0 0.0
        %2278 = vmatpush1.xpose.msra.mxu0 0.0
        %2279 = vmatprep.subr.mxu0 0.0
        %2280 = vmatpush1.xpose.msra.mxu0 0.0
        %2281 = vmatprep.subr.mxu0 0.0
        %2282 = vmatpush1.xpose.msra.mxu0 0.0
        %2283 = vmatprep.subr.mxu0 0.0
        %2284 = vmatpush1.xpose.msra.mxu0 0.0
        %2285 = vmatprep.subr.mxu0 0.0
        %2286 = vmatpush1.xpose.msra.mxu0 0.0
        %2287 = vmatprep.subr.mxu0 0.0
        %2288 = vmatpush1.xpose.msra.mxu0 0.0
        %2289 = vmatprep.subr.mxu0 0.0
        %2290 = vmatpush1.xpose.msra.mxu0 0.0
        %2291 = vmatprep.mubr.f32.mxu0 0.0
        %2292 = vmatmul.mubr.f32.gmra.mrb[0].mxu0 %v2223
        %v2293 = vpop.f32.mrb[0].mxu0
        %v2294 = vadd.f32 0.0, %v2293
        %v2295 = vpop.f32.mrb[0].mxu0
        %2296 = vdwg.mxu0
        %v2297 = vsel %vm363, %v1748, -inf
        %2298 = vmax.xlane.f32.xlu0 %v2297
        %v2299 = vpop.xlane.xlu0 %2298
        %v2300 = vsel %vm363, %v1826, -inf
        %2301 = vmax.xlane.f32.xlu0 %v2300
        %v2302 = vpop.xlane.xlu0 %2301
        %v2303 = vsel %vm363, %v1904, -inf
        %2304 = vmax.xlane.f32.xlu0 %v2303
        %v2305 = vpop.xlane.xlu0 %2304
        %v2306 = vsel %vm363, %v1982, -inf
        %2307 = vmax.xlane.f32.xlu0 %v2306
        %v2308 = vpop.xlane.xlu0 %2307
        %v2309 = vsel %vm363, %v2060, -inf
        %2310 = vmax.xlane.f32.xlu0 %v2309
        %v2311 = vpop.xlane.xlu0 %2310
        %v2312 = vsel %vm363, %v2138, -inf
        %2313 = vmax.xlane.f32.xlu0 %v2312
        %v2314 = vpop.xlane.xlu0 %2313
        %v2315 = vsel %vm363, %v2216, -inf
        %2316 = vmax.xlane.f32.xlu0 %v2315
        %v2317 = vpop.xlane.xlu0 %2316
        %v2318 = vsel %vm363, %v2294, -inf
        %2319 = vmax.xlane.f32.xlu0 %v2318
        %v2320 = vpop.xlane.xlu0 %2319
        %v2321 = vsub.f32 %v1748, %v2299
        %v2322 = vsub.f32 %v1826, %v2302
        %v2323 = vsub.f32 %v1904, %v2305
        %v2324 = vsub.f32 %v1982, %v2308
        %v2325 = vsub.f32 %v2060, %v2311
        %v2326 = vsub.f32 %v2138, %v2314
        %v2327 = vsub.f32 %v2216, %v2317
        %v2328 = vsub.f32 %v2294, %v2320
        %v2329 = vmul.f32 %v2321, 1.442695
        %v2330 = vpow.pop %v2329
        %v2331 = vmul.f32 %v2322, 1.442695
        %v2332 = vpow.pop %v2331
        %v2333 = vmul.f32 %v2323, 1.442695
        %v2334 = vpow.pop %v2333
        %v2335 = vmul.f32 %v2324, 1.442695
        %v2336 = vpow.pop %v2335
        %v2337 = vmul.f32 %v2325, 1.442695
        %v2338 = vpow.pop %v2337
        %v2339 = vmul.f32 %v2326, 1.442695
        %v2340 = vpow.pop %v2339
        %v2341 = vmul.f32 %v2327, 1.442695
        %v2342 = vpow.pop %v2341
        %v2343 = vmul.f32 %v2328, 1.442695
        %v2344 = vpow.pop %v2343
        %v2345 = vsel %vm363, %v2330, 0.0
        %2346 = vadd.xlane.f32.xlu0 %v2345
        %v2347 = vpop.xlane.xlu0 %2346
        %v2348 = vsel %vm363, %v2332, 0.0
        %2349 = vadd.xlane.f32.xlu0 %v2348
        %v2350 = vpop.xlane.xlu0 %2349
        %v2351 = vsel %vm363, %v2334, 0.0
        %2352 = vadd.xlane.f32.xlu0 %v2351
        %v2353 = vpop.xlane.xlu0 %2352
        %v2354 = vsel %vm363, %v2336, 0.0
        %2355 = vadd.xlane.f32.xlu0 %v2354
        %v2356 = vpop.xlane.xlu0 %2355
        %v2357 = vsel %vm363, %v2338, 0.0
        %2358 = vadd.xlane.f32.xlu0 %v2357
        %v2359 = vpop.xlane.xlu0 %2358
        %v2360 = vsel %vm363, %v2340, 0.0
        %2361 = vadd.xlane.f32.xlu0 %v2360
        %v2362 = vpop.xlane.xlu0 %2361
        %v2363 = vsel %vm363, %v2342, 0.0
        %2364 = vadd.xlane.f32.xlu0 %v2363
        %v2365 = vpop.xlane.xlu0 %2364
        %v2366 = vsel %vm363, %v2344, 0.0
        %2367 = vadd.xlane.f32.xlu0 %v2366
        %v2368 = vpop.xlane.xlu0 %2367
        %v2369 = vrcp.pop %v2347
        %v2370 = vrcp.pop %v2350
        %v2371 = vrcp.pop %v2353
        %v2372 = vrcp.pop %v2356
        %v2373 = vrcp.pop %v2359
        %v2374 = vrcp.pop %v2362
        %v2375 = vrcp.pop %v2365
        %v2376 = vrcp.pop %v2368
        %v2377 = vmul.f32 %v2330, %v2369
        %v2378 = vmul.f32 %v2332, %v2370
        %v2379 = vmul.f32 %v2334, %v2371
        %v2380 = vmul.f32 %v2336, %v2372
        %v2381 = vmul.f32 %v2338, %v2373
        %v2382 = vmul.f32 %v2340, %v2374
        %v2383 = vmul.f32 %v2342, %v2375
        %v2384 = vmul.f32 %v2344, %v2376
        %2385 = vrot.lane.b32.xlu0 %v330, 56
        %v2386 = vpop.permute.xlu0 %2385
        %v2389 = vsel %vm363, %v2377, 0
        %2391 = vmatprep.subr.mxu0 0.0
        %2392 = vmatpush1.msra.mxu0 %v2386
        %2393 = vmatprep.subr.mxu0 0.0
        %2394 = vmatpush1.msra.mxu0 0.0
        %2395 = vmatprep.subr.mxu0 0.0
        %2396 = vmatpush1.msra.mxu0 0.0
        %2397 = vmatprep.subr.mxu0 0.0
        %2398 = vmatpush1.msra.mxu0 0.0
        %2399 = vmatprep.subr.mxu0 0.0
        %2400 = vmatpush1.msra.mxu0 0.0
        %2401 = vmatprep.subr.mxu0 0.0
        %2402 = vmatpush1.msra.mxu0 0.0
        %2403 = vmatprep.subr.mxu0 0.0
        %2404 = vmatpush1.msra.mxu0 0.0
        %2405 = vmatprep.subr.mxu0 0.0
        %2406 = vmatpush1.msra.mxu0 0.0
        %2407 = vmatprep.subr.mxu0 0.0
        %2408 = vmatpush1.msra.mxu0 0.0
        %2409 = vmatprep.subr.mxu0 0.0
        %2410 = vmatpush1.msra.mxu0 0.0
        %2411 = vmatprep.subr.mxu0 0.0
        %2412 = vmatpush1.msra.mxu0 0.0
        %2413 = vmatprep.subr.mxu0 0.0
        %2414 = vmatpush1.msra.mxu0 0.0
        %2415 = vmatprep.subr.mxu0 0.0
        %2416 = vmatpush1.msra.mxu0 0.0
        %2417 = vmatprep.subr.mxu0 0.0
        %2418 = vmatpush1.msra.mxu0 0.0
        %2419 = vmatprep.subr.mxu0 0.0
        %2420 = vmatpush1.msra.mxu0 0.0
        %2421 = vmatprep.subr.mxu0 0.0
        %2422 = vmatpush1.msra.mxu0 0.0
        %2423 = vmatprep.subr.mxu0 0.0
        %2424 = vmatpush1.msra.mxu0 0.0
        %2425 = vmatprep.subr.mxu0 0.0
        %2426 = vmatpush1.msra.mxu0 0.0
        %2427 = vmatprep.subr.mxu0 0.0
        %2428 = vmatpush1.msra.mxu0 0.0
        %2429 = vmatprep.subr.mxu0 0.0
        %2430 = vmatpush1.msra.mxu0 0.0
        %2431 = vmatprep.subr.mxu0 0.0
        %2432 = vmatpush1.msra.mxu0 0.0
        %2433 = vmatprep.subr.mxu0 0.0
        %2434 = vmatpush1.msra.mxu0 0.0
        %2435 = vmatprep.subr.mxu0 0.0
        %2436 = vmatpush1.msra.mxu0 0.0
        %2437 = vmatprep.subr.mxu0 0.0
        %2438 = vmatpush1.msra.mxu0 0.0
        %2439 = vmatprep.subr.mxu0 0.0
        %2440 = vmatpush1.msra.mxu0 0.0
        %2441 = vmatprep.subr.mxu0 0.0
        %2442 = vmatpush1.msra.mxu0 0.0
        %2443 = vmatprep.subr.mxu0 0.0
        %2444 = vmatpush1.msra.mxu0 0.0
        %2445 = vmatprep.subr.mxu0 0.0
        %2446 = vmatpush1.msra.mxu0 0.0
        %2447 = vmatprep.subr.mxu0 0.0
        %2448 = vmatpush1.msra.mxu0 0.0
        %2449 = vmatprep.subr.mxu0 0.0
        %2450 = vmatpush1.msra.mxu0 0.0
        %2451 = vmatprep.subr.mxu0 0.0
        %2452 = vmatpush1.msra.mxu0 0.0
        %2453 = vmatprep.subr.mxu0 0.0
        %2454 = vmatpush1.msra.mxu0 0.0
        %2455 = vmatprep.mubr.f32.mxu0 0.0
        %2456 = vmatmul.mubr.f32.gmra.mrb[0].mxu0 %v2389
        %v2457 = vpop.f32.mrb[0].mxu0
        %v2458 = vadd.f32 0.0, %v2457
        %v2459 = vpop.f32.mrb[0].mxu0
        %2460 = vdwg.mxu0
        %2461 = vrot.lane.b32.xlu0 %v333, 56
        %v2462 = vpop.permute.xlu0 %2461
        %v2465 = vsel %vm363, %v2378, 0
        %2467 = vmatprep.subr.mxu0 0.0
        %2468 = vmatpush1.msra.mxu0 %v2462
        %2469 = vmatprep.subr.mxu0 0.0
        %2470 = vmatpush1.msra.mxu0 0.0
        %2471 = vmatprep.subr.mxu0 0.0
        %2472 = vmatpush1.msra.mxu0 0.0
        %2473 = vmatprep.subr.mxu0 0.0
        %2474 = vmatpush1.msra.mxu0 0.0
        %2475 = vmatprep.subr.mxu0 0.0
        %2476 = vmatpush1.msra.mxu0 0.0
        %2477 = vmatprep.subr.mxu0 0.0
        %2478 = vmatpush1.msra.mxu0 0.0
        %2479 = vmatprep.subr.mxu0 0.0
        %2480 = vmatpush1.msra.mxu0 0.0
        %2481 = vmatprep.subr.mxu0 0.0
        %2482 = vmatpush1.msra.mxu0 0.0
        %2483 = vmatprep.subr.mxu0 0.0
        %2484 = vmatpush1.msra.mxu0 0.0
        %2485 = vmatprep.subr.mxu0 0.0
        %2486 = vmatpush1.msra.mxu0 0.0
        %2487 = vmatprep.subr.mxu0 0.0
        %2488 = vmatpush1.msra.mxu0 0.0
        %2489 = vmatprep.subr.mxu0 0.0
        %2490 = vmatpush1.msra.mxu0 0.0
        %2491 = vmatprep.subr.mxu0 0.0
        %2492 = vmatpush1.msra.mxu0 0.0
        %2493 = vmatprep.subr.mxu0 0.0
        %2494 = vmatpush1.msra.mxu0 0.0
        %2495 = vmatprep.subr.mxu0 0.0
        %2496 = vmatpush1.msra.mxu0 0.0
        %2497 = vmatprep.subr.mxu0 0.0
        %2498 = vmatpush1.msra.mxu0 0.0
        %2499 = vmatprep.subr.mxu0 0.0
        %2500 = vmatpush1.msra.mxu0 0.0
        %2501 = vmatprep.subr.mxu0 0.0
        %2502 = vmatpush1.msra.mxu0 0.0
        %2503 = vmatprep.subr.mxu0 0.0
        %2504 = vmatpush1.msra.mxu0 0.0
        %2505 = vmatprep.subr.mxu0 0.0
        %2506 = vmatpush1.msra.mxu0 0.0
        %2507 = vmatprep.subr.mxu0 0.0
        %2508 = vmatpush1.msra.mxu0 0.0
        %2509 = vmatprep.subr.mxu0 0.0
        %2510 = vmatpush1.msra.mxu0 0.0
        %2511 = vmatprep.subr.mxu0 0.0
        %2512 = vmatpush1.msra.mxu0 0.0
        %2513 = vmatprep.subr.mxu0 0.0
        %2514 = vmatpush1.msra.mxu0 0.0
        %2515 = vmatprep.subr.mxu0 0.0
        %2516 = vmatpush1.msra.mxu0 0.0
        %2517 = vmatprep.subr.mxu0 0.0
        %2518 = vmatpush1.msra.mxu0 0.0
        %2519 = vmatprep.subr.mxu0 0.0
        %2520 = vmatpush1.msra.mxu0 0.0
        %2521 = vmatprep.subr.mxu0 0.0
        %2522 = vmatpush1.msra.mxu0 0.0
        %2523 = vmatprep.subr.mxu0 0.0
        %2524 = vmatpush1.msra.mxu0 0.0
        %2525 = vmatprep.subr.mxu0 0.0
        %2526 = vmatpush1.msra.mxu0 0.0
        %2527 = vmatprep.subr.mxu0 0.0
        %2528 = vmatpush1.msra.mxu0 0.0
        %2529 = vmatprep.subr.mxu0 0.0
        %2530 = vmatpush1.msra.mxu0 0.0
        %2531 = vmatprep.mubr.f32.mxu0 0.0
        %2532 = vmatmul.mubr.f32.gmra.mrb[0].mxu0 %v2465
        %v2533 = vpop.f32.mrb[0].mxu0
        %v2534 = vadd.f32 0.0, %v2533
        %v2535 = vpop.f32.mrb[0].mxu0
        %2536 = vdwg.mxu0
        %2537 = vrot.lane.b32.xlu0 %v338, 56
        %v2538 = vpop.permute.xlu0 %2537
        %v2541 = vsel %vm363, %v2379, 0
        %2543 = vmatprep.subr.mxu0 0.0
        %2544 = vmatpush1.msra.mxu0 %v2538
        %2545 = vmatprep.subr.mxu0 0.0
        %2546 = vmatpush1.msra.mxu0 0.0
        %2547 = vmatprep.subr.mxu0 0.0
        %2548 = vmatpush1.msra.mxu0 0.0
        %2549 = vmatprep.subr.mxu0 0.0
        %2550 = vmatpush1.msra.mxu0 0.0
        %2551 = vmatprep.subr.mxu0 0.0
        %2552 = vmatpush1.msra.mxu0 0.0
        %2553 = vmatprep.subr.mxu0 0.0
        %2554 = vmatpush1.msra.mxu0 0.0
        %2555 = vmatprep.subr.mxu0 0.0
        %2556 = vmatpush1.msra.mxu0 0.0
        %2557 = vmatprep.subr.mxu0 0.0
        %2558 = vmatpush1.msra.mxu0 0.0
        %2559 = vmatprep.subr.mxu0 0.0
        %2560 = vmatpush1.msra.mxu0 0.0
        %2561 = vmatprep.subr.mxu0 0.0
        %2562 = vmatpush1.msra.mxu0 0.0
        %2563 = vmatprep.subr.mxu0 0.0
        %2564 = vmatpush1.msra.mxu0 0.0
        %2565 = vmatprep.subr.mxu0 0.0
        %2566 = vmatpush1.msra.mxu0 0.0
        %2567 = vmatprep.subr.mxu0 0.0
        %2568 = vmatpush1.msra.mxu0 0.0
        %2569 = vmatprep.subr.mxu0 0.0
        %2570 = vmatpush1.msra.mxu0 0.0
        %2571 = vmatprep.subr.mxu0 0.0
        %2572 = vmatpush1.msra.mxu0 0.0
        %2573 = vmatprep.subr.mxu0 0.0
        %2574 = vmatpush1.msra.mxu0 0.0
        %2575 = vmatprep.subr.mxu0 0.0
        %2576 = vmatpush1.msra.mxu0 0.0
        %2577 = vmatprep.subr.mxu0 0.0
        %2578 = vmatpush1.msra.mxu0 0.0
        %2579 = vmatprep.subr.mxu0 0.0
        %2580 = vmatpush1.msra.mxu0 0.0
        %2581 = vmatprep.subr.mxu0 0.0
        %2582 = vmatpush1.msra.mxu0 0.0
        %2583 = vmatprep.subr.mxu0 0.0
        %2584 = vmatpush1.msra.mxu0 0.0
        %2585 = vmatprep.subr.mxu0 0.0
        %2586 = vmatpush1.msra.mxu0 0.0
        %2587 = vmatprep.subr.mxu0 0.0
        %2588 = vmatpush1.msra.mxu0 0.0
        %2589 = vmatprep.subr.mxu0 0.0
        %2590 = vmatpush1.msra.mxu0 0.0
        %2591 = vmatprep.subr.mxu0 0.0
        %2592 = vmatpush1.msra.mxu0 0.0
        %2593 = vmatprep.subr.mxu0 0.0
        %2594 = vmatpush1.msra.mxu0 0.0
        %2595 = vmatprep.subr.mxu0 0.0
        %2596 = vmatpush1.msra.mxu0 0.0
        %2597 = vmatprep.subr.mxu0 0.0
        %2598 = vmatpush1.msra.mxu0 0.0
        %2599 = vmatprep.subr.mxu0 0.0
        %2600 = vmatpush1.msra.mxu0 0.0
        %2601 = vmatprep.subr.mxu0 0.0
        %2602 = vmatpush1.msra.mxu0 0.0
        %2603 = vmatprep.subr.mxu0 0.0
        %2604 = vmatpush1.msra.mxu0 0.0
        %2605 = vmatprep.subr.mxu0 0.0
        %2606 = vmatpush1.msra.mxu0 0.0
        %2607 = vmatprep.mubr.f32.mxu0 0.0
        %2608 = vmatmul.mubr.f32.gmra.mrb[0].mxu0 %v2541
        %v2609 = vpop.f32.mrb[0].mxu0
        %v2610 = vadd.f32 0.0, %v2609
        %v2611 = vpop.f32.mrb[0].mxu0
        %2612 = vdwg.mxu0
        %2613 = vrot.lane.b32.xlu0 %v341, 56
        %v2614 = vpop.permute.xlu0 %2613
        %v2617 = vsel %vm363, %v2380, 0
        %2619 = vmatprep.subr.mxu0 0.0
        %2620 = vmatpush1.msra.mxu0 %v2614
        %2621 = vmatprep.subr.mxu0 0.0
        %2622 = vmatpush1.msra.mxu0 0.0
        %2623 = vmatprep.subr.mxu0 0.0
        %2624 = vmatpush1.msra.mxu0 0.0
        %2625 = vmatprep.subr.mxu0 0.0
        %2626 = vmatpush1.msra.mxu0 0.0
        %2627 = vmatprep.subr.mxu0 0.0
        %2628 = vmatpush1.msra.mxu0 0.0
        %2629 = vmatprep.subr.mxu0 0.0
        %2630 = vmatpush1.msra.mxu0 0.0
        %2631 = vmatprep.subr.mxu0 0.0
        %2632 = vmatpush1.msra.mxu0 0.0
        %2633 = vmatprep.subr.mxu0 0.0
        %2634 = vmatpush1.msra.mxu0 0.0
        %2635 = vmatprep.subr.mxu0 0.0
        %2636 = vmatpush1.msra.mxu0 0.0
        %2637 = vmatprep.subr.mxu0 0.0
        %2638 = vmatpush1.msra.mxu0 0.0
        %2639 = vmatprep.subr.mxu0 0.0
        %2640 = vmatpush1.msra.mxu0 0.0
        %2641 = vmatprep.subr.mxu0 0.0
        %2642 = vmatpush1.msra.mxu0 0.0
        %2643 = vmatprep.subr.mxu0 0.0
        %2644 = vmatpush1.msra.mxu0 0.0
        %2645 = vmatprep.subr.mxu0 0.0
        %2646 = vmatpush1.msra.mxu0 0.0
        %2647 = vmatprep.subr.mxu0 0.0
        %2648 = vmatpush1.msra.mxu0 0.0
        %2649 = vmatprep.subr.mxu0 0.0
        %2650 = vmatpush1.msra.mxu0 0.0
        %2651 = vmatprep.subr.mxu0 0.0
        %2652 = vmatpush1.msra.mxu0 0.0
        %2653 = vmatprep.subr.mxu0 0.0
        %2654 = vmatpush1.msra.mxu0 0.0
        %2655 = vmatprep.subr.mxu0 0.0
        %2656 = vmatpush1.msra.mxu0 0.0
        %2657 = vmatprep.subr.mxu0 0.0
        %2658 = vmatpush1.msra.mxu0 0.0
        %2659 = vmatprep.subr.mxu0 0.0
        %2660 = vmatpush1.msra.mxu0 0.0
        %2661 = vmatprep.subr.mxu0 0.0
        %2662 = vmatpush1.msra.mxu0 0.0
        %2663 = vmatprep.subr.mxu0 0.0
        %2664 = vmatpush1.msra.mxu0 0.0
        %2665 = vmatprep.subr.mxu0 0.0
        %2666 = vmatpush1.msra.mxu0 0.0
        %2667 = vmatprep.subr.mxu0 0.0
        %2668 = vmatpush1.msra.mxu0 0.0
        %2669 = vmatprep.subr.mxu0 0.0
        %2670 = vmatpush1.msra.mxu0 0.0
        %2671 = vmatprep.subr.mxu0 0.0
        %2672 = vmatpush1.msra.mxu0 0.0
        %2673 = vmatprep.subr.mxu0 0.0
        %2674 = vmatpush1.msra.mxu0 0.0
        %2675 = vmatprep.subr.mxu0 0.0
        %2676 = vmatpush1.msra.mxu0 0.0
        %2677 = vmatprep.subr.mxu0 0.0
        %2678 = vmatpush1.msra.mxu0 0.0
        %2679 = vmatprep.subr.mxu0 0.0
        %2680 = vmatpush1.msra.mxu0 0.0
        %2681 = vmatprep.subr.mxu0 0.0
        %2682 = vmatpush1.msra.mxu0 0.0
        %2683 = vmatprep.mubr.f32.mxu0 0.0
        %2684 = vmatmul.mubr.f32.gmra.mrb[0].mxu0 %v2617
        %v2685 = vpop.f32.mrb[0].mxu0
        %v2686 = vadd.f32 0.0, %v2685
        %v2687 = vpop.f32.mrb[0].mxu0
        %2688 = vdwg.mxu0
        %2689 = vrot.lane.b32.xlu0 %v346, 56
        %v2690 = vpop.permute.xlu0 %2689
        %v2693 = vsel %vm363, %v2381, 0
        %2695 = vmatprep.subr.mxu0 0.0
        %2696 = vmatpush1.msra.mxu0 %v2690
        %2697 = vmatprep.subr.mxu0 0.0
        %2698 = vmatpush1.msra.mxu0 0.0
        %2699 = vmatprep.subr.mxu0 0.0
        %2700 = vmatpush1.msra.mxu0 0.0
        %2701 = vmatprep.subr.mxu0 0.0
        %2702 = vmatpush1.msra.mxu0 0.0
        %2703 = vmatprep.subr.mxu0 0.0
        %2704 = vmatpush1.msra.mxu0 0.0
        %2705 = vmatprep.subr.mxu0 0.0
        %2706 = vmatpush1.msra.mxu0 0.0
        %2707 = vmatprep.subr.mxu0 0.0
        %2708 = vmatpush1.msra.mxu0 0.0
        %2709 = vmatprep.subr.mxu0 0.0
        %2710 = vmatpush1.msra.mxu0 0.0
        %2711 = vmatprep.subr.mxu0 0.0
        %2712 = vmatpush1.msra.mxu0 0.0
        %2713 = vmatprep.subr.mxu0 0.0
        %2714 = vmatpush1.msra.mxu0 0.0
        %2715 = vmatprep.subr.mxu0 0.0
        %2716 = vmatpush1.msra.mxu0 0.0
        %2717 = vmatprep.subr.mxu0 0.0
        %2718 = vmatpush1.msra.mxu0 0.0
        %2719 = vmatprep.subr.mxu0 0.0
        %2720 = vmatpush1.msra.mxu0 0.0
        %2721 = vmatprep.subr.mxu0 0.0
        %2722 = vmatpush1.msra.mxu0 0.0
        %2723 = vmatprep.subr.mxu0 0.0
        %2724 = vmatpush1.msra.mxu0 0.0
        %2725 = vmatprep.subr.mxu0 0.0
        %2726 = vmatpush1.msra.mxu0 0.0
        %2727 = vmatprep.subr.mxu0 0.0
        %2728 = vmatpush1.msra.mxu0 0.0
        %2729 = vmatprep.subr.mxu0 0.0
        %2730 = vmatpush1.msra.mxu0 0.0
        %2731 = vmatprep.subr.mxu0 0.0
        %2732 = vmatpush1.msra.mxu0 0.0
        %2733 = vmatprep.subr.mxu0 0.0
        %2734 = vmatpush1.msra.mxu0 0.0
        %2735 = vmatprep.subr.mxu0 0.0
        %2736 = vmatpush1.msra.mxu0 0.0
        %2737 = vmatprep.subr.mxu0 0.0
        %2738 = vmatpush1.msra.mxu0 0.0
        %2739 = vmatprep.subr.mxu0 0.0
        %2740 = vmatpush1.msra.mxu0 0.0
        %2741 = vmatprep.subr.mxu0 0.0
        %2742 = vmatpush1.msra.mxu0 0.0
        %2743 = vmatprep.subr.mxu0 0.0
        %2744 = vmatpush1.msra.mxu0 0.0
        %2745 = vmatprep.subr.mxu0 0.0
        %2746 = vmatpush1.msra.mxu0 0.0
        %2747 = vmatprep.subr.mxu0 0.0
        %2748 = vmatpush1.msra.mxu0 0.0
        %2749 = vmatprep.subr.mxu0 0.0
        %2750 = vmatpush1.msra.mxu0 0.0
        %2751 = vmatprep.subr.mxu0 0.0
        %2752 = vmatpush1.msra.mxu0 0.0
        %2753 = vmatprep.subr.mxu0 0.0
        %2754 = vmatpush1.msra.mxu0 0.0
        %2755 = vmatprep.subr.mxu0 0.0
        %2756 = vmatpush1.msra.mxu0 0.0
        %2757 = vmatprep.subr.mxu0 0.0
        %2758 = vmatpush1.msra.mxu0 0.0
        %2759 = vmatprep.mubr.f32.mxu0 0.0
        %2760 = vmatmul.mubr.f32.gmra.mrb[0].mxu0 %v2693
        %v2761 = vpop.f32.mrb[0].mxu0
        %v2762 = vadd.f32 0.0, %v2761
        %v2763 = vpop.f32.mrb[0].mxu0
        %2764 = vdwg.mxu0
        %2765 = vrot.lane.b32.xlu0 %v349, 56
        %v2766 = vpop.permute.xlu0 %2765
        %v2769 = vsel %vm363, %v2382, 0
        %2771 = vmatprep.subr.mxu0 0.0
        %2772 = vmatpush1.msra.mxu0 %v2766
        %2773 = vmatprep.subr.mxu0 0.0
        %2774 = vmatpush1.msra.mxu0 0.0
        %2775 = vmatprep.subr.mxu0 0.0
        %2776 = vmatpush1.msra.mxu0 0.0
        %2777 = vmatprep.subr.mxu0 0.0
        %2778 = vmatpush1.msra.mxu0 0.0
        %2779 = vmatprep.subr.mxu0 0.0
        %2780 = vmatpush1.msra.mxu0 0.0
        %2781 = vmatprep.subr.mxu0 0.0
        %2782 = vmatpush1.msra.mxu0 0.0
        %2783 = vmatprep.subr.mxu0 0.0
        %2784 = vmatpush1.msra.mxu0 0.0
        %2785 = vmatprep.subr.mxu0 0.0
        %2786 = vmatpush1.msra.mxu0 0.0
        %2787 = vmatprep.subr.mxu0 0.0
        %2788 = vmatpush1.msra.mxu0 0.0
        %2789 = vmatprep.subr.mxu0 0.0
        %2790 = vmatpush1.msra.mxu0 0.0
        %2791 = vmatprep.subr.mxu0 0.0
        %2792 = vmatpush1.msra.mxu0 0.0
        %2793 = vmatprep.subr.mxu0 0.0
        %2794 = vmatpush1.msra.mxu0 0.0
        %2795 = vmatprep.subr.mxu0 0.0
        %2796 = vmatpush1.msra.mxu0 0.0
        %2797 = vmatprep.subr.mxu0 0.0
        %2798 = vmatpush1.msra.mxu0 0.0
        %2799 = vmatprep.subr.mxu0 0.0
        %2800 = vmatpush1.msra.mxu0 0.0
        %2801 = vmatprep.subr.mxu0 0.0
        %2802 = vmatpush1.msra.mxu0 0.0
        %2803 = vmatprep.subr.mxu0 0.0
        %2804 = vmatpush1.msra.mxu0 0.0
        %2805 = vmatprep.subr.mxu0 0.0
        %2806 = vmatpush1.msra.mxu0 0.0
        %2807 = vmatprep.subr.mxu0 0.0
        %2808 = vmatpush1.msra.mxu0 0.0
        %2809 = vmatprep.subr.mxu0 0.0
        %2810 = vmatpush1.msra.mxu0 0.0
        %2811 = vmatprep.subr.mxu0 0.0
        %2812 = vmatpush1.msra.mxu0 0.0
        %2813 = vmatprep.subr.mxu0 0.0
        %2814 = vmatpush1.msra.mxu0 0.0
        %2815 = vmatprep.subr.mxu0 0.0
        %2816 = vmatpush1.msra.mxu0 0.0
        %2817 = vmatprep.subr.mxu0 0.0
        %2818 = vmatpush1.msra.mxu0 0.0
        %2819 = vmatprep.subr.mxu0 0.0
        %2820 = vmatpush1.msra.mxu0 0.0
        %2821 = vmatprep.subr.mxu0 0.0
        %2822 = vmatpush1.msra.mxu0 0.0
        %2823 = vmatprep.subr.mxu0 0.0
        %2824 = vmatpush1.msra.mxu0 0.0
        %2825 = vmatprep.subr.mxu0 0.0
        %2826 = vmatpush1.msra.mxu0 0.0
        %2827 = vmatprep.subr.mxu0 0.0
        %2828 = vmatpush1.msra.mxu0 0.0
        %2829 = vmatprep.subr.mxu0 0.0
        %2830 = vmatpush1.msra.mxu0 0.0
        %2831 = vmatprep.subr.mxu0 0.0
        %2832 = vmatpush1.msra.mxu0 0.0
        %2833 = vmatprep.subr.mxu0 0.0
        %2834 = vmatpush1.msra.mxu0 0.0
        %2835 = vmatprep.mubr.f32.mxu0 0.0
        %2836 = vmatmul.mubr.f32.gmra.mrb[0].mxu0 %v2769
        %v2837 = vpop.f32.mrb[0].mxu0
        %v2838 = vadd.f32 0.0, %v2837
        %v2839 = vpop.f32.mrb[0].mxu0
        %2840 = vdwg.mxu0
        %2841 = vrot.lane.b32.xlu0 %v354, 56
        %v2842 = vpop.permute.xlu0 %2841
        %v2845 = vsel %vm363, %v2383, 0
        %2847 = vmatprep.subr.mxu0 0.0
        %2848 = vmatpush1.msra.mxu0 %v2842
        %2849 = vmatprep.subr.mxu0 0.0
        %2850 = vmatpush1.msra.mxu0 0.0
        %2851 = vmatprep.subr.mxu0 0.0
        %2852 = vmatpush1.msra.mxu0 0.0
        %2853 = vmatprep.subr.mxu0 0.0
        %2854 = vmatpush1.msra.mxu0 0.0
        %2855 = vmatprep.subr.mxu0 0.0
        %2856 = vmatpush1.msra.mxu0 0.0
        %2857 = vmatprep.subr.mxu0 0.0
        %2858 = vmatpush1.msra.mxu0 0.0
        %2859 = vmatprep.subr.mxu0 0.0
        %2860 = vmatpush1.msra.mxu0 0.0
        %2861 = vmatprep.subr.mxu0 0.0
        %2862 = vmatpush1.msra.mxu0 0.0
        %2863 = vmatprep.subr.mxu0 0.0
        %2864 = vmatpush1.msra.mxu0 0.0
        %2865 = vmatprep.subr.mxu0 0.0
        %2866 = vmatpush1.msra.mxu0 0.0
        %2867 = vmatprep.subr.mxu0 0.0
        %2868 = vmatpush1.msra.mxu0 0.0
        %2869 = vmatprep.subr.mxu0 0.0
        %2870 = vmatpush1.msra.mxu0 0.0
        %2871 = vmatprep.subr.mxu0 0.0
        %2872 = vmatpush1.msra.mxu0 0.0
        %2873 = vmatprep.subr.mxu0 0.0
        %2874 = vmatpush1.msra.mxu0 0.0
        %2875 = vmatprep.subr.mxu0 0.0
        %2876 = vmatpush1.msra.mxu0 0.0
        %2877 = vmatprep.subr.mxu0 0.0
        %2878 = vmatpush1.msra.mxu0 0.0
        %2879 = vmatprep.subr.mxu0 0.0
        %2880 = vmatpush1.msra.mxu0 0.0
        %2881 = vmatprep.subr.mxu0 0.0
        %2882 = vmatpush1.msra.mxu0 0.0
        %2883 = vmatprep.subr.mxu0 0.0
        %2884 = vmatpush1.msra.mxu0 0.0
        %2885 = vmatprep.subr.mxu0 0.0
        %2886 = vmatpush1.msra.mxu0 0.0
        %2887 = vmatprep.subr.mxu0 0.0
        %2888 = vmatpush1.msra.mxu0 0.0
        %2889 = vmatprep.subr.mxu0 0.0
        %2890 = vmatpush1.msra.mxu0 0.0
        %2891 = vmatprep.subr.mxu0 0.0
        %2892 = vmatpush1.msra.mxu0 0.0
        %2893 = vmatprep.subr.mxu0 0.0
        %2894 = vmatpush1.msra.mxu0 0.0
        %2895 = vmatprep.subr.mxu0 0.0
        %2896 = vmatpush1.msra.mxu0 0.0
        %2897 = vmatprep.subr.mxu0 0.0
        %2898 = vmatpush1.msra.mxu0 0.0
        %2899 = vmatprep.subr.mxu0 0.0
        %2900 = vmatpush1.msra.mxu0 0.0
        %2901 = vmatprep.subr.mxu0 0.0
        %2902 = vmatpush1.msra.mxu0 0.0
        %2903 = vmatprep.subr.mxu0 0.0
        %2904 = vmatpush1.msra.mxu0 0.0
        %2905 = vmatprep.subr.mxu0 0.0
        %2906 = vmatpush1.msra.mxu0 0.0
        %2907 = vmatprep.subr.mxu0 0.0
        %2908 = vmatpush1.msra.mxu0 0.0
        %2909 = vmatprep.subr.mxu0 0.0
        %2910 = vmatpush1.msra.mxu0 0.0
        %2911 = vmatprep.mubr.f32.mxu0 0.0
        %2912 = vmatmul.mubr.f32.gmra.mrb[0].mxu0 %v2845
        %v2913 = vpop.f32.mrb[0].mxu0
        %v2914 = vadd.f32 0.0, %v2913
        %v2915 = vpop.f32.mrb[0].mxu0
        %2916 = vdwg.mxu0
        %2917 = vrot.lane.b32.xlu0 %v357, 56
        %v2918 = vpop.permute.xlu0 %2917
        %v2921 = vsel %vm363, %v2384, 0
        %2923 = vmatprep.subr.mxu0 0.0
        %2924 = vmatpush1.msra.mxu0 %v2918
        %2925 = vmatprep.subr.mxu0 0.0
        %2926 = vmatpush1.msra.mxu0 0.0
        %2927 = vmatprep.subr.mxu0 0.0
        %2928 = vmatpush1.msra.mxu0 0.0
        %2929 = vmatprep.subr.mxu0 0.0
        %2930 = vmatpush1.msra.mxu0 0.0
        %2931 = vmatprep.subr.mxu0 0.0
        %2932 = vmatpush1.msra.mxu0 0.0
        %2933 = vmatprep.subr.mxu0 0.0
        %2934 = vmatpush1.msra.mxu0 0.0
        %2935 = vmatprep.subr.mxu0 0.0
        %2936 = vmatpush1.msra.mxu0 0.0
        %2937 = vmatprep.subr.mxu0 0.0
        %2938 = vmatpush1.msra.mxu0 0.0
        %2939 = vmatprep.subr.mxu0 0.0
        %2940 = vmatpush1.msra.mxu0 0.0
        %2941 = vmatprep.subr.mxu0 0.0
        %2942 = vmatpush1.msra.mxu0 0.0
        %2943 = vmatprep.subr.mxu0 0.0
        %2944 = vmatpush1.msra.mxu0 0.0
        %2945 = vmatprep.subr.mxu0 0.0
        %2946 = vmatpush1.msra.mxu0 0.0
        %2947 = vmatprep.subr.mxu0 0.0
        %2948 = vmatpush1.msra.mxu0 0.0
        %2949 = vmatprep.subr.mxu0 0.0
        %2950 = vmatpush1.msra.mxu0 0.0
        %2951 = vmatprep.subr.mxu0 0.0
        %2952 = vmatpush1.msra.mxu0 0.0
        %2953 = vmatprep.subr.mxu0 0.0
        %2954 = vmatpush1.msra.mxu0 0.0
        %2955 = vmatprep.subr.mxu0 0.0
        %2956 = vmatpush1.msra.mxu0 0.0
        %2957 = vmatprep.subr.mxu0 0.0
        %2958 = vmatpush1.msra.mxu0 0.0
        %2959 = vmatprep.subr.mxu0 0.0
        %2960 = vmatpush1.msra.mxu0 0.0
        %2961 = vmatprep.subr.mxu0 0.0
        %2962 = vmatpush1.msra.mxu0 0.0
        %2963 = vmatprep.subr.mxu0 0.0
        %2964 = vmatpush1.msra.mxu0 0.0
        %2965 = vmatprep.subr.mxu0 0.0
        %2966 = vmatpush1.msra.mxu0 0.0
        %2967 = vmatprep.subr.mxu0 0.0
        %2968 = vmatpush1.msra.mxu0 0.0
        %2969 = vmatprep.subr.mxu0 0.0
        %2970 = vmatpush1.msra.mxu0 0.0
        %2971 = vmatprep.subr.mxu0 0.0
        %2972 = vmatpush1.msra.mxu0 0.0
        %2973 = vmatprep.subr.mxu0 0.0
        %2974 = vmatpush1.msra.mxu0 0.0
        %2975 = vmatprep.subr.mxu0 0.0
        %2976 = vmatpush1.msra.mxu0 0.0
        %2977 = vmatprep.subr.mxu0 0.0
        %2978 = vmatpush1.msra.mxu0 0.0
        %2979 = vmatprep.subr.mxu0 0.0
        %2980 = vmatpush1.msra.mxu0 0.0
        %2981 = vmatprep.subr.mxu0 0.0
        %2982 = vmatpush1.msra.mxu0 0.0
        %2983 = vmatprep.subr.mxu0 0.0
        %2984 = vmatpush1.msra.mxu0 0.0
        %2985 = vmatprep.subr.mxu0 0.0
        %2986 = vmatpush1.msra.mxu0 0.0
        %2987 = vmatprep.mubr.f32.mxu0 0.0
        %2988 = vmatmul.mubr.f32.gmra.mrb[0].mxu0 %v2921
        %v2989 = vpop.f32.mrb[0].mxu0
        %v2990 = vadd.f32 0.0, %v2989
        %v2991 = vpop.f32.mrb[0].mxu0
        %2992 = vdwg.mxu0
        %2993 = vrot.lane.b32.xlu0 %v330, 112
        %v2994 = vpop.permute.xlu0 %2993
        %2995 = vrot.lane.b32.xlu0 %v330, 80
        %v2996 = vpop.permute.xlu0 %2995
        %v2997 = vsel %vm363, %v2994, 0
        %v2999 = vsel %vm363, %v2996, 0
        %3001 = vmatprep.subr.mxu0 0.0
        %3002 = vmatpush1.xpose.msra.mxu0 %v2999
        %3003 = vmatprep.subr.mxu0 0.0
        %3004 = vmatpush1.xpose.msra.mxu0 0.0
        %3005 = vmatprep.subr.mxu0 0.0
        %3006 = vmatpush1.xpose.msra.mxu0 0.0
        %3007 = vmatprep.subr.mxu0 0.0
        %3008 = vmatpush1.xpose.msra.mxu0 0.0
        %3009 = vmatprep.subr.mxu0 0.0
        %3010 = vmatpush1.xpose.msra.mxu0 0.0
        %3011 = vmatprep.subr.mxu0 0.0
        %3012 = vmatpush1.xpose.msra.mxu0 0.0
        %3013 = vmatprep.subr.mxu0 0.0
        %3014 = vmatpush1.xpose.msra.mxu0 0.0
        %3015 = vmatprep.subr.mxu0 0.0
        %3016 = vmatpush1.xpose.msra.mxu0 0.0
        %3017 = vmatprep.subr.mxu0 0.0
        %3018 = vmatpush1.xpose.msra.mxu0 0.0
        %3019 = vmatprep.subr.mxu0 0.0
        %3020 = vmatpush1.xpose.msra.mxu0 0.0
        %3021 = vmatprep.subr.mxu0 0.0
        %3022 = vmatpush1.xpose.msra.mxu0 0.0
        %3023 = vmatprep.subr.mxu0 0.0
        %3024 = vmatpush1.xpose.msra.mxu0 0.0
        %3025 = vmatprep.subr.mxu0 0.0
        %3026 = vmatpush1.xpose.msra.mxu0 0.0
        %3027 = vmatprep.subr.mxu0 0.0
        %3028 = vmatpush1.xpose.msra.mxu0 0.0
        %3029 = vmatprep.subr.mxu0 0.0
        %3030 = vmatpush1.xpose.msra.mxu0 0.0
        %3031 = vmatprep.subr.mxu0 0.0
        %3032 = vmatpush1.xpose.msra.mxu0 0.0
        %3033 = vmatprep.subr.mxu0 0.0
        %3034 = vmatpush1.xpose.msra.mxu0 0.0
        %3035 = vmatprep.subr.mxu0 0.0
        %3036 = vmatpush1.xpose.msra.mxu0 0.0
        %3037 = vmatprep.subr.mxu0 0.0
        %3038 = vmatpush1.xpose.msra.mxu0 0.0
        %3039 = vmatprep.subr.mxu0 0.0
        %3040 = vmatpush1.xpose.msra.mxu0 0.0
        %3041 = vmatprep.subr.mxu0 0.0
        %3042 = vmatpush1.xpose.msra.mxu0 0.0
        %3043 = vmatprep.subr.mxu0 0.0
        %3044 = vmatpush1.xpose.msra.mxu0 0.0
        %3045 = vmatprep.subr.mxu0 0.0
        %3046 = vmatpush1.xpose.msra.mxu0 0.0
        %3047 = vmatprep.subr.mxu0 0.0
        %3048 = vmatpush1.xpose.msra.mxu0 0.0
        %3049 = vmatprep.subr.mxu0 0.0
        %3050 = vmatpush1.xpose.msra.mxu0 0.0
        %3051 = vmatprep.subr.mxu0 0.0
        %3052 = vmatpush1.xpose.msra.mxu0 0.0
        %3053 = vmatprep.subr.mxu0 0.0
        %3054 = vmatpush1.xpose.msra.mxu0 0.0
        %3055 = vmatprep.subr.mxu0 0.0
        %3056 = vmatpush1.xpose.msra.mxu0 0.0
        %3057 = vmatprep.subr.mxu0 0.0
        %3058 = vmatpush1.xpose.msra.mxu0 0.0
        %3059 = vmatprep.subr.mxu0 0.0
        %3060 = vmatpush1.xpose.msra.mxu0 0.0
        %3061 = vmatprep.subr.mxu0 0.0
        %3062 = vmatpush1.xpose.msra.mxu0 0.0
        %3063 = vmatprep.subr.mxu0 0.0
        %3064 = vmatpush1.xpose.msra.mxu0 0.0
        %3065 = vmatprep.mubr.f32.mxu0 0.0
        %3066 = vmatmul.mubr.f32.gmra.mrb[0].mxu0 %v2997
        %v3067 = vpop.f32.mrb[0].mxu0
        %v3068 = vadd.f32 0.0, %v3067
        %v3069 = vpop.f32.mrb[0].mxu0
        %3070 = vdwg.mxu0
        %3071 = vrot.lane.b32.xlu0 %v333, 112
        %v3072 = vpop.permute.xlu0 %3071
        %3073 = vrot.lane.b32.xlu0 %v333, 80
        %v3074 = vpop.permute.xlu0 %3073
        %v3075 = vsel %vm363, %v3072, 0
        %v3077 = vsel %vm363, %v3074, 0
        %3079 = vmatprep.subr.mxu0 0.0
        %3080 = vmatpush1.xpose.msra.mxu0 %v3077
        %3081 = vmatprep.subr.mxu0 0.0
        %3082 = vmatpush1.xpose.msra.mxu0 0.0
        %3083 = vmatprep.subr.mxu0 0.0
        %3084 = vmatpush1.xpose.msra.mxu0 0.0
        %3085 = vmatprep.subr.mxu0 0.0
        %3086 = vmatpush1.xpose.msra.mxu0 0.0
        %3087 = vmatprep.subr.mxu0 0.0
        %3088 = vmatpush1.xpose.msra.mxu0 0.0
        %3089 = vmatprep.subr.mxu0 0.0
        %3090 = vmatpush1.xpose.msra.mxu0 0.0
        %3091 = vmatprep.subr.mxu0 0.0
        %3092 = vmatpush1.xpose.msra.mxu0 0.0
        %3093 = vmatprep.subr.mxu0 0.0
        %3094 = vmatpush1.xpose.msra.mxu0 0.0
        %3095 = vmatprep.subr.mxu0 0.0
        %3096 = vmatpush1.xpose.msra.mxu0 0.0
        %3097 = vmatprep.subr.mxu0 0.0
        %3098 = vmatpush1.xpose.msra.mxu0 0.0
        %3099 = vmatprep.subr.mxu0 0.0
        %3100 = vmatpush1.xpose.msra.mxu0 0.0
        %3101 = vmatprep.subr.mxu0 0.0
        %3102 = vmatpush1.xpose.msra.mxu0 0.0
        %3103 = vmatprep.subr.mxu0 0.0
        %3104 = vmatpush1.xpose.msra.mxu0 0.0
        %3105 = vmatprep.subr.mxu0 0.0
        %3106 = vmatpush1.xpose.msra.mxu0 0.0
        %3107 = vmatprep.subr.mxu0 0.0
        %3108 = vmatpush1.xpose.msra.mxu0 0.0
        %3109 = vmatprep.subr.mxu0 0.0
        %3110 = vmatpush1.xpose.msra.mxu0 0.0
        %3111 = vmatprep.subr.mxu0 0.0
        %3112 = vmatpush1.xpose.msra.mxu0 0.0
        %3113 = vmatprep.subr.mxu0 0.0
        %3114 = vmatpush1.xpose.msra.mxu0 0.0
        %3115 = vmatprep.subr.mxu0 0.0
        %3116 = vmatpush1.xpose.msra.mxu0 0.0
        %3117 = vmatprep.subr.mxu0 0.0
        %3118 = vmatpush1.xpose.msra.mxu0 0.0
        %3119 = vmatprep.subr.mxu0 0.0
        %3120 = vmatpush1.xpose.msra.mxu0 0.0
        %3121 = vmatprep.subr.mxu0 0.0
        %3122 = vmatpush1.xpose.msra.mxu0 0.0
        %3123 = vmatprep.subr.mxu0 0.0
        %3124 = vmatpush1.xpose.msra.mxu0 0.0
        %3125 = vmatprep.subr.mxu0 0.0
        %3126 = vmatpush1.xpose.msra.mxu0 0.0
        %3127 = vmatprep.subr.mxu0 0.0
        %3128 = vmatpush1.xpose.msra.mxu0 0.0
        %3129 = vmatprep.subr.mxu0 0.0
        %3130 = vmatpush1.xpose.msra.mxu0 0.0
        %3131 = vmatprep.subr.mxu0 0.0
        %3132 = vmatpush1.xpose.msra.mxu0 0.0
        %3133 = vmatprep.subr.mxu0 0.0
        %3134 = vmatpush1.xpose.msra.mxu0 0.0
        %3135 = vmatprep.subr.mxu0 0.0
        %3136 = vmatpush1.xpose.msra.mxu0 0.0
        %3137 = vmatprep.subr.mxu0 0.0
        %3138 = vmatpush1.xpose.msra.mxu0 0.0
        %3139 = vmatprep.subr.mxu0 0.0
        %3140 = vmatpush1.xpose.msra.mxu0 0.0
        %3141 = vmatprep.subr.mxu0 0.0
        %3142 = vmatpush1.xpose.msra.mxu0 0.0
        %3143 = vmatprep.mubr.f32.mxu0 0.0
        %3144 = vmatmul.mubr.f32.gmra.mrb[0].mxu0 %v3075
        %v3145 = vpop.f32.mrb[0].mxu0
        %v3146 = vadd.f32 0.0, %v3145
        %v3147 = vpop.f32.mrb[0].mxu0
        %3148 = vdwg.mxu0
        %3149 = vrot.lane.b32.xlu0 %v338, 112
        %v3150 = vpop.permute.xlu0 %3149
        %3151 = vrot.lane.b32.xlu0 %v338, 80
        %v3152 = vpop.permute.xlu0 %3151
        %v3153 = vsel %vm363, %v3150, 0
        %v3155 = vsel %vm363, %v3152, 0
        %3157 = vmatprep.subr.mxu0 0.0
        %3158 = vmatpush1.xpose.msra.mxu0 %v3155
        %3159 = vmatprep.subr.mxu0 0.0
        %3160 = vmatpush1.xpose.msra.mxu0 0.0
        %3161 = vmatprep.subr.mxu0 0.0
        %3162 = vmatpush1.xpose.msra.mxu0 0.0
        %3163 = vmatprep.subr.mxu0 0.0
        %3164 = vmatpush1.xpose.msra.mxu0 0.0
        %3165 = vmatprep.subr.mxu0 0.0
        %3166 = vmatpush1.xpose.msra.mxu0 0.0
        %3167 = vmatprep.subr.mxu0 0.0
        %3168 = vmatpush1.xpose.msra.mxu0 0.0
        %3169 = vmatprep.subr.mxu0 0.0
        %3170 = vmatpush1.xpose.msra.mxu0 0.0
        %3171 = vmatprep.subr.mxu0 0.0
        %3172 = vmatpush1.xpose.msra.mxu0 0.0
        %3173 = vmatprep.subr.mxu0 0.0
        %3174 = vmatpush1.xpose.msra.mxu0 0.0
        %3175 = vmatprep.subr.mxu0 0.0
        %3176 = vmatpush1.xpose.msra.mxu0 0.0
        %3177 = vmatprep.subr.mxu0 0.0
        %3178 = vmatpush1.xpose.msra.mxu0 0.0
        %3179 = vmatprep.subr.mxu0 0.0
        %3180 = vmatpush1.xpose.msra.mxu0 0.0
        %3181 = vmatprep.subr.mxu0 0.0
        %3182 = vmatpush1.xpose.msra.mxu0 0.0
        %3183 = vmatprep.subr.mxu0 0.0
        %3184 = vmatpush1.xpose.msra.mxu0 0.0
        %3185 = vmatprep.subr.mxu0 0.0
        %3186 = vmatpush1.xpose.msra.mxu0 0.0
        %3187 = vmatprep.subr.mxu0 0.0
        %3188 = vmatpush1.xpose.msra.mxu0 0.0
        %3189 = vmatprep.subr.mxu0 0.0
        %3190 = vmatpush1.xpose.msra.mxu0 0.0
        %3191 = vmatprep.subr.mxu0 0.0
        %3192 = vmatpush1.xpose.msra.mxu0 0.0
        %3193 = vmatprep.subr.mxu0 0.0
        %3194 = vmatpush1.xpose.msra.mxu0 0.0
        %3195 = vmatprep.subr.mxu0 0.0
        %3196 = vmatpush1.xpose.msra.mxu0 0.0
        %3197 = vmatprep.subr.mxu0 0.0
        %3198 = vmatpush1.xpose.msra.mxu0 0.0
        %3199 = vmatprep.subr.mxu0 0.0
        %3200 = vmatpush1.xpose.msra.mxu0 0.0
        %3201 = vmatprep.subr.mxu0 0.0
        %3202 = vmatpush1.xpose.msra.mxu0 0.0
        %3203 = vmatprep.subr.mxu0 0.0
        %3204 = vmatpush1.xpose.msra.mxu0 0.0
        %3205 = vmatprep.subr.mxu0 0.0
        %3206 = vmatpush1.xpose.msra.mxu0 0.0
        %3207 = vmatprep.subr.mxu0 0.0
        %3208 = vmatpush1.xpose.msra.mxu0 0.0
        %3209 = vmatprep.subr.mxu0 0.0
        %3210 = vmatpush1.xpose.msra.mxu0 0.0
        %3211 = vmatprep.subr.mxu0 0.0
        %3212 = vmatpush1.xpose.msra.mxu0 0.0
        %3213 = vmatprep.subr.mxu0 0.0
        %3214 = vmatpush1.xpose.msra.mxu0 0.0
        %3215 = vmatprep.subr.mxu0 0.0
        %3216 = vmatpush1.xpose.msra.mxu0 0.0
        %3217 = vmatprep.subr.mxu0 0.0
        %3218 = vmatpush1.xpose.msra.mxu0 0.0
        %3219 = vmatprep.subr.mxu0 0.0
        %3220 = vmatpush1.xpose.msra.mxu0 0.0
        %3221 = vmatprep.mubr.f32.mxu0 0.0
        %3222 = vmatmul.mubr.f32.gmra.mrb[0].mxu0 %v3153
        %v3223 = vpop.f32.mrb[0].mxu0
        %v3224 = vadd.f32 0.0, %v3223
        %v3225 = vpop.f32.mrb[0].mxu0
        %3226 = vdwg.mxu0
        %3227 = vrot.lane.b32.xlu0 %v341, 112
        %v3228 = vpop.permute.xlu0 %3227
        %3229 = vrot.lane.b32.xlu0 %v341, 80
        %v3230 = vpop.permute.xlu0 %3229
        %v3231 = vsel %vm363, %v3228, 0
        %v3233 = vsel %vm363, %v3230, 0
        %3235 = vmatprep.subr.mxu0 0.0
        %3236 = vmatpush1.xpose.msra.mxu0 %v3233
        %3237 = vmatprep.subr.mxu0 0.0
        %3238 = vmatpush1.xpose.msra.mxu0 0.0
        %3239 = vmatprep.subr.mxu0 0.0
        %3240 = vmatpush1.xpose.msra.mxu0 0.0
        %3241 = vmatprep.subr.mxu0 0.0
        %3242 = vmatpush1.xpose.msra.mxu0 0.0
        %3243 = vmatprep.subr.mxu0 0.0
        %3244 = vmatpush1.xpose.msra.mxu0 0.0
        %3245 = vmatprep.subr.mxu0 0.0
        %3246 = vmatpush1.xpose.msra.mxu0 0.0
        %3247 = vmatprep.subr.mxu0 0.0
        %3248 = vmatpush1.xpose.msra.mxu0 0.0
        %3249 = vmatprep.subr.mxu0 0.0
        %3250 = vmatpush1.xpose.msra.mxu0 0.0
        %3251 = vmatprep.subr.mxu0 0.0
        %3252 = vmatpush1.xpose.msra.mxu0 0.0
        %3253 = vmatprep.subr.mxu0 0.0
        %3254 = vmatpush1.xpose.msra.mxu0 0.0
        %3255 = vmatprep.subr.mxu0 0.0
        %3256 = vmatpush1.xpose.msra.mxu0 0.0
        %3257 = vmatprep.subr.mxu0 0.0
        %3258 = vmatpush1.xpose.msra.mxu0 0.0
        %3259 = vmatprep.subr.mxu0 0.0
        %3260 = vmatpush1.xpose.msra.mxu0 0.0
        %3261 = vmatprep.subr.mxu0 0.0
        %3262 = vmatpush1.xpose.msra.mxu0 0.0
        %3263 = vmatprep.subr.mxu0 0.0
        %3264 = vmatpush1.xpose.msra.mxu0 0.0
        %3265 = vmatprep.subr.mxu0 0.0
        %3266 = vmatpush1.xpose.msra.mxu0 0.0
        %3267 = vmatprep.subr.mxu0 0.0
        %3268 = vmatpush1.xpose.msra.mxu0 0.0
        %3269 = vmatprep.subr.mxu0 0.0
        %3270 = vmatpush1.xpose.msra.mxu0 0.0
        %3271 = vmatprep.subr.mxu0 0.0
        %3272 = vmatpush1.xpose.msra.mxu0 0.0
        %3273 = vmatprep.subr.mxu0 0.0
        %3274 = vmatpush1.xpose.msra.mxu0 0.0
        %3275 = vmatprep.subr.mxu0 0.0
        %3276 = vmatpush1.xpose.msra.mxu0 0.0
        %3277 = vmatprep.subr.mxu0 0.0
        %3278 = vmatpush1.xpose.msra.mxu0 0.0
        %3279 = vmatprep.subr.mxu0 0.0
        %3280 = vmatpush1.xpose.msra.mxu0 0.0
        %3281 = vmatprep.subr.mxu0 0.0
        %3282 = vmatpush1.xpose.msra.mxu0 0.0
        %3283 = vmatprep.subr.mxu0 0.0
        %3284 = vmatpush1.xpose.msra.mxu0 0.0
        %3285 = vmatprep.subr.mxu0 0.0
        %3286 = vmatpush1.xpose.msra.mxu0 0.0
        %3287 = vmatprep.subr.mxu0 0.0
        %3288 = vmatpush1.xpose.msra.mxu0 0.0
        %3289 = vmatprep.subr.mxu0 0.0
        %3290 = vmatpush1.xpose.msra.mxu0 0.0
        %3291 = vmatprep.subr.mxu0 0.0
        %3292 = vmatpush1.xpose.msra.mxu0 0.0
        %3293 = vmatprep.subr.mxu0 0.0
        %3294 = vmatpush1.xpose.msra.mxu0 0.0
        %3295 = vmatprep.subr.mxu0 0.0
        %3296 = vmatpush1.xpose.msra.mxu0 0.0
        %3297 = vmatprep.subr.mxu0 0.0
        %3298 = vmatpush1.xpose.msra.mxu0 0.0
        %3299 = vmatprep.mubr.f32.mxu0 0.0
        %3300 = vmatmul.mubr.f32.gmra.mrb[0].mxu0 %v3231
        %v3301 = vpop.f32.mrb[0].mxu0
        %v3302 = vadd.f32 0.0, %v3301
        %v3303 = vpop.f32.mrb[0].mxu0
        %3304 = vdwg.mxu0
        %3305 = vrot.lane.b32.xlu0 %v346, 112
        %v3306 = vpop.permute.xlu0 %3305
        %3307 = vrot.lane.b32.xlu0 %v346, 80
        %v3308 = vpop.permute.xlu0 %3307
        %v3309 = vsel %vm363, %v3306, 0
        %v3311 = vsel %vm363, %v3308, 0
        %3313 = vmatprep.subr.mxu0 0.0
        %3314 = vmatpush1.xpose.msra.mxu0 %v3311
        %3315 = vmatprep.subr.mxu0 0.0
        %3316 = vmatpush1.xpose.msra.mxu0 0.0
        %3317 = vmatprep.subr.mxu0 0.0
        %3318 = vmatpush1.xpose.msra.mxu0 0.0
        %3319 = vmatprep.subr.mxu0 0.0
        %3320 = vmatpush1.xpose.msra.mxu0 0.0
        %3321 = vmatprep.subr.mxu0 0.0
        %3322 = vmatpush1.xpose.msra.mxu0 0.0
        %3323 = vmatprep.subr.mxu0 0.0
        %3324 = vmatpush1.xpose.msra.mxu0 0.0
        %3325 = vmatprep.subr.mxu0 0.0
        %3326 = vmatpush1.xpose.msra.mxu0 0.0
        %3327 = vmatprep.subr.mxu0 0.0
        %3328 = vmatpush1.xpose.msra.mxu0 0.0
        %3329 = vmatprep.subr.mxu0 0.0
        %3330 = vmatpush1.xpose.msra.mxu0 0.0
        %3331 = vmatprep.subr.mxu0 0.0
        %3332 = vmatpush1.xpose.msra.mxu0 0.0
        %3333 = vmatprep.subr.mxu0 0.0
        %3334 = vmatpush1.xpose.msra.mxu0 0.0
        %3335 = vmatprep.subr.mxu0 0.0
        %3336 = vmatpush1.xpose.msra.mxu0 0.0
        %3337 = vmatprep.subr.mxu0 0.0
        %3338 = vmatpush1.xpose.msra.mxu0 0.0
        %3339 = vmatprep.subr.mxu0 0.0
        %3340 = vmatpush1.xpose.msra.mxu0 0.0
        %3341 = vmatprep.subr.mxu0 0.0
        %3342 = vmatpush1.xpose.msra.mxu0 0.0
        %3343 = vmatprep.subr.mxu0 0.0
        %3344 = vmatpush1.xpose.msra.mxu0 0.0
        %3345 = vmatprep.subr.mxu0 0.0
        %3346 = vmatpush1.xpose.msra.mxu0 0.0
        %3347 = vmatprep.subr.mxu0 0.0
        %3348 = vmatpush1.xpose.msra.mxu0 0.0
        %3349 = vmatprep.subr.mxu0 0.0
        %3350 = vmatpush1.xpose.msra.mxu0 0.0
        %3351 = vmatprep.subr.mxu0 0.0
        %3352 = vmatpush1.xpose.msra.mxu0 0.0
        %3353 = vmatprep.subr.mxu0 0.0
        %3354 = vmatpush1.xpose.msra.mxu0 0.0
        %3355 = vmatprep.subr.mxu0 0.0
        %3356 = vmatpush1.xpose.msra.mxu0 0.0
        %3357 = vmatprep.subr.mxu0 0.0
        %3358 = vmatpush1.xpose.msra.mxu0 0.0
        %3359 = vmatprep.subr.mxu0 0.0
        %3360 = vmatpush1.xpose.msra.mxu0 0.0
        %3361 = vmatprep.subr.mxu0 0.0
        %3362 = vmatpush1.xpose.msra.mxu0 0.0
        %3363 = vmatprep.subr.mxu0 0.0
        %3364 = vmatpush1.xpose.msra.mxu0 0.0
        %3365 = vmatprep.subr.mxu0 0.0
        %3366 = vmatpush1.xpose.msra.mxu0 0.0
        %3367 = vmatprep.subr.mxu0 0.0
        %3368 = vmatpush1.xpose.msra.mxu0 0.0
        %3369 = vmatprep.subr.mxu0 0.0
        %3370 = vmatpush1.xpose.msra.mxu0 0.0
        %3371 = vmatprep.subr.mxu0 0.0
        %3372 = vmatpush1.xpose.msra.mxu0 0.0
        %3373 = vmatprep.subr.mxu0 0.0
        %3374 = vmatpush1.xpose.msra.mxu0 0.0
        %3375 = vmatprep.subr.mxu0 0.0
        %3376 = vmatpush1.xpose.msra.mxu0 0.0
        %3377 = vmatprep.mubr.f32.mxu0 0.0
        %3378 = vmatmul.mubr.f32.gmra.mrb[0].mxu0 %v3309
        %v3379 = vpop.f32.mrb[0].mxu0
        %v3380 = vadd.f32 0.0, %v3379
        %v3381 = vpop.f32.mrb[0].mxu0
        %3382 = vdwg.mxu0
        %3383 = vrot.lane.b32.xlu0 %v349, 112
        %v3384 = vpop.permute.xlu0 %3383
        %3385 = vrot.lane.b32.xlu0 %v349, 80
        %v3386 = vpop.permute.xlu0 %3385
        %v3387 = vsel %vm363, %v3384, 0
        %v3389 = vsel %vm363, %v3386, 0
        %3391 = vmatprep.subr.mxu0 0.0
        %3392 = vmatpush1.xpose.msra.mxu0 %v3389
        %3393 = vmatprep.subr.mxu0 0.0
        %3394 = vmatpush1.xpose.msra.mxu0 0.0
        %3395 = vmatprep.subr.mxu0 0.0
        %3396 = vmatpush1.xpose.msra.mxu0 0.0
        %3397 = vmatprep.subr.mxu0 0.0
        %3398 = vmatpush1.xpose.msra.mxu0 0.0
        %3399 = vmatprep.subr.mxu0 0.0
        %3400 = vmatpush1.xpose.msra.mxu0 0.0
        %3401 = vmatprep.subr.mxu0 0.0
        %3402 = vmatpush1.xpose.msra.mxu0 0.0
        %3403 = vmatprep.subr.mxu0 0.0
        %3404 = vmatpush1.xpose.msra.mxu0 0.0
        %3405 = vmatprep.subr.mxu0 0.0
        %3406 = vmatpush1.xpose.msra.mxu0 0.0
        %3407 = vmatprep.subr.mxu0 0.0
        %3408 = vmatpush1.xpose.msra.mxu0 0.0
        %3409 = vmatprep.subr.mxu0 0.0
        %3410 = vmatpush1.xpose.msra.mxu0 0.0
        %3411 = vmatprep.subr.mxu0 0.0
        %3412 = vmatpush1.xpose.msra.mxu0 0.0
        %3413 = vmatprep.subr.mxu0 0.0
        %3414 = vmatpush1.xpose.msra.mxu0 0.0
        %3415 = vmatprep.subr.mxu0 0.0
        %3416 = vmatpush1.xpose.msra.mxu0 0.0
        %3417 = vmatprep.subr.mxu0 0.0
        %3418 = vmatpush1.xpose.msra.mxu0 0.0
        %3419 = vmatprep.subr.mxu0 0.0
        %3420 = vmatpush1.xpose.msra.mxu0 0.0
        %3421 = vmatprep.subr.mxu0 0.0
        %3422 = vmatpush1.xpose.msra.mxu0 0.0
        %3423 = vmatprep.subr.mxu0 0.0
        %3424 = vmatpush1.xpose.msra.mxu0 0.0
        %3425 = vmatprep.subr.mxu0 0.0
        %3426 = vmatpush1.xpose.msra.mxu0 0.0
        %3427 = vmatprep.subr.mxu0 0.0
        %3428 = vmatpush1.xpose.msra.mxu0 0.0
        %3429 = vmatprep.subr.mxu0 0.0
        %3430 = vmatpush1.xpose.msra.mxu0 0.0
        %3431 = vmatprep.subr.mxu0 0.0
        %3432 = vmatpush1.xpose.msra.mxu0 0.0
        %3433 = vmatprep.subr.mxu0 0.0
        %3434 = vmatpush1.xpose.msra.mxu0 0.0
        %3435 = vmatprep.subr.mxu0 0.0
        %3436 = vmatpush1.xpose.msra.mxu0 0.0
        %3437 = vmatprep.subr.mxu0 0.0
        %3438 = vmatpush1.xpose.msra.mxu0 0.0
        %3439 = vmatprep.subr.mxu0 0.0
        %3440 = vmatpush1.xpose.msra.mxu0 0.0
        %3441 = vmatprep.subr.mxu0 0.0
        %3442 = vmatpush1.xpose.msra.mxu0 0.0
        %3443 = vmatprep.subr.mxu0 0.0
        %3444 = vmatpush1.xpose.msra.mxu0 0.0
        %3445 = vmatprep.subr.mxu0 0.0
        %3446 = vmatpush1.xpose.msra.mxu0 0.0
        %3447 = vmatprep.subr.mxu0 0.0
        %3448 = vmatpush1.xpose.msra.mxu0 0.0
        %3449 = vmatprep.subr.mxu0 0.0
        %3450 = vmatpush1.xpose.msra.mxu0 0.0
        %3451 = vmatprep.subr.mxu0 0.0
        %3452 = vmatpush1.xpose.msra.mxu0 0.0
        %3453 = vmatprep.subr.mxu0 0.0
        %3454 = vmatpush1.xpose.msra.mxu0 0.0
        %3455 = vmatprep.mubr.f32.mxu0 0.0
        %3456 = vmatmul.mubr.f32.gmra.mrb[0].mxu0 %v3387
        %v3457 = vpop.f32.mrb[0].mxu0
        %v3458 = vadd.f32 0.0, %v3457
        %v3459 = vpop.f32.mrb[0].mxu0
        %3460 = vdwg.mxu0
        %3461 = vrot.lane.b32.xlu0 %v354, 112
        %v3462 = vpop.permute.xlu0 %3461
        %3463 = vrot.lane.b32.xlu0 %v354, 80
        %v3464 = vpop.permute.xlu0 %3463
        %v3465 = vsel %vm363, %v3462, 0
        %v3467 = vsel %vm363, %v3464, 0
        %3469 = vmatprep.subr.mxu0 0.0
        %3470 = vmatpush1.xpose.msra.mxu0 %v3467
        %3471 = vmatprep.subr.mxu0 0.0
        %3472 = vmatpush1.xpose.msra.mxu0 0.0
        %3473 = vmatprep.subr.mxu0 0.0
        %3474 = vmatpush1.xpose.msra.mxu0 0.0
        %3475 = vmatprep.subr.mxu0 0.0
        %3476 = vmatpush1.xpose.msra.mxu0 0.0
        %3477 = vmatprep.subr.mxu0 0.0
        %3478 = vmatpush1.xpose.msra.mxu0 0.0
        %3479 = vmatprep.subr.mxu0 0.0
        %3480 = vmatpush1.xpose.msra.mxu0 0.0
        %3481 = vmatprep.subr.mxu0 0.0
        %3482 = vmatpush1.xpose.msra.mxu0 0.0
        %3483 = vmatprep.subr.mxu0 0.0
        %3484 = vmatpush1.xpose.msra.mxu0 0.0
        %3485 = vmatprep.subr.mxu0 0.0
        %3486 = vmatpush1.xpose.msra.mxu0 0.0
        %3487 = vmatprep.subr.mxu0 0.0
        %3488 = vmatpush1.xpose.msra.mxu0 0.0
        %3489 = vmatprep.subr.mxu0 0.0
        %3490 = vmatpush1.xpose.msra.mxu0 0.0
        %3491 = vmatprep.subr.mxu0 0.0
        %3492 = vmatpush1.xpose.msra.mxu0 0.0
        %3493 = vmatprep.subr.mxu0 0.0
        %3494 = vmatpush1.xpose.msra.mxu0 0.0
        %3495 = vmatprep.subr.mxu0 0.0
        %3496 = vmatpush1.xpose.msra.mxu0 0.0
        %3497 = vmatprep.subr.mxu0 0.0
        %3498 = vmatpush1.xpose.msra.mxu0 0.0
        %3499 = vmatprep.subr.mxu0 0.0
        %3500 = vmatpush1.xpose.msra.mxu0 0.0
        %3501 = vmatprep.subr.mxu0 0.0
        %3502 = vmatpush1.xpose.msra.mxu0 0.0
        %3503 = vmatprep.subr.mxu0 0.0
        %3504 = vmatpush1.xpose.msra.mxu0 0.0
        %3505 = vmatprep.subr.mxu0 0.0
        %3506 = vmatpush1.xpose.msra.mxu0 0.0
        %3507 = vmatprep.subr.mxu0 0.0
        %3508 = vmatpush1.xpose.msra.mxu0 0.0
        %3509 = vmatprep.subr.mxu0 0.0
        %3510 = vmatpush1.xpose.msra.mxu0 0.0
        %3511 = vmatprep.subr.mxu0 0.0
        %3512 = vmatpush1.xpose.msra.mxu0 0.0
        %3513 = vmatprep.subr.mxu0 0.0
        %3514 = vmatpush1.xpose.msra.mxu0 0.0
        %3515 = vmatprep.subr.mxu0 0.0
        %3516 = vmatpush1.xpose.msra.mxu0 0.0
        %3517 = vmatprep.subr.mxu0 0.0
        %3518 = vmatpush1.xpose.msra.mxu0 0.0
        %3519 = vmatprep.subr.mxu0 0.0
        %3520 = vmatpush1.xpose.msra.mxu0 0.0
        %3521 = vmatprep.subr.mxu0 0.0
        %3522 = vmatpush1.xpose.msra.mxu0 0.0
        %3523 = vmatprep.subr.mxu0 0.0
        %3524 = vmatpush1.xpose.msra.mxu0 0.0
        %3525 = vmatprep.subr.mxu0 0.0
        %3526 = vmatpush1.xpose.msra.mxu0 0.0
        %3527 = vmatprep.subr.mxu0 0.0
        %3528 = vmatpush1.xpose.msra.mxu0 0.0
        %3529 = vmatprep.subr.mxu0 0.0
        %3530 = vmatpush1.xpose.msra.mxu0 0.0
        %3531 = vmatprep.subr.mxu0 0.0
        %3532 = vmatpush1.xpose.msra.mxu0 0.0
        %3533 = vmatprep.mubr.f32.mxu0 0.0
        %3534 = vmatmul.mubr.f32.gmra.mrb[0].mxu0 %v3465
        %v3535 = vpop.f32.mrb[0].mxu0
        %v3536 = vadd.f32 0.0, %v3535
        %v3537 = vpop.f32.mrb[0].mxu0
        %3538 = vdwg.mxu0
        %3539 = vrot.lane.b32.xlu0 %v357, 112
        %v3540 = vpop.permute.xlu0 %3539
        %3541 = vrot.lane.b32.xlu0 %v357, 80
        %v3542 = vpop.permute.xlu0 %3541
        %v3543 = vsel %vm363, %v3540, 0
        %v3545 = vsel %vm363, %v3542, 0
        %3547 = vmatprep.subr.mxu0 0.0
        %3548 = vmatpush1.xpose.msra.mxu0 %v3545
        %3549 = vmatprep.subr.mxu0 0.0
        %3550 = vmatpush1.xpose.msra.mxu0 0.0
        %3551 = vmatprep.subr.mxu0 0.0
        %3552 = vmatpush1.xpose.msra.mxu0 0.0
        %3553 = vmatprep.subr.mxu0 0.0
        %3554 = vmatpush1.xpose.msra.mxu0 0.0
        %3555 = vmatprep.subr.mxu0 0.0
        %3556 = vmatpush1.xpose.msra.mxu0 0.0
        %3557 = vmatprep.subr.mxu0 0.0
        %3558 = vmatpush1.xpose.msra.mxu0 0.0
        %3559 = vmatprep.subr.mxu0 0.0
        %3560 = vmatpush1.xpose.msra.mxu0 0.0
        %3561 = vmatprep.subr.mxu0 0.0
        %3562 = vmatpush1.xpose.msra.mxu0 0.0
        %3563 = vmatprep.subr.mxu0 0.0
        %3564 = vmatpush1.xpose.msra.mxu0 0.0
        %3565 = vmatprep.subr.mxu0 0.0
        %3566 = vmatpush1.xpose.msra.mxu0 0.0
        %3567 = vmatprep.subr.mxu0 0.0
        %3568 = vmatpush1.xpose.msra.mxu0 0.0
        %3569 = vmatprep.subr.mxu0 0.0
        %3570 = vmatpush1.xpose.msra.mxu0 0.0
        %3571 = vmatprep.subr.mxu0 0.0
        %3572 = vmatpush1.xpose.msra.mxu0 0.0
        %3573 = vmatprep.subr.mxu0 0.0
        %3574 = vmatpush1.xpose.msra.mxu0 0.0
        %3575 = vmatprep.subr.mxu0 0.0
        %3576 = vmatpush1.xpose.msra.mxu0 0.0
        %3577 = vmatprep.subr.mxu0 0.0
        %3578 = vmatpush1.xpose.msra.mxu0 0.0
        %3579 = vmatprep.subr.mxu0 0.0
        %3580 = vmatpush1.xpose.msra.mxu0 0.0
        %3581 = vmatprep.subr.mxu0 0.0
        %3582 = vmatpush1.xpose.msra.mxu0 0.0
        %3583 = vmatprep.subr.mxu0 0.0
        %3584 = vmatpush1.xpose.msra.mxu0 0.0
        %3585 = vmatprep.subr.mxu0 0.0
        %3586 = vmatpush1.xpose.msra.mxu0 0.0
        %3587 = vmatprep.subr.mxu0 0.0
        %3588 = vmatpush1.xpose.msra.mxu0 0.0
        %3589 = vmatprep.subr.mxu0 0.0
        %3590 = vmatpush1.xpose.msra.mxu0 0.0
        %3591 = vmatprep.subr.mxu0 0.0
        %3592 = vmatpush1.xpose.msra.mxu0 0.0
        %3593 = vmatprep.subr.mxu0 0.0
        %3594 = vmatpush1.xpose.msra.mxu0 0.0
        %3595 = vmatprep.subr.mxu0 0.0
        %3596 = vmatpush1.xpose.msra.mxu0 0.0
        %3597 = vmatprep.subr.mxu0 0.0
        %3598 = vmatpush1.xpose.msra.mxu0 0.0
        %3599 = vmatprep.subr.mxu0 0.0
        %3600 = vmatpush1.xpose.msra.mxu0 0.0
        %3601 = vmatprep.subr.mxu0 0.0
        %3602 = vmatpush1.xpose.msra.mxu0 0.0
        %3603 = vmatprep.subr.mxu0 0.0
        %3604 = vmatpush1.xpose.msra.mxu0 0.0
        %3605 = vmatprep.subr.mxu0 0.0
        %3606 = vmatpush1.xpose.msra.mxu0 0.0
        %3607 = vmatprep.subr.mxu0 0.0
        %3608 = vmatpush1.xpose.msra.mxu0 0.0
        %3609 = vmatprep.subr.mxu0 0.0
        %3610 = vmatpush1.xpose.msra.mxu0 0.0
        %3611 = vmatprep.mubr.f32.mxu0 0.0
        %3612 = vmatmul.mubr.f32.gmra.mrb[0].mxu0 %v3543
        %v3613 = vpop.f32.mrb[0].mxu0
        %v3614 = vadd.f32 0.0, %v3613
        %v3615 = vpop.f32.mrb[0].mxu0
        %3616 = vdwg.mxu0
        %v3617 = vsel %vm363, %v3068, -inf
        %3618 = vmax.xlane.f32.xlu0 %v3617
        %v3619 = vpop.xlane.xlu0 %3618
        %v3620 = vsel %vm363, %v3146, -inf
        %3621 = vmax.xlane.f32.xlu0 %v3620
        %v3622 = vpop.xlane.xlu0 %3621
        %v3623 = vsel %vm363, %v3224, -inf
        %3624 = vmax.xlane.f32.xlu0 %v3623
        %v3625 = vpop.xlane.xlu0 %3624
        %v3626 = vsel %vm363, %v3302, -inf
        %3627 = vmax.xlane.f32.xlu0 %v3626
        %v3628 = vpop.xlane.xlu0 %3627
        %v3629 = vsel %vm363, %v3380, -inf
        %3630 = vmax.xlane.f32.xlu0 %v3629
        %v3631 = vpop.xlane.xlu0 %3630
        %v3632 = vsel %vm363, %v3458, -inf
        %3633 = vmax.xlane.f32.xlu0 %v3632
        %v3634 = vpop.xlane.xlu0 %3633
        %v3635 = vsel %vm363, %v3536, -inf
        %3636 = vmax.xlane.f32.xlu0 %v3635
        %v3637 = vpop.xlane.xlu0 %3636
        %v3638 = vsel %vm363, %v3614, -inf
        %3639 = vmax.xlane.f32.xlu0 %v3638
        %v3640 = vpop.xlane.xlu0 %3639
        %v3641 = vsub.f32 %v3068, %v3619
        %v3642 = vsub.f32 %v3146, %v3622
        %v3643 = vsub.f32 %v3224, %v3625
        %v3644 = vsub.f32 %v3302, %v3628
        %v3645 = vsub.f32 %v3380, %v3631
        %v3646 = vsub.f32 %v3458, %v3634
        %v3647 = vsub.f32 %v3536, %v3637
        %v3648 = vsub.f32 %v3614, %v3640
        %v3649 = vmul.f32 %v3641, 1.442695
        %v3650 = vpow.pop %v3649
        %v3651 = vmul.f32 %v3642, 1.442695
        %v3652 = vpow.pop %v3651
        %v3653 = vmul.f32 %v3643, 1.442695
        %v3654 = vpow.pop %v3653
        %v3655 = vmul.f32 %v3644, 1.442695
        %v3656 = vpow.pop %v3655
        %v3657 = vmul.f32 %v3645, 1.442695
        %v3658 = vpow.pop %v3657
        %v3659 = vmul.f32 %v3646, 1.442695
        %v3660 = vpow.pop %v3659
        %v3661 = vmul.f32 %v3647, 1.442695
        %v3662 = vpow.pop %v3661
        %v3663 = vmul.f32 %v3648, 1.442695
        %v3664 = vpow.pop %v3663
        %v3665 = vsel %vm363, %v3650, 0.0
        %3666 = vadd.xlane.f32.xlu0 %v3665
        %v3667 = vpop.xlane.xlu0 %3666
        %v3668 = vsel %vm363, %v3652, 0.0
        %3669 = vadd.xlane.f32.xlu0 %v3668
        %v3670 = vpop.xlane.xlu0 %3669
        %v3671 = vsel %vm363, %v3654, 0.0
        %3672 = vadd.xlane.f32.xlu0 %v3671
        %v3673 = vpop.xlane.xlu0 %3672
        %v3674 = vsel %vm363, %v3656, 0.0
        %3675 = vadd.xlane.f32.xlu0 %v3674
        %v3676 = vpop.xlane.xlu0 %3675
        %v3677 = vsel %vm363, %v3658, 0.0
        %3678 = vadd.xlane.f32.xlu0 %v3677
        %v3679 = vpop.xlane.xlu0 %3678
        %v3680 = vsel %vm363, %v3660, 0.0
        %3681 = vadd.xlane.f32.xlu0 %v3680
        %v3682 = vpop.xlane.xlu0 %3681
        %v3683 = vsel %vm363, %v3662, 0.0
        %3684 = vadd.xlane.f32.xlu0 %v3683
        %v3685 = vpop.xlane.xlu0 %3684
        %v3686 = vsel %vm363, %v3664, 0.0
        %3687 = vadd.xlane.f32.xlu0 %v3686
        %v3688 = vpop.xlane.xlu0 %3687
        %v3689 = vrcp.pop %v3667
        %v3690 = vrcp.pop %v3670
        %v3691 = vrcp.pop %v3673
        %v3692 = vrcp.pop %v3676
        %v3693 = vrcp.pop %v3679
        %v3694 = vrcp.pop %v3682
        %v3695 = vrcp.pop %v3685
        %v3696 = vrcp.pop %v3688
        %v3697 = vmul.f32 %v3650, %v3689
        %v3698 = vmul.f32 %v3652, %v3690
        %v3699 = vmul.f32 %v3654, %v3691
        %v3700 = vmul.f32 %v3656, %v3692
        %v3701 = vmul.f32 %v3658, %v3693
        %v3702 = vmul.f32 %v3660, %v3694
        %v3703 = vmul.f32 %v3662, %v3695
        %v3704 = vmul.f32 %v3664, %v3696
        %3705 = vrot.lane.b32.xlu0 %v330, 48
        %v3706 = vpop.permute.xlu0 %3705
        %v3709 = vsel %vm363, %v3697, 0
        %3711 = vmatprep.subr.mxu0 0.0
        %3712 = vmatpush1.msra.mxu0 %v3706
        %3713 = vmatprep.subr.mxu0 0.0
        %3714 = vmatpush1.msra.mxu0 0.0
        %3715 = vmatprep.subr.mxu0 0.0
        %3716 = vmatpush1.msra.mxu0 0.0
        %3717 = vmatprep.subr.mxu0 0.0
        %3718 = vmatpush1.msra.mxu0 0.0
        %3719 = vmatprep.subr.mxu0 0.0
        %3720 = vmatpush1.msra.mxu0 0.0
        %3721 = vmatprep.subr.mxu0 0.0
        %3722 = vmatpush1.msra.mxu0 0.0
        %3723 = vmatprep.subr.mxu0 0.0
        %3724 = vmatpush1.msra.mxu0 0.0
        %3725 = vmatprep.subr.mxu0 0.0
        %3726 = vmatpush1.msra.mxu0 0.0
        %3727 = vmatprep.subr.mxu0 0.0
        %3728 = vmatpush1.msra.mxu0 0.0
        %3729 = vmatprep.subr.mxu0 0.0
        %3730 = vmatpush1.msra.mxu0 0.0
        %3731 = vmatprep.subr.mxu0 0.0
        %3732 = vmatpush1.msra.mxu0 0.0
        %3733 = vmatprep.subr.mxu0 0.0
        %3734 = vmatpush1.msra.mxu0 0.0
        %3735 = vmatprep.subr.mxu0 0.0
        %3736 = vmatpush1.msra.mxu0 0.0
        %3737 = vmatprep.subr.mxu0 0.0
        %3738 = vmatpush1.msra.mxu0 0.0
        %3739 = vmatprep.subr.mxu0 0.0
        %3740 = vmatpush1.msra.mxu0 0.0
        %3741 = vmatprep.subr.mxu0 0.0
        %3742 = vmatpush1.msra.mxu0 0.0
        %3743 = vmatprep.subr.mxu0 0.0
        %3744 = vmatpush1.msra.mxu0 0.0
        %3745 = vmatprep.subr.mxu0 0.0
        %3746 = vmatpush1.msra.mxu0 0.0
        %3747 = vmatprep.subr.mxu0 0.0
        %3748 = vmatpush1.msra.mxu0 0.0
        %3749 = vmatprep.subr.mxu0 0.0
        %3750 = vmatpush1.msra.mxu0 0.0
        %3751 = vmatprep.subr.mxu0 0.0
        %3752 = vmatpush1.msra.mxu0 0.0
        %3753 = vmatprep.subr.mxu0 0.0
        %3754 = vmatpush1.msra.mxu0 0.0
        %3755 = vmatprep.subr.mxu0 0.0
        %3756 = vmatpush1.msra.mxu0 0.0
        %3757 = vmatprep.subr.mxu0 0.0
        %3758 = vmatpush1.msra.mxu0 0.0
        %3759 = vmatprep.subr.mxu0 0.0
        %3760 = vmatpush1.msra.mxu0 0.0
        %3761 = vmatprep.subr.mxu0 0.0
        %3762 = vmatpush1.msra.mxu0 0.0
        %3763 = vmatprep.subr.mxu0 0.0
        %3764 = vmatpush1.msra.mxu0 0.0
        %3765 = vmatprep.subr.mxu0 0.0
        %3766 = vmatpush1.msra.mxu0 0.0
        %3767 = vmatprep.subr.mxu0 0.0
        %3768 = vmatpush1.msra.mxu0 0.0
        %3769 = vmatprep.subr.mxu0 0.0
        %3770 = vmatpush1.msra.mxu0 0.0
        %3771 = vmatprep.subr.mxu0 0.0
        %3772 = vmatpush1.msra.mxu0 0.0
        %3773 = vmatprep.subr.mxu0 0.0
        %3774 = vmatpush1.msra.mxu0 0.0
        %3775 = vmatprep.mubr.f32.mxu0 0.0
        %3776 = vmatmul.mubr.f32.gmra.mrb[0].mxu0 %v3709
        %v3777 = vpop.f32.mrb[0].mxu0
        %v3778 = vadd.f32 0.0, %v3777
        %v3779 = vpop.f32.mrb[0].mxu0
        %3780 = vdwg.mxu0
        %3781 = vrot.lane.b32.xlu0 %v333, 48
        %v3782 = vpop.permute.xlu0 %3781
        %v3785 = vsel %vm363, %v3698, 0
        %3787 = vmatprep.subr.mxu0 0.0
        %3788 = vmatpush1.msra.mxu0 %v3782
        %3789 = vmatprep.subr.mxu0 0.0
        %3790 = vmatpush1.msra.mxu0 0.0
        %3791 = vmatprep.subr.mxu0 0.0
        %3792 = vmatpush1.msra.mxu0 0.0
        %3793 = vmatprep.subr.mxu0 0.0
        %3794 = vmatpush1.msra.mxu0 0.0
        %3795 = vmatprep.subr.mxu0 0.0
        %3796 = vmatpush1.msra.mxu0 0.0
        %3797 = vmatprep.subr.mxu0 0.0
        %3798 = vmatpush1.msra.mxu0 0.0
        %3799 = vmatprep.subr.mxu0 0.0
        %3800 = vmatpush1.msra.mxu0 0.0
        %3801 = vmatprep.subr.mxu0 0.0
        %3802 = vmatpush1.msra.mxu0 0.0
        %3803 = vmatprep.subr.mxu0 0.0
        %3804 = vmatpush1.msra.mxu0 0.0
        %3805 = vmatprep.subr.mxu0 0.0
        %3806 = vmatpush1.msra.mxu0 0.0
        %3807 = vmatprep.subr.mxu0 0.0
        %3808 = vmatpush1.msra.mxu0 0.0
        %3809 = vmatprep.subr.mxu0 0.0
        %3810 = vmatpush1.msra.mxu0 0.0
        %3811 = vmatprep.subr.mxu0 0.0
        %3812 = vmatpush1.msra.mxu0 0.0
        %3813 = vmatprep.subr.mxu0 0.0
        %3814 = vmatpush1.msra.mxu0 0.0
        %3815 = vmatprep.subr.mxu0 0.0
        %3816 = vmatpush1.msra.mxu0 0.0
        %3817 = vmatprep.subr.mxu0 0.0
        %3818 = vmatpush1.msra.mxu0 0.0
        %3819 = vmatprep.subr.mxu0 0.0
        %3820 = vmatpush1.msra.mxu0 0.0
        %3821 = vmatprep.subr.mxu0 0.0
        %3822 = vmatpush1.msra.mxu0 0.0
        %3823 = vmatprep.subr.mxu0 0.0
        %3824 = vmatpush1.msra.mxu0 0.0
        %3825 = vmatprep.subr.mxu0 0.0
        %3826 = vmatpush1.msra.mxu0 0.0
        %3827 = vmatprep.subr.mxu0 0.0
        %3828 = vmatpush1.msra.mxu0 0.0
        %3829 = vmatprep.subr.mxu0 0.0
        %3830 = vmatpush1.msra.mxu0 0.0
        %3831 = vmatprep.subr.mxu0 0.0
        %3832 = vmatpush1.msra.mxu0 0.0
        %3833 = vmatprep.subr.mxu0 0.0
        %3834 = vmatpush1.msra.mxu0 0.0
        %3835 = vmatprep.subr.mxu0 0.0
        %3836 = vmatpush1.msra.mxu0 0.0
        %3837 = vmatprep.subr.mxu0 0.0
        %3838 = vmatpush1.msra.mxu0 0.0
        %3839 = vmatprep.subr.mxu0 0.0
        %3840 = vmatpush1.msra.mxu0 0.0
        %3841 = vmatprep.subr.mxu0 0.0
        %3842 = vmatpush1.msra.mxu0 0.0
        %3843 = vmatprep.subr.mxu0 0.0
        %3844 = vmatpush1.msra.mxu0 0.0
        %3845 = vmatprep.subr.mxu0 0.0
        %3846 = vmatpush1.msra.mxu0 0.0
        %3847 = vmatprep.subr.mxu0 0.0
        %3848 = vmatpush1.msra.mxu0 0.0
        %3849 = vmatprep.subr.mxu0 0.0
        %3850 = vmatpush1.msra.mxu0 0.0
        %3851 = vmatprep.mubr.f32.mxu0 0.0
        %3852 = vmatmul.mubr.f32.gmra.mrb[0].mxu0 %v3785
        %v3853 = vpop.f32.mrb[0].mxu0
        %v3854 = vadd.f32 0.0, %v3853
        %v3855 = vpop.f32.mrb[0].mxu0
        %3856 = vdwg.mxu0
        %3857 = vrot.lane.b32.xlu0 %v338, 48
        %v3858 = vpop.permute.xlu0 %3857
        %v3861 = vsel %vm363, %v3699, 0
        %3863 = vmatprep.subr.mxu0 0.0
        %3864 = vmatpush1.msra.mxu0 %v3858
        %3865 = vmatprep.subr.mxu0 0.0
        %3866 = vmatpush1.msra.mxu0 0.0
        %3867 = vmatprep.subr.mxu0 0.0
        %3868 = vmatpush1.msra.mxu0 0.0
        %3869 = vmatprep.subr.mxu0 0.0
        %3870 = vmatpush1.msra.mxu0 0.0
        %3871 = vmatprep.subr.mxu0 0.0
        %3872 = vmatpush1.msra.mxu0 0.0
        %3873 = vmatprep.subr.mxu0 0.0
        %3874 = vmatpush1.msra.mxu0 0.0
        %3875 = vmatprep.subr.mxu0 0.0
        %3876 = vmatpush1.msra.mxu0 0.0
        %3877 = vmatprep.subr.mxu0 0.0
        %3878 = vmatpush1.msra.mxu0 0.0
        %3879 = vmatprep.subr.mxu0 0.0
        %3880 = vmatpush1.msra.mxu0 0.0
        %3881 = vmatprep.subr.mxu0 0.0
        %3882 = vmatpush1.msra.mxu0 0.0
        %3883 = vmatprep.subr.mxu0 0.0
        %3884 = vmatpush1.msra.mxu0 0.0
        %3885 = vmatprep.subr.mxu0 0.0
        %3886 = vmatpush1.msra.mxu0 0.0
        %3887 = vmatprep.subr.mxu0 0.0
        %3888 = vmatpush1.msra.mxu0 0.0
        %3889 = vmatprep.subr.mxu0 0.0
        %3890 = vmatpush1.msra.mxu0 0.0
        %3891 = vmatprep.subr.mxu0 0.0
        %3892 = vmatpush1.msra.mxu0 0.0
        %3893 = vmatprep.subr.mxu0 0.0
        %3894 = vmatpush1.msra.mxu0 0.0
        %3895 = vmatprep.subr.mxu0 0.0
        %3896 = vmatpush1.msra.mxu0 0.0
        %3897 = vmatprep.subr.mxu0 0.0
        %3898 = vmatpush1.msra.mxu0 0.0
        %3899 = vmatprep.subr.mxu0 0.0
        %3900 = vmatpush1.msra.mxu0 0.0
        %3901 = vmatprep.subr.mxu0 0.0
        %3902 = vmatpush1.msra.mxu0 0.0
        %3903 = vmatprep.subr.mxu0 0.0
        %3904 = vmatpush1.msra.mxu0 0.0
        %3905 = vmatprep.subr.mxu0 0.0
        %3906 = vmatpush1.msra.mxu0 0.0
        %3907 = vmatprep.subr.mxu0 0.0
        %3908 = vmatpush1.msra.mxu0 0.0
        %3909 = vmatprep.subr.mxu0 0.0
        %3910 = vmatpush1.msra.mxu0 0.0
        %3911 = vmatprep.subr.mxu0 0.0
        %3912 = vmatpush1.msra.mxu0 0.0
        %3913 = vmatprep.subr.mxu0 0.0
        %3914 = vmatpush1.msra.mxu0 0.0
        %3915 = vmatprep.subr.mxu0 0.0
        %3916 = vmatpush1.msra.mxu0 0.0
        %3917 = vmatprep.subr.mxu0 0.0
        %3918 = vmatpush1.msra.mxu0 0.0
        %3919 = vmatprep.subr.mxu0 0.0
        %3920 = vmatpush1.msra.mxu0 0.0
        %3921 = vmatprep.subr.mxu0 0.0
        %3922 = vmatpush1.msra.mxu0 0.0
        %3923 = vmatprep.subr.mxu0 0.0
        %3924 = vmatpush1.msra.mxu0 0.0
        %3925 = vmatprep.subr.mxu0 0.0
        %3926 = vmatpush1.msra.mxu0 0.0
        %3927 = vmatprep.mubr.f32.mxu0 0.0
        %3928 = vmatmul.mubr.f32.gmra.mrb[0].mxu0 %v3861
        %v3929 = vpop.f32.mrb[0].mxu0
        %v3930 = vadd.f32 0.0, %v3929
        %v3931 = vpop.f32.mrb[0].mxu0
        %3932 = vdwg.mxu0
        %3933 = vrot.lane.b32.xlu0 %v341, 48
        %v3934 = vpop.permute.xlu0 %3933
        %v3937 = vsel %vm363, %v3700, 0
        %3939 = vmatprep.subr.mxu0 0.0
        %3940 = vmatpush1.msra.mxu0 %v3934
        %3941 = vmatprep.subr.mxu0 0.0
        %3942 = vmatpush1.msra.mxu0 0.0
        %3943 = vmatprep.subr.mxu0 0.0
        %3944 = vmatpush1.msra.mxu0 0.0
        %3945 = vmatprep.subr.mxu0 0.0
        %3946 = vmatpush1.msra.mxu0 0.0
        %3947 = vmatprep.subr.mxu0 0.0
        %3948 = vmatpush1.msra.mxu0 0.0
        %3949 = vmatprep.subr.mxu0 0.0
        %3950 = vmatpush1.msra.mxu0 0.0
        %3951 = vmatprep.subr.mxu0 0.0
        %3952 = vmatpush1.msra.mxu0 0.0
        %3953 = vmatprep.subr.mxu0 0.0
        %3954 = vmatpush1.msra.mxu0 0.0
        %3955 = vmatprep.subr.mxu0 0.0
        %3956 = vmatpush1.msra.mxu0 0.0
        %3957 = vmatprep.subr.mxu0 0.0
        %3958 = vmatpush1.msra.mxu0 0.0
        %3959 = vmatprep.subr.mxu0 0.0
        %3960 = vmatpush1.msra.mxu0 0.0
        %3961 = vmatprep.subr.mxu0 0.0
        %3962 = vmatpush1.msra.mxu0 0.0
        %3963 = vmatprep.subr.mxu0 0.0
        %3964 = vmatpush1.msra.mxu0 0.0
        %3965 = vmatprep.subr.mxu0 0.0
        %3966 = vmatpush1.msra.mxu0 0.0
        %3967 = vmatprep.subr.mxu0 0.0
        %3968 = vmatpush1.msra.mxu0 0.0
        %3969 = vmatprep.subr.mxu0 0.0
        %3970 = vmatpush1.msra.mxu0 0.0
        %3971 = vmatprep.subr.mxu0 0.0
        %3972 = vmatpush1.msra.mxu0 0.0
        %3973 = vmatprep.subr.mxu0 0.0
        %3974 = vmatpush1.msra.mxu0 0.0
        %3975 = vmatprep.subr.mxu0 0.0
        %3976 = vmatpush1.msra.mxu0 0.0
        %3977 = vmatprep.subr.mxu0 0.0
        %3978 = vmatpush1.msra.mxu0 0.0
        %3979 = vmatprep.subr.mxu0 0.0
        %3980 = vmatpush1.msra.mxu0 0.0
        %3981 = vmatprep.subr.mxu0 0.0
        %3982 = vmatpush1.msra.mxu0 0.0
        %3983 = vmatprep.subr.mxu0 0.0
        %3984 = vmatpush1.msra.mxu0 0.0
        %3985 = vmatprep.subr.mxu0 0.0
        %3986 = vmatpush1.msra.mxu0 0.0
        %3987 = vmatprep.subr.mxu0 0.0
        %3988 = vmatpush1.msra.mxu0 0.0
        %3989 = vmatprep.subr.mxu0 0.0
        %3990 = vmatpush1.msra.mxu0 0.0
        %3991 = vmatprep.subr.mxu0 0.0
        %3992 = vmatpush1.msra.mxu0 0.0
        %3993 = vmatprep.subr.mxu0 0.0
        %3994 = vmatpush1.msra.mxu0 0.0
        %3995 = vmatprep.subr.mxu0 0.0
        %3996 = vmatpush1.msra.mxu0 0.0
        %3997 = vmatprep.subr.mxu0 0.0
        %3998 = vmatpush1.msra.mxu0 0.0
        %3999 = vmatprep.subr.mxu0 0.0
        %4000 = vmatpush1.msra.mxu0 0.0
        %4001 = vmatprep.subr.mxu0 0.0
        %4002 = vmatpush1.msra.mxu0 0.0
        %4003 = vmatprep.mubr.f32.mxu0 0.0
        %4004 = vmatmul.mubr.f32.gmra.mrb[0].mxu0 %v3937
        %v4005 = vpop.f32.mrb[0].mxu0
        %v4006 = vadd.f32 0.0, %v4005
        %v4007 = vpop.f32.mrb[0].mxu0
        %4008 = vdwg.mxu0
        %4009 = vrot.lane.b32.xlu0 %v346, 48
        %v4010 = vpop.permute.xlu0 %4009
        %v4013 = vsel %vm363, %v3701, 0
        %4015 = vmatprep.subr.mxu0 0.0
        %4016 = vmatpush1.msra.mxu0 %v4010
        %4017 = vmatprep.subr.mxu0 0.0
        %4018 = vmatpush1.msra.mxu0 0.0
        %4019 = vmatprep.subr.mxu0 0.0
        %4020 = vmatpush1.msra.mxu0 0.0
        %4021 = vmatprep.subr.mxu0 0.0
        %4022 = vmatpush1.msra.mxu0 0.0
        %4023 = vmatprep.subr.mxu0 0.0
        %4024 = vmatpush1.msra.mxu0 0.0
        %4025 = vmatprep.subr.mxu0 0.0
        %4026 = vmatpush1.msra.mxu0 0.0
        %4027 = vmatprep.subr.mxu0 0.0
        %4028 = vmatpush1.msra.mxu0 0.0
        %4029 = vmatprep.subr.mxu0 0.0
        %4030 = vmatpush1.msra.mxu0 0.0
        %4031 = vmatprep.subr.mxu0 0.0
        %4032 = vmatpush1.msra.mxu0 0.0
        %4033 = vmatprep.subr.mxu0 0.0
        %4034 = vmatpush1.msra.mxu0 0.0
        %4035 = vmatprep.subr.mxu0 0.0
        %4036 = vmatpush1.msra.mxu0 0.0
        %4037 = vmatprep.subr.mxu0 0.0
        %4038 = vmatpush1.msra.mxu0 0.0
        %4039 = vmatprep.subr.mxu0 0.0
        %4040 = vmatpush1.msra.mxu0 0.0
        %4041 = vmatprep.subr.mxu0 0.0
        %4042 = vmatpush1.msra.mxu0 0.0
        %4043 = vmatprep.subr.mxu0 0.0
        %4044 = vmatpush1.msra.mxu0 0.0
        %4045 = vmatprep.subr.mxu0 0.0
        %4046 = vmatpush1.msra.mxu0 0.0
        %4047 = vmatprep.subr.mxu0 0.0
        %4048 = vmatpush1.msra.mxu0 0.0
        %4049 = vmatprep.subr.mxu0 0.0
        %4050 = vmatpush1.msra.mxu0 0.0
        %4051 = vmatprep.subr.mxu0 0.0
        %4052 = vmatpush1.msra.mxu0 0.0
        %4053 = vmatprep.subr.mxu0 0.0
        %4054 = vmatpush1.msra.mxu0 0.0
        %4055 = vmatprep.subr.mxu0 0.0
        %4056 = vmatpush1.msra.mxu0 0.0
        %4057 = vmatprep.subr.mxu0 0.0
        %4058 = vmatpush1.msra.mxu0 0.0
        %4059 = vmatprep.subr.mxu0 0.0
        %4060 = vmatpush1.msra.mxu0 0.0
        %4061 = vmatprep.subr.mxu0 0.0
        %4062 = vmatpush1.msra.mxu0 0.0
        %4063 = vmatprep.subr.mxu0 0.0
        %4064 = vmatpush1.msra.mxu0 0.0
        %4065 = vmatprep.subr.mxu0 0.0
        %4066 = vmatpush1.msra.mxu0 0.0
        %4067 = vmatprep.subr.mxu0 0.0
        %4068 = vmatpush1.msra.mxu0 0.0
        %4069 = vmatprep.subr.mxu0 0.0
        %4070 = vmatpush1.msra.mxu0 0.0
        %4071 = vmatprep.subr.mxu0 0.0
        %4072 = vmatpush1.msra.mxu0 0.0
        %4073 = vmatprep.subr.mxu0 0.0
        %4074 = vmatpush1.msra.mxu0 0.0
        %4075 = vmatprep.subr.mxu0 0.0
        %4076 = vmatpush1.msra.mxu0 0.0
        %4077 = vmatprep.subr.mxu0 0.0
        %4078 = vmatpush1.msra.mxu0 0.0
        %4079 = vmatprep.mubr.f32.mxu0 0.0
        %4080 = vmatmul.mubr.f32.gmra.mrb[0].mxu0 %v4013
        %v4081 = vpop.f32.mrb[0].mxu0
        %v4082 = vadd.f32 0.0, %v4081
        %v4083 = vpop.f32.mrb[0].mxu0
        %4084 = vdwg.mxu0
        %4085 = vrot.lane.b32.xlu0 %v349, 48
        %v4086 = vpop.permute.xlu0 %4085
        %v4089 = vsel %vm363, %v3702, 0
        %4091 = vmatprep.subr.mxu0 0.0
        %4092 = vmatpush1.msra.mxu0 %v4086
        %4093 = vmatprep.subr.mxu0 0.0
        %4094 = vmatpush1.msra.mxu0 0.0
        %4095 = vmatprep.subr.mxu0 0.0
        %4096 = vmatpush1.msra.mxu0 0.0
        %4097 = vmatprep.subr.mxu0 0.0
        %4098 = vmatpush1.msra.mxu0 0.0
        %4099 = vmatprep.subr.mxu0 0.0
        %4100 = vmatpush1.msra.mxu0 0.0
        %4101 = vmatprep.subr.mxu0 0.0
        %4102 = vmatpush1.msra.mxu0 0.0
        %4103 = vmatprep.subr.mxu0 0.0
        %4104 = vmatpush1.msra.mxu0 0.0
        %4105 = vmatprep.subr.mxu0 0.0
        %4106 = vmatpush1.msra.mxu0 0.0
        %4107 = vmatprep.subr.mxu0 0.0
        %4108 = vmatpush1.msra.mxu0 0.0
        %4109 = vmatprep.subr.mxu0 0.0
        %4110 = vmatpush1.msra.mxu0 0.0
        %4111 = vmatprep.subr.mxu0 0.0
        %4112 = vmatpush1.msra.mxu0 0.0
        %4113 = vmatprep.subr.mxu0 0.0
        %4114 = vmatpush1.msra.mxu0 0.0
        %4115 = vmatprep.subr.mxu0 0.0
        %4116 = vmatpush1.msra.mxu0 0.0
        %4117 = vmatprep.subr.mxu0 0.0
        %4118 = vmatpush1.msra.mxu0 0.0
        %4119 = vmatprep.subr.mxu0 0.0
        %4120 = vmatpush1.msra.mxu0 0.0
        %4121 = vmatprep.subr.mxu0 0.0
        %4122 = vmatpush1.msra.mxu0 0.0
        %4123 = vmatprep.subr.mxu0 0.0
        %4124 = vmatpush1.msra.mxu0 0.0
        %4125 = vmatprep.subr.mxu0 0.0
        %4126 = vmatpush1.msra.mxu0 0.0
        %4127 = vmatprep.subr.mxu0 0.0
        %4128 = vmatpush1.msra.mxu0 0.0
        %4129 = vmatprep.subr.mxu0 0.0
        %4130 = vmatpush1.msra.mxu0 0.0
        %4131 = vmatprep.subr.mxu0 0.0
        %4132 = vmatpush1.msra.mxu0 0.0
        %4133 = vmatprep.subr.mxu0 0.0
        %4134 = vmatpush1.msra.mxu0 0.0
        %4135 = vmatprep.subr.mxu0 0.0
        %4136 = vmatpush1.msra.mxu0 0.0
        %4137 = vmatprep.subr.mxu0 0.0
        %4138 = vmatpush1.msra.mxu0 0.0
        %4139 = vmatprep.subr.mxu0 0.0
        %4140 = vmatpush1.msra.mxu0 0.0
        %4141 = vmatprep.subr.mxu0 0.0
        %4142 = vmatpush1.msra.mxu0 0.0
        %4143 = vmatprep.subr.mxu0 0.0
        %4144 = vmatpush1.msra.mxu0 0.0
        %4145 = vmatprep.subr.mxu0 0.0
        %4146 = vmatpush1.msra.mxu0 0.0
        %4147 = vmatprep.subr.mxu0 0.0
        %4148 = vmatpush1.msra.mxu0 0.0
        %4149 = vmatprep.subr.mxu0 0.0
        %4150 = vmatpush1.msra.mxu0 0.0
        %4151 = vmatprep.subr.mxu0 0.0
        %4152 = vmatpush1.msra.mxu0 0.0
        %4153 = vmatprep.subr.mxu0 0.0
        %4154 = vmatpush1.msra.mxu0 0.0
        %4155 = vmatprep.mubr.f32.mxu0 0.0
        %4156 = vmatmul.mubr.f32.gmra.mrb[0].mxu0 %v4089
        %v4157 = vpop.f32.mrb[0].mxu0
        %v4158 = vadd.f32 0.0, %v4157
        %v4159 = vpop.f32.mrb[0].mxu0
        %4160 = vdwg.mxu0
        %4161 = vrot.lane.b32.xlu0 %v354, 48
        %v4162 = vpop.permute.xlu0 %4161
        %v4165 = vsel %vm363, %v3703, 0
        %4167 = vmatprep.subr.mxu0 0.0
        %4168 = vmatpush1.msra.mxu0 %v4162
        %4169 = vmatprep.subr.mxu0 0.0
        %4170 = vmatpush1.msra.mxu0 0.0
        %4171 = vmatprep.subr.mxu0 0.0
        %4172 = vmatpush1.msra.mxu0 0.0
        %4173 = vmatprep.subr.mxu0 0.0
        %4174 = vmatpush1.msra.mxu0 0.0
        %4175 = vmatprep.subr.mxu0 0.0
        %4176 = vmatpush1.msra.mxu0 0.0
        %4177 = vmatprep.subr.mxu0 0.0
        %4178 = vmatpush1.msra.mxu0 0.0
        %4179 = vmatprep.subr.mxu0 0.0
        %4180 = vmatpush1.msra.mxu0 0.0
        %4181 = vmatprep.subr.mxu0 0.0
        %4182 = vmatpush1.msra.mxu0 0.0
        %4183 = vmatprep.subr.mxu0 0.0
        %4184 = vmatpush1.msra.mxu0 0.0
        %4185 = vmatprep.subr.mxu0 0.0
        %4186 = vmatpush1.msra.mxu0 0.0
        %4187 = vmatprep.subr.mxu0 0.0
        %4188 = vmatpush1.msra.mxu0 0.0
        %4189 = vmatprep.subr.mxu0 0.0
        %4190 = vmatpush1.msra.mxu0 0.0
        %4191 = vmatprep.subr.mxu0 0.0
        %4192 = vmatpush1.msra.mxu0 0.0
        %4193 = vmatprep.subr.mxu0 0.0
        %4194 = vmatpush1.msra.mxu0 0.0
        %4195 = vmatprep.subr.mxu0 0.0
        %4196 = vmatpush1.msra.mxu0 0.0
        %4197 = vmatprep.subr.mxu0 0.0
        %4198 = vmatpush1.msra.mxu0 0.0
        %4199 = vmatprep.subr.mxu0 0.0
        %4200 = vmatpush1.msra.mxu0 0.0
        %4201 = vmatprep.subr.mxu0 0.0
        %4202 = vmatpush1.msra.mxu0 0.0
        %4203 = vmatprep.subr.mxu0 0.0
        %4204 = vmatpush1.msra.mxu0 0.0
        %4205 = vmatprep.subr.mxu0 0.0
        %4206 = vmatpush1.msra.mxu0 0.0
        %4207 = vmatprep.subr.mxu0 0.0
        %4208 = vmatpush1.msra.mxu0 0.0
        %4209 = vmatprep.subr.mxu0 0.0
        %4210 = vmatpush1.msra.mxu0 0.0
        %4211 = vmatprep.subr.mxu0 0.0
        %4212 = vmatpush1.msra.mxu0 0.0
        %4213 = vmatprep.subr.mxu0 0.0
        %4214 = vmatpush1.msra.mxu0 0.0
        %4215 = vmatprep.subr.mxu0 0.0
        %4216 = vmatpush1.msra.mxu0 0.0
        %4217 = vmatprep.subr.mxu0 0.0
        %4218 = vmatpush1.msra.mxu0 0.0
        %4219 = vmatprep.subr.mxu0 0.0
        %4220 = vmatpush1.msra.mxu0 0.0
        %4221 = vmatprep.subr.mxu0 0.0
        %4222 = vmatpush1.msra.mxu0 0.0
        %4223 = vmatprep.subr.mxu0 0.0
        %4224 = vmatpush1.msra.mxu0 0.0
        %4225 = vmatprep.subr.mxu0 0.0
        %4226 = vmatpush1.msra.mxu0 0.0
        %4227 = vmatprep.subr.mxu0 0.0
        %4228 = vmatpush1.msra.mxu0 0.0
        %4229 = vmatprep.subr.mxu0 0.0
        %4230 = vmatpush1.msra.mxu0 0.0
        %4231 = vmatprep.mubr.f32.mxu0 0.0
        %4232 = vmatmul.mubr.f32.gmra.mrb[0].mxu0 %v4165
        %v4233 = vpop.f32.mrb[0].mxu0
        %v4234 = vadd.f32 0.0, %v4233
        %v4235 = vpop.f32.mrb[0].mxu0
        %4236 = vdwg.mxu0
        %4237 = vrot.lane.b32.xlu0 %v357, 48
        %v4238 = vpop.permute.xlu0 %4237
        %v4241 = vsel %vm363, %v3704, 0
        %4243 = vmatprep.subr.mxu0 0.0
        %4244 = vmatpush1.msra.mxu0 %v4238
        %4245 = vmatprep.subr.mxu0 0.0
        %4246 = vmatpush1.msra.mxu0 0.0
        %4247 = vmatprep.subr.mxu0 0.0
        %4248 = vmatpush1.msra.mxu0 0.0
        %4249 = vmatprep.subr.mxu0 0.0
        %4250 = vmatpush1.msra.mxu0 0.0
        %4251 = vmatprep.subr.mxu0 0.0
        %4252 = vmatpush1.msra.mxu0 0.0
        %4253 = vmatprep.subr.mxu0 0.0
        %4254 = vmatpush1.msra.mxu0 0.0
        %4255 = vmatprep.subr.mxu0 0.0
        %4256 = vmatpush1.msra.mxu0 0.0
        %4257 = vmatprep.subr.mxu0 0.0
        %4258 = vmatpush1.msra.mxu0 0.0
        %4259 = vmatprep.subr.mxu0 0.0
        %4260 = vmatpush1.msra.mxu0 0.0
        %4261 = vmatprep.subr.mxu0 0.0
        %4262 = vmatpush1.msra.mxu0 0.0
        %4263 = vmatprep.subr.mxu0 0.0
        %4264 = vmatpush1.msra.mxu0 0.0
        %4265 = vmatprep.subr.mxu0 0.0
        %4266 = vmatpush1.msra.mxu0 0.0
        %4267 = vmatprep.subr.mxu0 0.0
        %4268 = vmatpush1.msra.mxu0 0.0
        %4269 = vmatprep.subr.mxu0 0.0
        %4270 = vmatpush1.msra.mxu0 0.0
        %4271 = vmatprep.subr.mxu0 0.0
        %4272 = vmatpush1.msra.mxu0 0.0
        %4273 = vmatprep.subr.mxu0 0.0
        %4274 = vmatpush1.msra.mxu0 0.0
        %4275 = vmatprep.subr.mxu0 0.0
        %4276 = vmatpush1.msra.mxu0 0.0
        %4277 = vmatprep.subr.mxu0 0.0
        %4278 = vmatpush1.msra.mxu0 0.0
        %4279 = vmatprep.subr.mxu0 0.0
        %4280 = vmatpush1.msra.mxu0 0.0
        %4281 = vmatprep.subr.mxu0 0.0
        %4282 = vmatpush1.msra.mxu0 0.0
        %4283 = vmatprep.subr.mxu0 0.0
        %4284 = vmatpush1.msra.mxu0 0.0
        %4285 = vmatprep.subr.mxu0 0.0
        %4286 = vmatpush1.msra.mxu0 0.0
        %4287 = vmatprep.subr.mxu0 0.0
        %4288 = vmatpush1.msra.mxu0 0.0
        %4289 = vmatprep.subr.mxu0 0.0
        %4290 = vmatpush1.msra.mxu0 0.0
        %4291 = vmatprep.subr.mxu0 0.0
        %4292 = vmatpush1.msra.mxu0 0.0
        %4293 = vmatprep.subr.mxu0 0.0
        %4294 = vmatpush1.msra.mxu0 0.0
        %4295 = vmatprep.subr.mxu0 0.0
        %4296 = vmatpush1.msra.mxu0 0.0
        %4297 = vmatprep.subr.mxu0 0.0
        %4298 = vmatpush1.msra.mxu0 0.0
        %4299 = vmatprep.subr.mxu0 0.0
        %4300 = vmatpush1.msra.mxu0 0.0
        %4301 = vmatprep.subr.mxu0 0.0
        %4302 = vmatpush1.msra.mxu0 0.0
        %4303 = vmatprep.subr.mxu0 0.0
        %4304 = vmatpush1.msra.mxu0 0.0
        %4305 = vmatprep.subr.mxu0 0.0
        %4306 = vmatpush1.msra.mxu0 0.0
        %4307 = vmatprep.mubr.f32.mxu0 0.0
        %4308 = vmatmul.mubr.f32.gmra.mrb[0].mxu0 %v4241
        %v4309 = vpop.f32.mrb[0].mxu0
        %v4310 = vadd.f32 0.0, %v4309
        %v4311 = vpop.f32.mrb[0].mxu0
        %4312 = vdwg.mxu0
        %4313 = vrot.lane.b32.xlu0 %v330, 104
        %v4314 = vpop.permute.xlu0 %4313
        %4315 = vrot.lane.b32.xlu0 %v330, 72
        %v4316 = vpop.permute.xlu0 %4315
        %v4317 = vsel %vm363, %v4314, 0
        %v4319 = vsel %vm363, %v4316, 0
        %4321 = vmatprep.subr.mxu0 0.0
        %4322 = vmatpush1.xpose.msra.mxu0 %v4319
        %4323 = vmatprep.subr.mxu0 0.0
        %4324 = vmatpush1.xpose.msra.mxu0 0.0
        %4325 = vmatprep.subr.mxu0 0.0
        %4326 = vmatpush1.xpose.msra.mxu0 0.0
        %4327 = vmatprep.subr.mxu0 0.0
        %4328 = vmatpush1.xpose.msra.mxu0 0.0
        %4329 = vmatprep.subr.mxu0 0.0
        %4330 = vmatpush1.xpose.msra.mxu0 0.0
        %4331 = vmatprep.subr.mxu0 0.0
        %4332 = vmatpush1.xpose.msra.mxu0 0.0
        %4333 = vmatprep.subr.mxu0 0.0
        %4334 = vmatpush1.xpose.msra.mxu0 0.0
        %4335 = vmatprep.subr.mxu0 0.0
        %4336 = vmatpush1.xpose.msra.mxu0 0.0
        %4337 = vmatprep.subr.mxu0 0.0
        %4338 = vmatpush1.xpose.msra.mxu0 0.0
        %4339 = vmatprep.subr.mxu0 0.0
        %4340 = vmatpush1.xpose.msra.mxu0 0.0
        %4341 = vmatprep.subr.mxu0 0.0
        %4342 = vmatpush1.xpose.msra.mxu0 0.0
        %4343 = vmatprep.subr.mxu0 0.0
        %4344 = vmatpush1.xpose.msra.mxu0 0.0
        %4345 = vmatprep.subr.mxu0 0.0
        %4346 = vmatpush1.xpose.msra.mxu0 0.0
        %4347 = vmatprep.subr.mxu0 0.0
        %4348 = vmatpush1.xpose.msra.mxu0 0.0
        %4349 = vmatprep.subr.mxu0 0.0
        %4350 = vmatpush1.xpose.msra.mxu0 0.0
        %4351 = vmatprep.subr.mxu0 0.0
        %4352 = vmatpush1.xpose.msra.mxu0 0.0
        %4353 = vmatprep.subr.mxu0 0.0
        %4354 = vmatpush1.xpose.msra.mxu0 0.0
        %4355 = vmatprep.subr.mxu0 0.0
        %4356 = vmatpush1.xpose.msra.mxu0 0.0
        %4357 = vmatprep.subr.mxu0 0.0
        %4358 = vmatpush1.xpose.msra.mxu0 0.0
        %4359 = vmatprep.subr.mxu0 0.0
        %4360 = vmatpush1.xpose.msra.mxu0 0.0
        %4361 = vmatprep.subr.mxu0 0.0
        %4362 = vmatpush1.xpose.msra.mxu0 0.0
        %4363 = vmatprep.subr.mxu0 0.0
        %4364 = vmatpush1.xpose.msra.mxu0 0.0
        %4365 = vmatprep.subr.mxu0 0.0
        %4366 = vmatpush1.xpose.msra.mxu0 0.0
        %4367 = vmatprep.subr.mxu0 0.0
        %4368 = vmatpush1.xpose.msra.mxu0 0.0
        %4369 = vmatprep.subr.mxu0 0.0
        %4370 = vmatpush1.xpose.msra.mxu0 0.0
        %4371 = vmatprep.subr.mxu0 0.0
        %4372 = vmatpush1.xpose.msra.mxu0 0.0
        %4373 = vmatprep.subr.mxu0 0.0
        %4374 = vmatpush1.xpose.msra.mxu0 0.0
        %4375 = vmatprep.subr.mxu0 0.0
        %4376 = vmatpush1.xpose.msra.mxu0 0.0
        %4377 = vmatprep.subr.mxu0 0.0
        %4378 = vmatpush1.xpose.msra.mxu0 0.0
        %4379 = vmatprep.subr.mxu0 0.0
        %4380 = vmatpush1.xpose.msra.mxu0 0.0
        %4381 = vmatprep.subr.mxu0 0.0
        %4382 = vmatpush1.xpose.msra.mxu0 0.0
        %4383 = vmatprep.subr.mxu0 0.0
        %4384 = vmatpush1.xpose.msra.mxu0 0.0
        %4385 = vmatprep.mubr.f32.mxu0 0.0
        %4386 = vmatmul.mubr.f32.gmra.mrb[0].mxu0 %v4317
        %v4387 = vpop.f32.mrb[0].mxu0
        %v4388 = vadd.f32 0.0, %v4387
        %v4389 = vpop.f32.mrb[0].mxu0
        %4390 = vdwg.mxu0
        %4391 = vrot.lane.b32.xlu0 %v333, 104
        %v4392 = vpop.permute.xlu0 %4391
        %4393 = vrot.lane.b32.xlu0 %v333, 72
        %v4394 = vpop.permute.xlu0 %4393
        %v4395 = vsel %vm363, %v4392, 0
        %v4397 = vsel %vm363, %v4394, 0
        %4399 = vmatprep.subr.mxu0 0.0
        %4400 = vmatpush1.xpose.msra.mxu0 %v4397
        %4401 = vmatprep.subr.mxu0 0.0
        %4402 = vmatpush1.xpose.msra.mxu0 0.0
        %4403 = vmatprep.subr.mxu0 0.0
        %4404 = vmatpush1.xpose.msra.mxu0 0.0
        %4405 = vmatprep.subr.mxu0 0.0
        %4406 = vmatpush1.xpose.msra.mxu0 0.0
        %4407 = vmatprep.subr.mxu0 0.0
        %4408 = vmatpush1.xpose.msra.mxu0 0.0
        %4409 = vmatprep.subr.mxu0 0.0
        %4410 = vmatpush1.xpose.msra.mxu0 0.0
        %4411 = vmatprep.subr.mxu0 0.0
        %4412 = vmatpush1.xpose.msra.mxu0 0.0
        %4413 = vmatprep.subr.mxu0 0.0
        %4414 = vmatpush1.xpose.msra.mxu0 0.0
        %4415 = vmatprep.subr.mxu0 0.0
        %4416 = vmatpush1.xpose.msra.mxu0 0.0
        %4417 = vmatprep.subr.mxu0 0.0
        %4418 = vmatpush1.xpose.msra.mxu0 0.0
        %4419 = vmatprep.subr.mxu0 0.0
        %4420 = vmatpush1.xpose.msra.mxu0 0.0
        %4421 = vmatprep.subr.mxu0 0.0
        %4422 = vmatpush1.xpose.msra.mxu0 0.0
        %4423 = vmatprep.subr.mxu0 0.0
        %4424 = vmatpush1.xpose.msra.mxu0 0.0
        %4425 = vmatprep.subr.mxu0 0.0
        %4426 = vmatpush1.xpose.msra.mxu0 0.0
        %4427 = vmatprep.subr.mxu0 0.0
        %4428 = vmatpush1.xpose.msra.mxu0 0.0
        %4429 = vmatprep.subr.mxu0 0.0
        %4430 = vmatpush1.xpose.msra.mxu0 0.0
        %4431 = vmatprep.subr.mxu0 0.0
        %4432 = vmatpush1.xpose.msra.mxu0 0.0
        %4433 = vmatprep.subr.mxu0 0.0
        %4434 = vmatpush1.xpose.msra.mxu0 0.0
        %4435 = vmatprep.subr.mxu0 0.0
        %4436 = vmatpush1.xpose.msra.mxu0 0.0
        %4437 = vmatprep.subr.mxu0 0.0
        %4438 = vmatpush1.xpose.msra.mxu0 0.0
        %4439 = vmatprep.subr.mxu0 0.0
        %4440 = vmatpush1.xpose.msra.mxu0 0.0
        %4441 = vmatprep.subr.mxu0 0.0
        %4442 = vmatpush1.xpose.msra.mxu0 0.0
        %4443 = vmatprep.subr.mxu0 0.0
        %4444 = vmatpush1.xpose.msra.mxu0 0.0
        %4445 = vmatprep.subr.mxu0 0.0
        %4446 = vmatpush1.xpose.msra.mxu0 0.0
        %4447 = vmatprep.subr.mxu0 0.0
        %4448 = vmatpush1.xpose.msra.mxu0 0.0
        %4449 = vmatprep.subr.mxu0 0.0
        %4450 = vmatpush1.xpose.msra.mxu0 0.0
        %4451 = vmatprep.subr.mxu0 0.0
        %4452 = vmatpush1.xpose.msra.mxu0 0.0
        %4453 = vmatprep.subr.mxu0 0.0
        %4454 = vmatpush1.xpose.msra.mxu0 0.0
        %4455 = vmatprep.subr.mxu0 0.0
        %4456 = vmatpush1.xpose.msra.mxu0 0.0
        %4457 = vmatprep.subr.mxu0 0.0
        %4458 = vmatpush1.xpose.msra.mxu0 0.0
        %4459 = vmatprep.subr.mxu0 0.0
        %4460 = vmatpush1.xpose.msra.mxu0 0.0
        %4461 = vmatprep.subr.mxu0 0.0
        %4462 = vmatpush1.xpose.msra.mxu0 0.0
        %4463 = vmatprep.mubr.f32.mxu0 0.0
        %4464 = vmatmul.mubr.f32.gmra.mrb[0].mxu0 %v4395
        %v4465 = vpop.f32.mrb[0].mxu0
        %v4466 = vadd.f32 0.0, %v4465
        %v4467 = vpop.f32.mrb[0].mxu0
        %4468 = vdwg.mxu0
        %4469 = vrot.lane.b32.xlu0 %v338, 104
        %v4470 = vpop.permute.xlu0 %4469
        %4471 = vrot.lane.b32.xlu0 %v338, 72
        %v4472 = vpop.permute.xlu0 %4471
        %v4473 = vsel %vm363, %v4470, 0
        %v4475 = vsel %vm363, %v4472, 0
        %4477 = vmatprep.subr.mxu0 0.0
        %4478 = vmatpush1.xpose.msra.mxu0 %v4475
        %4479 = vmatprep.subr.mxu0 0.0
        %4480 = vmatpush1.xpose.msra.mxu0 0.0
        %4481 = vmatprep.subr.mxu0 0.0
        %4482 = vmatpush1.xpose.msra.mxu0 0.0
        %4483 = vmatprep.subr.mxu0 0.0
        %4484 = vmatpush1.xpose.msra.mxu0 0.0
        %4485 = vmatprep.subr.mxu0 0.0
        %4486 = vmatpush1.xpose.msra.mxu0 0.0
        %4487 = vmatprep.subr.mxu0 0.0
        %4488 = vmatpush1.xpose.msra.mxu0 0.0
        %4489 = vmatprep.subr.mxu0 0.0
        %4490 = vmatpush1.xpose.msra.mxu0 0.0
        %4491 = vmatprep.subr.mxu0 0.0
        %4492 = vmatpush1.xpose.msra.mxu0 0.0
        %4493 = vmatprep.subr.mxu0 0.0
        %4494 = vmatpush1.xpose.msra.mxu0 0.0
        %4495 = vmatprep.subr.mxu0 0.0
        %4496 = vmatpush1.xpose.msra.mxu0 0.0
        %4497 = vmatprep.subr.mxu0 0.0
        %4498 = vmatpush1.xpose.msra.mxu0 0.0
        %4499 = vmatprep.subr.mxu0 0.0
        %4500 = vmatpush1.xpose.msra.mxu0 0.0
        %4501 = vmatprep.subr.mxu0 0.0
        %4502 = vmatpush1.xpose.msra.mxu0 0.0
        %4503 = vmatprep.subr.mxu0 0.0
        %4504 = vmatpush1.xpose.msra.mxu0 0.0
        %4505 = vmatprep.subr.mxu0 0.0
        %4506 = vmatpush1.xpose.msra.mxu0 0.0
        %4507 = vmatprep.subr.mxu0 0.0
        %4508 = vmatpush1.xpose.msra.mxu0 0.0
        %4509 = vmatprep.subr.mxu0 0.0
        %4510 = vmatpush1.xpose.msra.mxu0 0.0
        %4511 = vmatprep.subr.mxu0 0.0
        %4512 = vmatpush1.xpose.msra.mxu0 0.0
        %4513 = vmatprep.subr.mxu0 0.0
        %4514 = vmatpush1.xpose.msra.mxu0 0.0
        %4515 = vmatprep.subr.mxu0 0.0
        %4516 = vmatpush1.xpose.msra.mxu0 0.0
        %4517 = vmatprep.subr.mxu0 0.0
        %4518 = vmatpush1.xpose.msra.mxu0 0.0
        %4519 = vmatprep.subr.mxu0 0.0
        %4520 = vmatpush1.xpose.msra.mxu0 0.0
        %4521 = vmatprep.subr.mxu0 0.0
        %4522 = vmatpush1.xpose.msra.mxu0 0.0
        %4523 = vmatprep.subr.mxu0 0.0
        %4524 = vmatpush1.xpose.msra.mxu0 0.0
        %4525 = vmatprep.subr.mxu0 0.0
        %4526 = vmatpush1.xpose.msra.mxu0 0.0
        %4527 = vmatprep.subr.mxu0 0.0
        %4528 = vmatpush1.xpose.msra.mxu0 0.0
        %4529 = vmatprep.subr.mxu0 0.0
        %4530 = vmatpush1.xpose.msra.mxu0 0.0
        %4531 = vmatprep.subr.mxu0 0.0
        %4532 = vmatpush1.xpose.msra.mxu0 0.0
        %4533 = vmatprep.subr.mxu0 0.0
        %4534 = vmatpush1.xpose.msra.mxu0 0.0
        %4535 = vmatprep.subr.mxu0 0.0
        %4536 = vmatpush1.xpose.msra.mxu0 0.0
        %4537 = vmatprep.subr.mxu0 0.0
        %4538 = vmatpush1.xpose.msra.mxu0 0.0
        %4539 = vmatprep.subr.mxu0 0.0
        %4540 = vmatpush1.xpose.msra.mxu0 0.0
        %4541 = vmatprep.mubr.f32.mxu0 0.0
        %4542 = vmatmul.mubr.f32.gmra.mrb[0].mxu0 %v4473
        %v4543 = vpop.f32.mrb[0].mxu0
        %v4544 = vadd.f32 0.0, %v4543
        %v4545 = vpop.f32.mrb[0].mxu0
        %4546 = vdwg.mxu0
        %4547 = vrot.lane.b32.xlu0 %v341, 104
        %v4548 = vpop.permute.xlu0 %4547
        %4549 = vrot.lane.b32.xlu0 %v341, 72
        %v4550 = vpop.permute.xlu0 %4549
        %v4551 = vsel %vm363, %v4548, 0
        %v4553 = vsel %vm363, %v4550, 0
        %4555 = vmatprep.subr.mxu0 0.0
        %4556 = vmatpush1.xpose.msra.mxu0 %v4553
        %4557 = vmatprep.subr.mxu0 0.0
        %4558 = vmatpush1.xpose.msra.mxu0 0.0
        %4559 = vmatprep.subr.mxu0 0.0
        %4560 = vmatpush1.xpose.msra.mxu0 0.0
        %4561 = vmatprep.subr.mxu0 0.0
        %4562 = vmatpush1.xpose.msra.mxu0 0.0
        %4563 = vmatprep.subr.mxu0 0.0
        %4564 = vmatpush1.xpose.msra.mxu0 0.0
        %4565 = vmatprep.subr.mxu0 0.0
        %4566 = vmatpush1.xpose.msra.mxu0 0.0
        %4567 = vmatprep.subr.mxu0 0.0
        %4568 = vmatpush1.xpose.msra.mxu0 0.0
        %4569 = vmatprep.subr.mxu0 0.0
        %4570 = vmatpush1.xpose.msra.mxu0 0.0
        %4571 = vmatprep.subr.mxu0 0.0
        %4572 = vmatpush1.xpose.msra.mxu0 0.0
        %4573 = vmatprep.subr.mxu0 0.0
        %4574 = vmatpush1.xpose.msra.mxu0 0.0
        %4575 = vmatprep.subr.mxu0 0.0
        %4576 = vmatpush1.xpose.msra.mxu0 0.0
        %4577 = vmatprep.subr.mxu0 0.0
        %4578 = vmatpush1.xpose.msra.mxu0 0.0
        %4579 = vmatprep.subr.mxu0 0.0
        %4580 = vmatpush1.xpose.msra.mxu0 0.0
        %4581 = vmatprep.subr.mxu0 0.0
        %4582 = vmatpush1.xpose.msra.mxu0 0.0
        %4583 = vmatprep.subr.mxu0 0.0
        %4584 = vmatpush1.xpose.msra.mxu0 0.0
        %4585 = vmatprep.subr.mxu0 0.0
        %4586 = vmatpush1.xpose.msra.mxu0 0.0
        %4587 = vmatprep.subr.mxu0 0.0
        %4588 = vmatpush1.xpose.msra.mxu0 0.0
        %4589 = vmatprep.subr.mxu0 0.0
        %4590 = vmatpush1.xpose.msra.mxu0 0.0
        %4591 = vmatprep.subr.mxu0 0.0
        %4592 = vmatpush1.xpose.msra.mxu0 0.0
        %4593 = vmatprep.subr.mxu0 0.0
        %4594 = vmatpush1.xpose.msra.mxu0 0.0
        %4595 = vmatprep.subr.mxu0 0.0
        %4596 = vmatpush1.xpose.msra.mxu0 0.0
        %4597 = vmatprep.subr.mxu0 0.0
        %4598 = vmatpush1.xpose.msra.mxu0 0.0
        %4599 = vmatprep.subr.mxu0 0.0
        %4600 = vmatpush1.xpose.msra.mxu0 0.0
        %4601 = vmatprep.subr.mxu0 0.0
        %4602 = vmatpush1.xpose.msra.mxu0 0.0
        %4603 = vmatprep.subr.mxu0 0.0
        %4604 = vmatpush1.xpose.msra.mxu0 0.0
        %4605 = vmatprep.subr.mxu0 0.0
        %4606 = vmatpush1.xpose.msra.mxu0 0.0
        %4607 = vmatprep.subr.mxu0 0.0
        %4608 = vmatpush1.xpose.msra.mxu0 0.0
        %4609 = vmatprep.subr.mxu0 0.0
        %4610 = vmatpush1.xpose.msra.mxu0 0.0
        %4611 = vmatprep.subr.mxu0 0.0
        %4612 = vmatpush1.xpose.msra.mxu0 0.0
        %4613 = vmatprep.subr.mxu0 0.0
        %4614 = vmatpush1.xpose.msra.mxu0 0.0
        %4615 = vmatprep.subr.mxu0 0.0
        %4616 = vmatpush1.xpose.msra.mxu0 0.0
        %4617 = vmatprep.subr.mxu0 0.0
        %4618 = vmatpush1.xpose.msra.mxu0 0.0
        %4619 = vmatprep.mubr.f32.mxu0 0.0
        %4620 = vmatmul.mubr.f32.gmra.mrb[0].mxu0 %v4551
        %v4621 = vpop.f32.mrb[0].mxu0
        %v4622 = vadd.f32 0.0, %v4621
        %v4623 = vpop.f32.mrb[0].mxu0
        %4624 = vdwg.mxu0
        %4625 = vrot.lane.b32.xlu0 %v346, 104
        %v4626 = vpop.permute.xlu0 %4625
        %4627 = vrot.lane.b32.xlu0 %v346, 72
        %v4628 = vpop.permute.xlu0 %4627
        %v4629 = vsel %vm363, %v4626, 0
        %v4631 = vsel %vm363, %v4628, 0
        %4633 = vmatprep.subr.mxu0 0.0
        %4634 = vmatpush1.xpose.msra.mxu0 %v4631
        %4635 = vmatprep.subr.mxu0 0.0
        %4636 = vmatpush1.xpose.msra.mxu0 0.0
        %4637 = vmatprep.subr.mxu0 0.0
        %4638 = vmatpush1.xpose.msra.mxu0 0.0
        %4639 = vmatprep.subr.mxu0 0.0
        %4640 = vmatpush1.xpose.msra.mxu0 0.0
        %4641 = vmatprep.subr.mxu0 0.0
        %4642 = vmatpush1.xpose.msra.mxu0 0.0
        %4643 = vmatprep.subr.mxu0 0.0
        %4644 = vmatpush1.xpose.msra.mxu0 0.0
        %4645 = vmatprep.subr.mxu0 0.0
        %4646 = vmatpush1.xpose.msra.mxu0 0.0
        %4647 = vmatprep.subr.mxu0 0.0
        %4648 = vmatpush1.xpose.msra.mxu0 0.0
        %4649 = vmatprep.subr.mxu0 0.0
        %4650 = vmatpush1.xpose.msra.mxu0 0.0
        %4651 = vmatprep.subr.mxu0 0.0
        %4652 = vmatpush1.xpose.msra.mxu0 0.0
        %4653 = vmatprep.subr.mxu0 0.0
        %4654 = vmatpush1.xpose.msra.mxu0 0.0
        %4655 = vmatprep.subr.mxu0 0.0
        %4656 = vmatpush1.xpose.msra.mxu0 0.0
        %4657 = vmatprep.subr.mxu0 0.0
        %4658 = vmatpush1.xpose.msra.mxu0 0.0
        %4659 = vmatprep.subr.mxu0 0.0
        %4660 = vmatpush1.xpose.msra.mxu0 0.0
        %4661 = vmatprep.subr.mxu0 0.0
        %4662 = vmatpush1.xpose.msra.mxu0 0.0
        %4663 = vmatprep.subr.mxu0 0.0
        %4664 = vmatpush1.xpose.msra.mxu0 0.0
        %4665 = vmatprep.subr.mxu0 0.0
        %4666 = vmatpush1.xpose.msra.mxu0 0.0
        %4667 = vmatprep.subr.mxu0 0.0
        %4668 = vmatpush1.xpose.msra.mxu0 0.0
        %4669 = vmatprep.subr.mxu0 0.0
        %4670 = vmatpush1.xpose.msra.mxu0 0.0
        %4671 = vmatprep.subr.mxu0 0.0
        %4672 = vmatpush1.xpose.msra.mxu0 0.0
        %4673 = vmatprep.subr.mxu0 0.0
        %4674 = vmatpush1.xpose.msra.mxu0 0.0
        %4675 = vmatprep.subr.mxu0 0.0
        %4676 = vmatpush1.xpose.msra.mxu0 0.0
        %4677 = vmatprep.subr.mxu0 0.0
        %4678 = vmatpush1.xpose.msra.mxu0 0.0
        %4679 = vmatprep.subr.mxu0 0.0
        %4680 = vmatpush1.xpose.msra.mxu0 0.0
        %4681 = vmatprep.subr.mxu0 0.0
        %4682 = vmatpush1.xpose.msra.mxu0 0.0
        %4683 = vmatprep.subr.mxu0 0.0
        %4684 = vmatpush1.xpose.msra.mxu0 0.0
        %4685 = vmatprep.subr.mxu0 0.0
        %4686 = vmatpush1.xpose.msra.mxu0 0.0
        %4687 = vmatprep.subr.mxu0 0.0
        %4688 = vmatpush1.xpose.msra.mxu0 0.0
        %4689 = vmatprep.subr.mxu0 0.0
        %4690 = vmatpush1.xpose.msra.mxu0 0.0
        %4691 = vmatprep.subr.mxu0 0.0
        %4692 = vmatpush1.xpose.msra.mxu0 0.0
        %4693 = vmatprep.subr.mxu0 0.0
        %4694 = vmatpush1.xpose.msra.mxu0 0.0
        %4695 = vmatprep.subr.mxu0 0.0
        %4696 = vmatpush1.xpose.msra.mxu0 0.0
        %4697 = vmatprep.mubr.f32.mxu0 0.0
        %4698 = vmatmul.mubr.f32.gmra.mrb[0].mxu0 %v4629
        %v4699 = vpop.f32.mrb[0].mxu0
        %v4700 = vadd.f32 0.0, %v4699
        %v4701 = vpop.f32.mrb[0].mxu0
        %4702 = vdwg.mxu0
        %4703 = vrot.lane.b32.xlu0 %v349, 104
        %v4704 = vpop.permute.xlu0 %4703
        %4705 = vrot.lane.b32.xlu0 %v349, 72
        %v4706 = vpop.permute.xlu0 %4705
        %v4707 = vsel %vm363, %v4704, 0
        %v4709 = vsel %vm363, %v4706, 0
        %4711 = vmatprep.subr.mxu0 0.0
        %4712 = vmatpush1.xpose.msra.mxu0 %v4709
        %4713 = vmatprep.subr.mxu0 0.0
        %4714 = vmatpush1.xpose.msra.mxu0 0.0
        %4715 = vmatprep.subr.mxu0 0.0
        %4716 = vmatpush1.xpose.msra.mxu0 0.0
        %4717 = vmatprep.subr.mxu0 0.0
        %4718 = vmatpush1.xpose.msra.mxu0 0.0
        %4719 = vmatprep.subr.mxu0 0.0
        %4720 = vmatpush1.xpose.msra.mxu0 0.0
        %4721 = vmatprep.subr.mxu0 0.0
        %4722 = vmatpush1.xpose.msra.mxu0 0.0
        %4723 = vmatprep.subr.mxu0 0.0
        %4724 = vmatpush1.xpose.msra.mxu0 0.0
        %4725 = vmatprep.subr.mxu0 0.0
        %4726 = vmatpush1.xpose.msra.mxu0 0.0
        %4727 = vmatprep.subr.mxu0 0.0
        %4728 = vmatpush1.xpose.msra.mxu0 0.0
        %4729 = vmatprep.subr.mxu0 0.0
        %4730 = vmatpush1.xpose.msra.mxu0 0.0
        %4731 = vmatprep.subr.mxu0 0.0
        %4732 = vmatpush1.xpose.msra.mxu0 0.0
        %4733 = vmatprep.subr.mxu0 0.0
        %4734 = vmatpush1.xpose.msra.mxu0 0.0
        %4735 = vmatprep.subr.mxu0 0.0
        %4736 = vmatpush1.xpose.msra.mxu0 0.0
        %4737 = vmatprep.subr.mxu0 0.0
        %4738 = vmatpush1.xpose.msra.mxu0 0.0
        %4739 = vmatprep.subr.mxu0 0.0
        %4740 = vmatpush1.xpose.msra.mxu0 0.0
        %4741 = vmatprep.subr.mxu0 0.0
        %4742 = vmatpush1.xpose.msra.mxu0 0.0
        %4743 = vmatprep.subr.mxu0 0.0
        %4744 = vmatpush1.xpose.msra.mxu0 0.0
        %4745 = vmatprep.subr.mxu0 0.0
        %4746 = vmatpush1.xpose.msra.mxu0 0.0
        %4747 = vmatprep.subr.mxu0 0.0
        %4748 = vmatpush1.xpose.msra.mxu0 0.0
        %4749 = vmatprep.subr.mxu0 0.0
        %4750 = vmatpush1.xpose.msra.mxu0 0.0
        %4751 = vmatprep.subr.mxu0 0.0
        %4752 = vmatpush1.xpose.msra.mxu0 0.0
        %4753 = vmatprep.subr.mxu0 0.0
        %4754 = vmatpush1.xpose.msra.mxu0 0.0
        %4755 = vmatprep.subr.mxu0 0.0
        %4756 = vmatpush1.xpose.msra.mxu0 0.0
        %4757 = vmatprep.subr.mxu0 0.0
        %4758 = vmatpush1.xpose.msra.mxu0 0.0
        %4759 = vmatprep.subr.mxu0 0.0
        %4760 = vmatpush1.xpose.msra.mxu0 0.0
        %4761 = vmatprep.subr.mxu0 0.0
        %4762 = vmatpush1.xpose.msra.mxu0 0.0
        %4763 = vmatprep.subr.mxu0 0.0
        %4764 = vmatpush1.xpose.msra.mxu0 0.0
        %4765 = vmatprep.subr.mxu0 0.0
        %4766 = vmatpush1.xpose.msra.mxu0 0.0
        %4767 = vmatprep.subr.mxu0 0.0
        %4768 = vmatpush1.xpose.msra.mxu0 0.0
        %4769 = vmatprep.subr.mxu0 0.0
        %4770 = vmatpush1.xpose.msra.mxu0 0.0
        %4771 = vmatprep.subr.mxu0 0.0
        %4772 = vmatpush1.xpose.msra.mxu0 0.0
        %4773 = vmatprep.subr.mxu0 0.0
        %4774 = vmatpush1.xpose.msra.mxu0 0.0
        %4775 = vmatprep.mubr.f32.mxu0 0.0
        %4776 = vmatmul.mubr.f32.gmra.mrb[0].mxu0 %v4707
        %v4777 = vpop.f32.mrb[0].mxu0
        %v4778 = vadd.f32 0.0, %v4777
        %v4779 = vpop.f32.mrb[0].mxu0
        %4780 = vdwg.mxu0
        %4781 = vrot.lane.b32.xlu0 %v354, 104
        %v4782 = vpop.permute.xlu0 %4781
        %4783 = vrot.lane.b32.xlu0 %v354, 72
        %v4784 = vpop.permute.xlu0 %4783
        %v4785 = vsel %vm363, %v4782, 0
        %v4787 = vsel %vm363, %v4784, 0
        %4789 = vmatprep.subr.mxu0 0.0
        %4790 = vmatpush1.xpose.msra.mxu0 %v4787
        %4791 = vmatprep.subr.mxu0 0.0
        %4792 = vmatpush1.xpose.msra.mxu0 0.0
        %4793 = vmatprep.subr.mxu0 0.0
        %4794 = vmatpush1.xpose.msra.mxu0 0.0
        %4795 = vmatprep.subr.mxu0 0.0
        %4796 = vmatpush1.xpose.msra.mxu0 0.0
        %4797 = vmatprep.subr.mxu0 0.0
        %4798 = vmatpush1.xpose.msra.mxu0 0.0
        %4799 = vmatprep.subr.mxu0 0.0
        %4800 = vmatpush1.xpose.msra.mxu0 0.0
        %4801 = vmatprep.subr.mxu0 0.0
        %4802 = vmatpush1.xpose.msra.mxu0 0.0
        %4803 = vmatprep.subr.mxu0 0.0
        %4804 = vmatpush1.xpose.msra.mxu0 0.0
        %4805 = vmatprep.subr.mxu0 0.0
        %4806 = vmatpush1.xpose.msra.mxu0 0.0
        %4807 = vmatprep.subr.mxu0 0.0
        %4808 = vmatpush1.xpose.msra.mxu0 0.0
        %4809 = vmatprep.subr.mxu0 0.0
        %4810 = vmatpush1.xpose.msra.mxu0 0.0
        %4811 = vmatprep.subr.mxu0 0.0
        %4812 = vmatpush1.xpose.msra.mxu0 0.0
        %4813 = vmatprep.subr.mxu0 0.0
        %4814 = vmatpush1.xpose.msra.mxu0 0.0
        %4815 = vmatprep.subr.mxu0 0.0
        %4816 = vmatpush1.xpose.msra.mxu0 0.0
        %4817 = vmatprep.subr.mxu0 0.0
        %4818 = vmatpush1.xpose.msra.mxu0 0.0
        %4819 = vmatprep.subr.mxu0 0.0
        %4820 = vmatpush1.xpose.msra.mxu0 0.0
        %4821 = vmatprep.subr.mxu0 0.0
        %4822 = vmatpush1.xpose.msra.mxu0 0.0
        %4823 = vmatprep.subr.mxu0 0.0
        %4824 = vmatpush1.xpose.msra.mxu0 0.0
        %4825 = vmatprep.subr.mxu0 0.0
        %4826 = vmatpush1.xpose.msra.mxu0 0.0
        %4827 = vmatprep.subr.mxu0 0.0
        %4828 = vmatpush1.xpose.msra.mxu0 0.0
        %4829 = vmatprep.subr.mxu0 0.0
        %4830 = vmatpush1.xpose.msra.mxu0 0.0
        %4831 = vmatprep.subr.mxu0 0.0
        %4832 = vmatpush1.xpose.msra.mxu0 0.0
        %4833 = vmatprep.subr.mxu0 0.0
        %4834 = vmatpush1.xpose.msra.mxu0 0.0
        %4835 = vmatprep.subr.mxu0 0.0
        %4836 = vmatpush1.xpose.msra.mxu0 0.0
        %4837 = vmatprep.subr.mxu0 0.0
        %4838 = vmatpush1.xpose.msra.mxu0 0.0
        %4839 = vmatprep.subr.mxu0 0.0
        %4840 = vmatpush1.xpose.msra.mxu0 0.0
        %4841 = vmatprep.subr.mxu0 0.0
        %4842 = vmatpush1.xpose.msra.mxu0 0.0
        %4843 = vmatprep.subr.mxu0 0.0
        %4844 = vmatpush1.xpose.msra.mxu0 0.0
        %4845 = vmatprep.subr.mxu0 0.0
        %4846 = vmatpush1.xpose.msra.mxu0 0.0
        %4847 = vmatprep.subr.mxu0 0.0
        %4848 = vmatpush1.xpose.msra.mxu0 0.0
        %4849 = vmatprep.subr.mxu0 0.0
        %4850 = vmatpush1.xpose.msra.mxu0 0.0
        %4851 = vmatprep.subr.mxu0 0.0
        %4852 = vmatpush1.xpose.msra.mxu0 0.0
        %4853 = vmatprep.mubr.f32.mxu0 0.0
        %4854 = vmatmul.mubr.f32.gmra.mrb[0].mxu0 %v4785
        %v4855 = vpop.f32.mrb[0].mxu0
        %v4856 = vadd.f32 0.0, %v4855
        %v4857 = vpop.f32.mrb[0].mxu0
        %4858 = vdwg.mxu0
        %4859 = vrot.lane.b32.xlu0 %v357, 104
        %v4860 = vpop.permute.xlu0 %4859
        %4861 = vrot.lane.b32.xlu0 %v357, 72
        %v4862 = vpop.permute.xlu0 %4861
        %v4863 = vsel %vm363, %v4860, 0
        %v4865 = vsel %vm363, %v4862, 0
        %4867 = vmatprep.subr.mxu0 0.0
        %4868 = vmatpush1.xpose.msra.mxu0 %v4865
        %4869 = vmatprep.subr.mxu0 0.0
        %4870 = vmatpush1.xpose.msra.mxu0 0.0
        %4871 = vmatprep.subr.mxu0 0.0
        %4872 = vmatpush1.xpose.msra.mxu0 0.0
        %4873 = vmatprep.subr.mxu0 0.0
        %4874 = vmatpush1.xpose.msra.mxu0 0.0
        %4875 = vmatprep.subr.mxu0 0.0
        %4876 = vmatpush1.xpose.msra.mxu0 0.0
        %4877 = vmatprep.subr.mxu0 0.0
        %4878 = vmatpush1.xpose.msra.mxu0 0.0
        %4879 = vmatprep.subr.mxu0 0.0
        %4880 = vmatpush1.xpose.msra.mxu0 0.0
        %4881 = vmatprep.subr.mxu0 0.0
        %4882 = vmatpush1.xpose.msra.mxu0 0.0
        %4883 = vmatprep.subr.mxu0 0.0
        %4884 = vmatpush1.xpose.msra.mxu0 0.0
        %4885 = vmatprep.subr.mxu0 0.0
        %4886 = vmatpush1.xpose.msra.mxu0 0.0
        %4887 = vmatprep.subr.mxu0 0.0
        %4888 = vmatpush1.xpose.msra.mxu0 0.0
        %4889 = vmatprep.subr.mxu0 0.0
        %4890 = vmatpush1.xpose.msra.mxu0 0.0
        %4891 = vmatprep.subr.mxu0 0.0
        %4892 = vmatpush1.xpose.msra.mxu0 0.0
        %4893 = vmatprep.subr.mxu0 0.0
        %4894 = vmatpush1.xpose.msra.mxu0 0.0
        %4895 = vmatprep.subr.mxu0 0.0
        %4896 = vmatpush1.xpose.msra.mxu0 0.0
        %4897 = vmatprep.subr.mxu0 0.0
        %4898 = vmatpush1.xpose.msra.mxu0 0.0
        %4899 = vmatprep.subr.mxu0 0.0
        %4900 = vmatpush1.xpose.msra.mxu0 0.0
        %4901 = vmatprep.subr.mxu0 0.0
        %4902 = vmatpush1.xpose.msra.mxu0 0.0
        %4903 = vmatprep.subr.mxu0 0.0
        %4904 = vmatpush1.xpose.msra.mxu0 0.0
        %4905 = vmatprep.subr.mxu0 0.0
        %4906 = vmatpush1.xpose.msra.mxu0 0.0
        %4907 = vmatprep.subr.mxu0 0.0
        %4908 = vmatpush1.xpose.msra.mxu0 0.0
        %4909 = vmatprep.subr.mxu0 0.0
        %4910 = vmatpush1.xpose.msra.mxu0 0.0
        %4911 = vmatprep.subr.mxu0 0.0
        %4912 = vmatpush1.xpose.msra.mxu0 0.0
        %4913 = vmatprep.subr.mxu0 0.0
        %4914 = vmatpush1.xpose.msra.mxu0 0.0
        %4915 = vmatprep.subr.mxu0 0.0
        %4916 = vmatpush1.xpose.msra.mxu0 0.0
        %4917 = vmatprep.subr.mxu0 0.0
        %4918 = vmatpush1.xpose.msra.mxu0 0.0
        %4919 = vmatprep.subr.mxu0 0.0
        %4920 = vmatpush1.xpose.msra.mxu0 0.0
        %4921 = vmatprep.subr.mxu0 0.0
        %4922 = vmatpush1.xpose.msra.mxu0 0.0
        %4923 = vmatprep.subr.mxu0 0.0
        %4924 = vmatpush1.xpose.msra.mxu0 0.0
        %4925 = vmatprep.subr.mxu0 0.0
        %4926 = vmatpush1.xpose.msra.mxu0 0.0
        %4927 = vmatprep.subr.mxu0 0.0
        %4928 = vmatpush1.xpose.msra.mxu0 0.0
        %4929 = vmatprep.subr.mxu0 0.0
        %4930 = vmatpush1.xpose.msra.mxu0 0.0
        %4931 = vmatprep.mubr.f32.mxu0 0.0
        %4932 = vmatmul.mubr.f32.gmra.mrb[0].mxu0 %v4863
        %v4933 = vpop.f32.mrb[0].mxu0
        %v4934 = vadd.f32 0.0, %v4933
        %v4935 = vpop.f32.mrb[0].mxu0
        %4936 = vdwg.mxu0
        %v4937 = vsel %vm363, %v4388, -inf
        %4938 = vmax.xlane.f32.xlu0 %v4937
        %v4939 = vpop.xlane.xlu0 %4938
        %v4940 = vsel %vm363, %v4466, -inf
        %4941 = vmax.xlane.f32.xlu0 %v4940
        %v4942 = vpop.xlane.xlu0 %4941
        %v4943 = vsel %vm363, %v4544, -inf
        %4944 = vmax.xlane.f32.xlu0 %v4943
        %v4945 = vpop.xlane.xlu0 %4944
        %v4946 = vsel %vm363, %v4622, -inf
        %4947 = vmax.xlane.f32.xlu0 %v4946
        %v4948 = vpop.xlane.xlu0 %4947
        %v4949 = vsel %vm363, %v4700, -inf
        %4950 = vmax.xlane.f32.xlu0 %v4949
        %v4951 = vpop.xlane.xlu0 %4950
        %v4952 = vsel %vm363, %v4778, -inf
        %4953 = vmax.xlane.f32.xlu0 %v4952
        %v4954 = vpop.xlane.xlu0 %4953
        %v4955 = vsel %vm363, %v4856, -inf
        %4956 = vmax.xlane.f32.xlu0 %v4955
        %v4957 = vpop.xlane.xlu0 %4956
        %v4958 = vsel %vm363, %v4934, -inf
        %4959 = vmax.xlane.f32.xlu0 %v4958
        %v4960 = vpop.xlane.xlu0 %4959
        %v4961 = vsub.f32 %v4388, %v4939
        %v4962 = vsub.f32 %v4466, %v4942
        %v4963 = vsub.f32 %v4544, %v4945
        %v4964 = vsub.f32 %v4622, %v4948
        %v4965 = vsub.f32 %v4700, %v4951
        %v4966 = vsub.f32 %v4778, %v4954
        %v4967 = vsub.f32 %v4856, %v4957
        %v4968 = vsub.f32 %v4934, %v4960
        %v4969 = vmul.f32 %v4961, 1.442695
        %v4970 = vpow.pop %v4969
        %v4971 = vmul.f32 %v4962, 1.442695
        %v4972 = vpow.pop %v4971
        %v4973 = vmul.f32 %v4963, 1.442695
        %v4974 = vpow.pop %v4973
        %v4975 = vmul.f32 %v4964, 1.442695
        %v4976 = vpow.pop %v4975
        %v4977 = vmul.f32 %v4965, 1.442695
        %v4978 = vpow.pop %v4977
        %v4979 = vmul.f32 %v4966, 1.442695
        %v4980 = vpow.pop %v4979
        %v4981 = vmul.f32 %v4967, 1.442695
        %v4982 = vpow.pop %v4981
        %v4983 = vmul.f32 %v4968, 1.442695
        %v4984 = vpow.pop %v4983
        %v4985 = vsel %vm363, %v4970, 0.0
        %4986 = vadd.xlane.f32.xlu0 %v4985
        %v4987 = vpop.xlane.xlu0 %4986
        %v4988 = vsel %vm363, %v4972, 0.0
        %4989 = vadd.xlane.f32.xlu0 %v4988
        %v4990 = vpop.xlane.xlu0 %4989
        %v4991 = vsel %vm363, %v4974, 0.0
        %4992 = vadd.xlane.f32.xlu0 %v4991
        %v4993 = vpop.xlane.xlu0 %4992
        %v4994 = vsel %vm363, %v4976, 0.0
        %4995 = vadd.xlane.f32.xlu0 %v4994
        %v4996 = vpop.xlane.xlu0 %4995
        %v4997 = vsel %vm363, %v4978, 0.0
        %4998 = vadd.xlane.f32.xlu0 %v4997
        %v4999 = vpop.xlane.xlu0 %4998
        %v5000 = vsel %vm363, %v4980, 0.0
        %5001 = vadd.xlane.f32.xlu0 %v5000
        %v5002 = vpop.xlane.xlu0 %5001
        %v5003 = vsel %vm363, %v4982, 0.0
        %5004 = vadd.xlane.f32.xlu0 %v5003
        %v5005 = vpop.xlane.xlu0 %5004
        %v5006 = vsel %vm363, %v4984, 0.0
        %5007 = vadd.xlane.f32.xlu0 %v5006
        %v5008 = vpop.xlane.xlu0 %5007
        %v5009 = vrcp.pop %v4987
        %v5010 = vrcp.pop %v4990
        %v5011 = vrcp.pop %v4993
        %v5012 = vrcp.pop %v4996
        %v5013 = vrcp.pop %v4999
        %v5014 = vrcp.pop %v5002
        %v5015 = vrcp.pop %v5005
        %v5016 = vrcp.pop %v5008
        %v5017 = vmul.f32 %v4970, %v5009
        %v5018 = vmul.f32 %v4972, %v5010
        %v5019 = vmul.f32 %v4974, %v5011
        %v5020 = vmul.f32 %v4976, %v5012
        %v5021 = vmul.f32 %v4978, %v5013
        %v5022 = vmul.f32 %v4980, %v5014
        %v5023 = vmul.f32 %v4982, %v5015
        %v5024 = vmul.f32 %v4984, %v5016
        %5025 = vrot.lane.b32.xlu0 %v330, 40
        %v5026 = vpop.permute.xlu0 %5025
        %v5029 = vsel %vm363, %v5017, 0
        %5031 = vmatprep.subr.mxu0 0.0
        %5032 = vmatpush1.msra.mxu0 %v5026
        %5033 = vmatprep.subr.mxu0 0.0
        %5034 = vmatpush1.msra.mxu0 0.0
        %5035 = vmatprep.subr.mxu0 0.0
        %5036 = vmatpush1.msra.mxu0 0.0
        %5037 = vmatprep.subr.mxu0 0.0
        %5038 = vmatpush1.msra.mxu0 0.0
        %5039 = vmatprep.subr.mxu0 0.0
        %5040 = vmatpush1.msra.mxu0 0.0
        %5041 = vmatprep.subr.mxu0 0.0
        %5042 = vmatpush1.msra.mxu0 0.0
        %5043 = vmatprep.subr.mxu0 0.0
        %5044 = vmatpush1.msra.mxu0 0.0
        %5045 = vmatprep.subr.mxu0 0.0
        %5046 = vmatpush1.msra.mxu0 0.0
        %5047 = vmatprep.subr.mxu0 0.0
        %5048 = vmatpush1.msra.mxu0 0.0
        %5049 = vmatprep.subr.mxu0 0.0
        %5050 = vmatpush1.msra.mxu0 0.0
        %5051 = vmatprep.subr.mxu0 0.0
        %5052 = vmatpush1.msra.mxu0 0.0
        %5053 = vmatprep.subr.mxu0 0.0
        %5054 = vmatpush1.msra.mxu0 0.0
        %5055 = vmatprep.subr.mxu0 0.0
        %5056 = vmatpush1.msra.mxu0 0.0
        %5057 = vmatprep.subr.mxu0 0.0
        %5058 = vmatpush1.msra.mxu0 0.0
        %5059 = vmatprep.subr.mxu0 0.0
        %5060 = vmatpush1.msra.mxu0 0.0
        %5061 = vmatprep.subr.mxu0 0.0
        %5062 = vmatpush1.msra.mxu0 0.0
        %5063 = vmatprep.subr.mxu0 0.0
        %5064 = vmatpush1.msra.mxu0 0.0
        %5065 = vmatprep.subr.mxu0 0.0
        %5066 = vmatpush1.msra.mxu0 0.0
        %5067 = vmatprep.subr.mxu0 0.0
        %5068 = vmatpush1.msra.mxu0 0.0
        %5069 = vmatprep.subr.mxu0 0.0
        %5070 = vmatpush1.msra.mxu0 0.0
        %5071 = vmatprep.subr.mxu0 0.0
        %5072 = vmatpush1.msra.mxu0 0.0
        %5073 = vmatprep.subr.mxu0 0.0
        %5074 = vmatpush1.msra.mxu0 0.0
        %5075 = vmatprep.subr.mxu0 0.0
        %5076 = vmatpush1.msra.mxu0 0.0
        %5077 = vmatprep.subr.mxu0 0.0
        %5078 = vmatpush1.msra.mxu0 0.0
        %5079 = vmatprep.subr.mxu0 0.0
        %5080 = vmatpush1.msra.mxu0 0.0
        %5081 = vmatprep.subr.mxu0 0.0
        %5082 = vmatpush1.msra.mxu0 0.0
        %5083 = vmatprep.subr.mxu0 0.0
        %5084 = vmatpush1.msra.mxu0 0.0
        %5085 = vmatprep.subr.mxu0 0.0
        %5086 = vmatpush1.msra.mxu0 0.0
        %5087 = vmatprep.subr.mxu0 0.0
        %5088 = vmatpush1.msra.mxu0 0.0
        %5089 = vmatprep.subr.mxu0 0.0
        %5090 = vmatpush1.msra.mxu0 0.0
        %5091 = vmatprep.subr.mxu0 0.0
        %5092 = vmatpush1.msra.mxu0 0.0
        %5093 = vmatprep.subr.mxu0 0.0
        %5094 = vmatpush1.msra.mxu0 0.0
        %5095 = vmatprep.mubr.f32.mxu0 0.0
        %5096 = vmatmul.mubr.f32.gmra.mrb[0].mxu0 %v5029
        %v5097 = vpop.f32.mrb[0].mxu0
        %v5098 = vadd.f32 0.0, %v5097
        %v5099 = vpop.f32.mrb[0].mxu0
        %5100 = vdwg.mxu0
        %5101 = vrot.lane.b32.xlu0 %v333, 40
        %v5102 = vpop.permute.xlu0 %5101
        %v5105 = vsel %vm363, %v5018, 0
        %5107 = vmatprep.subr.mxu0 0.0
        %5108 = vmatpush1.msra.mxu0 %v5102
        %5109 = vmatprep.subr.mxu0 0.0
        %5110 = vmatpush1.msra.mxu0 0.0
        %5111 = vmatprep.subr.mxu0 0.0
        %5112 = vmatpush1.msra.mxu0 0.0
        %5113 = vmatprep.subr.mxu0 0.0
        %5114 = vmatpush1.msra.mxu0 0.0
        %5115 = vmatprep.subr.mxu0 0.0
        %5116 = vmatpush1.msra.mxu0 0.0
        %5117 = vmatprep.subr.mxu0 0.0
        %5118 = vmatpush1.msra.mxu0 0.0
        %5119 = vmatprep.subr.mxu0 0.0
        %5120 = vmatpush1.msra.mxu0 0.0
        %5121 = vmatprep.subr.mxu0 0.0
        %5122 = vmatpush1.msra.mxu0 0.0
        %5123 = vmatprep.subr.mxu0 0.0
        %5124 = vmatpush1.msra.mxu0 0.0
        %5125 = vmatprep.subr.mxu0 0.0
        %5126 = vmatpush1.msra.mxu0 0.0
        %5127 = vmatprep.subr.mxu0 0.0
        %5128 = vmatpush1.msra.mxu0 0.0
        %5129 = vmatprep.subr.mxu0 0.0
        %5130 = vmatpush1.msra.mxu0 0.0
        %5131 = vmatprep.subr.mxu0 0.0
        %5132 = vmatpush1.msra.mxu0 0.0
        %5133 = vmatprep.subr.mxu0 0.0
        %5134 = vmatpush1.msra.mxu0 0.0
        %5135 = vmatprep.subr.mxu0 0.0
        %5136 = vmatpush1.msra.mxu0 0.0
        %5137 = vmatprep.subr.mxu0 0.0
        %5138 = vmatpush1.msra.mxu0 0.0
        %5139 = vmatprep.subr.mxu0 0.0
        %5140 = vmatpush1.msra.mxu0 0.0
        %5141 = vmatprep.subr.mxu0 0.0
        %5142 = vmatpush1.msra.mxu0 0.0
        %5143 = vmatprep.subr.mxu0 0.0
        %5144 = vmatpush1.msra.mxu0 0.0
        %5145 = vmatprep.subr.mxu0 0.0
        %5146 = vmatpush1.msra.mxu0 0.0
        %5147 = vmatprep.subr.mxu0 0.0
        %5148 = vmatpush1.msra.mxu0 0.0
        %5149 = vmatprep.subr.mxu0 0.0
        %5150 = vmatpush1.msra.mxu0 0.0
        %5151 = vmatprep.subr.mxu0 0.0
        %5152 = vmatpush1.msra.mxu0 0.0
        %5153 = vmatprep.subr.mxu0 0.0
        %5154 = vmatpush1.msra.mxu0 0.0
        %5155 = vmatprep.subr.mxu0 0.0
        %5156 = vmatpush1.msra.mxu0 0.0
        %5157 = vmatprep.subr.mxu0 0.0
        %5158 = vmatpush1.msra.mxu0 0.0
        %5159 = vmatprep.subr.mxu0 0.0
        %5160 = vmatpush1.msra.mxu0 0.0
        %5161 = vmatprep.subr.mxu0 0.0
        %5162 = vmatpush1.msra.mxu0 0.0
        %5163 = vmatprep.subr.mxu0 0.0
        %5164 = vmatpush1.msra.mxu0 0.0
        %5165 = vmatprep.subr.mxu0 0.0
        %5166 = vmatpush1.msra.mxu0 0.0
        %5167 = vmatprep.subr.mxu0 0.0
        %5168 = vmatpush1.msra.mxu0 0.0
        %5169 = vmatprep.subr.mxu0 0.0
        %5170 = vmatpush1.msra.mxu0 0.0
        %5171 = vmatprep.mubr.f32.mxu0 0.0
        %5172 = vmatmul.mubr.f32.gmra.mrb[0].mxu0 %v5105
        %v5173 = vpop.f32.mrb[0].mxu0
        %v5174 = vadd.f32 0.0, %v5173
        %v5175 = vpop.f32.mrb[0].mxu0
        %5176 = vdwg.mxu0
        %5177 = vrot.lane.b32.xlu0 %v338, 40
        %v5178 = vpop.permute.xlu0 %5177
        %v5181 = vsel %vm363, %v5019, 0
        %5183 = vmatprep.subr.mxu0 0.0
        %5184 = vmatpush1.msra.mxu0 %v5178
        %5185 = vmatprep.subr.mxu0 0.0
        %5186 = vmatpush1.msra.mxu0 0.0
        %5187 = vmatprep.subr.mxu0 0.0
        %5188 = vmatpush1.msra.mxu0 0.0
        %5189 = vmatprep.subr.mxu0 0.0
        %5190 = vmatpush1.msra.mxu0 0.0
        %5191 = vmatprep.subr.mxu0 0.0
        %5192 = vmatpush1.msra.mxu0 0.0
        %5193 = vmatprep.subr.mxu0 0.0
        %5194 = vmatpush1.msra.mxu0 0.0
        %5195 = vmatprep.subr.mxu0 0.0
        %5196 = vmatpush1.msra.mxu0 0.0
        %5197 = vmatprep.subr.mxu0 0.0
        %5198 = vmatpush1.msra.mxu0 0.0
        %5199 = vmatprep.subr.mxu0 0.0
        %5200 = vmatpush1.msra.mxu0 0.0
        %5201 = vmatprep.subr.mxu0 0.0
        %5202 = vmatpush1.msra.mxu0 0.0
        %5203 = vmatprep.subr.mxu0 0.0
        %5204 = vmatpush1.msra.mxu0 0.0
        %5205 = vmatprep.subr.mxu0 0.0
        %5206 = vmatpush1.msra.mxu0 0.0
        %5207 = vmatprep.subr.mxu0 0.0
        %5208 = vmatpush1.msra.mxu0 0.0
        %5209 = vmatprep.subr.mxu0 0.0
        %5210 = vmatpush1.msra.mxu0 0.0
        %5211 = vmatprep.subr.mxu0 0.0
        %5212 = vmatpush1.msra.mxu0 0.0
        %5213 = vmatprep.subr.mxu0 0.0
        %5214 = vmatpush1.msra.mxu0 0.0
        %5215 = vmatprep.subr.mxu0 0.0
        %5216 = vmatpush1.msra.mxu0 0.0
        %5217 = vmatprep.subr.mxu0 0.0
        %5218 = vmatpush1.msra.mxu0 0.0
        %5219 = vmatprep.subr.mxu0 0.0
        %5220 = vmatpush1.msra.mxu0 0.0
        %5221 = vmatprep.subr.mxu0 0.0
        %5222 = vmatpush1.msra.mxu0 0.0
        %5223 = vmatprep.subr.mxu0 0.0
        %5224 = vmatpush1.msra.mxu0 0.0
        %5225 = vmatprep.subr.mxu0 0.0
        %5226 = vmatpush1.msra.mxu0 0.0
        %5227 = vmatprep.subr.mxu0 0.0
        %5228 = vmatpush1.msra.mxu0 0.0
        %5229 = vmatprep.subr.mxu0 0.0
        %5230 = vmatpush1.msra.mxu0 0.0
        %5231 = vmatprep.subr.mxu0 0.0
        %5232 = vmatpush1.msra.mxu0 0.0
        %5233 = vmatprep.subr.mxu0 0.0
        %5234 = vmatpush1.msra.mxu0 0.0
        %5235 = vmatprep.subr.mxu0 0.0
        %5236 = vmatpush1.msra.mxu0 0.0
        %5237 = vmatprep.subr.mxu0 0.0
        %5238 = vmatpush1.msra.mxu0 0.0
        %5239 = vmatprep.subr.mxu0 0.0
        %5240 = vmatpush1.msra.mxu0 0.0
        %5241 = vmatprep.subr.mxu0 0.0
        %5242 = vmatpush1.msra.mxu0 0.0
        %5243 = vmatprep.subr.mxu0 0.0
        %5244 = vmatpush1.msra.mxu0 0.0
        %5245 = vmatprep.subr.mxu0 0.0
        %5246 = vmatpush1.msra.mxu0 0.0
        %5247 = vmatprep.mubr.f32.mxu0 0.0
        %5248 = vmatmul.mubr.f32.gmra.mrb[0].mxu0 %v5181
        %v5249 = vpop.f32.mrb[0].mxu0
        %v5250 = vadd.f32 0.0, %v5249
        %v5251 = vpop.f32.mrb[0].mxu0
        %5252 = vdwg.mxu0
        %5253 = vrot.lane.b32.xlu0 %v341, 40
        %v5254 = vpop.permute.xlu0 %5253
        %v5257 = vsel %vm363, %v5020, 0
        %5259 = vmatprep.subr.mxu0 0.0
        %5260 = vmatpush1.msra.mxu0 %v5254
        %5261 = vmatprep.subr.mxu0 0.0
        %5262 = vmatpush1.msra.mxu0 0.0
        %5263 = vmatprep.subr.mxu0 0.0
        %5264 = vmatpush1.msra.mxu0 0.0
        %5265 = vmatprep.subr.mxu0 0.0
        %5266 = vmatpush1.msra.mxu0 0.0
        %5267 = vmatprep.subr.mxu0 0.0
        %5268 = vmatpush1.msra.mxu0 0.0
        %5269 = vmatprep.subr.mxu0 0.0
        %5270 = vmatpush1.msra.mxu0 0.0
        %5271 = vmatprep.subr.mxu0 0.0
        %5272 = vmatpush1.msra.mxu0 0.0
        %5273 = vmatprep.subr.mxu0 0.0
        %5274 = vmatpush1.msra.mxu0 0.0
        %5275 = vmatprep.subr.mxu0 0.0
        %5276 = vmatpush1.msra.mxu0 0.0
        %5277 = vmatprep.subr.mxu0 0.0
        %5278 = vmatpush1.msra.mxu0 0.0
        %5279 = vmatprep.subr.mxu0 0.0
        %5280 = vmatpush1.msra.mxu0 0.0
        %5281 = vmatprep.subr.mxu0 0.0
        %5282 = vmatpush1.msra.mxu0 0.0
        %5283 = vmatprep.subr.mxu0 0.0
        %5284 = vmatpush1.msra.mxu0 0.0
        %5285 = vmatprep.subr.mxu0 0.0
        %5286 = vmatpush1.msra.mxu0 0.0
        %5287 = vmatprep.subr.mxu0 0.0
        %5288 = vmatpush1.msra.mxu0 0.0
        %5289 = vmatprep.subr.mxu0 0.0
        %5290 = vmatpush1.msra.mxu0 0.0
        %5291 = vmatprep.subr.mxu0 0.0
        %5292 = vmatpush1.msra.mxu0 0.0
        %5293 = vmatprep.subr.mxu0 0.0
        %5294 = vmatpush1.msra.mxu0 0.0
        %5295 = vmatprep.subr.mxu0 0.0
        %5296 = vmatpush1.msra.mxu0 0.0
        %5297 = vmatprep.subr.mxu0 0.0
        %5298 = vmatpush1.msra.mxu0 0.0
        %5299 = vmatprep.subr.mxu0 0.0
        %5300 = vmatpush1.msra.mxu0 0.0
        %5301 = vmatprep.subr.mxu0 0.0
        %5302 = vmatpush1.msra.mxu0 0.0
        %5303 = vmatprep.subr.mxu0 0.0
        %5304 = vmatpush1.msra.mxu0 0.0
        %5305 = vmatprep.subr.mxu0 0.0
        %5306 = vmatpush1.msra.mxu0 0.0
        %5307 = vmatprep.subr.mxu0 0.0
        %5308 = vmatpush1.msra.mxu0 0.0
        %5309 = vmatprep.subr.mxu0 0.0
        %5310 = vmatpush1.msra.mxu0 0.0
        %5311 = vmatprep.subr.mxu0 0.0
        %5312 = vmatpush1.msra.mxu0 0.0
        %5313 = vmatprep.subr.mxu0 0.0
        %5314 = vmatpush1.msra.mxu0 0.0
        %5315 = vmatprep.subr.mxu0 0.0
        %5316 = vmatpush1.msra.mxu0 0.0
        %5317 = vmatprep.subr.mxu0 0.0
        %5318 = vmatpush1.msra.mxu0 0.0
        %5319 = vmatprep.subr.mxu0 0.0
        %5320 = vmatpush1.msra.mxu0 0.0
        %5321 = vmatprep.subr.mxu0 0.0
        %5322 = vmatpush1.msra.mxu0 0.0
        %5323 = vmatprep.mubr.f32.mxu0 0.0
        %5324 = vmatmul.mubr.f32.gmra.mrb[0].mxu0 %v5257
        %v5325 = vpop.f32.mrb[0].mxu0
        %v5326 = vadd.f32 0.0, %v5325
        %v5327 = vpop.f32.mrb[0].mxu0
        %5328 = vdwg.mxu0
        %5329 = vrot.lane.b32.xlu0 %v346, 40
        %v5330 = vpop.permute.xlu0 %5329
        %v5333 = vsel %vm363, %v5021, 0
        %5335 = vmatprep.subr.mxu0 0.0
        %5336 = vmatpush1.msra.mxu0 %v5330
        %5337 = vmatprep.subr.mxu0 0.0
        %5338 = vmatpush1.msra.mxu0 0.0
        %5339 = vmatprep.subr.mxu0 0.0
        %5340 = vmatpush1.msra.mxu0 0.0
        %5341 = vmatprep.subr.mxu0 0.0
        %5342 = vmatpush1.msra.mxu0 0.0
        %5343 = vmatprep.subr.mxu0 0.0
        %5344 = vmatpush1.msra.mxu0 0.0
        %5345 = vmatprep.subr.mxu0 0.0
        %5346 = vmatpush1.msra.mxu0 0.0
        %5347 = vmatprep.subr.mxu0 0.0
        %5348 = vmatpush1.msra.mxu0 0.0
        %5349 = vmatprep.subr.mxu0 0.0
        %5350 = vmatpush1.msra.mxu0 0.0
        %5351 = vmatprep.subr.mxu0 0.0
        %5352 = vmatpush1.msra.mxu0 0.0
        %5353 = vmatprep.subr.mxu0 0.0
        %5354 = vmatpush1.msra.mxu0 0.0
        %5355 = vmatprep.subr.mxu0 0.0
        %5356 = vmatpush1.msra.mxu0 0.0
        %5357 = vmatprep.subr.mxu0 0.0
        %5358 = vmatpush1.msra.mxu0 0.0
        %5359 = vmatprep.subr.mxu0 0.0
        %5360 = vmatpush1.msra.mxu0 0.0
        %5361 = vmatprep.subr.mxu0 0.0
        %5362 = vmatpush1.msra.mxu0 0.0
        %5363 = vmatprep.subr.mxu0 0.0
        %5364 = vmatpush1.msra.mxu0 0.0
        %5365 = vmatprep.subr.mxu0 0.0
        %5366 = vmatpush1.msra.mxu0 0.0
        %5367 = vmatprep.subr.mxu0 0.0
        %5368 = vmatpush1.msra.mxu0 0.0
        %5369 = vmatprep.subr.mxu0 0.0
        %5370 = vmatpush1.msra.mxu0 0.0
        %5371 = vmatprep.subr.mxu0 0.0
        %5372 = vmatpush1.msra.mxu0 0.0
        %5373 = vmatprep.subr.mxu0 0.0
        %5374 = vmatpush1.msra.mxu0 0.0
        %5375 = vmatprep.subr.mxu0 0.0
        %5376 = vmatpush1.msra.mxu0 0.0
        %5377 = vmatprep.subr.mxu0 0.0
        %5378 = vmatpush1.msra.mxu0 0.0
        %5379 = vmatprep.subr.mxu0 0.0
        %5380 = vmatpush1.msra.mxu0 0.0
        %5381 = vmatprep.subr.mxu0 0.0
        %5382 = vmatpush1.msra.mxu0 0.0
        %5383 = vmatprep.subr.mxu0 0.0
        %5384 = vmatpush1.msra.mxu0 0.0
        %5385 = vmatprep.subr.mxu0 0.0
        %5386 = vmatpush1.msra.mxu0 0.0
        %5387 = vmatprep.subr.mxu0 0.0
        %5388 = vmatpush1.msra.mxu0 0.0
        %5389 = vmatprep.subr.mxu0 0.0
        %5390 = vmatpush1.msra.mxu0 0.0
        %5391 = vmatprep.subr.mxu0 0.0
        %5392 = vmatpush1.msra.mxu0 0.0
        %5393 = vmatprep.subr.mxu0 0.0
        %5394 = vmatpush1.msra.mxu0 0.0
        %5395 = vmatprep.subr.mxu0 0.0
        %5396 = vmatpush1.msra.mxu0 0.0
        %5397 = vmatprep.subr.mxu0 0.0
        %5398 = vmatpush1.msra.mxu0 0.0
        %5399 = vmatprep.mubr.f32.mxu0 0.0
        %5400 = vmatmul.mubr.f32.gmra.mrb[0].mxu0 %v5333
        %v5401 = vpop.f32.mrb[0].mxu0
        %v5402 = vadd.f32 0.0, %v5401
        %v5403 = vpop.f32.mrb[0].mxu0
        %5404 = vdwg.mxu0
        %5405 = vrot.lane.b32.xlu0 %v349, 40
        %v5406 = vpop.permute.xlu0 %5405
        %v5409 = vsel %vm363, %v5022, 0
        %5411 = vmatprep.subr.mxu0 0.0
        %5412 = vmatpush1.msra.mxu0 %v5406
        %5413 = vmatprep.subr.mxu0 0.0
        %5414 = vmatpush1.msra.mxu0 0.0
        %5415 = vmatprep.subr.mxu0 0.0
        %5416 = vmatpush1.msra.mxu0 0.0
        %5417 = vmatprep.subr.mxu0 0.0
        %5418 = vmatpush1.msra.mxu0 0.0
        %5419 = vmatprep.subr.mxu0 0.0
        %5420 = vmatpush1.msra.mxu0 0.0
        %5421 = vmatprep.subr.mxu0 0.0
        %5422 = vmatpush1.msra.mxu0 0.0
        %5423 = vmatprep.subr.mxu0 0.0
        %5424 = vmatpush1.msra.mxu0 0.0
        %5425 = vmatprep.subr.mxu0 0.0
        %5426 = vmatpush1.msra.mxu0 0.0
        %5427 = vmatprep.subr.mxu0 0.0
        %5428 = vmatpush1.msra.mxu0 0.0
        %5429 = vmatprep.subr.mxu0 0.0
        %5430 = vmatpush1.msra.mxu0 0.0
        %5431 = vmatprep.subr.mxu0 0.0
        %5432 = vmatpush1.msra.mxu0 0.0
        %5433 = vmatprep.subr.mxu0 0.0
        %5434 = vmatpush1.msra.mxu0 0.0
        %5435 = vmatprep.subr.mxu0 0.0
        %5436 = vmatpush1.msra.mxu0 0.0
        %5437 = vmatprep.subr.mxu0 0.0
        %5438 = vmatpush1.msra.mxu0 0.0
        %5439 = vmatprep.subr.mxu0 0.0
        %5440 = vmatpush1.msra.mxu0 0.0
        %5441 = vmatprep.subr.mxu0 0.0
        %5442 = vmatpush1.msra.mxu0 0.0
        %5443 = vmatprep.subr.mxu0 0.0
        %5444 = vmatpush1.msra.mxu0 0.0
        %5445 = vmatprep.subr.mxu0 0.0
        %5446 = vmatpush1.msra.mxu0 0.0
        %5447 = vmatprep.subr.mxu0 0.0
        %5448 = vmatpush1.msra.mxu0 0.0
        %5449 = vmatprep.subr.mxu0 0.0
        %5450 = vmatpush1.msra.mxu0 0.0
        %5451 = vmatprep.subr.mxu0 0.0
        %5452 = vmatpush1.msra.mxu0 0.0
        %5453 = vmatprep.subr.mxu0 0.0
        %5454 = vmatpush1.msra.mxu0 0.0
        %5455 = vmatprep.subr.mxu0 0.0
        %5456 = vmatpush1.msra.mxu0 0.0
        %5457 = vmatprep.subr.mxu0 0.0
        %5458 = vmatpush1.msra.mxu0 0.0
        %5459 = vmatprep.subr.mxu0 0.0
        %5460 = vmatpush1.msra.mxu0 0.0
        %5461 = vmatprep.subr.mxu0 0.0
        %5462 = vmatpush1.msra.mxu0 0.0
        %5463 = vmatprep.subr.mxu0 0.0
        %5464 = vmatpush1.msra.mxu0 0.0
        %5465 = vmatprep.subr.mxu0 0.0
        %5466 = vmatpush1.msra.mxu0 0.0
        %5467 = vmatprep.subr.mxu0 0.0
        %5468 = vmatpush1.msra.mxu0 0.0
        %5469 = vmatprep.subr.mxu0 0.0
        %5470 = vmatpush1.msra.mxu0 0.0
        %5471 = vmatprep.subr.mxu0 0.0
        %5472 = vmatpush1.msra.mxu0 0.0
        %5473 = vmatprep.subr.mxu0 0.0
        %5474 = vmatpush1.msra.mxu0 0.0
        %5475 = vmatprep.mubr.f32.mxu0 0.0
        %5476 = vmatmul.mubr.f32.gmra.mrb[0].mxu0 %v5409
        %v5477 = vpop.f32.mrb[0].mxu0
        %v5478 = vadd.f32 0.0, %v5477
        %v5479 = vpop.f32.mrb[0].mxu0
        %5480 = vdwg.mxu0
        %5481 = vrot.lane.b32.xlu0 %v354, 40
        %v5482 = vpop.permute.xlu0 %5481
        %v5485 = vsel %vm363, %v5023, 0
        %5487 = vmatprep.subr.mxu0 0.0
        %5488 = vmatpush1.msra.mxu0 %v5482
        %5489 = vmatprep.subr.mxu0 0.0
        %5490 = vmatpush1.msra.mxu0 0.0
        %5491 = vmatprep.subr.mxu0 0.0
        %5492 = vmatpush1.msra.mxu0 0.0
        %5493 = vmatprep.subr.mxu0 0.0
        %5494 = vmatpush1.msra.mxu0 0.0
        %5495 = vmatprep.subr.mxu0 0.0
        %5496 = vmatpush1.msra.mxu0 0.0
        %5497 = vmatprep.subr.mxu0 0.0
        %5498 = vmatpush1.msra.mxu0 0.0
        %5499 = vmatprep.subr.mxu0 0.0
        %5500 = vmatpush1.msra.mxu0 0.0
        %5501 = vmatprep.subr.mxu0 0.0
        %5502 = vmatpush1.msra.mxu0 0.0
        %5503 = vmatprep.subr.mxu0 0.0
        %5504 = vmatpush1.msra.mxu0 0.0
        %5505 = vmatprep.subr.mxu0 0.0
        %5506 = vmatpush1.msra.mxu0 0.0
        %5507 = vmatprep.subr.mxu0 0.0
        %5508 = vmatpush1.msra.mxu0 0.0
        %5509 = vmatprep.subr.mxu0 0.0
        %5510 = vmatpush1.msra.mxu0 0.0
        %5511 = vmatprep.subr.mxu0 0.0
        %5512 = vmatpush1.msra.mxu0 0.0
        %5513 = vmatprep.subr.mxu0 0.0
        %5514 = vmatpush1.msra.mxu0 0.0
        %5515 = vmatprep.subr.mxu0 0.0
        %5516 = vmatpush1.msra.mxu0 0.0
        %5517 = vmatprep.subr.mxu0 0.0
        %5518 = vmatpush1.msra.mxu0 0.0
        %5519 = vmatprep.subr.mxu0 0.0
        %5520 = vmatpush1.msra.mxu0 0.0
        %5521 = vmatprep.subr.mxu0 0.0
        %5522 = vmatpush1.msra.mxu0 0.0
        %5523 = vmatprep.subr.mxu0 0.0
        %5524 = vmatpush1.msra.mxu0 0.0
        %5525 = vmatprep.subr.mxu0 0.0
        %5526 = vmatpush1.msra.mxu0 0.0
        %5527 = vmatprep.subr.mxu0 0.0
        %5528 = vmatpush1.msra.mxu0 0.0
        %5529 = vmatprep.subr.mxu0 0.0
        %5530 = vmatpush1.msra.mxu0 0.0
        %5531 = vmatprep.subr.mxu0 0.0
        %5532 = vmatpush1.msra.mxu0 0.0
        %5533 = vmatprep.subr.mxu0 0.0
        %5534 = vmatpush1.msra.mxu0 0.0
        %5535 = vmatprep.subr.mxu0 0.0
        %5536 = vmatpush1.msra.mxu0 0.0
        %5537 = vmatprep.subr.mxu0 0.0
        %5538 = vmatpush1.msra.mxu0 0.0
        %5539 = vmatprep.subr.mxu0 0.0
        %5540 = vmatpush1.msra.mxu0 0.0
        %5541 = vmatprep.subr.mxu0 0.0
        %5542 = vmatpush1.msra.mxu0 0.0
        %5543 = vmatprep.subr.mxu0 0.0
        %5544 = vmatpush1.msra.mxu0 0.0
        %5545 = vmatprep.subr.mxu0 0.0
        %5546 = vmatpush1.msra.mxu0 0.0
        %5547 = vmatprep.subr.mxu0 0.0
        %5548 = vmatpush1.msra.mxu0 0.0
        %5549 = vmatprep.subr.mxu0 0.0
        %5550 = vmatpush1.msra.mxu0 0.0
        %5551 = vmatprep.mubr.f32.mxu0 0.0
        %5552 = vmatmul.mubr.f32.gmra.mrb[0].mxu0 %v5485
        %v5553 = vpop.f32.mrb[0].mxu0
        %v5554 = vadd.f32 0.0, %v5553
        %v5555 = vpop.f32.mrb[0].mxu0
        %5556 = vdwg.mxu0
        %5557 = vrot.lane.b32.xlu0 %v357, 40
        %v5558 = vpop.permute.xlu0 %5557
        %v5561 = vsel %vm363, %v5024, 0
        %5563 = vmatprep.subr.mxu0 0.0
        %5564 = vmatpush1.msra.mxu0 %v5558
        %5565 = vmatprep.subr.mxu0 0.0
        %5566 = vmatpush1.msra.mxu0 0.0
        %5567 = vmatprep.subr.mxu0 0.0
        %5568 = vmatpush1.msra.mxu0 0.0
        %5569 = vmatprep.subr.mxu0 0.0
        %5570 = vmatpush1.msra.mxu0 0.0
        %5571 = vmatprep.subr.mxu0 0.0
        %5572 = vmatpush1.msra.mxu0 0.0
        %5573 = vmatprep.subr.mxu0 0.0
        %5574 = vmatpush1.msra.mxu0 0.0
        %5575 = vmatprep.subr.mxu0 0.0
        %5576 = vmatpush1.msra.mxu0 0.0
        %5577 = vmatprep.subr.mxu0 0.0
        %5578 = vmatpush1.msra.mxu0 0.0
        %5579 = vmatprep.subr.mxu0 0.0
        %5580 = vmatpush1.msra.mxu0 0.0
        %5581 = vmatprep.subr.mxu0 0.0
        %5582 = vmatpush1.msra.mxu0 0.0
        %5583 = vmatprep.subr.mxu0 0.0
        %5584 = vmatpush1.msra.mxu0 0.0
        %5585 = vmatprep.subr.mxu0 0.0
        %5586 = vmatpush1.msra.mxu0 0.0
        %5587 = vmatprep.subr.mxu0 0.0
        %5588 = vmatpush1.msra.mxu0 0.0
        %5589 = vmatprep.subr.mxu0 0.0
        %5590 = vmatpush1.msra.mxu0 0.0
        %5591 = vmatprep.subr.mxu0 0.0
        %5592 = vmatpush1.msra.mxu0 0.0
        %5593 = vmatprep.subr.mxu0 0.0
        %5594 = vmatpush1.msra.mxu0 0.0
        %5595 = vmatprep.subr.mxu0 0.0
        %5596 = vmatpush1.msra.mxu0 0.0
        %5597 = vmatprep.subr.mxu0 0.0
        %5598 = vmatpush1.msra.mxu0 0.0
        %5599 = vmatprep.subr.mxu0 0.0
        %5600 = vmatpush1.msra.mxu0 0.0
        %5601 = vmatprep.subr.mxu0 0.0
        %5602 = vmatpush1.msra.mxu0 0.0
        %5603 = vmatprep.subr.mxu0 0.0
        %5604 = vmatpush1.msra.mxu0 0.0
        %5605 = vmatprep.subr.mxu0 0.0
        %5606 = vmatpush1.msra.mxu0 0.0
        %5607 = vmatprep.subr.mxu0 0.0
        %5608 = vmatpush1.msra.mxu0 0.0
        %5609 = vmatprep.subr.mxu0 0.0
        %5610 = vmatpush1.msra.mxu0 0.0
        %5611 = vmatprep.subr.mxu0 0.0
        %5612 = vmatpush1.msra.mxu0 0.0
        %5613 = vmatprep.subr.mxu0 0.0
        %5614 = vmatpush1.msra.mxu0 0.0
        %5615 = vmatprep.subr.mxu0 0.0
        %5616 = vmatpush1.msra.mxu0 0.0
        %5617 = vmatprep.subr.mxu0 0.0
        %5618 = vmatpush1.msra.mxu0 0.0
        %5619 = vmatprep.subr.mxu0 0.0
        %5620 = vmatpush1.msra.mxu0 0.0
        %5621 = vmatprep.subr.mxu0 0.0
        %5622 = vmatpush1.msra.mxu0 0.0
        %5623 = vmatprep.subr.mxu0 0.0
        %5624 = vmatpush1.msra.mxu0 0.0
        %5625 = vmatprep.subr.mxu0 0.0
        %5626 = vmatpush1.msra.mxu0 0.0
        %5627 = vmatprep.mubr.f32.mxu0 0.0
        %5628 = vmatmul.mubr.f32.gmra.mrb[0].mxu0 %v5561
        %v5629 = vpop.f32.mrb[0].mxu0
        %v5630 = vadd.f32 0.0, %v5629
        %v5631 = vpop.f32.mrb[0].mxu0
        %5632 = vdwg.mxu0
        %v5641 = vrot.slane %v1214, 7
        %vm5642 = vcmask 1041409
        %v5643 = vsel %vm5642, %v5641, %v1138
        %v5644 = vrot.slane %v1290, 6
        %vm5645 = vcmask 1042434
        %v5646 = vsel %vm5645, %v5644, %v5643
        %v5647 = vrot.slane %v1366, 5
        %vm5648 = vcmask 1043459
        %v5649 = vsel %vm5648, %v5647, %v5646
        %v5650 = vrot.slane %v1442, 4
        %vm5651 = vcmask 1044484
        %v5652 = vsel %vm5651, %v5650, %v5649
        %v5653 = vrot.slane %v1518, 3
        %vm5654 = vcmask 1045509
        %v5655 = vsel %vm5654, %v5653, %v5652
        %v5656 = vrot.slane %v1594, 2
        %vm5657 = vcmask 1046534
        %v5658 = vsel %vm5657, %v5656, %v5655
        %v5659 = vrot.slane %v1670, 1
        %vm5660 = vcmask 1047559
        %v5661 = vsel %vm5660, %v5659, %v5658
        %v5663 = vrot.slane %v1138, 1
        %v5664 = vsel %vm5642, %v1214, %v5663
        %v5665 = vrot.slane %v1290, 7
        %v5666 = vsel %vm5645, %v5665, %v5664
        %v5667 = vrot.slane %v1366, 6
        %v5668 = vsel %vm5648, %v5667, %v5666
        %v5669 = vrot.slane %v1442, 5
        %v5670 = vsel %vm5651, %v5669, %v5668
        %v5671 = vrot.slane %v1518, 4
        %v5672 = vsel %vm5654, %v5671, %v5670
        %v5673 = vrot.slane %v1594, 3
        %v5674 = vsel %vm5657, %v5673, %v5672
        %v5675 = vrot.slane %v1670, 2
        %v5676 = vsel %vm5660, %v5675, %v5674
        %5677 = vrot.lane.b32.xlu0 %v5676, 8
        %v5678 = vpop.permute.xlu0 %5677
        %v5680 = vrot.slane %v1138, 2
        %v5681 = vrot.slane %v1214, 1
        %v5682 = vsel %vm5642, %v5681, %v5680
        %v5683 = vsel %vm5645, %v1290, %v5682
        %v5684 = vrot.slane %v1366, 7
        %v5685 = vsel %vm5648, %v5684, %v5683
        %v5686 = vrot.slane %v1442, 6
        %v5687 = vsel %vm5651, %v5686, %v5685
        %v5688 = vrot.slane %v1518, 5
        %v5689 = vsel %vm5654, %v5688, %v5687
        %v5690 = vrot.slane %v1594, 4
        %v5691 = vsel %vm5657, %v5690, %v5689
        %v5692 = vrot.slane %v1670, 3
        %v5693 = vsel %vm5660, %v5692, %v5691
        %5694 = vrot.lane.b32.xlu0 %v5693, 16
        %v5695 = vpop.permute.xlu0 %5694
        %v5697 = vrot.slane %v1138, 3
        %v5698 = vrot.slane %v1214, 2
        %v5699 = vsel %vm5642, %v5698, %v5697
        %v5700 = vrot.slane %v1290, 1
        %v5701 = vsel %vm5645, %v5700, %v5699
        %v5702 = vsel %vm5648, %v1366, %v5701
        %v5703 = vrot.slane %v1442, 7
        %v5704 = vsel %vm5651, %v5703, %v5702
        %v5705 = vrot.slane %v1518, 6
        %v5706 = vsel %vm5654, %v5705, %v5704
        %v5707 = vrot.slane %v1594, 5
        %v5708 = vsel %vm5657, %v5707, %v5706
        %v5709 = vrot.slane %v1670, 4
        %v5710 = vsel %vm5660, %v5709, %v5708
        %5711 = vrot.lane.b32.xlu0 %v5710, 24
        %v5712 = vpop.permute.xlu0 %5711
        %v5714 = vsel %vm363, %v5661, %v5678
        %vm5715 = vcmask 130048
        %v5716 = vsel %vm5715, %v5714, %v5695
        %vm5717 = vcmask 195584
        %v5718 = vsel %vm5717, %v5716, %v5712
        %v5719 = vsel %vm5654, %v5641, %v1138
        %v5720 = vsel %vm5657, %v5644, %v5719
        %v5721 = vsel %vm5660, %v5647, %v5720
        %v5722 = vsel %vm5642, %v5653, %v5650
        %v5723 = vsel %vm5645, %v5656, %v5722
        %v5724 = vsel %vm5648, %v5659, %v5723
        %v5727 = vsel %vm5654, %v1214, %v5663
        %v5728 = vsel %vm5657, %v5665, %v5727
        %v5729 = vsel %vm5660, %v5667, %v5728
        %v5730 = vsel %vm5642, %v5671, %v5669
        %v5731 = vsel %vm5645, %v5673, %v5730
        %v5732 = vsel %vm5648, %v5675, %v5731
        %5733 = vrot.lane.b32.xlu0 %v5729, 8
        %v5734 = vpop.permute.xlu0 %5733
        %5735 = vrot.lane.b32.xlu0 %v5732, 8
        %v5736 = vpop.permute.xlu0 %5735
        %v5739 = vsel %vm5654, %v5681, %v5680
        %v5740 = vsel %vm5657, %v1290, %v5739
        %v5741 = vsel %vm5660, %v5684, %v5740
        %v5742 = vsel %vm5642, %v5688, %v5686
        %v5743 = vsel %vm5645, %v5690, %v5742
        %v5744 = vsel %vm5648, %v5692, %v5743
        %5745 = vrot.lane.b32.xlu0 %v5741, 16
        %v5746 = vpop.permute.xlu0 %5745
        %5747 = vrot.lane.b32.xlu0 %v5744, 16
        %v5748 = vpop.permute.xlu0 %5747
        %v5751 = vsel %vm5654, %v5698, %v5697
        %v5752 = vsel %vm5657, %v5700, %v5751
        %v5753 = vsel %vm5660, %v1366, %v5752
        %v5754 = vsel %vm5642, %v5705, %v5703
        %v5755 = vsel %vm5645, %v5707, %v5754
        %v5756 = vsel %vm5648, %v5709, %v5755
        %5757 = vrot.lane.b32.xlu0 %v5753, 24
        %v5758 = vpop.permute.xlu0 %5757
        %5759 = vrot.lane.b32.xlu0 %v5756, 24
        %v5760 = vpop.permute.xlu0 %5759
        %v5763 = vsel %vm363, %v5721, %v5734
        %v5764 = vsel %vm363, %v5724, %v5736
        %v5765 = vsel %vm5715, %v5763, %v5746
        %v5766 = vsel %vm5715, %v5764, %v5748
        %v5767 = vsel %vm5717, %v5765, %v5758
        %v5768 = vsel %vm5717, %v5766, %v5760
        %v5777 = vrot.slane %v2534, 7
        %v5778 = vsel %vm5642, %v5777, %v2458
        %v5779 = vrot.slane %v2610, 6
        %v5780 = vsel %vm5645, %v5779, %v5778
        %v5781 = vrot.slane %v2686, 5
        %v5782 = vsel %vm5648, %v5781, %v5780
        %v5783 = vrot.slane %v2762, 4
        %v5784 = vsel %vm5651, %v5783, %v5782
        %v5785 = vrot.slane %v2838, 3
        %v5786 = vsel %vm5654, %v5785, %v5784
        %v5787 = vrot.slane %v2914, 2
        %v5788 = vsel %vm5657, %v5787, %v5786
        %v5789 = vrot.slane %v2990, 1
        %v5790 = vsel %vm5660, %v5789, %v5788
        %v5792 = vrot.slane %v2458, 1
        %v5793 = vsel %vm5642, %v2534, %v5792
        %v5794 = vrot.slane %v2610, 7
        %v5795 = vsel %vm5645, %v5794, %v5793
        %v5796 = vrot.slane %v2686, 6
        %v5797 = vsel %vm5648, %v5796, %v5795
        %v5798 = vrot.slane %v2762, 5
        %v5799 = vsel %vm5651, %v5798, %v5797
        %v5800 = vrot.slane %v2838, 4
        %v5801 = vsel %vm5654, %v5800, %v5799
        %v5802 = vrot.slane %v2914, 3
        %v5803 = vsel %vm5657, %v5802, %v5801
        %v5804 = vrot.slane %v2990, 2
        %v5805 = vsel %vm5660, %v5804, %v5803
        %5806 = vrot.lane.b32.xlu0 %v5805, 8
        %v5807 = vpop.permute.xlu0 %5806
        %v5809 = vrot.slane %v2458, 2
        %v5810 = vrot.slane %v2534, 1
        %v5811 = vsel %vm5642, %v5810, %v5809
        %v5812 = vsel %vm5645, %v2610, %v5811
        %v5813 = vrot.slane %v2686, 7
        %v5814 = vsel %vm5648, %v5813, %v5812
        %v5815 = vrot.slane %v2762, 6
        %v5816 = vsel %vm5651, %v5815, %v5814
        %v5817 = vrot.slane %v2838, 5
        %v5818 = vsel %vm5654, %v5817, %v5816
        %v5819 = vrot.slane %v2914, 4
        %v5820 = vsel %vm5657, %v5819, %v5818
        %v5821 = vrot.slane %v2990, 3
        %v5822 = vsel %vm5660, %v5821, %v5820
        %5823 = vrot.lane.b32.xlu0 %v5822, 16
        %v5824 = vpop.permute.xlu0 %5823
        %v5826 = vrot.slane %v2458, 3
        %v5827 = vrot.slane %v2534, 2
        %v5828 = vsel %vm5642, %v5827, %v5826
        %v5829 = vrot.slane %v2610, 1
        %v5830 = vsel %vm5645, %v5829, %v5828
        %v5831 = vsel %vm5648, %v2686, %v5830
        %v5832 = vrot.slane %v2762, 7
        %v5833 = vsel %vm5651, %v5832, %v5831
        %v5834 = vrot.slane %v2838, 6
        %v5835 = vsel %vm5654, %v5834, %v5833
        %v5836 = vrot.slane %v2914, 5
        %v5837 = vsel %vm5657, %v5836, %v5835
        %v5838 = vrot.slane %v2990, 4
        %v5839 = vsel %vm5660, %v5838, %v5837
        %5840 = vrot.lane.b32.xlu0 %v5839, 24
        %v5841 = vpop.permute.xlu0 %5840
        %v5843 = vsel %vm363, %v5790, %v5807
        %v5844 = vsel %vm5715, %v5843, %v5824
        %v5845 = vsel %vm5717, %v5844, %v5841
        %v5846 = vsel %vm5654, %v5777, %v2458
        %v5847 = vsel %vm5657, %v5779, %v5846
        %v5848 = vsel %vm5660, %v5781, %v5847
        %v5849 = vsel %vm5642, %v5785, %v5783
        %v5850 = vsel %vm5645, %v5787, %v5849
        %v5851 = vsel %vm5648, %v5789, %v5850
        %v5854 = vsel %vm5654, %v2534, %v5792
        %v5855 = vsel %vm5657, %v5794, %v5854
        %v5856 = vsel %vm5660, %v5796, %v5855
        %v5857 = vsel %vm5642, %v5800, %v5798
        %v5858 = vsel %vm5645, %v5802, %v5857
        %v5859 = vsel %vm5648, %v5804, %v5858
        %5860 = vrot.lane.b32.xlu0 %v5856, 8
        %v5861 = vpop.permute.xlu0 %5860
        %5862 = vrot.lane.b32.xlu0 %v5859, 8
        %v5863 = vpop.permute.xlu0 %5862
        %v5866 = vsel %vm5654, %v5810, %v5809
        %v5867 = vsel %vm5657, %v2610, %v5866
        %v5868 = vsel %vm5660, %v5813, %v5867
        %v5869 = vsel %vm5642, %v5817, %v5815
        %v5870 = vsel %vm5645, %v5819, %v5869
        %v5871 = vsel %vm5648, %v5821, %v5870
        %5872 = vrot.lane.b32.xlu0 %v5868, 16
        %v5873 = vpop.permute.xlu0 %5872
        %5874 = vrot.lane.b32.xlu0 %v5871, 16
        %v5875 = vpop.permute.xlu0 %5874
        %v5878 = vsel %vm5654, %v5827, %v5826
        %v5879 = vsel %vm5657, %v5829, %v5878
        %v5880 = vsel %vm5660, %v2686, %v5879
        %v5881 = vsel %vm5642, %v5834, %v5832
        %v5882 = vsel %vm5645, %v5836, %v5881
        %v5883 = vsel %vm5648, %v5838, %v5882
        %5884 = vrot.lane.b32.xlu0 %v5880, 24
        %v5885 = vpop.permute.xlu0 %5884
        %5886 = vrot.lane.b32.xlu0 %v5883, 24
        %v5887 = vpop.permute.xlu0 %5886
        %v5890 = vsel %vm363, %v5848, %v5861
        %v5891 = vsel %vm363, %v5851, %v5863
        %v5892 = vsel %vm5715, %v5890, %v5873
        %v5893 = vsel %vm5715, %v5891, %v5875
        %v5894 = vsel %vm5717, %v5892, %v5885
        %v5895 = vsel %vm5717, %v5893, %v5887
        %v5904 = vrot.slane %v3854, 7
        %v5905 = vsel %vm5642, %v5904, %v3778
        %v5906 = vrot.slane %v3930, 6
        %v5907 = vsel %vm5645, %v5906, %v5905
        %v5908 = vrot.slane %v4006, 5
        %v5909 = vsel %vm5648, %v5908, %v5907
        %v5910 = vrot.slane %v4082, 4
        %v5911 = vsel %vm5651, %v5910, %v5909
        %v5912 = vrot.slane %v4158, 3
        %v5913 = vsel %vm5654, %v5912, %v5911
        %v5914 = vrot.slane %v4234, 2
        %v5915 = vsel %vm5657, %v5914, %v5913
        %v5916 = vrot.slane %v4310, 1
        %v5917 = vsel %vm5660, %v5916, %v5915
        %v5919 = vrot.slane %v3778, 1
        %v5920 = vsel %vm5642, %v3854, %v5919
        %v5921 = vrot.slane %v3930, 7
        %v5922 = vsel %vm5645, %v5921, %v5920
        %v5923 = vrot.slane %v4006, 6
        %v5924 = vsel %vm5648, %v5923, %v5922
        %v5925 = vrot.slane %v4082, 5
        %v5926 = vsel %vm5651, %v5925, %v5924
        %v5927 = vrot.slane %v4158, 4
        %v5928 = vsel %vm5654, %v5927, %v5926
        %v5929 = vrot.slane %v4234, 3
        %v5930 = vsel %vm5657, %v5929, %v5928
        %v5931 = vrot.slane %v4310, 2
        %v5932 = vsel %vm5660, %v5931, %v5930
        %5933 = vrot.lane.b32.xlu0 %v5932, 8
        %v5934 = vpop.permute.xlu0 %5933
        %v5936 = vrot.slane %v3778, 2
        %v5937 = vrot.slane %v3854, 1
        %v5938 = vsel %vm5642, %v5937, %v5936
        %v5939 = vsel %vm5645, %v3930, %v5938
        %v5940 = vrot.slane %v4006, 7
        %v5941 = vsel %vm5648, %v5940, %v5939
        %v5942 = vrot.slane %v4082, 6
        %v5943 = vsel %vm5651, %v5942, %v5941
        %v5944 = vrot.slane %v4158, 5
        %v5945 = vsel %vm5654, %v5944, %v5943
        %v5946 = vrot.slane %v4234, 4
        %v5947 = vsel %vm5657, %v5946, %v5945
        %v5948 = vrot.slane %v4310, 3
        %v5949 = vsel %vm5660, %v5948, %v5947
        %5950 = vrot.lane.b32.xlu0 %v5949, 16
        %v5951 = vpop.permute.xlu0 %5950
        %v5953 = vrot.slane %v3778, 3
        %v5954 = vrot.slane %v3854, 2
        %v5955 = vsel %vm5642, %v5954, %v5953
        %v5956 = vrot.slane %v3930, 1
        %v5957 = vsel %vm5645, %v5956, %v5955
        %v5958 = vsel %vm5648, %v4006, %v5957
        %v5959 = vrot.slane %v4082, 7
        %v5960 = vsel %vm5651, %v5959, %v5958
        %v5961 = vrot.slane %v4158, 6
        %v5962 = vsel %vm5654, %v5961, %v5960
        %v5963 = vrot.slane %v4234, 5
        %v5964 = vsel %vm5657, %v5963, %v5962
        %v5965 = vrot.slane %v4310, 4
        %v5966 = vsel %vm5660, %v5965, %v5964
        %5967 = vrot.lane.b32.xlu0 %v5966, 24
        %v5968 = vpop.permute.xlu0 %5967
        %v5970 = vsel %vm363, %v5917, %v5934
        %v5971 = vsel %vm5715, %v5970, %v5951
        %v5972 = vsel %vm5717, %v5971, %v5968
        %v5973 = vsel %vm5654, %v5904, %v3778
        %v5974 = vsel %vm5657, %v5906, %v5973
        %v5975 = vsel %vm5660, %v5908, %v5974
        %v5976 = vsel %vm5642, %v5912, %v5910
        %v5977 = vsel %vm5645, %v5914, %v5976
        %v5978 = vsel %vm5648, %v5916, %v5977
        %v5981 = vsel %vm5654, %v3854, %v5919
        %v5982 = vsel %vm5657, %v5921, %v5981
        %v5983 = vsel %vm5660, %v5923, %v5982
        %v5984 = vsel %vm5642, %v5927, %v5925
        %v5985 = vsel %vm5645, %v5929, %v5984
        %v5986 = vsel %vm5648, %v5931, %v5985
        %5987 = vrot.lane.b32.xlu0 %v5983, 8
        %v5988 = vpop.permute.xlu0 %5987
        %5989 = vrot.lane.b32.xlu0 %v5986, 8
        %v5990 = vpop.permute.xlu0 %5989
        %v5993 = vsel %vm5654, %v5937, %v5936
        %v5994 = vsel %vm5657, %v3930, %v5993
        %v5995 = vsel %vm5660, %v5940, %v5994
        %v5996 = vsel %vm5642, %v5944, %v5942
        %v5997 = vsel %vm5645, %v5946, %v5996
        %v5998 = vsel %vm5648, %v5948, %v5997
        %5999 = vrot.lane.b32.xlu0 %v5995, 16
        %v6000 = vpop.permute.xlu0 %5999
        %6001 = vrot.lane.b32.xlu0 %v5998, 16
        %v6002 = vpop.permute.xlu0 %6001
        %v6005 = vsel %vm5654, %v5954, %v5953
        %v6006 = vsel %vm5657, %v5956, %v6005
        %v6007 = vsel %vm5660, %v4006, %v6006
        %v6008 = vsel %vm5642, %v5961, %v5959
        %v6009 = vsel %vm5645, %v5963, %v6008
        %v6010 = vsel %vm5648, %v5965, %v6009
        %6011 = vrot.lane.b32.xlu0 %v6007, 24
        %v6012 = vpop.permute.xlu0 %6011
        %6013 = vrot.lane.b32.xlu0 %v6010, 24
        %v6014 = vpop.permute.xlu0 %6013
        %v6017 = vsel %vm363, %v5975, %v5988
        %v6018 = vsel %vm363, %v5978, %v5990
        %v6019 = vsel %vm5715, %v6017, %v6000
        %v6020 = vsel %vm5715, %v6018, %v6002
        %v6021 = vsel %vm5717, %v6019, %v6012
        %v6022 = vsel %vm5717, %v6020, %v6014
        %v6031 = vrot.slane %v5174, 7
        %v6032 = vsel %vm5642, %v6031, %v5098
        %v6033 = vrot.slane %v5250, 6
        %v6034 = vsel %vm5645, %v6033, %v6032
        %v6035 = vrot.slane %v5326, 5
        %v6036 = vsel %vm5648, %v6035, %v6034
        %v6037 = vrot.slane %v5402, 4
        %v6038 = vsel %vm5651, %v6037, %v6036
        %v6039 = vrot.slane %v5478, 3
        %v6040 = vsel %vm5654, %v6039, %v6038
        %v6041 = vrot.slane %v5554, 2
        %v6042 = vsel %vm5657, %v6041, %v6040
        %v6043 = vrot.slane %v5630, 1
        %v6044 = vsel %vm5660, %v6043, %v6042
        %v6046 = vrot.slane %v5098, 1
        %v6047 = vsel %vm5642, %v5174, %v6046
        %v6048 = vrot.slane %v5250, 7
        %v6049 = vsel %vm5645, %v6048, %v6047
        %v6050 = vrot.slane %v5326, 6
        %v6051 = vsel %vm5648, %v6050, %v6049
        %v6052 = vrot.slane %v5402, 5
        %v6053 = vsel %vm5651, %v6052, %v6051
        %v6054 = vrot.slane %v5478, 4
        %v6055 = vsel %vm5654, %v6054, %v6053
        %v6056 = vrot.slane %v5554, 3
        %v6057 = vsel %vm5657, %v6056, %v6055
        %v6058 = vrot.slane %v5630, 2
        %v6059 = vsel %vm5660, %v6058, %v6057
        %6060 = vrot.lane.b32.xlu0 %v6059, 8
        %v6061 = vpop.permute.xlu0 %6060
        %v6063 = vrot.slane %v5098, 2
        %v6064 = vrot.slane %v5174, 1
        %v6065 = vsel %vm5642, %v6064, %v6063
        %v6066 = vsel %vm5645, %v5250, %v6065
        %v6067 = vrot.slane %v5326, 7
        %v6068 = vsel %vm5648, %v6067, %v6066
        %v6069 = vrot.slane %v5402, 6
        %v6070 = vsel %vm5651, %v6069, %v6068
        %v6071 = vrot.slane %v5478, 5
        %v6072 = vsel %vm5654, %v6071, %v6070
        %v6073 = vrot.slane %v5554, 4
        %v6074 = vsel %vm5657, %v6073, %v6072
        %v6075 = vrot.slane %v5630, 3
        %v6076 = vsel %vm5660, %v6075, %v6074
        %6077 = vrot.lane.b32.xlu0 %v6076, 16
        %v6078 = vpop.permute.xlu0 %6077
        %v6080 = vrot.slane %v5098, 3
        %v6081 = vrot.slane %v5174, 2
        %v6082 = vsel %vm5642, %v6081, %v6080
        %v6083 = vrot.slane %v5250, 1
        %v6084 = vsel %vm5645, %v6083, %v6082
        %v6085 = vsel %vm5648, %v5326, %v6084
        %v6086 = vrot.slane %v5402, 7
        %v6087 = vsel %vm5651, %v6086, %v6085
        %v6088 = vrot.slane %v5478, 6
        %v6089 = vsel %vm5654, %v6088, %v6087
        %v6090 = vrot.slane %v5554, 5
        %v6091 = vsel %vm5657, %v6090, %v6089
        %v6092 = vrot.slane %v5630, 4
        %v6093 = vsel %vm5660, %v6092, %v6091
        %6094 = vrot.lane.b32.xlu0 %v6093, 24
        %v6095 = vpop.permute.xlu0 %6094
        %v6097 = vsel %vm363, %v6044, %v6061
        %v6098 = vsel %vm5715, %v6097, %v6078
        %v6099 = vsel %vm5717, %v6098, %v6095
        %v6100 = vsel %vm5654, %v6031, %v5098
        %v6101 = vsel %vm5657, %v6033, %v6100
        %v6102 = vsel %vm5660, %v6035, %v6101
        %v6103 = vsel %vm5642, %v6039, %v6037
        %v6104 = vsel %vm5645, %v6041, %v6103
        %v6105 = vsel %vm5648, %v6043, %v6104
        %v6108 = vsel %vm5654, %v5174, %v6046
        %v6109 = vsel %vm5657, %v6048, %v6108
        %v6110 = vsel %vm5660, %v6050, %v6109
        %v6111 = vsel %vm5642, %v6054, %v6052
        %v6112 = vsel %vm5645, %v6056, %v6111
        %v6113 = vsel %vm5648, %v6058, %v6112
        %6114 = vrot.lane.b32.xlu0 %v6110, 8
        %v6115 = vpop.permute.xlu0 %6114
        %6116 = vrot.lane.b32.xlu0 %v6113, 8
        %v6117 = vpop.permute.xlu0 %6116
        %v6120 = vsel %vm5654, %v6064, %v6063
        %v6121 = vsel %vm5657, %v5250, %v6120
        %v6122 = vsel %vm5660, %v6067, %v6121
        %v6123 = vsel %vm5642, %v6071, %v6069
        %v6124 = vsel %vm5645, %v6073, %v6123
        %v6125 = vsel %vm5648, %v6075, %v6124
        %6126 = vrot.lane.b32.xlu0 %v6122, 16
        %v6127 = vpop.permute.xlu0 %6126
        %6128 = vrot.lane.b32.xlu0 %v6125, 16
        %v6129 = vpop.permute.xlu0 %6128
        %v6132 = vsel %vm5654, %v6081, %v6080
        %v6133 = vsel %vm5657, %v6083, %v6132
        %v6134 = vsel %vm5660, %v5326, %v6133
        %v6135 = vsel %vm5642, %v6088, %v6086
        %v6136 = vsel %vm5645, %v6090, %v6135
        %v6137 = vsel %vm5648, %v6092, %v6136
        %6138 = vrot.lane.b32.xlu0 %v6134, 24
        %v6139 = vpop.permute.xlu0 %6138
        %6140 = vrot.lane.b32.xlu0 %v6137, 24
        %v6141 = vpop.permute.xlu0 %6140
        %v6144 = vsel %vm363, %v6102, %v6115
        %v6145 = vsel %vm363, %v6105, %v6117
        %v6146 = vsel %vm5715, %v6144, %v6127
        %v6147 = vsel %vm5715, %v6145, %v6129
        %v6148 = vsel %vm5717, %v6146, %v6139
        %v6149 = vsel %vm5717, %v6147, %v6141
        %vm6152 = vcmask 1043456
        %v6153 = vrot.slane %v5767, 4
        %v6154 = vrot.slane %v5768, 4
        %v6155 = vsel %vm6152, %v6153, %v6154
        %v6159 = vrot.slane %v5894, 4
        %v6160 = vrot.slane %v5895, 4
        %v6161 = vsel %vm6152, %v6159, %v6160
        %v6165 = vrot.slane %v6021, 4
        %v6166 = vrot.slane %v6022, 4
        %v6167 = vsel %vm6152, %v6165, %v6166
        %v6171 = vrot.slane %v6148, 4
        %v6172 = vrot.slane %v6149, 4
        %v6173 = vsel %vm6152, %v6171, %v6172
        %v6175 = vpack.c.bf16 %v6155, %v5718
        %v6176 = vpack.c.bf16 %v6161, %v5845
        %v6177 = vpack.c.bf16 %v6167, %v5972
        %v6178 = vpack.c.bf16 %v6173, %v6099
        %v6179 = vld [vmem:[%s3] sm:$0xf]
        %v6180 = vld [vmem:[%s3 + $0x4] sm:$0xf]
        %v6181 = vld [vmem:[%s3 + $0x8] sm:$0xf]
        %v6182 = vld [vmem:[%s3 + $0xc] sm:$0xf]
        %v6183 = vld [vmem:[%s4] sm:$0x1]
        %v6185 = vlaneseq
        %v6186 = vshrl.u32 %v6185, 7
        %v6187 = vsub.s32 0, %v6186
        %v6188 = vrot.slane %v6183, %v6187
        %v6194 = vunpack.c.l.b16 %v6179
        %v6195 = vunpack.c.l.b16 %v6180
        %v6196 = vunpack.c.l.b16 %v6181
        %v6197 = vunpack.c.l.b16 %v6182
        %v6198 = vpack.c.b16 %v6195, %v6194
        %v6199 = vpack.c.b16 %v6197, %v6196
        %v6203 = vsel %vm282, %v6175, 0
        %v6206 = vsel %vm282, %v6176, 0
        %v6209 = vsel %vm282, %v6177, 0
        %v6212 = vsel %vm282, %v6178, 0
        %6214 = vmatprep.subr.bf16.mxu0 0
        %6215 = vmatpush1.bf16.msra.mxu0 %v6198
        %6216 = vmatprep.subr.bf16.mxu0 0
        %6217 = vmatpush1.bf16.msra.mxu0 %v6199
        %6218 = vmatprep.subr.bf16.mxu0 0
        %6219 = vmatpush1.bf16.msra.mxu0 0
        %6220 = vmatprep.subr.bf16.mxu0 0
        %6221 = vmatpush1.bf16.msra.mxu0 0
        %6222 = vmatprep.subr.bf16.mxu0 0
        %6223 = vmatpush1.bf16.msra.mxu0 0
        %6224 = vmatprep.subr.bf16.mxu0 0
        %6225 = vmatpush1.bf16.msra.mxu0 0
        %6226 = vmatprep.subr.bf16.mxu0 0
        %6227 = vmatpush1.bf16.msra.mxu0 0
        %6228 = vmatprep.subr.bf16.mxu0 0
        %6229 = vmatpush1.bf16.msra.mxu0 0
        %6230 = vmatprep.subr.bf16.mxu0 0
        %6231 = vmatpush1.bf16.msra.mxu0 0
        %6232 = vmatprep.subr.bf16.mxu0 0
        %6233 = vmatpush1.bf16.msra.mxu0 0
        %6234 = vmatprep.subr.bf16.mxu0 0
        %6235 = vmatpush1.bf16.msra.mxu0 0
        %6236 = vmatprep.subr.bf16.mxu0 0
        %6237 = vmatpush1.bf16.msra.mxu0 0
        %6238 = vmatprep.subr.bf16.mxu0 0
        %6239 = vmatpush1.bf16.msra.mxu0 0
        %6240 = vmatprep.subr.bf16.mxu0 0
        %6241 = vmatpush1.bf16.msra.mxu0 0
        %6242 = vmatprep.subr.bf16.mxu0 0
        %6243 = vmatpush1.bf16.msra.mxu0 0
        %6244 = vmatprep.subr.bf16.mxu0 0
        %6245 = vmatpush1.bf16.msra.mxu0 0
        %6246 = vmatprep.mubr.bf16.mxu0 0
        %6247 = vmatmul.mubr.bf16.gmra.mrb[0].mxu0 %v6203
        %v6248 = vpop.f32.mrb[0].mxu0
        %v6249 = vadd.f32 %v6188, %v6248
        %v6250 = vpop.f32.mrb[0].mxu0
        %v6251 = vpop.f32.mrb[0].mxu0
        %v6252 = vadd.f32 %v6188, %v6251
        %v6253 = vpop.f32.mrb[0].mxu0
        %6254 = vmatprep.mubr.bf16.mxu0 0
        %6255 = vmatmul.mubr.bf16.gmra.mrb[0].mxu0 %v6206
        %v6256 = vpop.f32.mrb[0].mxu0
        %v6257 = vadd.f32 %v6188, %v6256
        %v6258 = vpop.f32.mrb[0].mxu0
        %v6259 = vpop.f32.mrb[0].mxu0
        %v6260 = vadd.f32 %v6188, %v6259
        %v6261 = vpop.f32.mrb[0].mxu0
        %6262 = vmatprep.mubr.bf16.mxu0 0
        %6263 = vmatmul.mubr.bf16.gmra.mrb[0].mxu0 %v6209
        %v6264 = vpop.f32.mrb[0].mxu0
        %v6265 = vadd.f32 %v6188, %v6264
        %v6266 = vpop.f32.mrb[0].mxu0
        %v6267 = vpop.f32.mrb[0].mxu0
        %v6268 = vadd.f32 %v6188, %v6267
        %v6269 = vpop.f32.mrb[0].mxu0
        %6270 = vmatprep.mubr.bf16.mxu0 0
        %6271 = vmatmul.mubr.bf16.gmra.mrb[0].mxu0 %v6212
        %v6272 = vpop.f32.mrb[0].mxu0
        %v6273 = vadd.f32 %v6188, %v6272
        %v6274 = vpop.f32.mrb[0].mxu0
        %v6275 = vpop.f32.mrb[0].mxu0
        %v6276 = vadd.f32 %v6188, %v6275
        %v6277 = vpop.f32.mrb[0].mxu0
        %6278 = vdwg.mxu0
        %6280 = vrot.lane.b32.xlu0 %v6252, 32
        %v6281 = vpop.permute.xlu0 %6280
        %6284 = vrot.lane.b32.xlu0 %v6257, 64
        %v6285 = vpop.permute.xlu0 %6284
        %6288 = vrot.lane.b32.xlu0 %v6260, 96
        %v6289 = vpop.permute.xlu0 %6288
        %6292 = vrot.lane.b32.xlu0 %v6268, 32
        %v6293 = vpop.permute.xlu0 %6292
        %6296 = vrot.lane.b32.xlu0 %v6273, 64
        %v6297 = vpop.permute.xlu0 %6296
        %6300 = vrot.lane.b32.xlu0 %v6276, 96
        %v6301 = vpop.permute.xlu0 %6300
        %v6303 = vsel %vm282, %v6249, %v6281
        %vm6304 = vcmask 523264
        %v6305 = vsel %vm6304, %v6303, %v6285
        %vm6306 = vcmask 785408
        %v6307 = vsel %vm6306, %v6305, %v6289
        %v6308 = vsel %vm282, %v6265, %v6293
        %v6309 = vsel %vm6304, %v6308, %v6297
        %v6310 = vsel %vm6306, %v6309, %v6301
        %6311 = vst [vmem:[%s245] sm:$0xff] %v6307
        %6312 = vst [vmem:[%s245 + $0x8] sm:$0xff] %v6310
        %p6313 = scmp.lt.s32.totalorder %s19, 1
        %s6314 = scalar_select %p6313, %s19, 1
        %s6315 = smul.addr %s6314, 2
        %s6316 = smul.addr %s6315, 8
        %s6317 = scalar_lea.vmem %s5, %s6316
        // Predicated region
        $region45: #{window_attention.1} parent=39 // pred_check
          %p6318 = pneg %p147
        $region46: #{window_attention.1} parent=39 // pred_check_branch
          %6320 = sbr.rel (%p6318) target = $region48
        $region47: #{window_attention.1} parent=39 // pred_region
          _
        $region48: #{window_attention.1} parent=39 // pred_fallthru
          _
      $region40: #{window_attention.1} parent=5 // pred_fallthru
        _
      %p6321 = scmp.le.s32.totalorder 2, %s14
      // Predicated region
      $region49: #{window_attention.1} parent=5 // pred_check
        %p6322 = pneg %p6321
      $region50: #{window_attention.1} parent=5 // pred_check_branch
        %6324 = sbr.rel (%p6322) target = $region52
      $region51: #{window_attention.1} parent=5 // pred_region
        %s6325 = ssub.s32 %s14, 2
        // Predicated region
        $region53: #{window_attention.1} parent=51 // pred_check
          %p6326 = pneg %p153
        $region54: #{window_attention.1} parent=51 // pred_check_branch
          %6328 = sbr.rel (%p6326) target = $region56
        $region55: #{window_attention.1} parent=51 // pred_region
          %p6329 = scmp.lt.s32.totalorder %s20, 1
          %s6330 = scalar_select %p6329, %s20, 1
          %s6331 = smul.addr %s6330, 2
          %s6332 = smul.addr %s6331, 8
          %s6333 = scalar_lea.vmem %s5, %s6332
        $region56: #{window_attention.1} parent=51 // pred_fallthru
          _
      $region52: #{window_attention.1} parent=5 // pred_fallthru
        _
    $region6: #{window_attention.1} parent=1 // loop_footer
      %s18 = sadd.s32 1, %s14
    $region7: #{window_attention.1} parent=1 // loop_footer_branch
      %13 = sbr.rel target = $region3
    $region8: #{window_attention.1} parent=1 // loop_exit
      _
    %6334 = vsyncpa [#allocation3], 1
    %s6335 = scalar_lea.sflag [#allocation3], 1
    %6336 = vsyncpa %s6335, 1

</llo_original>
